<compile_context>
chip_gen: v5e
topology: v5e:2x2
jax: 0.10.0
libtpu: 0.0.40
codegen_flags: <defaults>
</compile_context>

<pallas_src>
import functools

import jax
import jax.numpy as jnp
from jax.experimental import pallas as pl
from jax.experimental.pallas import tpu as pltpu


def _stable_log_sigmoid(x):
    # log(sigmoid(x)) = min(x, 0) - log1p(exp(-|x|))
    return jnp.minimum(x, 0.0) - jnp.log1p(jnp.exp(-jnp.abs(x)))


def _round_up(x, m):
    return ((x + m - 1) // m) * m


def _w2v_loss_kernel(in_lbl_ref,    # (tb, 1)      int32  VMEM
                     ctx_lbl_ref,   # (tb*K, 1)    int32  VMEM
                     in_tab_ref,    # (V, E)       table  VMEM (resident, constant block)
                     out_tab_ref,   # (V, E)       table  VMEM (resident, constant block)
                     loss_ref,      # (1, tb)      f32    output block (lane-dense)
                     *, tb, K, C, V):
    E = in_tab_ref.shape[1]
    tab_dtype = in_tab_ref.dtype

    in_lbl = in_lbl_ref[...]                                     # (tb, 1)
    ctx_lbl = ctx_lbl_ref[...]                                   # (tb*K, 1)

    # ---- vectorized embedding gather via one-hot matmuls (MXU) ----
    iota_in = jax.lax.broadcasted_iota(jnp.int32, (tb, V), 1)
    one_hot_in = (iota_in == in_lbl).astype(tab_dtype)           # (tb, V)
    in_rows = jnp.dot(one_hot_in, in_tab_ref[...],
                      preferred_element_type=jnp.float32)        # (tb, E) f32

    iota_ctx = jax.lax.broadcasted_iota(jnp.int32, (tb * K, V), 1)
    one_hot_ctx = (iota_ctx == ctx_lbl).astype(tab_dtype)        # (tb*K, V)
    ctx_rows = jnp.dot(one_hot_ctx, out_tab_ref[...],
                       preferred_element_type=jnp.float32)       # (tb*K, E) f32
    ctx_rows = ctx_rows.reshape(tb, K, E)                        # (tb, K, E)

    # ---- loss math (f32 throughout; pos/neg handled with a static sign) ----
    dots = jnp.sum(ctx_rows * in_rows[:, None, :], axis=-1)      # (tb, K)
    col = jax.lax.broadcasted_iota(jnp.int32, (tb, K), 1)
    signed = jnp.where(col < C, dots, -dots)                     # + for positives, - for negatives
    log_sig = _stable_log_sigmoid(signed)                        # (tb, K)
    loss = -jnp.sum(log_sig, axis=-1)                            # (tb,)
    loss_ref[...] = loss.reshape(1, tb)                          # full-lane store


def embedding_model_forward(in_embed, out_embed,
                            input_labels, pos_labels, neg_labels,
                            *, max_tile_b=128):
    """Pallas equivalent of EmbeddingModel.forward — returns per-example loss, shape (B,)."""
    V, E = in_embed.shape
    B = input_labels.shape[0]
    C = pos_labels.shape[1]
    N = neg_labels.shape[1]
    K = C + N

    # Tile choice: single full-batch block when small, otherwise 128-wide tiles so the
    # lane-dense output block stays a multiple of 128.
    if B <= max_tile_b:
        tb = _round_up(B, 8)
    else:
        tb = max_tile_b
        assert tb % 128 == 0
    Bp = _round_up(B, tb)
    pad = Bp - B

    in_labels = input_labels.astype(jnp.int32).reshape(B, 1)                     # (B, 1)
    ctx_labels = jnp.concatenate([pos_labels, neg_labels], axis=1).astype(jnp.int32)  # (B, K)
    if pad:
        in_labels = jnp.concatenate([in_labels, jnp.zeros((pad, 1), jnp.int32)], axis=0)
        ctx_labels = jnp.concatenate([ctx_labels, jnp.zeros((pad, K), jnp.int32)], axis=0)
    ctx_flat = ctx_labels.reshape(Bp * K, 1)                                     # (Bp*K, 1)

    kernel = functools.partial(_w2v_loss_kernel, tb=tb, K=K, C=C, V=V)

    out = pl.pallas_call(
        kernel,
        out_shape=jax.ShapeDtypeStruct((1, Bp), jnp.float32),
        grid_spec=pltpu.PrefetchScalarGridSpec(
            num_scalar_prefetch=0,
            grid=(Bp // tb,),
            in_specs=[
                pl.BlockSpec((tb, 1), lambda i: (i, 0)),          # center-word labels
                pl.BlockSpec((tb * K, 1), lambda i: (i, 0)),      # flattened ctx labels
                pl.BlockSpec((V, E), lambda i: (0, 0)),           # in_embed table (resident)
                pl.BlockSpec((V, E), lambda i: (0, 0)),           # out_embed table (resident)
            ],
            out_specs=pl.BlockSpec((1, tb), lambda i: (0, i)),    # lane-dense loss row
        ),
        compiler_params=pltpu.CompilerParams(
            dimension_semantics=("parallel",),                    # shard batch tiles across TCs
            vmem_limit_bytes=64 * 1024 * 1024,
        ),
    )(in_labels, ctx_flat, in_embed, out_embed)

    return out[0, :B]


def _reference_forward(in_embed, out_embed, input_labels, pos_labels, neg_labels):
    inp = jnp.take(in_embed, input_labels, axis=0)            # (B, E)
    pos = jnp.take(out_embed, pos_labels, axis=0)             # (B, C, E)
    neg = jnp.take(out_embed, neg_labels, axis=0)             # (B, N, E)
    pos_dot = jnp.sum(pos * inp[:, None, :], axis=-1)         # (B, C)
    neg_dot = jnp.sum(neg * (-inp)[:, None, :], axis=-1)      # (B, N)
    log_pos = jax.nn.log_sigmoid(pos_dot).sum(1)
    log_neg = jax.nn.log_sigmoid(neg_dot).sum(1)
    return -(log_pos + log_neg)


if __name__ == "__main__":
    VOCAB = 64
    EMBED = 32
    B = 256      # -> 2 grid steps of tile 128 (exercises pipelining + megacore split)
    C = 4        # positive context words per center word
    N = 8        # negative samples per center word

    key = jax.random.PRNGKey(0)
    k_in, k_out, k_i, k_p, k_n = jax.random.split(key, 5)

    # nn.Embedding default init: N(0, 1)
    in_embed_w = jax.random.normal(k_in, (VOCAB, EMBED), dtype=jnp.float32)
    out_embed_w = jax.random.normal(k_out, (VOCAB, EMBED), dtype=jnp.float32)

    input_labels = jax.random.randint(k_i, (B,), 0, VOCAB, dtype=jnp.int32)
    pos_labels = jax.random.randint(k_p, (B, C), 0, VOCAB, dtype=jnp.int32)
    neg_labels = jax.random.randint(k_n, (B, N), 0, VOCAB, dtype=jnp.int32)

    loss = embedding_model_forward(in_embed_w, out_embed_w,
                                   input_labels, pos_labels, neg_labels)
    loss = jax.block_until_ready(loss)

    ref = _reference_forward(in_embed_w, out_embed_w,
                             input_labels, pos_labels, neg_labels)
    assert loss.shape == (B,)
    assert jnp.allclose(loss, ref, atol=1e-4, rtol=1e-5), (loss, ref)

    print("KERNEL_OK")
</pallas_src>

<mosaic_0001>
module attributes {stable_mosaic.version = 11 : i64} {
  func.func @_w2v_loss_kernel(%arg0: i32, %arg1: memref<128x1xi32, #tpu.memory_space<vmem>>, %arg2: memref<1536x1xi32, #tpu.memory_space<vmem>>, %arg3: memref<64x32xf32, #tpu.memory_space<vmem>>, %arg4: memref<64x32xf32, #tpu.memory_space<vmem>>, %arg5: memref<1x128xf32, #tpu.memory_space<vmem>>) attributes {dimension_semantics = [#tpu.dimension_semantics<parallel>], iteration_bounds = array<i64: 2>, scalar_prefetch = 0 : i64, scratch_operands = 0 : i64, tpu.core_type = #tpu.core_type<tc>, window_params = [{transform_indices = @transform_0, window_bounds = array<i64: 128, 1>}, {transform_indices = @transform_1, window_bounds = array<i64: 1536, 1>}, {pipeline_mode = #tpu.pipeline_mode<synchronous>, transform_indices = @transform_2, window_bounds = array<i64: 64, 32>}, {pipeline_mode = #tpu.pipeline_mode<synchronous>, transform_indices = @transform_3, window_bounds = array<i64: 64, 32>}, {transform_indices = @transform_4, window_bounds = array<i64: 1, 128>}]} {
    %c0 = arith.constant 0 : index
    %c0_0 = arith.constant 0 : index
    %0 = vector.load %arg1[%c0, %c0_0] : memref<128x1xi32, #tpu.memory_space<vmem>>, vector<128x1xi32>
    %c0_1 = arith.constant 0 : index
    %c0_2 = arith.constant 0 : index
    %1 = vector.load %arg2[%c0_1, %c0_2] : memref<1536x1xi32, #tpu.memory_space<vmem>>, vector<1536x1xi32>
    %2 = tpu.iota {dimensions = array<i32: 1>} : vector<128x64xi32>
    %3 = vector.broadcast %0 : vector<128x1xi32> to vector<128x64xi32>
    %4 = arith.cmpi eq, %2, %3 : vector<128x64xi32>
    %5 = arith.extui %4 : vector<128x64xi1> to vector<128x64xi32>
    %6 = arith.sitofp %5 : vector<128x64xi32> to vector<128x64xf32>
    %c0_3 = arith.constant 0 : index
    %c0_4 = arith.constant 0 : index
    %7 = vector.load %arg3[%c0_3, %c0_4] : memref<64x32xf32, #tpu.memory_space<vmem>>, vector<64x32xf32>
    %cst = arith.constant dense<0.000000e+00> : vector<128x32xf32>
    %8 = tpu.matmul %6, %7, %cst {dimension_numbers = #tpu.dot_dimension_numbers<[1], [0], [0], [1], [0, 0, 1, 1], [], []>} : vector<128x64xf32>, vector<64x32xf32>, vector<128x32xf32> -> vector<128x32xf32>
    %9 = tpu.iota {dimensions = array<i32: 1>} : vector<1536x64xi32>
    %10 = vector.broadcast %1 : vector<1536x1xi32> to vector<1536x64xi32>
    %11 = arith.cmpi eq, %9, %10 : vector<1536x64xi32>
    %12 = arith.extui %11 : vector<1536x64xi1> to vector<1536x64xi32>
    %13 = arith.sitofp %12 : vector<1536x64xi32> to vector<1536x64xf32>
    %c0_5 = arith.constant 0 : index
    %c0_6 = arith.constant 0 : index
    %14 = vector.load %arg4[%c0_5, %c0_6] : memref<64x32xf32, #tpu.memory_space<vmem>>, vector<64x32xf32>
    %cst_7 = arith.constant dense<0.000000e+00> : vector<1536x32xf32>
    %15 = tpu.matmul %13, %14, %cst_7 {dimension_numbers = #tpu.dot_dimension_numbers<[1], [0], [0], [1], [0, 0, 1, 1], [], []>} : vector<1536x64xf32>, vector<64x32xf32>, vector<1536x32xf32> -> vector<1536x32xf32>
    %16 = vector.shape_cast %15 : vector<1536x32xf32> to vector<128x12x32xf32>
    %17 = vector.shape_cast %8 : vector<128x32xf32> to vector<128x1x32xf32>
    %18 = vector.broadcast %17 : vector<128x1x32xf32> to vector<128x12x32xf32>
    %19 = arith.mulf %16, %18 : vector<128x12x32xf32>
    %cst_8 = arith.constant dense<0.000000e+00> : vector<128x12xf32>
    %20 = vector.multi_reduction <add>, %19, %cst_8 [2] : vector<128x12x32xf32> to vector<128x12xf32>
    %21 = tpu.iota {dimensions = array<i32: 1>} : vector<128x12xi32>
    %c4_i32 = arith.constant 4 : i32
    %22 = vector.broadcast %c4_i32 : i32 to vector<128x12xi32>
    %23 = arith.cmpi slt, %21, %22 : vector<128x12xi32>
    %cst_9 = arith.constant 0.000000e+00 : f32
    %24 = vector.broadcast %cst_9 : f32 to vector<128x12xf32>
    %25 = arith.subf %24, %20 : vector<128x12xf32>
    %26 = arith.select %23, %20, %25 : vector<128x12xi1>, vector<128x12xf32>
    %cst_10 = arith.constant 0.000000e+00 : f32
    %27 = vector.broadcast %cst_10 : f32 to vector<128x12xf32>
    %28 = arith.minimumf %26, %27 : vector<128x12xf32>
    %29 = math.absf %26 : vector<128x12xf32>
    %cst_11 = arith.constant 0.000000e+00 : f32
    %30 = vector.broadcast %cst_11 : f32 to vector<128x12xf32>
    %31 = arith.subf %30, %29 : vector<128x12xf32>
    %32 = math.exp %31 : vector<128x12xf32>
    %33 = math.log1p %32 : vector<128x12xf32>
    %34 = arith.subf %28, %33 : vector<128x12xf32>
    %cst_12 = arith.constant dense<0.000000e+00> : vector<128xf32>
    %35 = vector.multi_reduction <add>, %34, %cst_12 [1] : vector<128x12xf32> to vector<128xf32>
    %cst_13 = arith.constant 0.000000e+00 : f32
    %36 = vector.broadcast %cst_13 : f32 to vector<128xf32>
    %37 = arith.subf %36, %35 : vector<128xf32>
    %38 = vector.shape_cast %37 : vector<128xf32> to vector<1x128xf32>
    %c0_14 = arith.constant 0 : index
    %c0_15 = arith.constant 0 : index
    %39 = vector.load %arg5[%c0_14, %c0_15] : memref<1x128xf32, #tpu.memory_space<vmem>>, vector<1x128xf32>
    tpu.vector_store %arg5[%c0_14, %c0_15], %38 {strides = array<i32>} : memref<1x128xf32, #tpu.memory_space<vmem>>, vector<1x128xf32>,
    return
  }
  func.func @transform_0(%arg0: i32) -> (i32, i32) {
    %c0_i32 = arith.constant 0 : i32
    %c0_i32_0 = arith.constant 0 : i32
    return %arg0, %c0_i32 : i32, i32
  }
  func.func @transform_1(%arg0: i32) -> (i32, i32) {
    %c0_i32 = arith.constant 0 : i32
    %c0_i32_0 = arith.constant 0 : i32
    return %arg0, %c0_i32 : i32, i32
  }
  func.func @transform_2(%arg0: i32) -> (i32, i32) {
    %c0_i32 = arith.constant 0 : i32
    %c0_i32_0 = arith.constant 0 : i32
    %c0_i32_1 = arith.constant 0 : i32
    return %c0_i32, %c0_i32_0 : i32, i32
  }
  func.func @transform_3(%arg0: i32) -> (i32, i32) {
    %c0_i32 = arith.constant 0 : i32
    %c0_i32_0 = arith.constant 0 : i32
    %c0_i32_1 = arith.constant 0 : i32
    return %c0_i32, %c0_i32_0 : i32, i32
  }
  func.func @transform_4(%arg0: i32) -> (i32, i32) {
    %c0_i32 = arith.constant 0 : i32
    %c0_i32_0 = arith.constant 0 : i32
    return %c0_i32, %arg0 : i32, i32
  }
}

</mosaic_0001>

<llo_original>
// kernel: tpu_custom_call.1
$region0: #{tpu_custom_call.1}
  #allocation0 [shape = 'u32[]', space=smem, size = 0x4, offset = 0x4, fixed_abs, tag = 'smem constant byte address 0x4 - core index']
  #allocation1 [shape = 'u32[72,128]{1,0:T(1,128)}', space=vmem, size = 0x9000, scoped, tag = 'internal scratch']
  %s0 = inlined_call_operand.vmem [shape: s32[256,1], index: 0, kind: input, shape index: {}]
  %s1 = inlined_call_operand.vmem [shape: s32[3072,1], index: 1, kind: input, shape index: {}]
  %s2 = inlined_call_operand.vmem [shape: f32[64,32], index: 2, kind: input, shape index: {}]
  %s3 = inlined_call_operand.vmem [shape: f32[64,32], index: 3, kind: input, shape index: {}]
  %s4 = inlined_call_operand.hbm [shape: f32[1,256], index: 4, kind: output, shape index: {}]
  %s5 = sld [smem:[#allocation0]]
  $region49: #{tpu_custom_call.1} parent=0
    _
  %s7 = ssub.s32 1, %s5
  %s8 = scalar_select 0, %s7, %s5
  $region1: #{tpu_custom_call.1} parent=0
    #allocation2 [shape = 'u8[1024]{0}', space=vmem, size = 0x400, scoped, tag = 'output window, operand 0']
    #allocation3 [shape = 's32[2]{0}', space=sflag, size = 0x8, scoped, tag = 'scoped memory for tpu_custom_call.1']
    %9 = vsyncpa [#allocation3], 0
    %s10 = scalar_lea.sflag [#allocation3], 1
    %11 = vsyncpa %s10, 0
    loop: start=0, step=1, limit=4
    $region2: #{tpu_custom_call.1} parent=1 // loop_pre_header
      _
    $region3: #{tpu_custom_call.1} parent=1 // loop_header
      %s13 = sphi 0, %s17
      %p14 = scmp.ge.s32.totalorder %s13, 4
      %s23 = sphi 0, %s25
      %s26 = sphi 0, %s23
      %s27 = sphi 0, %s26
      %s43 = sphi 0, %s27
      %s49 = sphi 0, %s51
      %s52 = sphi 0, %s49
      %s53 = sphi 0, %s52
      %s69 = sphi 0, %s53
      %s73 = sphi 0, %s73
      %s75 = sphi 0, %s73
      %s76 = sphi 0, %s75
      %s90 = sphi 0, %s76
      %s94 = sphi 0, %s94
      %s96 = sphi 0, %s94
      %s97 = sphi 0, %s96
      %s111 = sphi 0, %s97
      %s117 = sphi 0, %s119
      %s120 = sphi 0, %s117
      %s121 = sphi 0, %s120
      %s137 = sphi 0, %s121
    $region4: #{tpu_custom_call.1} parent=1 // loop_header_branch
      %16 = sbr.rel (%p14) target = $region8
    $region5: #{tpu_custom_call.1} parent=1 // loop_body
      %s18 = ssub.s32 %s13, 1
      %s19 = ssub.s32 %s13, 2
      %s20 = sadd.s32 %s13, 1
      %s21 = ssub.s32 %s13, %s20
      %p22 = scmp.eq.s32.totalorder %s21, 0
      %s24 = sadd.s32 %s23, 1
      %s25 = scalar_select %p22, %s23, %s24
      %p28 = pneg %p22
      %p29 = scmp.eq.s32.totalorder %s13, 1
      %p30 = por %p28, %p29
      %p31 = scmp.ne.s32.totalorder %s23, %s26
      %p32 = scmp.eq.s32.totalorder %s13, 0
      %p33 = por %p31, %p32
      %p34 = scmp.ne.s32.totalorder %s23, %s26
      %p35 = scmp.eq.s32.totalorder %s18, 1
      %p36 = por %p34, %p35
      %p37 = scmp.ne.s32.totalorder %s26, %s27
      %p38 = scmp.eq.s32.totalorder %s18, 0
      %p39 = por %p37, %p38
      %p40 = scmp.ne.s32.totalorder %s26, %s27
      %p41 = scmp.eq.s32.totalorder %s19, 1
      %p42 = por %p40, %p41
      %p44 = scmp.ne.s32.totalorder %s27, %s43
      %p45 = scmp.eq.s32.totalorder %s19, 0
      %p46 = por %p44, %p45
      %s47 = ssub.s32 %s13, %s20
      %p48 = scmp.eq.s32.totalorder %s47, 0
      %s50 = sadd.s32 %s49, 1
      %s51 = scalar_select %p48, %s49, %s50
      %p54 = pneg %p48
      %p55 = scmp.eq.s32.totalorder %s13, 1
      %p56 = por %p54, %p55
      %p57 = scmp.ne.s32.totalorder %s49, %s52
      %p58 = scmp.eq.s32.totalorder %s13, 0
      %p59 = por %p57, %p58
      %p60 = scmp.ne.s32.totalorder %s49, %s52
      %p61 = scmp.eq.s32.totalorder %s18, 1
      %p62 = por %p60, %p61
      %p63 = scmp.ne.s32.totalorder %s52, %s53
      %p64 = scmp.eq.s32.totalorder %s18, 0
      %p65 = por %p63, %p64
      %p66 = scmp.ne.s32.totalorder %s52, %s53
      %p67 = scmp.eq.s32.totalorder %s19, 1
      %p68 = por %p66, %p67
      %p70 = scmp.ne.s32.totalorder %s53, %s69
      %p71 = scmp.eq.s32.totalorder %s19, 0
      %p72 = por %p70, %p71
      %s74 = sadd.s32 %s73, 1
      %p77 = scmp.eq.s32.totalorder %s13, 1
      %p78 = scmp.ne.s32.totalorder %s73, %s75
      %p79 = scmp.eq.s32.totalorder %s13, 0
      %p80 = por %p78, %p79
      %p81 = scmp.ne.s32.totalorder %s73, %s75
      %p82 = scmp.eq.s32.totalorder %s18, 1
      %p83 = por %p81, %p82
      %p84 = scmp.ne.s32.totalorder %s75, %s76
      %p85 = scmp.eq.s32.totalorder %s18, 0
      %p86 = por %p84, %p85
      %p87 = scmp.ne.s32.totalorder %s75, %s76
      %p88 = scmp.eq.s32.totalorder %s19, 1
      %p89 = por %p87, %p88
      %p91 = scmp.ne.s32.totalorder %s76, %s90
      %p92 = scmp.eq.s32.totalorder %s19, 0
      %p93 = por %p91, %p92
      %s95 = sadd.s32 %s94, 1
      %p98 = scmp.eq.s32.totalorder %s13, 1
      %p99 = scmp.ne.s32.totalorder %s94, %s96
      %p100 = scmp.eq.s32.totalorder %s13, 0
      %p101 = por %p99, %p100
      %p102 = scmp.ne.s32.totalorder %s94, %s96
      %p103 = scmp.eq.s32.totalorder %s18, 1
      %p104 = por %p102, %p103
      %p105 = scmp.ne.s32.totalorder %s96, %s97
      %p106 = scmp.eq.s32.totalorder %s18, 0
      %p107 = por %p105, %p106
      %p108 = scmp.ne.s32.totalorder %s96, %s97
      %p109 = scmp.eq.s32.totalorder %s19, 1
      %p110 = por %p108, %p109
      %p112 = scmp.ne.s32.totalorder %s97, %s111
      %p113 = scmp.eq.s32.totalorder %s19, 0
      %p114 = por %p112, %p113
      %s115 = ssub.s32 %s13, %s20
      %p116 = scmp.eq.s32.totalorder %s115, 0
      %s118 = sadd.s32 %s117, 1
      %s119 = scalar_select %p116, %s117, %s118
      %p122 = pneg %p116
      %p123 = scmp.eq.s32.totalorder %s13, 1
      %p124 = por %p122, %p123
      %p125 = scmp.ne.s32.totalorder %s117, %s120
      %p126 = scmp.eq.s32.totalorder %s13, 0
      %p127 = por %p125, %p126
      %p128 = scmp.ne.s32.totalorder %s117, %s120
      %p129 = scmp.eq.s32.totalorder %s18, 1
      %p130 = por %p128, %p129
      %p131 = scmp.ne.s32.totalorder %s120, %s121
      %p132 = scmp.eq.s32.totalorder %s18, 0
      %p133 = por %p131, %p132
      %p134 = scmp.ne.s32.totalorder %s120, %s121
      %p135 = scmp.eq.s32.totalorder %s19, 1
      %p136 = por %p134, %p135
      %p138 = scmp.ne.s32.totalorder %s121, %s137
      %p139 = scmp.eq.s32.totalorder %s19, 0
      %p140 = por %p138, %p139
      %p141 = scmp.le.s32.totalorder 1, %s13
      %p142 = scmp.lt.s32.totalorder %s13, 3
      %p143 = pnand %p141, %p142
      %p144 = pneg %p143
      // Predicated region
      $region9: #{tpu_custom_call.1} parent=5 // pred_check
        _
      $region10: #{tpu_custom_call.1} parent=5 // pred_check_branch
        %146 = sbr.rel (%p143) target = $region12
      $region11: #{tpu_custom_call.1} parent=5 // pred_region
        %s147 = ssub.s32 %s13, 1
        // Predicated region
        $region13: #{tpu_custom_call.1} parent=11 // pred_check
          %p148 = pneg %p86
        $region14: #{tpu_custom_call.1} parent=11 // pred_check_branch
          %150 = sbr.rel (%p148) target = $region16
        $region15: #{tpu_custom_call.1} parent=11 // pred_region
          _
        $region16: #{tpu_custom_call.1} parent=11 // pred_fallthru
          _
        // Predicated region
        $region17: #{tpu_custom_call.1} parent=11 // pred_check
          %p151 = pneg %p107
        $region18: #{tpu_custom_call.1} parent=11 // pred_check_branch
          %153 = sbr.rel (%p151) target = $region20
        $region19: #{tpu_custom_call.1} parent=11 // pred_region
          _
        $region20: #{tpu_custom_call.1} parent=11 // pred_fallthru
          _
      $region12: #{tpu_custom_call.1} parent=5 // pred_fallthru
        _
      %p154 = scmp.lt.s32.totalorder %s13, 2
      // Predicated region
      $region21: #{tpu_custom_call.1} parent=5 // pred_check
        %p155 = pneg %p154
      $region22: #{tpu_custom_call.1} parent=5 // pred_check_branch
        %157 = sbr.rel (%p155) target = $region24
      $region23: #{tpu_custom_call.1} parent=5 // pred_region
        // Predicated region
        $region25: #{tpu_custom_call.1} parent=23 // pred_check
          %p158 = pneg %p33
        $region26: #{tpu_custom_call.1} parent=23 // pred_check_branch
          %160 = sbr.rel (%p158) target = $region28
        $region27: #{tpu_custom_call.1} parent=23 // pred_region
          %s161 = smul.u32 16, %s13
          %p162 = scmp.lt.s32.totalorder %s161, 31
          %s163 = scalar_select %p162, %s161, 31
          %s164 = smul.addr %s163, 8
          %s165 = scalar_lea.vmem %s0, %s164
          %s166 = smul.u32 16, %s13
        $region28: #{tpu_custom_call.1} parent=23 // pred_fallthru
          _
        // Predicated region
        $region29: #{tpu_custom_call.1} parent=23 // pred_check
          %p167 = pneg %p59
        $region30: #{tpu_custom_call.1} parent=23 // pred_check_branch
          %169 = sbr.rel (%p167) target = $region32
        $region31: #{tpu_custom_call.1} parent=23 // pred_region
          %s170 = smul.u32 192, %s13
          %p171 = scmp.lt.s32.totalorder %s170, 383
          %s172 = scalar_select %p171, %s170, 383
          %s173 = smul.addr %s172, 8
          %s174 = scalar_lea.vmem %s1, %s173
          %s175 = smul.u32 192, %s13
        $region32: #{tpu_custom_call.1} parent=23 // pred_fallthru
          _
      $region24: #{tpu_custom_call.1} parent=5 // pred_fallthru
        _
      %p176 = scmp.le.s32.totalorder 1, %s13
      %p177 = scmp.lt.s32.totalorder %s13, 3
      %p178 = pnand %p176, %p177
      %p179 = pneg %p178
      // Predicated region
      $region33: #{tpu_custom_call.1} parent=5 // pred_check
        _
      $region34: #{tpu_custom_call.1} parent=5 // pred_check_branch
        %181 = sbr.rel (%p178) target = $region36
      $region35: #{tpu_custom_call.1} parent=5 // pred_region
        %s182 = ssub.s32 %s13, 1
        %s183 = smul.u32 16, %s18
        %p184 = scmp.lt.s32.totalorder %s183, 31
        %s185 = scalar_select %p184, %s183, 31
        %s186 = smul.addr %s185, 8
        %s187 = scalar_lea.vmem %s0, %s186
        %p188 = pneg %p39
        %p189 = pneg %p36
        %s190 = smul.u32 192, %s18
        %p191 = scmp.lt.s32.totalorder %s190, 383
        %s192 = scalar_select %p191, %s190, 383
        %s193 = smul.addr %s192, 8
        %s194 = scalar_lea.vmem %s1, %s193
        %p195 = pneg %p65
        %p196 = pneg %p62
        %p197 = pneg %p86
        %p198 = pneg %p83
        %p199 = pneg %p107
        %p200 = pneg %p104
        %p201 = pneg %p133
        %p202 = pneg %p130
        %s203 = sand.u32 %s120, 1
        %s204 = scalar_lea.sflag [#allocation3], %s203
        %s205 = sand.u32 %s120, 1
        %s206 = scalar_lea.vmem [#allocation2], %s205
        %s207 = smul.u32 16, %s18
        %p208 = scmp.lt.s32.totalorder %s207, 31
        %s209 = scalar_select %p208, %s207, 31
        %s210 = smul.addr %s209, 8
        %s211 = scalar_lea.vmem %s0, %s210
        %s212 = smul.u32 16, %s18
        %s213 = smul.u32 192, %s18
        %p214 = scmp.lt.s32.totalorder %s213, 383
        %s215 = scalar_select %p214, %s213, 383
        %s216 = smul.addr %s215, 8
        %s217 = scalar_lea.vmem %s1, %s216
        %s218 = smul.u32 192, %s18
        %v219 = vld [vmem:[%s211] sm:$0xff]
        %v220 = vld [vmem:[%s211 + $0x8] sm:$0xff]
        %v221 = vld [vmem:[%s211 + $0x10] sm:$0xff]
        %v222 = vld [vmem:[%s211 + $0x18] sm:$0xff]
        %v223 = vld [vmem:[%s211 + $0x20] sm:$0xff]
        %v224 = vld [vmem:[%s211 + $0x28] sm:$0xff]
        %v225 = vld [vmem:[%s211 + $0x30] sm:$0xff]
        %v226 = vld [vmem:[%s211 + $0x38] sm:$0xff]
        %v227 = vld [vmem:[%s211 + $0x40] sm:$0xff]
        %v228 = vld [vmem:[%s211 + $0x48] sm:$0xff]
        %v229 = vld [vmem:[%s211 + $0x50] sm:$0xff]
        %v230 = vld [vmem:[%s211 + $0x58] sm:$0xff]
        %v231 = vld [vmem:[%s211 + $0x60] sm:$0xff]
        %v232 = vld [vmem:[%s211 + $0x68] sm:$0xff]
        %v233 = vld [vmem:[%s211 + $0x70] sm:$0xff]
        %v234 = vld [vmem:[%s211 + $0x78] sm:$0xff]
        %v235 = vld [vmem:[%s217] sm:$0xff]
        %v236 = vld [vmem:[%s217 + $0x8] sm:$0xff]
        %v237 = vld [vmem:[%s217 + $0x10] sm:$0xff]
        %v238 = vld [vmem:[%s217 + $0x18] sm:$0xff]
        %v239 = vld [vmem:[%s217 + $0x20] sm:$0xff]
        %v240 = vld [vmem:[%s217 + $0x28] sm:$0xff]
        %v241 = vld [vmem:[%s217 + $0x30] sm:$0xff]
        %v242 = vld [vmem:[%s217 + $0x38] sm:$0xff]
        %v243 = vld [vmem:[%s217 + $0x40] sm:$0xff]
        %v244 = vld [vmem:[%s217 + $0x48] sm:$0xff]
        %v245 = vld [vmem:[%s217 + $0x50] sm:$0xff]
        %v246 = vld [vmem:[%s217 + $0x58] sm:$0xff]
        %v247 = vld [vmem:[%s217 + $0x60] sm:$0xff]
        %v248 = vld [vmem:[%s217 + $0x68] sm:$0xff]
        %v249 = vld [vmem:[%s217 + $0x70] sm:$0xff]
        %v250 = vld [vmem:[%s217 + $0x78] sm:$0xff]
        %v251 = vld [vmem:[%s217 + $0x80] sm:$0xff]
        %v252 = vld [vmem:[%s217 + $0x88] sm:$0xff]
        %v253 = vld [vmem:[%s217 + $0x90] sm:$0xff]
        %v254 = vld [vmem:[%s217 + $0x98] sm:$0xff]
        %v255 = vld [vmem:[%s217 + $0xa0] sm:$0xff]
        %v256 = vld [vmem:[%s217 + $0xa8] sm:$0xff]
        %v257 = vld [vmem:[%s217 + $0xb0] sm:$0xff]
        %v258 = vld [vmem:[%s217 + $0xb8] sm:$0xff]
        %v259 = vld [vmem:[%s217 + $0xc0] sm:$0xff]
        %v260 = vld [vmem:[%s217 + $0xc8] sm:$0xff]
        %v261 = vld [vmem:[%s217 + $0xd0] sm:$0xff]
        %v262 = vld [vmem:[%s217 + $0xd8] sm:$0xff]
        %v263 = vld [vmem:[%s217 + $0xe0] sm:$0xff]
        %v264 = vld [vmem:[%s217 + $0xe8] sm:$0xff]
        %v265 = vld [vmem:[%s217 + $0xf0] sm:$0xff]
        %v266 = vld [vmem:[%s217 + $0xf8] sm:$0xff]
        %v267 = vld [vmem:[%s217 + $0x100] sm:$0xff]
        %v268 = vld [vmem:[%s217 + $0x108] sm:$0xff]
        %v269 = vld [vmem:[%s217 + $0x110] sm:$0xff]
        %v270 = vld [vmem:[%s217 + $0x118] sm:$0xff]
        %v271 = vld [vmem:[%s217 + $0x120] sm:$0xff]
        %v272 = vld [vmem:[%s217 + $0x128] sm:$0xff]
        %v273 = vld [vmem:[%s217 + $0x130] sm:$0xff]
        %v274 = vld [vmem:[%s217 + $0x138] sm:$0xff]
        %v275 = vld [vmem:[%s217 + $0x140] sm:$0xff]
        %v276 = vld [vmem:[%s217 + $0x148] sm:$0xff]
        %v277 = vld [vmem:[%s217 + $0x150] sm:$0xff]
        %v278 = vld [vmem:[%s217 + $0x158] sm:$0xff]
        %v279 = vld [vmem:[%s217 + $0x160] sm:$0xff]
        %v280 = vld [vmem:[%s217 + $0x168] sm:$0xff]
        %v281 = vld [vmem:[%s217 + $0x170] sm:$0xff]
        %v282 = vld [vmem:[%s217 + $0x178] sm:$0xff]
        %v283 = vld [vmem:[%s217 + $0x180] sm:$0xff]
        %v284 = vld [vmem:[%s217 + $0x188] sm:$0xff]
        %v285 = vld [vmem:[%s217 + $0x190] sm:$0xff]
        %v286 = vld [vmem:[%s217 + $0x198] sm:$0xff]
        %v287 = vld [vmem:[%s217 + $0x1a0] sm:$0xff]
        %v288 = vld [vmem:[%s217 + $0x1a8] sm:$0xff]
        %v289 = vld [vmem:[%s217 + $0x1b0] sm:$0xff]
        %v290 = vld [vmem:[%s217 + $0x1b8] sm:$0xff]
        %v291 = vld [vmem:[%s217 + $0x1c0] sm:$0xff]
        %v292 = vld [vmem:[%s217 + $0x1c8] sm:$0xff]
        %v293 = vld [vmem:[%s217 + $0x1d0] sm:$0xff]
        %v294 = vld [vmem:[%s217 + $0x1d8] sm:$0xff]
        %v295 = vld [vmem:[%s217 + $0x1e0] sm:$0xff]
        %v296 = vld [vmem:[%s217 + $0x1e8] sm:$0xff]
        %v297 = vld [vmem:[%s217 + $0x1f0] sm:$0xff]
        %v298 = vld [vmem:[%s217 + $0x1f8] sm:$0xff]
        %v299 = vld [vmem:[%s217 + $0x200] sm:$0xff]
        %v300 = vld [vmem:[%s217 + $0x208] sm:$0xff]
        %v301 = vld [vmem:[%s217 + $0x210] sm:$0xff]
        %v302 = vld [vmem:[%s217 + $0x218] sm:$0xff]
        %v303 = vld [vmem:[%s217 + $0x220] sm:$0xff]
        %v304 = vld [vmem:[%s217 + $0x228] sm:$0xff]
        %v305 = vld [vmem:[%s217 + $0x230] sm:$0xff]
        %v306 = vld [vmem:[%s217 + $0x238] sm:$0xff]
        %v307 = vld [vmem:[%s217 + $0x240] sm:$0xff]
        %v308 = vld [vmem:[%s217 + $0x248] sm:$0xff]
        %v309 = vld [vmem:[%s217 + $0x250] sm:$0xff]
        %v310 = vld [vmem:[%s217 + $0x258] sm:$0xff]
        %v311 = vld [vmem:[%s217 + $0x260] sm:$0xff]
        %v312 = vld [vmem:[%s217 + $0x268] sm:$0xff]
        %v313 = vld [vmem:[%s217 + $0x270] sm:$0xff]
        %v314 = vld [vmem:[%s217 + $0x278] sm:$0xff]
        %v315 = vld [vmem:[%s217 + $0x280] sm:$0xff]
        %v316 = vld [vmem:[%s217 + $0x288] sm:$0xff]
        %v317 = vld [vmem:[%s217 + $0x290] sm:$0xff]
        %v318 = vld [vmem:[%s217 + $0x298] sm:$0xff]
        %v319 = vld [vmem:[%s217 + $0x2a0] sm:$0xff]
        %v320 = vld [vmem:[%s217 + $0x2a8] sm:$0xff]
        %v321 = vld [vmem:[%s217 + $0x2b0] sm:$0xff]
        %v322 = vld [vmem:[%s217 + $0x2b8] sm:$0xff]
        %v323 = vld [vmem:[%s217 + $0x2c0] sm:$0xff]
        %v324 = vld [vmem:[%s217 + $0x2c8] sm:$0xff]
        %v325 = vld [vmem:[%s217 + $0x2d0] sm:$0xff]
        %v326 = vld [vmem:[%s217 + $0x2d8] sm:$0xff]
        %v327 = vld [vmem:[%s217 + $0x2e0] sm:$0xff]
        %v328 = vld [vmem:[%s217 + $0x2e8] sm:$0xff]
        %v329 = vld [vmem:[%s217 + $0x2f0] sm:$0xff]
        %v330 = vld [vmem:[%s217 + $0x2f8] sm:$0xff]
        %v331 = vld [vmem:[%s217 + $0x300] sm:$0xff]
        %v332 = vld [vmem:[%s217 + $0x308] sm:$0xff]
        %v333 = vld [vmem:[%s217 + $0x310] sm:$0xff]
        %v334 = vld [vmem:[%s217 + $0x318] sm:$0xff]
        %v335 = vld [vmem:[%s217 + $0x320] sm:$0xff]
        %v336 = vld [vmem:[%s217 + $0x328] sm:$0xff]
        %v337 = vld [vmem:[%s217 + $0x330] sm:$0xff]
        %v338 = vld [vmem:[%s217 + $0x338] sm:$0xff]
        %v339 = vld [vmem:[%s217 + $0x340] sm:$0xff]
        %v340 = vld [vmem:[%s217 + $0x348] sm:$0xff]
        %v341 = vld [vmem:[%s217 + $0x350] sm:$0xff]
        %v342 = vld [vmem:[%s217 + $0x358] sm:$0xff]
        %v343 = vld [vmem:[%s217 + $0x360] sm:$0xff]
        %v344 = vld [vmem:[%s217 + $0x368] sm:$0xff]
        %v345 = vld [vmem:[%s217 + $0x370] sm:$0xff]
        %v346 = vld [vmem:[%s217 + $0x378] sm:$0xff]
        %v347 = vld [vmem:[%s217 + $0x380] sm:$0xff]
        %v348 = vld [vmem:[%s217 + $0x388] sm:$0xff]
        %v349 = vld [vmem:[%s217 + $0x390] sm:$0xff]
        %v350 = vld [vmem:[%s217 + $0x398] sm:$0xff]
        %v351 = vld [vmem:[%s217 + $0x3a0] sm:$0xff]
        %v352 = vld [vmem:[%s217 + $0x3a8] sm:$0xff]
        %v353 = vld [vmem:[%s217 + $0x3b0] sm:$0xff]
        %v354 = vld [vmem:[%s217 + $0x3b8] sm:$0xff]
        %v355 = vld [vmem:[%s217 + $0x3c0] sm:$0xff]
        %v356 = vld [vmem:[%s217 + $0x3c8] sm:$0xff]
        %v357 = vld [vmem:[%s217 + $0x3d0] sm:$0xff]
        %v358 = vld [vmem:[%s217 + $0x3d8] sm:$0xff]
        %v359 = vld [vmem:[%s217 + $0x3e0] sm:$0xff]
        %v360 = vld [vmem:[%s217 + $0x3e8] sm:$0xff]
        %v361 = vld [vmem:[%s217 + $0x3f0] sm:$0xff]
        %v362 = vld [vmem:[%s217 + $0x3f8] sm:$0xff]
        %v363 = vld [vmem:[%s217 + $0x400] sm:$0xff]
        %v364 = vld [vmem:[%s217 + $0x408] sm:$0xff]
        %v365 = vld [vmem:[%s217 + $0x410] sm:$0xff]
        %v366 = vld [vmem:[%s217 + $0x418] sm:$0xff]
        %v367 = vld [vmem:[%s217 + $0x420] sm:$0xff]
        %v368 = vld [vmem:[%s217 + $0x428] sm:$0xff]
        %v369 = vld [vmem:[%s217 + $0x430] sm:$0xff]
        %v370 = vld [vmem:[%s217 + $0x438] sm:$0xff]
        %v371 = vld [vmem:[%s217 + $0x440] sm:$0xff]
        %v372 = vld [vmem:[%s217 + $0x448] sm:$0xff]
        %v373 = vld [vmem:[%s217 + $0x450] sm:$0xff]
        %v374 = vld [vmem:[%s217 + $0x458] sm:$0xff]
        %v375 = vld [vmem:[%s217 + $0x460] sm:$0xff]
        %v376 = vld [vmem:[%s217 + $0x468] sm:$0xff]
        %v377 = vld [vmem:[%s217 + $0x470] sm:$0xff]
        %v378 = vld [vmem:[%s217 + $0x478] sm:$0xff]
        %v379 = vld [vmem:[%s217 + $0x480] sm:$0xff]
        %v380 = vld [vmem:[%s217 + $0x488] sm:$0xff]
        %v381 = vld [vmem:[%s217 + $0x490] sm:$0xff]
        %v382 = vld [vmem:[%s217 + $0x498] sm:$0xff]
        %v383 = vld [vmem:[%s217 + $0x4a0] sm:$0xff]
        %v384 = vld [vmem:[%s217 + $0x4a8] sm:$0xff]
        %v385 = vld [vmem:[%s217 + $0x4b0] sm:$0xff]
        %v386 = vld [vmem:[%s217 + $0x4b8] sm:$0xff]
        %v387 = vld [vmem:[%s217 + $0x4c0] sm:$0xff]
        %v388 = vld [vmem:[%s217 + $0x4c8] sm:$0xff]
        %v389 = vld [vmem:[%s217 + $0x4d0] sm:$0xff]
        %v390 = vld [vmem:[%s217 + $0x4d8] sm:$0xff]
        %v391 = vld [vmem:[%s217 + $0x4e0] sm:$0xff]
        %v392 = vld [vmem:[%s217 + $0x4e8] sm:$0xff]
        %v393 = vld [vmem:[%s217 + $0x4f0] sm:$0xff]
        %v394 = vld [vmem:[%s217 + $0x4f8] sm:$0xff]
        %v395 = vld [vmem:[%s217 + $0x500] sm:$0xff]
        %v396 = vld [vmem:[%s217 + $0x508] sm:$0xff]
        %v397 = vld [vmem:[%s217 + $0x510] sm:$0xff]
        %v398 = vld [vmem:[%s217 + $0x518] sm:$0xff]
        %v399 = vld [vmem:[%s217 + $0x520] sm:$0xff]
        %v400 = vld [vmem:[%s217 + $0x528] sm:$0xff]
        %v401 = vld [vmem:[%s217 + $0x530] sm:$0xff]
        %v402 = vld [vmem:[%s217 + $0x538] sm:$0xff]
        %v403 = vld [vmem:[%s217 + $0x540] sm:$0xff]
        %v404 = vld [vmem:[%s217 + $0x548] sm:$0xff]
        %v405 = vld [vmem:[%s217 + $0x550] sm:$0xff]
        %v406 = vld [vmem:[%s217 + $0x558] sm:$0xff]
        %v407 = vld [vmem:[%s217 + $0x560] sm:$0xff]
        %v408 = vld [vmem:[%s217 + $0x568] sm:$0xff]
        %v409 = vld [vmem:[%s217 + $0x570] sm:$0xff]
        %v410 = vld [vmem:[%s217 + $0x578] sm:$0xff]
        %v411 = vld [vmem:[%s217 + $0x580] sm:$0xff]
        %v412 = vld [vmem:[%s217 + $0x588] sm:$0xff]
        %v413 = vld [vmem:[%s217 + $0x590] sm:$0xff]
        %v414 = vld [vmem:[%s217 + $0x598] sm:$0xff]
        %v415 = vld [vmem:[%s217 + $0x5a0] sm:$0xff]
        %v416 = vld [vmem:[%s217 + $0x5a8] sm:$0xff]
        %v417 = vld [vmem:[%s217 + $0x5b0] sm:$0xff]
        %v418 = vld [vmem:[%s217 + $0x5b8] sm:$0xff]
        %v419 = vld [vmem:[%s217 + $0x5c0] sm:$0xff]
        %v420 = vld [vmem:[%s217 + $0x5c8] sm:$0xff]
        %v421 = vld [vmem:[%s217 + $0x5d0] sm:$0xff]
        %v422 = vld [vmem:[%s217 + $0x5d8] sm:$0xff]
        %v423 = vld [vmem:[%s217 + $0x5e0] sm:$0xff]
        %v424 = vld [vmem:[%s217 + $0x5e8] sm:$0xff]
        %v425 = vld [vmem:[%s217 + $0x5f0] sm:$0xff]
        %v426 = vld [vmem:[%s217 + $0x5f8] sm:$0xff]
        %v427 = vlaneseq
        %v428 = vand.u32 %v427, 127
        %429 = vset.pattern.permute.xlu0 0
        %430 = vperm.xlu0 %429, %v219
        %v431 = vpop.permute.xlu0 %430
        %432 = vset.pattern.permute.xlu0 0
        %433 = vperm.xlu0 %432, %v220
        %v434 = vpop.permute.xlu0 %433
        %435 = vset.pattern.permute.xlu0 0
        %436 = vperm.xlu0 %435, %v221
        %v437 = vpop.permute.xlu0 %436
        %438 = vset.pattern.permute.xlu0 0
        %439 = vperm.xlu0 %438, %v222
        %v440 = vpop.permute.xlu0 %439
        %441 = vset.pattern.permute.xlu0 0
        %442 = vperm.xlu0 %441, %v223
        %v443 = vpop.permute.xlu0 %442
        %444 = vset.pattern.permute.xlu0 0
        %445 = vperm.xlu0 %444, %v224
        %v446 = vpop.permute.xlu0 %445
        %447 = vset.pattern.permute.xlu0 0
        %448 = vperm.xlu0 %447, %v225
        %v449 = vpop.permute.xlu0 %448
        %450 = vset.pattern.permute.xlu0 0
        %451 = vperm.xlu0 %450, %v226
        %v452 = vpop.permute.xlu0 %451
        %453 = vset.pattern.permute.xlu0 0
        %454 = vperm.xlu0 %453, %v227
        %v455 = vpop.permute.xlu0 %454
        %456 = vset.pattern.permute.xlu0 0
        %457 = vperm.xlu0 %456, %v228
        %v458 = vpop.permute.xlu0 %457
        %459 = vset.pattern.permute.xlu0 0
        %460 = vperm.xlu0 %459, %v229
        %v461 = vpop.permute.xlu0 %460
        %462 = vset.pattern.permute.xlu0 0
        %463 = vperm.xlu0 %462, %v230
        %v464 = vpop.permute.xlu0 %463
        %465 = vset.pattern.permute.xlu0 0
        %466 = vperm.xlu0 %465, %v231
        %v467 = vpop.permute.xlu0 %466
        %468 = vset.pattern.permute.xlu0 0
        %469 = vperm.xlu0 %468, %v232
        %v470 = vpop.permute.xlu0 %469
        %471 = vset.pattern.permute.xlu0 0
        %472 = vperm.xlu0 %471, %v233
        %v473 = vpop.permute.xlu0 %472
        %474 = vset.pattern.permute.xlu0 0
        %475 = vperm.xlu0 %474, %v234
        %v476 = vpop.permute.xlu0 %475
        %vm477 = vcmp.eq.s32.totalorder %v428, %v431
        %vm478 = vcmp.eq.s32.totalorder %v428, %v434
        %vm479 = vcmp.eq.s32.totalorder %v428, %v437
        %vm480 = vcmp.eq.s32.totalorder %v428, %v440
        %vm481 = vcmp.eq.s32.totalorder %v428, %v443
        %vm482 = vcmp.eq.s32.totalorder %v428, %v446
        %vm483 = vcmp.eq.s32.totalorder %v428, %v449
        %vm484 = vcmp.eq.s32.totalorder %v428, %v452
        %vm485 = vcmp.eq.s32.totalorder %v428, %v455
        %vm486 = vcmp.eq.s32.totalorder %v428, %v458
        %vm487 = vcmp.eq.s32.totalorder %v428, %v461
        %vm488 = vcmp.eq.s32.totalorder %v428, %v464
        %vm489 = vcmp.eq.s32.totalorder %v428, %v467
        %vm490 = vcmp.eq.s32.totalorder %v428, %v470
        %vm491 = vcmp.eq.s32.totalorder %v428, %v473
        %vm492 = vcmp.eq.s32.totalorder %v428, %v476
        %v493 = vsel %vm477, 1, 0
        %v494 = vsel %vm478, 1, 0
        %v495 = vsel %vm479, 1, 0
        %v496 = vsel %vm480, 1, 0
        %v497 = vsel %vm481, 1, 0
        %v498 = vsel %vm482, 1, 0
        %v499 = vsel %vm483, 1, 0
        %v500 = vsel %vm484, 1, 0
        %v501 = vsel %vm485, 1, 0
        %v502 = vsel %vm486, 1, 0
        %v503 = vsel %vm487, 1, 0
        %v504 = vsel %vm488, 1, 0
        %v505 = vsel %vm489, 1, 0
        %v506 = vsel %vm490, 1, 0
        %v507 = vsel %vm491, 1, 0
        %v508 = vsel %vm492, 1, 0
        %v509 = vcvt.s32.f32 %v493
        %v510 = vcvt.s32.f32 %v494
        %v511 = vcvt.s32.f32 %v495
        %v512 = vcvt.s32.f32 %v496
        %v513 = vcvt.s32.f32 %v497
        %v514 = vcvt.s32.f32 %v498
        %v515 = vcvt.s32.f32 %v499
        %v516 = vcvt.s32.f32 %v500
        %v517 = vcvt.s32.f32 %v501
        %v518 = vcvt.s32.f32 %v502
        %v519 = vcvt.s32.f32 %v503
        %v520 = vcvt.s32.f32 %v504
        %v521 = vcvt.s32.f32 %v505
        %v522 = vcvt.s32.f32 %v506
        %v523 = vcvt.s32.f32 %v507
        %v524 = vcvt.s32.f32 %v508
        %v525 = vld [vmem:[%s2] sm:$0xff]
        %v526 = vld [vmem:[%s2 + $0x8] sm:$0xff]
        %v527 = vld [vmem:[%s2 + $0x10] sm:$0xff]
        %v528 = vld [vmem:[%s2 + $0x18] sm:$0xff]
        %v529 = vld [vmem:[%s2 + $0x20] sm:$0xff]
        %v530 = vld [vmem:[%s2 + $0x28] sm:$0xff]
        %v531 = vld [vmem:[%s2 + $0x30] sm:$0xff]
        %v532 = vld [vmem:[%s2 + $0x38] sm:$0xff]
        %vm533 = vcmask 523264
        %v535 = vsel %vm533, %v509, 0
        %v538 = vsel %vm533, %v510, 0
        %v541 = vsel %vm533, %v511, 0
        %v544 = vsel %vm533, %v512, 0
        %v547 = vsel %vm533, %v513, 0
        %v550 = vsel %vm533, %v514, 0
        %v553 = vsel %vm533, %v515, 0
        %v556 = vsel %vm533, %v516, 0
        %v559 = vsel %vm533, %v517, 0
        %v562 = vsel %vm533, %v518, 0
        %v565 = vsel %vm533, %v519, 0
        %v568 = vsel %vm533, %v520, 0
        %v571 = vsel %vm533, %v521, 0
        %v574 = vsel %vm533, %v522, 0
        %v577 = vsel %vm533, %v523, 0
        %v580 = vsel %vm533, %v524, 0
        %582 = vmatpush.msra.mxu0 0.0
        %583 = vmatpush.msra.mxu0 0.0
        %584 = vmatpush.msra.mxu0 0.0
        %585 = vmatpush.msra.mxu0 0.0
        %586 = vmatpush.msra.mxu0 0.0
        %587 = vmatpush.msra.mxu0 0.0
        %588 = vmatpush.msra.mxu0 0.0
        %589 = vmatpush.msra.mxu0 0.0
        %590 = vmatpush.msra.mxu0 %v532
        %591 = vmatpush.msra.mxu0 %v531
        %592 = vmatpush.msra.mxu0 %v530
        %593 = vmatpush.msra.mxu0 %v529
        %594 = vmatpush.msra.mxu0 %v528
        %595 = vmatpush.msra.mxu0 %v527
        %596 = vmatpush.msra.mxu0 %v526
        %597 = vmatpush.msra.mxu0 %v525
        %598 = vmatmul.f32.gmra.mxu0 %v535
        %v599 = vpop.f32.mrf.mxu0
        %v600 = vadd.f32 0.0, %v599
        %601 = vmatmul.f32.gmra.mxu0 %v538
        %v602 = vpop.f32.mrf.mxu0
        %v603 = vadd.f32 0.0, %v602
        %604 = vmatmul.f32.gmra.mxu0 %v541
        %v605 = vpop.f32.mrf.mxu0
        %v606 = vadd.f32 0.0, %v605
        %607 = vmatmul.f32.gmra.mxu0 %v544
        %v608 = vpop.f32.mrf.mxu0
        %v609 = vadd.f32 0.0, %v608
        %610 = vmatmul.f32.gmra.mxu0 %v547
        %v611 = vpop.f32.mrf.mxu0
        %v612 = vadd.f32 0.0, %v611
        %613 = vmatmul.f32.gmra.mxu0 %v550
        %v614 = vpop.f32.mrf.mxu0
        %v615 = vadd.f32 0.0, %v614
        %616 = vmatmul.f32.gmra.mxu0 %v553
        %v617 = vpop.f32.mrf.mxu0
        %v618 = vadd.f32 0.0, %v617
        %619 = vmatmul.f32.gmra.mxu0 %v556
        %v620 = vpop.f32.mrf.mxu0
        %v621 = vadd.f32 0.0, %v620
        %622 = vmatmul.f32.gmra.mxu0 %v559
        %v623 = vpop.f32.mrf.mxu0
        %v624 = vadd.f32 0.0, %v623
        %625 = vmatmul.f32.gmra.mxu0 %v562
        %v626 = vpop.f32.mrf.mxu0
        %v627 = vadd.f32 0.0, %v626
        %628 = vmatmul.f32.gmra.mxu0 %v565
        %v629 = vpop.f32.mrf.mxu0
        %v630 = vadd.f32 0.0, %v629
        %631 = vmatmul.f32.gmra.mxu0 %v568
        %v632 = vpop.f32.mrf.mxu0
        %v633 = vadd.f32 0.0, %v632
        %634 = vmatmul.f32.gmra.mxu0 %v571
        %v635 = vpop.f32.mrf.mxu0
        %v636 = vadd.f32 0.0, %v635
        %637 = vmatmul.f32.gmra.mxu0 %v574
        %v638 = vpop.f32.mrf.mxu0
        %v639 = vadd.f32 0.0, %v638
        %640 = vmatmul.f32.gmra.mxu0 %v577
        %v641 = vpop.f32.mrf.mxu0
        %v642 = vadd.f32 0.0, %v641
        %643 = vmatmul.f32.gmra.mxu0 %v580
        %v644 = vpop.f32.mrf.mxu0
        %v645 = vadd.f32 0.0, %v644
        %646 = vdwg.mxu0
        %647 = vset.pattern.permute.xlu0 0
        %648 = vperm.xlu0 %647, %v235
        %v649 = vpop.permute.xlu0 %648
        %650 = vset.pattern.permute.xlu0 0
        %651 = vperm.xlu0 %650, %v236
        %v652 = vpop.permute.xlu0 %651
        %653 = vset.pattern.permute.xlu0 0
        %654 = vperm.xlu0 %653, %v237
        %v655 = vpop.permute.xlu0 %654
        %656 = vset.pattern.permute.xlu0 0
        %657 = vperm.xlu0 %656, %v238
        %v658 = vpop.permute.xlu0 %657
        %659 = vset.pattern.permute.xlu0 0
        %660 = vperm.xlu0 %659, %v239
        %v661 = vpop.permute.xlu0 %660
        %662 = vset.pattern.permute.xlu0 0
        %663 = vperm.xlu0 %662, %v240
        %v664 = vpop.permute.xlu0 %663
        %665 = vset.pattern.permute.xlu0 0
        %666 = vperm.xlu0 %665, %v241
        %v667 = vpop.permute.xlu0 %666
        %668 = vset.pattern.permute.xlu0 0
        %669 = vperm.xlu0 %668, %v242
        %v670 = vpop.permute.xlu0 %669
        %671 = vset.pattern.permute.xlu0 0
        %672 = vperm.xlu0 %671, %v243
        %v673 = vpop.permute.xlu0 %672
        %674 = vset.pattern.permute.xlu0 0
        %675 = vperm.xlu0 %674, %v244
        %v676 = vpop.permute.xlu0 %675
        %677 = vset.pattern.permute.xlu0 0
        %678 = vperm.xlu0 %677, %v245
        %v679 = vpop.permute.xlu0 %678
        %680 = vset.pattern.permute.xlu0 0
        %681 = vperm.xlu0 %680, %v246
        %v682 = vpop.permute.xlu0 %681
        %683 = vset.pattern.permute.xlu0 0
        %684 = vperm.xlu0 %683, %v247
        %v685 = vpop.permute.xlu0 %684
        %686 = vset.pattern.permute.xlu0 0
        %687 = vperm.xlu0 %686, %v248
        %v688 = vpop.permute.xlu0 %687
        %689 = vset.pattern.permute.xlu0 0
        %690 = vperm.xlu0 %689, %v249
        %v691 = vpop.permute.xlu0 %690
        %692 = vset.pattern.permute.xlu0 0
        %693 = vperm.xlu0 %692, %v250
        %v694 = vpop.permute.xlu0 %693
        %695 = vset.pattern.permute.xlu0 0
        %696 = vperm.xlu0 %695, %v251
        %v697 = vpop.permute.xlu0 %696
        %698 = vset.pattern.permute.xlu0 0
        %699 = vperm.xlu0 %698, %v252
        %v700 = vpop.permute.xlu0 %699
        %701 = vset.pattern.permute.xlu0 0
        %702 = vperm.xlu0 %701, %v253
        %v703 = vpop.permute.xlu0 %702
        %704 = vset.pattern.permute.xlu0 0
        %705 = vperm.xlu0 %704, %v254
        %v706 = vpop.permute.xlu0 %705
        %707 = vset.pattern.permute.xlu0 0
        %708 = vperm.xlu0 %707, %v255
        %v709 = vpop.permute.xlu0 %708
        %710 = vset.pattern.permute.xlu0 0
        %711 = vperm.xlu0 %710, %v256
        %v712 = vpop.permute.xlu0 %711
        %713 = vset.pattern.permute.xlu0 0
        %714 = vperm.xlu0 %713, %v257
        %v715 = vpop.permute.xlu0 %714
        %716 = vset.pattern.permute.xlu0 0
        %717 = vperm.xlu0 %716, %v258
        %v718 = vpop.permute.xlu0 %717
        %719 = vset.pattern.permute.xlu0 0
        %720 = vperm.xlu0 %719, %v259
        %v721 = vpop.permute.xlu0 %720
        %722 = vset.pattern.permute.xlu0 0
        %723 = vperm.xlu0 %722, %v260
        %v724 = vpop.permute.xlu0 %723
        %725 = vset.pattern.permute.xlu0 0
        %726 = vperm.xlu0 %725, %v261
        %v727 = vpop.permute.xlu0 %726
        %728 = vset.pattern.permute.xlu0 0
        %729 = vperm.xlu0 %728, %v262
        %v730 = vpop.permute.xlu0 %729
        %731 = vset.pattern.permute.xlu0 0
        %732 = vperm.xlu0 %731, %v263
        %v733 = vpop.permute.xlu0 %732
        %734 = vset.pattern.permute.xlu0 0
        %735 = vperm.xlu0 %734, %v264
        %v736 = vpop.permute.xlu0 %735
        %737 = vset.pattern.permute.xlu0 0
        %738 = vperm.xlu0 %737, %v265
        %v739 = vpop.permute.xlu0 %738
        %740 = vset.pattern.permute.xlu0 0
        %741 = vperm.xlu0 %740, %v266
        %v742 = vpop.permute.xlu0 %741
        %743 = vset.pattern.permute.xlu0 0
        %744 = vperm.xlu0 %743, %v267
        %v745 = vpop.permute.xlu0 %744
        %746 = vset.pattern.permute.xlu0 0
        %747 = vperm.xlu0 %746, %v268
        %v748 = vpop.permute.xlu0 %747
        %749 = vset.pattern.permute.xlu0 0
        %750 = vperm.xlu0 %749, %v269
        %v751 = vpop.permute.xlu0 %750
        %752 = vset.pattern.permute.xlu0 0
        %753 = vperm.xlu0 %752, %v270
        %v754 = vpop.permute.xlu0 %753
        %755 = vset.pattern.permute.xlu0 0
        %756 = vperm.xlu0 %755, %v271
        %v757 = vpop.permute.xlu0 %756
        %758 = vset.pattern.permute.xlu0 0
        %759 = vperm.xlu0 %758, %v272
        %v760 = vpop.permute.xlu0 %759
        %761 = vset.pattern.permute.xlu0 0
        %762 = vperm.xlu0 %761, %v273
        %v763 = vpop.permute.xlu0 %762
        %764 = vset.pattern.permute.xlu0 0
        %765 = vperm.xlu0 %764, %v274
        %v766 = vpop.permute.xlu0 %765
        %767 = vset.pattern.permute.xlu0 0
        %768 = vperm.xlu0 %767, %v275
        %v769 = vpop.permute.xlu0 %768
        %770 = vset.pattern.permute.xlu0 0
        %771 = vperm.xlu0 %770, %v276
        %v772 = vpop.permute.xlu0 %771
        %773 = vset.pattern.permute.xlu0 0
        %774 = vperm.xlu0 %773, %v277
        %v775 = vpop.permute.xlu0 %774
        %776 = vset.pattern.permute.xlu0 0
        %777 = vperm.xlu0 %776, %v278
        %v778 = vpop.permute.xlu0 %777
        %779 = vset.pattern.permute.xlu0 0
        %780 = vperm.xlu0 %779, %v279
        %v781 = vpop.permute.xlu0 %780
        %782 = vset.pattern.permute.xlu0 0
        %783 = vperm.xlu0 %782, %v280
        %v784 = vpop.permute.xlu0 %783
        %785 = vset.pattern.permute.xlu0 0
        %786 = vperm.xlu0 %785, %v281
        %v787 = vpop.permute.xlu0 %786
        %788 = vset.pattern.permute.xlu0 0
        %789 = vperm.xlu0 %788, %v282
        %v790 = vpop.permute.xlu0 %789
        %791 = vset.pattern.permute.xlu0 0
        %792 = vperm.xlu0 %791, %v283
        %v793 = vpop.permute.xlu0 %792
        %794 = vset.pattern.permute.xlu0 0
        %795 = vperm.xlu0 %794, %v284
        %v796 = vpop.permute.xlu0 %795
        %797 = vset.pattern.permute.xlu0 0
        %798 = vperm.xlu0 %797, %v285
        %v799 = vpop.permute.xlu0 %798
        %800 = vset.pattern.permute.xlu0 0
        %801 = vperm.xlu0 %800, %v286
        %v802 = vpop.permute.xlu0 %801
        %803 = vset.pattern.permute.xlu0 0
        %804 = vperm.xlu0 %803, %v287
        %v805 = vpop.permute.xlu0 %804
        %806 = vset.pattern.permute.xlu0 0
        %807 = vperm.xlu0 %806, %v288
        %v808 = vpop.permute.xlu0 %807
        %809 = vset.pattern.permute.xlu0 0
        %810 = vperm.xlu0 %809, %v289
        %v811 = vpop.permute.xlu0 %810
        %812 = vset.pattern.permute.xlu0 0
        %813 = vperm.xlu0 %812, %v290
        %v814 = vpop.permute.xlu0 %813
        %815 = vset.pattern.permute.xlu0 0
        %816 = vperm.xlu0 %815, %v291
        %v817 = vpop.permute.xlu0 %816
        %818 = vset.pattern.permute.xlu0 0
        %819 = vperm.xlu0 %818, %v292
        %v820 = vpop.permute.xlu0 %819
        %821 = vset.pattern.permute.xlu0 0
        %822 = vperm.xlu0 %821, %v293
        %v823 = vpop.permute.xlu0 %822
        %824 = vset.pattern.permute.xlu0 0
        %825 = vperm.xlu0 %824, %v294
        %v826 = vpop.permute.xlu0 %825
        %827 = vset.pattern.permute.xlu0 0
        %828 = vperm.xlu0 %827, %v295
        %v829 = vpop.permute.xlu0 %828
        %830 = vset.pattern.permute.xlu0 0
        %831 = vperm.xlu0 %830, %v296
        %v832 = vpop.permute.xlu0 %831
        %833 = vset.pattern.permute.xlu0 0
        %834 = vperm.xlu0 %833, %v297
        %v835 = vpop.permute.xlu0 %834
        %836 = vset.pattern.permute.xlu0 0
        %837 = vperm.xlu0 %836, %v298
        %v838 = vpop.permute.xlu0 %837
        %839 = vset.pattern.permute.xlu0 0
        %840 = vperm.xlu0 %839, %v299
        %v841 = vpop.permute.xlu0 %840
        %842 = vset.pattern.permute.xlu0 0
        %843 = vperm.xlu0 %842, %v300
        %v844 = vpop.permute.xlu0 %843
        %845 = vset.pattern.permute.xlu0 0
        %846 = vperm.xlu0 %845, %v301
        %v847 = vpop.permute.xlu0 %846
        %848 = vset.pattern.permute.xlu0 0
        %849 = vperm.xlu0 %848, %v302
        %v850 = vpop.permute.xlu0 %849
        %851 = vset.pattern.permute.xlu0 0
        %852 = vperm.xlu0 %851, %v303
        %v853 = vpop.permute.xlu0 %852
        %854 = vset.pattern.permute.xlu0 0
        %855 = vperm.xlu0 %854, %v304
        %v856 = vpop.permute.xlu0 %855
        %857 = vset.pattern.permute.xlu0 0
        %858 = vperm.xlu0 %857, %v305
        %v859 = vpop.permute.xlu0 %858
        %860 = vset.pattern.permute.xlu0 0
        %861 = vperm.xlu0 %860, %v306
        %v862 = vpop.permute.xlu0 %861
        %863 = vset.pattern.permute.xlu0 0
        %864 = vperm.xlu0 %863, %v307
        %v865 = vpop.permute.xlu0 %864
        %866 = vset.pattern.permute.xlu0 0
        %867 = vperm.xlu0 %866, %v308
        %v868 = vpop.permute.xlu0 %867
        %869 = vset.pattern.permute.xlu0 0
        %870 = vperm.xlu0 %869, %v309
        %v871 = vpop.permute.xlu0 %870
        %872 = vset.pattern.permute.xlu0 0
        %873 = vperm.xlu0 %872, %v310
        %v874 = vpop.permute.xlu0 %873
        %875 = vset.pattern.permute.xlu0 0
        %876 = vperm.xlu0 %875, %v311
        %v877 = vpop.permute.xlu0 %876
        %878 = vset.pattern.permute.xlu0 0
        %879 = vperm.xlu0 %878, %v312
        %v880 = vpop.permute.xlu0 %879
        %881 = vset.pattern.permute.xlu0 0
        %882 = vperm.xlu0 %881, %v313
        %v883 = vpop.permute.xlu0 %882
        %884 = vset.pattern.permute.xlu0 0
        %885 = vperm.xlu0 %884, %v314
        %v886 = vpop.permute.xlu0 %885
        %887 = vset.pattern.permute.xlu0 0
        %888 = vperm.xlu0 %887, %v315
        %v889 = vpop.permute.xlu0 %888
        %890 = vset.pattern.permute.xlu0 0
        %891 = vperm.xlu0 %890, %v316
        %v892 = vpop.permute.xlu0 %891
        %893 = vset.pattern.permute.xlu0 0
        %894 = vperm.xlu0 %893, %v317
        %v895 = vpop.permute.xlu0 %894
        %896 = vset.pattern.permute.xlu0 0
        %897 = vperm.xlu0 %896, %v318
        %v898 = vpop.permute.xlu0 %897
        %899 = vset.pattern.permute.xlu0 0
        %900 = vperm.xlu0 %899, %v319
        %v901 = vpop.permute.xlu0 %900
        %902 = vset.pattern.permute.xlu0 0
        %903 = vperm.xlu0 %902, %v320
        %v904 = vpop.permute.xlu0 %903
        %905 = vset.pattern.permute.xlu0 0
        %906 = vperm.xlu0 %905, %v321
        %v907 = vpop.permute.xlu0 %906
        %908 = vset.pattern.permute.xlu0 0
        %909 = vperm.xlu0 %908, %v322
        %v910 = vpop.permute.xlu0 %909
        %911 = vset.pattern.permute.xlu0 0
        %912 = vperm.xlu0 %911, %v323
        %v913 = vpop.permute.xlu0 %912
        %914 = vset.pattern.permute.xlu0 0
        %915 = vperm.xlu0 %914, %v324
        %v916 = vpop.permute.xlu0 %915
        %917 = vset.pattern.permute.xlu0 0
        %918 = vperm.xlu0 %917, %v325
        %v919 = vpop.permute.xlu0 %918
        %920 = vset.pattern.permute.xlu0 0
        %921 = vperm.xlu0 %920, %v326
        %v922 = vpop.permute.xlu0 %921
        %923 = vset.pattern.permute.xlu0 0
        %924 = vperm.xlu0 %923, %v327
        %v925 = vpop.permute.xlu0 %924
        %926 = vset.pattern.permute.xlu0 0
        %927 = vperm.xlu0 %926, %v328
        %v928 = vpop.permute.xlu0 %927
        %929 = vset.pattern.permute.xlu0 0
        %930 = vperm.xlu0 %929, %v329
        %v931 = vpop.permute.xlu0 %930
        %932 = vset.pattern.permute.xlu0 0
        %933 = vperm.xlu0 %932, %v330
        %v934 = vpop.permute.xlu0 %933
        %935 = vset.pattern.permute.xlu0 0
        %936 = vperm.xlu0 %935, %v331
        %v937 = vpop.permute.xlu0 %936
        %938 = vset.pattern.permute.xlu0 0
        %939 = vperm.xlu0 %938, %v332
        %v940 = vpop.permute.xlu0 %939
        %941 = vset.pattern.permute.xlu0 0
        %942 = vperm.xlu0 %941, %v333
        %v943 = vpop.permute.xlu0 %942
        %944 = vset.pattern.permute.xlu0 0
        %945 = vperm.xlu0 %944, %v334
        %v946 = vpop.permute.xlu0 %945
        %947 = vset.pattern.permute.xlu0 0
        %948 = vperm.xlu0 %947, %v335
        %v949 = vpop.permute.xlu0 %948
        %950 = vset.pattern.permute.xlu0 0
        %951 = vperm.xlu0 %950, %v336
        %v952 = vpop.permute.xlu0 %951
        %953 = vset.pattern.permute.xlu0 0
        %954 = vperm.xlu0 %953, %v337
        %v955 = vpop.permute.xlu0 %954
        %956 = vset.pattern.permute.xlu0 0
        %957 = vperm.xlu0 %956, %v338
        %v958 = vpop.permute.xlu0 %957
        %959 = vset.pattern.permute.xlu0 0
        %960 = vperm.xlu0 %959, %v339
        %v961 = vpop.permute.xlu0 %960
        %962 = vset.pattern.permute.xlu0 0
        %963 = vperm.xlu0 %962, %v340
        %v964 = vpop.permute.xlu0 %963
        %965 = vset.pattern.permute.xlu0 0
        %966 = vperm.xlu0 %965, %v341
        %v967 = vpop.permute.xlu0 %966
        %968 = vset.pattern.permute.xlu0 0
        %969 = vperm.xlu0 %968, %v342
        %v970 = vpop.permute.xlu0 %969
        %971 = vset.pattern.permute.xlu0 0
        %972 = vperm.xlu0 %971, %v343
        %v973 = vpop.permute.xlu0 %972
        %974 = vset.pattern.permute.xlu0 0
        %975 = vperm.xlu0 %974, %v344
        %v976 = vpop.permute.xlu0 %975
        %977 = vset.pattern.permute.xlu0 0
        %978 = vperm.xlu0 %977, %v345
        %v979 = vpop.permute.xlu0 %978
        %980 = vset.pattern.permute.xlu0 0
        %981 = vperm.xlu0 %980, %v346
        %v982 = vpop.permute.xlu0 %981
        %983 = vset.pattern.permute.xlu0 0
        %984 = vperm.xlu0 %983, %v347
        %v985 = vpop.permute.xlu0 %984
        %986 = vset.pattern.permute.xlu0 0
        %987 = vperm.xlu0 %986, %v348
        %v988 = vpop.permute.xlu0 %987
        %989 = vset.pattern.permute.xlu0 0
        %990 = vperm.xlu0 %989, %v349
        %v991 = vpop.permute.xlu0 %990
        %992 = vset.pattern.permute.xlu0 0
        %993 = vperm.xlu0 %992, %v350
        %v994 = vpop.permute.xlu0 %993
        %995 = vset.pattern.permute.xlu0 0
        %996 = vperm.xlu0 %995, %v351
        %v997 = vpop.permute.xlu0 %996
        %998 = vset.pattern.permute.xlu0 0
        %999 = vperm.xlu0 %998, %v352
        %v1000 = vpop.permute.xlu0 %999
        %1001 = vset.pattern.permute.xlu0 0
        %1002 = vperm.xlu0 %1001, %v353
        %v1003 = vpop.permute.xlu0 %1002
        %1004 = vset.pattern.permute.xlu0 0
        %1005 = vperm.xlu0 %1004, %v354
        %v1006 = vpop.permute.xlu0 %1005
        %1007 = vset.pattern.permute.xlu0 0
        %1008 = vperm.xlu0 %1007, %v355
        %v1009 = vpop.permute.xlu0 %1008
        %1010 = vset.pattern.permute.xlu0 0
        %1011 = vperm.xlu0 %1010, %v356
        %v1012 = vpop.permute.xlu0 %1011
        %1013 = vset.pattern.permute.xlu0 0
        %1014 = vperm.xlu0 %1013, %v357
        %v1015 = vpop.permute.xlu0 %1014
        %1016 = vset.pattern.permute.xlu0 0
        %1017 = vperm.xlu0 %1016, %v358
        %v1018 = vpop.permute.xlu0 %1017
        %1019 = vset.pattern.permute.xlu0 0
        %1020 = vperm.xlu0 %1019, %v359
        %v1021 = vpop.permute.xlu0 %1020
        %1022 = vset.pattern.permute.xlu0 0
        %1023 = vperm.xlu0 %1022, %v360
        %v1024 = vpop.permute.xlu0 %1023
        %1025 = vset.pattern.permute.xlu0 0
        %1026 = vperm.xlu0 %1025, %v361
        %v1027 = vpop.permute.xlu0 %1026
        %1028 = vset.pattern.permute.xlu0 0
        %1029 = vperm.xlu0 %1028, %v362
        %v1030 = vpop.permute.xlu0 %1029
        %1031 = vset.pattern.permute.xlu0 0
        %1032 = vperm.xlu0 %1031, %v363
        %v1033 = vpop.permute.xlu0 %1032
        %1034 = vset.pattern.permute.xlu0 0
        %1035 = vperm.xlu0 %1034, %v364
        %v1036 = vpop.permute.xlu0 %1035
        %1037 = vset.pattern.permute.xlu0 0
        %1038 = vperm.xlu0 %1037, %v365
        %v1039 = vpop.permute.xlu0 %1038
        %1040 = vset.pattern.permute.xlu0 0
        %1041 = vperm.xlu0 %1040, %v366
        %v1042 = vpop.permute.xlu0 %1041
        %1043 = vset.pattern.permute.xlu0 0
        %1044 = vperm.xlu0 %1043, %v367
        %v1045 = vpop.permute.xlu0 %1044
        %1046 = vset.pattern.permute.xlu0 0
        %1047 = vperm.xlu0 %1046, %v368
        %v1048 = vpop.permute.xlu0 %1047
        %1049 = vset.pattern.permute.xlu0 0
        %1050 = vperm.xlu0 %1049, %v369
        %v1051 = vpop.permute.xlu0 %1050
        %1052 = vset.pattern.permute.xlu0 0
        %1053 = vperm.xlu0 %1052, %v370
        %v1054 = vpop.permute.xlu0 %1053
        %1055 = vset.pattern.permute.xlu0 0
        %1056 = vperm.xlu0 %1055, %v371
        %v1057 = vpop.permute.xlu0 %1056
        %1058 = vset.pattern.permute.xlu0 0
        %1059 = vperm.xlu0 %1058, %v372
        %v1060 = vpop.permute.xlu0 %1059
        %1061 = vset.pattern.permute.xlu0 0
        %1062 = vperm.xlu0 %1061, %v373
        %v1063 = vpop.permute.xlu0 %1062
        %1064 = vset.pattern.permute.xlu0 0
        %1065 = vperm.xlu0 %1064, %v374
        %v1066 = vpop.permute.xlu0 %1065
        %1067 = vset.pattern.permute.xlu0 0
        %1068 = vperm.xlu0 %1067, %v375
        %v1069 = vpop.permute.xlu0 %1068
        %1070 = vset.pattern.permute.xlu0 0
        %1071 = vperm.xlu0 %1070, %v376
        %v1072 = vpop.permute.xlu0 %1071
        %1073 = vset.pattern.permute.xlu0 0
        %1074 = vperm.xlu0 %1073, %v377
        %v1075 = vpop.permute.xlu0 %1074
        %1076 = vset.pattern.permute.xlu0 0
        %1077 = vperm.xlu0 %1076, %v378
        %v1078 = vpop.permute.xlu0 %1077
        %1079 = vset.pattern.permute.xlu0 0
        %1080 = vperm.xlu0 %1079, %v379
        %v1081 = vpop.permute.xlu0 %1080
        %1082 = vset.pattern.permute.xlu0 0
        %1083 = vperm.xlu0 %1082, %v380
        %v1084 = vpop.permute.xlu0 %1083
        %1085 = vset.pattern.permute.xlu0 0
        %1086 = vperm.xlu0 %1085, %v381
        %v1087 = vpop.permute.xlu0 %1086
        %1088 = vset.pattern.permute.xlu0 0
        %1089 = vperm.xlu0 %1088, %v382
        %v1090 = vpop.permute.xlu0 %1089
        %1091 = vset.pattern.permute.xlu0 0
        %1092 = vperm.xlu0 %1091, %v383
        %v1093 = vpop.permute.xlu0 %1092
        %1094 = vset.pattern.permute.xlu0 0
        %1095 = vperm.xlu0 %1094, %v384
        %v1096 = vpop.permute.xlu0 %1095
        %1097 = vset.pattern.permute.xlu0 0
        %1098 = vperm.xlu0 %1097, %v385
        %v1099 = vpop.permute.xlu0 %1098
        %1100 = vset.pattern.permute.xlu0 0
        %1101 = vperm.xlu0 %1100, %v386
        %v1102 = vpop.permute.xlu0 %1101
        %1103 = vset.pattern.permute.xlu0 0
        %1104 = vperm.xlu0 %1103, %v387
        %v1105 = vpop.permute.xlu0 %1104
        %1106 = vset.pattern.permute.xlu0 0
        %1107 = vperm.xlu0 %1106, %v388
        %v1108 = vpop.permute.xlu0 %1107
        %1109 = vset.pattern.permute.xlu0 0
        %1110 = vperm.xlu0 %1109, %v389
        %v1111 = vpop.permute.xlu0 %1110
        %1112 = vset.pattern.permute.xlu0 0
        %1113 = vperm.xlu0 %1112, %v390
        %v1114 = vpop.permute.xlu0 %1113
        %1115 = vset.pattern.permute.xlu0 0
        %1116 = vperm.xlu0 %1115, %v391
        %v1117 = vpop.permute.xlu0 %1116
        %1118 = vset.pattern.permute.xlu0 0
        %1119 = vperm.xlu0 %1118, %v392
        %v1120 = vpop.permute.xlu0 %1119
        %1121 = vset.pattern.permute.xlu0 0
        %1122 = vperm.xlu0 %1121, %v393
        %v1123 = vpop.permute.xlu0 %1122
        %1124 = vset.pattern.permute.xlu0 0
        %1125 = vperm.xlu0 %1124, %v394
        %v1126 = vpop.permute.xlu0 %1125
        %1127 = vset.pattern.permute.xlu0 0
        %1128 = vperm.xlu0 %1127, %v395
        %v1129 = vpop.permute.xlu0 %1128
        %1130 = vset.pattern.permute.xlu0 0
        %1131 = vperm.xlu0 %1130, %v396
        %v1132 = vpop.permute.xlu0 %1131
        %1133 = vset.pattern.permute.xlu0 0
        %1134 = vperm.xlu0 %1133, %v397
        %v1135 = vpop.permute.xlu0 %1134
        %1136 = vset.pattern.permute.xlu0 0
        %1137 = vperm.xlu0 %1136, %v398
        %v1138 = vpop.permute.xlu0 %1137
        %1139 = vset.pattern.permute.xlu0 0
        %1140 = vperm.xlu0 %1139, %v399
        %v1141 = vpop.permute.xlu0 %1140
        %1142 = vset.pattern.permute.xlu0 0
        %1143 = vperm.xlu0 %1142, %v400
        %v1144 = vpop.permute.xlu0 %1143
        %1145 = vset.pattern.permute.xlu0 0
        %1146 = vperm.xlu0 %1145, %v401
        %v1147 = vpop.permute.xlu0 %1146
        %1148 = vset.pattern.permute.xlu0 0
        %1149 = vperm.xlu0 %1148, %v402
        %v1150 = vpop.permute.xlu0 %1149
        %1151 = vset.pattern.permute.xlu0 0
        %1152 = vperm.xlu0 %1151, %v403
        %v1153 = vpop.permute.xlu0 %1152
        %1154 = vset.pattern.permute.xlu0 0
        %1155 = vperm.xlu0 %1154, %v404
        %v1156 = vpop.permute.xlu0 %1155
        %1157 = vset.pattern.permute.xlu0 0
        %1158 = vperm.xlu0 %1157, %v405
        %v1159 = vpop.permute.xlu0 %1158
        %1160 = vset.pattern.permute.xlu0 0
        %1161 = vperm.xlu0 %1160, %v406
        %v1162 = vpop.permute.xlu0 %1161
        %1163 = vset.pattern.permute.xlu0 0
        %1164 = vperm.xlu0 %1163, %v407
        %v1165 = vpop.permute.xlu0 %1164
        %1166 = vset.pattern.permute.xlu0 0
        %1167 = vperm.xlu0 %1166, %v408
        %v1168 = vpop.permute.xlu0 %1167
        %1169 = vset.pattern.permute.xlu0 0
        %1170 = vperm.xlu0 %1169, %v409
        %v1171 = vpop.permute.xlu0 %1170
        %1172 = vset.pattern.permute.xlu0 0
        %1173 = vperm.xlu0 %1172, %v410
        %v1174 = vpop.permute.xlu0 %1173
        %1175 = vset.pattern.permute.xlu0 0
        %1176 = vperm.xlu0 %1175, %v411
        %v1177 = vpop.permute.xlu0 %1176
        %1178 = vset.pattern.permute.xlu0 0
        %1179 = vperm.xlu0 %1178, %v412
        %v1180 = vpop.permute.xlu0 %1179
        %1181 = vset.pattern.permute.xlu0 0
        %1182 = vperm.xlu0 %1181, %v413
        %v1183 = vpop.permute.xlu0 %1182
        %1184 = vset.pattern.permute.xlu0 0
        %1185 = vperm.xlu0 %1184, %v414
        %v1186 = vpop.permute.xlu0 %1185
        %1187 = vset.pattern.permute.xlu0 0
        %1188 = vperm.xlu0 %1187, %v415
        %v1189 = vpop.permute.xlu0 %1188
        %1190 = vset.pattern.permute.xlu0 0
        %1191 = vperm.xlu0 %1190, %v416
        %v1192 = vpop.permute.xlu0 %1191
        %1193 = vset.pattern.permute.xlu0 0
        %1194 = vperm.xlu0 %1193, %v417
        %v1195 = vpop.permute.xlu0 %1194
        %1196 = vset.pattern.permute.xlu0 0
        %1197 = vperm.xlu0 %1196, %v418
        %v1198 = vpop.permute.xlu0 %1197
        %1199 = vset.pattern.permute.xlu0 0
        %1200 = vperm.xlu0 %1199, %v419
        %v1201 = vpop.permute.xlu0 %1200
        %1202 = vset.pattern.permute.xlu0 0
        %1203 = vperm.xlu0 %1202, %v420
        %v1204 = vpop.permute.xlu0 %1203
        %1205 = vset.pattern.permute.xlu0 0
        %1206 = vperm.xlu0 %1205, %v421
        %v1207 = vpop.permute.xlu0 %1206
        %1208 = vset.pattern.permute.xlu0 0
        %1209 = vperm.xlu0 %1208, %v422
        %v1210 = vpop.permute.xlu0 %1209
        %1211 = vset.pattern.permute.xlu0 0
        %1212 = vperm.xlu0 %1211, %v423
        %v1213 = vpop.permute.xlu0 %1212
        %1214 = vset.pattern.permute.xlu0 0
        %1215 = vperm.xlu0 %1214, %v424
        %v1216 = vpop.permute.xlu0 %1215
        %1217 = vset.pattern.permute.xlu0 0
        %1218 = vperm.xlu0 %1217, %v425
        %v1219 = vpop.permute.xlu0 %1218
        %1220 = vset.pattern.permute.xlu0 0
        %1221 = vperm.xlu0 %1220, %v426
        %v1222 = vpop.permute.xlu0 %1221
        %vm1223 = vcmp.eq.s32.totalorder %v428, %v649
        %vm1224 = vcmp.eq.s32.totalorder %v428, %v652
        %vm1225 = vcmp.eq.s32.totalorder %v428, %v655
        %vm1226 = vcmp.eq.s32.totalorder %v428, %v658
        %vm1227 = vcmp.eq.s32.totalorder %v428, %v661
        %vm1228 = vcmp.eq.s32.totalorder %v428, %v664
        %vm1229 = vcmp.eq.s32.totalorder %v428, %v667
        %vm1230 = vcmp.eq.s32.totalorder %v428, %v670
        %vm1231 = vcmp.eq.s32.totalorder %v428, %v673
        %vm1232 = vcmp.eq.s32.totalorder %v428, %v676
        %vm1233 = vcmp.eq.s32.totalorder %v428, %v679
        %vm1234 = vcmp.eq.s32.totalorder %v428, %v682
        %vm1235 = vcmp.eq.s32.totalorder %v428, %v685
        %vm1236 = vcmp.eq.s32.totalorder %v428, %v688
        %vm1237 = vcmp.eq.s32.totalorder %v428, %v691
        %vm1238 = vcmp.eq.s32.totalorder %v428, %v694
        %vm1239 = vcmp.eq.s32.totalorder %v428, %v697
        %vm1240 = vcmp.eq.s32.totalorder %v428, %v700
        %vm1241 = vcmp.eq.s32.totalorder %v428, %v703
        %vm1242 = vcmp.eq.s32.totalorder %v428, %v706
        %vm1243 = vcmp.eq.s32.totalorder %v428, %v709
        %vm1244 = vcmp.eq.s32.totalorder %v428, %v712
        %vm1245 = vcmp.eq.s32.totalorder %v428, %v715
        %vm1246 = vcmp.eq.s32.totalorder %v428, %v718
        %vm1247 = vcmp.eq.s32.totalorder %v428, %v721
        %vm1248 = vcmp.eq.s32.totalorder %v428, %v724
        %vm1249 = vcmp.eq.s32.totalorder %v428, %v727
        %vm1250 = vcmp.eq.s32.totalorder %v428, %v730
        %vm1251 = vcmp.eq.s32.totalorder %v428, %v733
        %vm1252 = vcmp.eq.s32.totalorder %v428, %v736
        %vm1253 = vcmp.eq.s32.totalorder %v428, %v739
        %vm1254 = vcmp.eq.s32.totalorder %v428, %v742
        %vm1255 = vcmp.eq.s32.totalorder %v428, %v745
        %vm1256 = vcmp.eq.s32.totalorder %v428, %v748
        %vm1257 = vcmp.eq.s32.totalorder %v428, %v751
        %vm1258 = vcmp.eq.s32.totalorder %v428, %v754
        %vm1259 = vcmp.eq.s32.totalorder %v428, %v757
        %vm1260 = vcmp.eq.s32.totalorder %v428, %v760
        %vm1261 = vcmp.eq.s32.totalorder %v428, %v763
        %vm1262 = vcmp.eq.s32.totalorder %v428, %v766
        %vm1263 = vcmp.eq.s32.totalorder %v428, %v769
        %vm1264 = vcmp.eq.s32.totalorder %v428, %v772
        %vm1265 = vcmp.eq.s32.totalorder %v428, %v775
        %vm1266 = vcmp.eq.s32.totalorder %v428, %v778
        %vm1267 = vcmp.eq.s32.totalorder %v428, %v781
        %vm1268 = vcmp.eq.s32.totalorder %v428, %v784
        %vm1269 = vcmp.eq.s32.totalorder %v428, %v787
        %vm1270 = vcmp.eq.s32.totalorder %v428, %v790
        %vm1271 = vcmp.eq.s32.totalorder %v428, %v793
        %vm1272 = vcmp.eq.s32.totalorder %v428, %v796
        %vm1273 = vcmp.eq.s32.totalorder %v428, %v799
        %vm1274 = vcmp.eq.s32.totalorder %v428, %v802
        %vm1275 = vcmp.eq.s32.totalorder %v428, %v805
        %vm1276 = vcmp.eq.s32.totalorder %v428, %v808
        %vm1277 = vcmp.eq.s32.totalorder %v428, %v811
        %vm1278 = vcmp.eq.s32.totalorder %v428, %v814
        %vm1279 = vcmp.eq.s32.totalorder %v428, %v817
        %vm1280 = vcmp.eq.s32.totalorder %v428, %v820
        %vm1281 = vcmp.eq.s32.totalorder %v428, %v823
        %vm1282 = vcmp.eq.s32.totalorder %v428, %v826
        %vm1283 = vcmp.eq.s32.totalorder %v428, %v829
        %vm1284 = vcmp.eq.s32.totalorder %v428, %v832
        %vm1285 = vcmp.eq.s32.totalorder %v428, %v835
        %vm1286 = vcmp.eq.s32.totalorder %v428, %v838
        %vm1287 = vcmp.eq.s32.totalorder %v428, %v841
        %vm1288 = vcmp.eq.s32.totalorder %v428, %v844
        %vm1289 = vcmp.eq.s32.totalorder %v428, %v847
        %vm1290 = vcmp.eq.s32.totalorder %v428, %v850
        %vm1291 = vcmp.eq.s32.totalorder %v428, %v853
        %vm1292 = vcmp.eq.s32.totalorder %v428, %v856
        %vm1293 = vcmp.eq.s32.totalorder %v428, %v859
        %vm1294 = vcmp.eq.s32.totalorder %v428, %v862
        %vm1295 = vcmp.eq.s32.totalorder %v428, %v865
        %vm1296 = vcmp.eq.s32.totalorder %v428, %v868
        %vm1297 = vcmp.eq.s32.totalorder %v428, %v871
        %vm1298 = vcmp.eq.s32.totalorder %v428, %v874
        %vm1299 = vcmp.eq.s32.totalorder %v428, %v877
        %vm1300 = vcmp.eq.s32.totalorder %v428, %v880
        %vm1301 = vcmp.eq.s32.totalorder %v428, %v883
        %vm1302 = vcmp.eq.s32.totalorder %v428, %v886
        %vm1303 = vcmp.eq.s32.totalorder %v428, %v889
        %vm1304 = vcmp.eq.s32.totalorder %v428, %v892
        %vm1305 = vcmp.eq.s32.totalorder %v428, %v895
        %vm1306 = vcmp.eq.s32.totalorder %v428, %v898
        %vm1307 = vcmp.eq.s32.totalorder %v428, %v901
        %vm1308 = vcmp.eq.s32.totalorder %v428, %v904
        %vm1309 = vcmp.eq.s32.totalorder %v428, %v907
        %vm1310 = vcmp.eq.s32.totalorder %v428, %v910
        %vm1311 = vcmp.eq.s32.totalorder %v428, %v913
        %vm1312 = vcmp.eq.s32.totalorder %v428, %v916
        %vm1313 = vcmp.eq.s32.totalorder %v428, %v919
        %vm1314 = vcmp.eq.s32.totalorder %v428, %v922
        %vm1315 = vcmp.eq.s32.totalorder %v428, %v925
        %vm1316 = vcmp.eq.s32.totalorder %v428, %v928
        %vm1317 = vcmp.eq.s32.totalorder %v428, %v931
        %vm1318 = vcmp.eq.s32.totalorder %v428, %v934
        %vm1319 = vcmp.eq.s32.totalorder %v428, %v937
        %vm1320 = vcmp.eq.s32.totalorder %v428, %v940
        %vm1321 = vcmp.eq.s32.totalorder %v428, %v943
        %vm1322 = vcmp.eq.s32.totalorder %v428, %v946
        %vm1323 = vcmp.eq.s32.totalorder %v428, %v949
        %vm1324 = vcmp.eq.s32.totalorder %v428, %v952
        %vm1325 = vcmp.eq.s32.totalorder %v428, %v955
        %vm1326 = vcmp.eq.s32.totalorder %v428, %v958
        %vm1327 = vcmp.eq.s32.totalorder %v428, %v961
        %vm1328 = vcmp.eq.s32.totalorder %v428, %v964
        %vm1329 = vcmp.eq.s32.totalorder %v428, %v967
        %vm1330 = vcmp.eq.s32.totalorder %v428, %v970
        %vm1331 = vcmp.eq.s32.totalorder %v428, %v973
        %vm1332 = vcmp.eq.s32.totalorder %v428, %v976
        %vm1333 = vcmp.eq.s32.totalorder %v428, %v979
        %vm1334 = vcmp.eq.s32.totalorder %v428, %v982
        %vm1335 = vcmp.eq.s32.totalorder %v428, %v985
        %vm1336 = vcmp.eq.s32.totalorder %v428, %v988
        %vm1337 = vcmp.eq.s32.totalorder %v428, %v991
        %vm1338 = vcmp.eq.s32.totalorder %v428, %v994
        %vm1339 = vcmp.eq.s32.totalorder %v428, %v997
        %vm1340 = vcmp.eq.s32.totalorder %v428, %v1000
        %vm1341 = vcmp.eq.s32.totalorder %v428, %v1003
        %vm1342 = vcmp.eq.s32.totalorder %v428, %v1006
        %vm1343 = vcmp.eq.s32.totalorder %v428, %v1009
        %vm1344 = vcmp.eq.s32.totalorder %v428, %v1012
        %vm1345 = vcmp.eq.s32.totalorder %v428, %v1015
        %vm1346 = vcmp.eq.s32.totalorder %v428, %v1018
        %vm1347 = vcmp.eq.s32.totalorder %v428, %v1021
        %vm1348 = vcmp.eq.s32.totalorder %v428, %v1024
        %vm1349 = vcmp.eq.s32.totalorder %v428, %v1027
        %vm1350 = vcmp.eq.s32.totalorder %v428, %v1030
        %vm1351 = vcmp.eq.s32.totalorder %v428, %v1033
        %vm1352 = vcmp.eq.s32.totalorder %v428, %v1036
        %vm1353 = vcmp.eq.s32.totalorder %v428, %v1039
        %vm1354 = vcmp.eq.s32.totalorder %v428, %v1042
        %vm1355 = vcmp.eq.s32.totalorder %v428, %v1045
        %vm1356 = vcmp.eq.s32.totalorder %v428, %v1048
        %vm1357 = vcmp.eq.s32.totalorder %v428, %v1051
        %vm1358 = vcmp.eq.s32.totalorder %v428, %v1054
        %vm1359 = vcmp.eq.s32.totalorder %v428, %v1057
        %vm1360 = vcmp.eq.s32.totalorder %v428, %v1060
        %vm1361 = vcmp.eq.s32.totalorder %v428, %v1063
        %vm1362 = vcmp.eq.s32.totalorder %v428, %v1066
        %vm1363 = vcmp.eq.s32.totalorder %v428, %v1069
        %vm1364 = vcmp.eq.s32.totalorder %v428, %v1072
        %vm1365 = vcmp.eq.s32.totalorder %v428, %v1075
        %vm1366 = vcmp.eq.s32.totalorder %v428, %v1078
        %vm1367 = vcmp.eq.s32.totalorder %v428, %v1081
        %vm1368 = vcmp.eq.s32.totalorder %v428, %v1084
        %vm1369 = vcmp.eq.s32.totalorder %v428, %v1087
        %vm1370 = vcmp.eq.s32.totalorder %v428, %v1090
        %vm1371 = vcmp.eq.s32.totalorder %v428, %v1093
        %vm1372 = vcmp.eq.s32.totalorder %v428, %v1096
        %vm1373 = vcmp.eq.s32.totalorder %v428, %v1099
        %vm1374 = vcmp.eq.s32.totalorder %v428, %v1102
        %vm1375 = vcmp.eq.s32.totalorder %v428, %v1105
        %vm1376 = vcmp.eq.s32.totalorder %v428, %v1108
        %vm1377 = vcmp.eq.s32.totalorder %v428, %v1111
        %vm1378 = vcmp.eq.s32.totalorder %v428, %v1114
        %vm1379 = vcmp.eq.s32.totalorder %v428, %v1117
        %vm1380 = vcmp.eq.s32.totalorder %v428, %v1120
        %vm1381 = vcmp.eq.s32.totalorder %v428, %v1123
        %vm1382 = vcmp.eq.s32.totalorder %v428, %v1126
        %vm1383 = vcmp.eq.s32.totalorder %v428, %v1129
        %vm1384 = vcmp.eq.s32.totalorder %v428, %v1132
        %vm1385 = vcmp.eq.s32.totalorder %v428, %v1135
        %vm1386 = vcmp.eq.s32.totalorder %v428, %v1138
        %vm1387 = vcmp.eq.s32.totalorder %v428, %v1141
        %vm1388 = vcmp.eq.s32.totalorder %v428, %v1144
        %vm1389 = vcmp.eq.s32.totalorder %v428, %v1147
        %vm1390 = vcmp.eq.s32.totalorder %v428, %v1150
        %vm1391 = vcmp.eq.s32.totalorder %v428, %v1153
        %vm1392 = vcmp.eq.s32.totalorder %v428, %v1156
        %vm1393 = vcmp.eq.s32.totalorder %v428, %v1159
        %vm1394 = vcmp.eq.s32.totalorder %v428, %v1162
        %vm1395 = vcmp.eq.s32.totalorder %v428, %v1165
        %vm1396 = vcmp.eq.s32.totalorder %v428, %v1168
        %vm1397 = vcmp.eq.s32.totalorder %v428, %v1171
        %vm1398 = vcmp.eq.s32.totalorder %v428, %v1174
        %vm1399 = vcmp.eq.s32.totalorder %v428, %v1177
        %vm1400 = vcmp.eq.s32.totalorder %v428, %v1180
        %vm1401 = vcmp.eq.s32.totalorder %v428, %v1183
        %vm1402 = vcmp.eq.s32.totalorder %v428, %v1186
        %vm1403 = vcmp.eq.s32.totalorder %v428, %v1189
        %vm1404 = vcmp.eq.s32.totalorder %v428, %v1192
        %vm1405 = vcmp.eq.s32.totalorder %v428, %v1195
        %vm1406 = vcmp.eq.s32.totalorder %v428, %v1198
        %vm1407 = vcmp.eq.s32.totalorder %v428, %v1201
        %vm1408 = vcmp.eq.s32.totalorder %v428, %v1204
        %vm1409 = vcmp.eq.s32.totalorder %v428, %v1207
        %vm1410 = vcmp.eq.s32.totalorder %v428, %v1210
        %vm1411 = vcmp.eq.s32.totalorder %v428, %v1213
        %vm1412 = vcmp.eq.s32.totalorder %v428, %v1216
        %vm1413 = vcmp.eq.s32.totalorder %v428, %v1219
        %vm1414 = vcmp.eq.s32.totalorder %v428, %v1222
        %v1415 = vsel %vm1223, 1, 0
        %v1416 = vsel %vm1224, 1, 0
        %v1417 = vsel %vm1225, 1, 0
        %v1418 = vsel %vm1226, 1, 0
        %v1419 = vsel %vm1227, 1, 0
        %v1420 = vsel %vm1228, 1, 0
        %v1421 = vsel %vm1229, 1, 0
        %v1422 = vsel %vm1230, 1, 0
        %v1423 = vsel %vm1231, 1, 0
        %v1424 = vsel %vm1232, 1, 0
        %v1425 = vsel %vm1233, 1, 0
        %v1426 = vsel %vm1234, 1, 0
        %v1427 = vsel %vm1235, 1, 0
        %v1428 = vsel %vm1236, 1, 0
        %v1429 = vsel %vm1237, 1, 0
        %v1430 = vsel %vm1238, 1, 0
        %v1431 = vsel %vm1239, 1, 0
        %v1432 = vsel %vm1240, 1, 0
        %v1433 = vsel %vm1241, 1, 0
        %v1434 = vsel %vm1242, 1, 0
        %v1435 = vsel %vm1243, 1, 0
        %v1436 = vsel %vm1244, 1, 0
        %v1437 = vsel %vm1245, 1, 0
        %v1438 = vsel %vm1246, 1, 0
        %v1439 = vsel %vm1247, 1, 0
        %v1440 = vsel %vm1248, 1, 0
        %v1441 = vsel %vm1249, 1, 0
        %v1442 = vsel %vm1250, 1, 0
        %v1443 = vsel %vm1251, 1, 0
        %v1444 = vsel %vm1252, 1, 0
        %v1445 = vsel %vm1253, 1, 0
        %v1446 = vsel %vm1254, 1, 0
        %v1447 = vsel %vm1255, 1, 0
        %v1448 = vsel %vm1256, 1, 0
        %v1449 = vsel %vm1257, 1, 0
        %v1450 = vsel %vm1258, 1, 0
        %v1451 = vsel %vm1259, 1, 0
        %v1452 = vsel %vm1260, 1, 0
        %v1453 = vsel %vm1261, 1, 0
        %v1454 = vsel %vm1262, 1, 0
        %v1455 = vsel %vm1263, 1, 0
        %v1456 = vsel %vm1264, 1, 0
        %v1457 = vsel %vm1265, 1, 0
        %v1458 = vsel %vm1266, 1, 0
        %v1459 = vsel %vm1267, 1, 0
        %v1460 = vsel %vm1268, 1, 0
        %v1461 = vsel %vm1269, 1, 0
        %v1462 = vsel %vm1270, 1, 0
        %v1463 = vsel %vm1271, 1, 0
        %v1464 = vsel %vm1272, 1, 0
        %v1465 = vsel %vm1273, 1, 0
        %v1466 = vsel %vm1274, 1, 0
        %v1467 = vsel %vm1275, 1, 0
        %v1468 = vsel %vm1276, 1, 0
        %v1469 = vsel %vm1277, 1, 0
        %v1470 = vsel %vm1278, 1, 0
        %v1471 = vsel %vm1279, 1, 0
        %v1472 = vsel %vm1280, 1, 0
        %v1473 = vsel %vm1281, 1, 0
        %v1474 = vsel %vm1282, 1, 0
        %v1475 = vsel %vm1283, 1, 0
        %v1476 = vsel %vm1284, 1, 0
        %v1477 = vsel %vm1285, 1, 0
        %v1478 = vsel %vm1286, 1, 0
        %v1479 = vsel %vm1287, 1, 0
        %v1480 = vsel %vm1288, 1, 0
        %v1481 = vsel %vm1289, 1, 0
        %v1482 = vsel %vm1290, 1, 0
        %v1483 = vsel %vm1291, 1, 0
        %v1484 = vsel %vm1292, 1, 0
        %v1485 = vsel %vm1293, 1, 0
        %v1486 = vsel %vm1294, 1, 0
        %v1487 = vsel %vm1295, 1, 0
        %v1488 = vsel %vm1296, 1, 0
        %v1489 = vsel %vm1297, 1, 0
        %v1490 = vsel %vm1298, 1, 0
        %v1491 = vsel %vm1299, 1, 0
        %v1492 = vsel %vm1300, 1, 0
        %v1493 = vsel %vm1301, 1, 0
        %v1494 = vsel %vm1302, 1, 0
        %v1495 = vsel %vm1303, 1, 0
        %v1496 = vsel %vm1304, 1, 0
        %v1497 = vsel %vm1305, 1, 0
        %v1498 = vsel %vm1306, 1, 0
        %v1499 = vsel %vm1307, 1, 0
        %v1500 = vsel %vm1308, 1, 0
        %v1501 = vsel %vm1309, 1, 0
        %v1502 = vsel %vm1310, 1, 0
        %v1503 = vsel %vm1311, 1, 0
        %v1504 = vsel %vm1312, 1, 0
        %v1505 = vsel %vm1313, 1, 0
        %v1506 = vsel %vm1314, 1, 0
        %v1507 = vsel %vm1315, 1, 0
        %v1508 = vsel %vm1316, 1, 0
        %v1509 = vsel %vm1317, 1, 0
        %v1510 = vsel %vm1318, 1, 0
        %v1511 = vsel %vm1319, 1, 0
        %v1512 = vsel %vm1320, 1, 0
        %v1513 = vsel %vm1321, 1, 0
        %v1514 = vsel %vm1322, 1, 0
        %v1515 = vsel %vm1323, 1, 0
        %v1516 = vsel %vm1324, 1, 0
        %v1517 = vsel %vm1325, 1, 0
        %v1518 = vsel %vm1326, 1, 0
        %v1519 = vsel %vm1327, 1, 0
        %v1520 = vsel %vm1328, 1, 0
        %v1521 = vsel %vm1329, 1, 0
        %v1522 = vsel %vm1330, 1, 0
        %v1523 = vsel %vm1331, 1, 0
        %v1524 = vsel %vm1332, 1, 0
        %v1525 = vsel %vm1333, 1, 0
        %v1526 = vsel %vm1334, 1, 0
        %v1527 = vsel %vm1335, 1, 0
        %v1528 = vsel %vm1336, 1, 0
        %v1529 = vsel %vm1337, 1, 0
        %v1530 = vsel %vm1338, 1, 0
        %v1531 = vsel %vm1339, 1, 0
        %v1532 = vsel %vm1340, 1, 0
        %v1533 = vsel %vm1341, 1, 0
        %v1534 = vsel %vm1342, 1, 0
        %v1535 = vsel %vm1343, 1, 0
        %v1536 = vsel %vm1344, 1, 0
        %v1537 = vsel %vm1345, 1, 0
        %v1538 = vsel %vm1346, 1, 0
        %v1539 = vsel %vm1347, 1, 0
        %v1540 = vsel %vm1348, 1, 0
        %v1541 = vsel %vm1349, 1, 0
        %v1542 = vsel %vm1350, 1, 0
        %v1543 = vsel %vm1351, 1, 0
        %v1544 = vsel %vm1352, 1, 0
        %v1545 = vsel %vm1353, 1, 0
        %v1546 = vsel %vm1354, 1, 0
        %v1547 = vsel %vm1355, 1, 0
        %v1548 = vsel %vm1356, 1, 0
        %v1549 = vsel %vm1357, 1, 0
        %v1550 = vsel %vm1358, 1, 0
        %v1551 = vsel %vm1359, 1, 0
        %v1552 = vsel %vm1360, 1, 0
        %v1553 = vsel %vm1361, 1, 0
        %v1554 = vsel %vm1362, 1, 0
        %v1555 = vsel %vm1363, 1, 0
        %v1556 = vsel %vm1364, 1, 0
        %v1557 = vsel %vm1365, 1, 0
        %v1558 = vsel %vm1366, 1, 0
        %v1559 = vsel %vm1367, 1, 0
        %v1560 = vsel %vm1368, 1, 0
        %v1561 = vsel %vm1369, 1, 0
        %v1562 = vsel %vm1370, 1, 0
        %v1563 = vsel %vm1371, 1, 0
        %v1564 = vsel %vm1372, 1, 0
        %v1565 = vsel %vm1373, 1, 0
        %v1566 = vsel %vm1374, 1, 0
        %v1567 = vsel %vm1375, 1, 0
        %v1568 = vsel %vm1376, 1, 0
        %v1569 = vsel %vm1377, 1, 0
        %v1570 = vsel %vm1378, 1, 0
        %v1571 = vsel %vm1379, 1, 0
        %v1572 = vsel %vm1380, 1, 0
        %v1573 = vsel %vm1381, 1, 0
        %v1574 = vsel %vm1382, 1, 0
        %v1575 = vsel %vm1383, 1, 0
        %v1576 = vsel %vm1384, 1, 0
        %v1577 = vsel %vm1385, 1, 0
        %v1578 = vsel %vm1386, 1, 0
        %v1579 = vsel %vm1387, 1, 0
        %v1580 = vsel %vm1388, 1, 0
        %v1581 = vsel %vm1389, 1, 0
        %v1582 = vsel %vm1390, 1, 0
        %v1583 = vsel %vm1391, 1, 0
        %v1584 = vsel %vm1392, 1, 0
        %v1585 = vsel %vm1393, 1, 0
        %v1586 = vsel %vm1394, 1, 0
        %v1587 = vsel %vm1395, 1, 0
        %v1588 = vsel %vm1396, 1, 0
        %v1589 = vsel %vm1397, 1, 0
        %v1590 = vsel %vm1398, 1, 0
        %v1591 = vsel %vm1399, 1, 0
        %v1592 = vsel %vm1400, 1, 0
        %v1593 = vsel %vm1401, 1, 0
        %v1594 = vsel %vm1402, 1, 0
        %v1595 = vsel %vm1403, 1, 0
        %v1596 = vsel %vm1404, 1, 0
        %v1597 = vsel %vm1405, 1, 0
        %v1598 = vsel %vm1406, 1, 0
        %v1599 = vsel %vm1407, 1, 0
        %v1600 = vsel %vm1408, 1, 0
        %v1601 = vsel %vm1409, 1, 0
        %v1602 = vsel %vm1410, 1, 0
        %v1603 = vsel %vm1411, 1, 0
        %v1604 = vsel %vm1412, 1, 0
        %v1605 = vsel %vm1413, 1, 0
        %v1606 = vsel %vm1414, 1, 0
        %v1607 = vcvt.s32.f32 %v1415
        %v1608 = vcvt.s32.f32 %v1416
        %v1609 = vcvt.s32.f32 %v1417
        %v1610 = vcvt.s32.f32 %v1418
        %v1611 = vcvt.s32.f32 %v1419
        %v1612 = vcvt.s32.f32 %v1420
        %v1613 = vcvt.s32.f32 %v1421
        %v1614 = vcvt.s32.f32 %v1422
        %v1615 = vcvt.s32.f32 %v1423
        %v1616 = vcvt.s32.f32 %v1424
        %v1617 = vcvt.s32.f32 %v1425
        %v1618 = vcvt.s32.f32 %v1426
        %v1619 = vcvt.s32.f32 %v1427
        %v1620 = vcvt.s32.f32 %v1428
        %v1621 = vcvt.s32.f32 %v1429
        %v1622 = vcvt.s32.f32 %v1430
        %v1623 = vcvt.s32.f32 %v1431
        %v1624 = vcvt.s32.f32 %v1432
        %v1625 = vcvt.s32.f32 %v1433
        %v1626 = vcvt.s32.f32 %v1434
        %v1627 = vcvt.s32.f32 %v1435
        %v1628 = vcvt.s32.f32 %v1436
        %v1629 = vcvt.s32.f32 %v1437
        %v1630 = vcvt.s32.f32 %v1438
        %v1631 = vcvt.s32.f32 %v1439
        %v1632 = vcvt.s32.f32 %v1440
        %v1633 = vcvt.s32.f32 %v1441
        %v1634 = vcvt.s32.f32 %v1442
        %v1635 = vcvt.s32.f32 %v1443
        %v1636 = vcvt.s32.f32 %v1444
        %v1637 = vcvt.s32.f32 %v1445
        %v1638 = vcvt.s32.f32 %v1446
        %v1639 = vcvt.s32.f32 %v1447
        %v1640 = vcvt.s32.f32 %v1448
        %v1641 = vcvt.s32.f32 %v1449
        %v1642 = vcvt.s32.f32 %v1450
        %v1643 = vcvt.s32.f32 %v1451
        %v1644 = vcvt.s32.f32 %v1452
        %v1645 = vcvt.s32.f32 %v1453
        %v1646 = vcvt.s32.f32 %v1454
        %v1647 = vcvt.s32.f32 %v1455
        %v1648 = vcvt.s32.f32 %v1456
        %v1649 = vcvt.s32.f32 %v1457
        %v1650 = vcvt.s32.f32 %v1458
        %v1651 = vcvt.s32.f32 %v1459
        %v1652 = vcvt.s32.f32 %v1460
        %v1653 = vcvt.s32.f32 %v1461
        %v1654 = vcvt.s32.f32 %v1462
        %v1655 = vcvt.s32.f32 %v1463
        %v1656 = vcvt.s32.f32 %v1464
        %v1657 = vcvt.s32.f32 %v1465
        %v1658 = vcvt.s32.f32 %v1466
        %v1659 = vcvt.s32.f32 %v1467
        %v1660 = vcvt.s32.f32 %v1468
        %v1661 = vcvt.s32.f32 %v1469
        %v1662 = vcvt.s32.f32 %v1470
        %v1663 = vcvt.s32.f32 %v1471
        %v1664 = vcvt.s32.f32 %v1472
        %v1665 = vcvt.s32.f32 %v1473
        %v1666 = vcvt.s32.f32 %v1474
        %v1667 = vcvt.s32.f32 %v1475
        %v1668 = vcvt.s32.f32 %v1476
        %v1669 = vcvt.s32.f32 %v1477
        %v1670 = vcvt.s32.f32 %v1478
        %v1671 = vcvt.s32.f32 %v1479
        %v1672 = vcvt.s32.f32 %v1480
        %v1673 = vcvt.s32.f32 %v1481
        %v1674 = vcvt.s32.f32 %v1482
        %v1675 = vcvt.s32.f32 %v1483
        %v1676 = vcvt.s32.f32 %v1484
        %v1677 = vcvt.s32.f32 %v1485
        %v1678 = vcvt.s32.f32 %v1486
        %v1679 = vcvt.s32.f32 %v1487
        %v1680 = vcvt.s32.f32 %v1488
        %v1681 = vcvt.s32.f32 %v1489
        %v1682 = vcvt.s32.f32 %v1490
        %v1683 = vcvt.s32.f32 %v1491
        %v1684 = vcvt.s32.f32 %v1492
        %v1685 = vcvt.s32.f32 %v1493
        %v1686 = vcvt.s32.f32 %v1494
        %v1687 = vcvt.s32.f32 %v1495
        %v1688 = vcvt.s32.f32 %v1496
        %v1689 = vcvt.s32.f32 %v1497
        %v1690 = vcvt.s32.f32 %v1498
        %v1691 = vcvt.s32.f32 %v1499
        %v1692 = vcvt.s32.f32 %v1500
        %v1693 = vcvt.s32.f32 %v1501
        %v1694 = vcvt.s32.f32 %v1502
        %v1695 = vcvt.s32.f32 %v1503
        %v1696 = vcvt.s32.f32 %v1504
        %v1697 = vcvt.s32.f32 %v1505
        %v1698 = vcvt.s32.f32 %v1506
        %v1699 = vcvt.s32.f32 %v1507
        %v1700 = vcvt.s32.f32 %v1508
        %v1701 = vcvt.s32.f32 %v1509
        %v1702 = vcvt.s32.f32 %v1510
        %v1703 = vcvt.s32.f32 %v1511
        %v1704 = vcvt.s32.f32 %v1512
        %v1705 = vcvt.s32.f32 %v1513
        %v1706 = vcvt.s32.f32 %v1514
        %v1707 = vcvt.s32.f32 %v1515
        %v1708 = vcvt.s32.f32 %v1516
        %v1709 = vcvt.s32.f32 %v1517
        %v1710 = vcvt.s32.f32 %v1518
        %v1711 = vcvt.s32.f32 %v1519
        %v1712 = vcvt.s32.f32 %v1520
        %v1713 = vcvt.s32.f32 %v1521
        %v1714 = vcvt.s32.f32 %v1522
        %v1715 = vcvt.s32.f32 %v1523
        %v1716 = vcvt.s32.f32 %v1524
        %v1717 = vcvt.s32.f32 %v1525
        %v1718 = vcvt.s32.f32 %v1526
        %v1719 = vcvt.s32.f32 %v1527
        %v1720 = vcvt.s32.f32 %v1528
        %v1721 = vcvt.s32.f32 %v1529
        %v1722 = vcvt.s32.f32 %v1530
        %v1723 = vcvt.s32.f32 %v1531
        %v1724 = vcvt.s32.f32 %v1532
        %v1725 = vcvt.s32.f32 %v1533
        %v1726 = vcvt.s32.f32 %v1534
        %v1727 = vcvt.s32.f32 %v1535
        %v1728 = vcvt.s32.f32 %v1536
        %v1729 = vcvt.s32.f32 %v1537
        %v1730 = vcvt.s32.f32 %v1538
        %v1731 = vcvt.s32.f32 %v1539
        %v1732 = vcvt.s32.f32 %v1540
        %v1733 = vcvt.s32.f32 %v1541
        %v1734 = vcvt.s32.f32 %v1542
        %v1735 = vcvt.s32.f32 %v1543
        %v1736 = vcvt.s32.f32 %v1544
        %v1737 = vcvt.s32.f32 %v1545
        %v1738 = vcvt.s32.f32 %v1546
        %v1739 = vcvt.s32.f32 %v1547
        %v1740 = vcvt.s32.f32 %v1548
        %v1741 = vcvt.s32.f32 %v1549
        %v1742 = vcvt.s32.f32 %v1550
        %v1743 = vcvt.s32.f32 %v1551
        %v1744 = vcvt.s32.f32 %v1552
        %v1745 = vcvt.s32.f32 %v1553
        %v1746 = vcvt.s32.f32 %v1554
        %v1747 = vcvt.s32.f32 %v1555
        %v1748 = vcvt.s32.f32 %v1556
        %v1749 = vcvt.s32.f32 %v1557
        %v1750 = vcvt.s32.f32 %v1558
        %v1751 = vcvt.s32.f32 %v1559
        %v1752 = vcvt.s32.f32 %v1560
        %v1753 = vcvt.s32.f32 %v1561
        %v1754 = vcvt.s32.f32 %v1562
        %v1755 = vcvt.s32.f32 %v1563
        %v1756 = vcvt.s32.f32 %v1564
        %v1757 = vcvt.s32.f32 %v1565
        %v1758 = vcvt.s32.f32 %v1566
        %v1759 = vcvt.s32.f32 %v1567
        %v1760 = vcvt.s32.f32 %v1568
        %v1761 = vcvt.s32.f32 %v1569
        %v1762 = vcvt.s32.f32 %v1570
        %v1763 = vcvt.s32.f32 %v1571
        %v1764 = vcvt.s32.f32 %v1572
        %v1765 = vcvt.s32.f32 %v1573
        %v1766 = vcvt.s32.f32 %v1574
        %v1767 = vcvt.s32.f32 %v1575
        %v1768 = vcvt.s32.f32 %v1576
        %v1769 = vcvt.s32.f32 %v1577
        %v1770 = vcvt.s32.f32 %v1578
        %v1771 = vcvt.s32.f32 %v1579
        %v1772 = vcvt.s32.f32 %v1580
        %v1773 = vcvt.s32.f32 %v1581
        %v1774 = vcvt.s32.f32 %v1582
        %v1775 = vcvt.s32.f32 %v1583
        %v1776 = vcvt.s32.f32 %v1584
        %v1777 = vcvt.s32.f32 %v1585
        %v1778 = vcvt.s32.f32 %v1586
        %v1779 = vcvt.s32.f32 %v1587
        %v1780 = vcvt.s32.f32 %v1588
        %v1781 = vcvt.s32.f32 %v1589
        %v1782 = vcvt.s32.f32 %v1590
        %v1783 = vcvt.s32.f32 %v1591
        %v1784 = vcvt.s32.f32 %v1592
        %v1785 = vcvt.s32.f32 %v1593
        %v1786 = vcvt.s32.f32 %v1594
        %v1787 = vcvt.s32.f32 %v1595
        %v1788 = vcvt.s32.f32 %v1596
        %v1789 = vcvt.s32.f32 %v1597
        %v1790 = vcvt.s32.f32 %v1598
        %v1791 = vcvt.s32.f32 %v1599
        %v1792 = vcvt.s32.f32 %v1600
        %v1793 = vcvt.s32.f32 %v1601
        %v1794 = vcvt.s32.f32 %v1602
        %v1795 = vcvt.s32.f32 %v1603
        %v1796 = vcvt.s32.f32 %v1604
        %v1797 = vcvt.s32.f32 %v1605
        %v1798 = vcvt.s32.f32 %v1606
        %v1799 = vld [vmem:[%s3] sm:$0xff]
        %v1800 = vld [vmem:[%s3 + $0x8] sm:$0xff]
        %v1801 = vld [vmem:[%s3 + $0x10] sm:$0xff]
        %v1802 = vld [vmem:[%s3 + $0x18] sm:$0xff]
        %v1803 = vld [vmem:[%s3 + $0x20] sm:$0xff]
        %v1804 = vld [vmem:[%s3 + $0x28] sm:$0xff]
        %v1805 = vld [vmem:[%s3 + $0x30] sm:$0xff]
        %v1806 = vld [vmem:[%s3 + $0x38] sm:$0xff]
        %v1808 = vsel %vm533, %v1607, 0
        %v1811 = vsel %vm533, %v1608, 0
        %v1814 = vsel %vm533, %v1609, 0
        %v1817 = vsel %vm533, %v1610, 0
        %v1820 = vsel %vm533, %v1611, 0
        %v1823 = vsel %vm533, %v1612, 0
        %v1826 = vsel %vm533, %v1613, 0
        %v1829 = vsel %vm533, %v1614, 0
        %v1832 = vsel %vm533, %v1615, 0
        %v1835 = vsel %vm533, %v1616, 0
        %v1838 = vsel %vm533, %v1617, 0
        %v1841 = vsel %vm533, %v1618, 0
        %v1844 = vsel %vm533, %v1619, 0
        %v1847 = vsel %vm533, %v1620, 0
        %v1850 = vsel %vm533, %v1621, 0
        %v1853 = vsel %vm533, %v1622, 0
        %v1856 = vsel %vm533, %v1623, 0
        %v1859 = vsel %vm533, %v1624, 0
        %v1862 = vsel %vm533, %v1625, 0
        %v1865 = vsel %vm533, %v1626, 0
        %v1868 = vsel %vm533, %v1627, 0
        %v1871 = vsel %vm533, %v1628, 0
        %v1874 = vsel %vm533, %v1629, 0
        %v1877 = vsel %vm533, %v1630, 0
        %v1880 = vsel %vm533, %v1631, 0
        %v1883 = vsel %vm533, %v1632, 0
        %v1886 = vsel %vm533, %v1633, 0
        %v1889 = vsel %vm533, %v1634, 0
        %v1892 = vsel %vm533, %v1635, 0
        %v1895 = vsel %vm533, %v1636, 0
        %v1898 = vsel %vm533, %v1637, 0
        %v1901 = vsel %vm533, %v1638, 0
        %v1904 = vsel %vm533, %v1639, 0
        %v1907 = vsel %vm533, %v1640, 0
        %v1910 = vsel %vm533, %v1641, 0
        %v1913 = vsel %vm533, %v1642, 0
        %v1916 = vsel %vm533, %v1643, 0
        %v1919 = vsel %vm533, %v1644, 0
        %v1922 = vsel %vm533, %v1645, 0
        %v1925 = vsel %vm533, %v1646, 0
        %v1928 = vsel %vm533, %v1647, 0
        %v1931 = vsel %vm533, %v1648, 0
        %v1934 = vsel %vm533, %v1649, 0
        %v1937 = vsel %vm533, %v1650, 0
        %v1940 = vsel %vm533, %v1651, 0
        %v1943 = vsel %vm533, %v1652, 0
        %v1946 = vsel %vm533, %v1653, 0
        %v1949 = vsel %vm533, %v1654, 0
        %v1952 = vsel %vm533, %v1655, 0
        %v1955 = vsel %vm533, %v1656, 0
        %v1958 = vsel %vm533, %v1657, 0
        %v1961 = vsel %vm533, %v1658, 0
        %v1964 = vsel %vm533, %v1659, 0
        %v1967 = vsel %vm533, %v1660, 0
        %v1970 = vsel %vm533, %v1661, 0
        %v1973 = vsel %vm533, %v1662, 0
        %v1976 = vsel %vm533, %v1663, 0
        %v1979 = vsel %vm533, %v1664, 0
        %v1982 = vsel %vm533, %v1665, 0
        %v1985 = vsel %vm533, %v1666, 0
        %v1988 = vsel %vm533, %v1667, 0
        %v1991 = vsel %vm533, %v1668, 0
        %v1994 = vsel %vm533, %v1669, 0
        %v1997 = vsel %vm533, %v1670, 0
        %v2000 = vsel %vm533, %v1671, 0
        %v2003 = vsel %vm533, %v1672, 0
        %v2006 = vsel %vm533, %v1673, 0
        %v2009 = vsel %vm533, %v1674, 0
        %v2012 = vsel %vm533, %v1675, 0
        %v2015 = vsel %vm533, %v1676, 0
        %v2018 = vsel %vm533, %v1677, 0
        %v2021 = vsel %vm533, %v1678, 0
        %v2024 = vsel %vm533, %v1679, 0
        %v2027 = vsel %vm533, %v1680, 0
        %v2030 = vsel %vm533, %v1681, 0
        %v2033 = vsel %vm533, %v1682, 0
        %v2036 = vsel %vm533, %v1683, 0
        %v2039 = vsel %vm533, %v1684, 0
        %v2042 = vsel %vm533, %v1685, 0
        %v2045 = vsel %vm533, %v1686, 0
        %v2048 = vsel %vm533, %v1687, 0
        %v2051 = vsel %vm533, %v1688, 0
        %v2054 = vsel %vm533, %v1689, 0
        %v2057 = vsel %vm533, %v1690, 0
        %v2060 = vsel %vm533, %v1691, 0
        %v2063 = vsel %vm533, %v1692, 0
        %v2066 = vsel %vm533, %v1693, 0
        %v2069 = vsel %vm533, %v1694, 0
        %v2072 = vsel %vm533, %v1695, 0
        %v2075 = vsel %vm533, %v1696, 0
        %v2078 = vsel %vm533, %v1697, 0
        %v2081 = vsel %vm533, %v1698, 0
        %v2084 = vsel %vm533, %v1699, 0
        %v2087 = vsel %vm533, %v1700, 0
        %v2090 = vsel %vm533, %v1701, 0
        %v2093 = vsel %vm533, %v1702, 0
        %v2096 = vsel %vm533, %v1703, 0
        %v2099 = vsel %vm533, %v1704, 0
        %v2102 = vsel %vm533, %v1705, 0
        %v2105 = vsel %vm533, %v1706, 0
        %v2108 = vsel %vm533, %v1707, 0
        %v2111 = vsel %vm533, %v1708, 0
        %v2114 = vsel %vm533, %v1709, 0
        %v2117 = vsel %vm533, %v1710, 0
        %v2120 = vsel %vm533, %v1711, 0
        %v2123 = vsel %vm533, %v1712, 0
        %v2126 = vsel %vm533, %v1713, 0
        %v2129 = vsel %vm533, %v1714, 0
        %v2132 = vsel %vm533, %v1715, 0
        %v2135 = vsel %vm533, %v1716, 0
        %v2138 = vsel %vm533, %v1717, 0
        %v2141 = vsel %vm533, %v1718, 0
        %v2144 = vsel %vm533, %v1719, 0
        %v2147 = vsel %vm533, %v1720, 0
        %v2150 = vsel %vm533, %v1721, 0
        %v2153 = vsel %vm533, %v1722, 0
        %v2156 = vsel %vm533, %v1723, 0
        %v2159 = vsel %vm533, %v1724, 0
        %v2162 = vsel %vm533, %v1725, 0
        %v2165 = vsel %vm533, %v1726, 0
        %v2168 = vsel %vm533, %v1727, 0
        %v2171 = vsel %vm533, %v1728, 0
        %v2174 = vsel %vm533, %v1729, 0
        %v2177 = vsel %vm533, %v1730, 0
        %v2180 = vsel %vm533, %v1731, 0
        %v2183 = vsel %vm533, %v1732, 0
        %v2186 = vsel %vm533, %v1733, 0
        %v2189 = vsel %vm533, %v1734, 0
        %v2192 = vsel %vm533, %v1735, 0
        %v2195 = vsel %vm533, %v1736, 0
        %v2198 = vsel %vm533, %v1737, 0
        %v2201 = vsel %vm533, %v1738, 0
        %v2204 = vsel %vm533, %v1739, 0
        %v2207 = vsel %vm533, %v1740, 0
        %v2210 = vsel %vm533, %v1741, 0
        %v2213 = vsel %vm533, %v1742, 0
        %v2216 = vsel %vm533, %v1743, 0
        %v2219 = vsel %vm533, %v1744, 0
        %v2222 = vsel %vm533, %v1745, 0
        %v2225 = vsel %vm533, %v1746, 0
        %v2228 = vsel %vm533, %v1747, 0
        %v2231 = vsel %vm533, %v1748, 0
        %v2234 = vsel %vm533, %v1749, 0
        %v2237 = vsel %vm533, %v1750, 0
        %v2240 = vsel %vm533, %v1751, 0
        %v2243 = vsel %vm533, %v1752, 0
        %v2246 = vsel %vm533, %v1753, 0
        %v2249 = vsel %vm533, %v1754, 0
        %v2252 = vsel %vm533, %v1755, 0
        %v2255 = vsel %vm533, %v1756, 0
        %v2258 = vsel %vm533, %v1757, 0
        %v2261 = vsel %vm533, %v1758, 0
        %v2264 = vsel %vm533, %v1759, 0
        %v2267 = vsel %vm533, %v1760, 0
        %v2270 = vsel %vm533, %v1761, 0
        %v2273 = vsel %vm533, %v1762, 0
        %v2276 = vsel %vm533, %v1763, 0
        %v2279 = vsel %vm533, %v1764, 0
        %v2282 = vsel %vm533, %v1765, 0
        %v2285 = vsel %vm533, %v1766, 0
        %v2288 = vsel %vm533, %v1767, 0
        %v2291 = vsel %vm533, %v1768, 0
        %v2294 = vsel %vm533, %v1769, 0
        %v2297 = vsel %vm533, %v1770, 0
        %v2300 = vsel %vm533, %v1771, 0
        %v2303 = vsel %vm533, %v1772, 0
        %v2306 = vsel %vm533, %v1773, 0
        %v2309 = vsel %vm533, %v1774, 0
        %v2312 = vsel %vm533, %v1775, 0
        %v2315 = vsel %vm533, %v1776, 0
        %v2318 = vsel %vm533, %v1777, 0
        %v2321 = vsel %vm533, %v1778, 0
        %v2324 = vsel %vm533, %v1779, 0
        %v2327 = vsel %vm533, %v1780, 0
        %v2330 = vsel %vm533, %v1781, 0
        %v2333 = vsel %vm533, %v1782, 0
        %v2336 = vsel %vm533, %v1783, 0
        %v2339 = vsel %vm533, %v1784, 0
        %v2342 = vsel %vm533, %v1785, 0
        %v2345 = vsel %vm533, %v1786, 0
        %v2348 = vsel %vm533, %v1787, 0
        %v2351 = vsel %vm533, %v1788, 0
        %v2354 = vsel %vm533, %v1789, 0
        %v2357 = vsel %vm533, %v1790, 0
        %v2360 = vsel %vm533, %v1791, 0
        %v2363 = vsel %vm533, %v1792, 0
        %v2366 = vsel %vm533, %v1793, 0
        %v2369 = vsel %vm533, %v1794, 0
        %v2372 = vsel %vm533, %v1795, 0
        %v2375 = vsel %vm533, %v1796, 0
        %v2378 = vsel %vm533, %v1797, 0
        %v2381 = vsel %vm533, %v1798, 0
        %2383 = vmatpush.msra.mxu0 0.0
        %2384 = vmatpush.msra.mxu0 0.0
        %2385 = vmatpush.msra.mxu0 0.0
        %2386 = vmatpush.msra.mxu0 0.0
        %2387 = vmatpush.msra.mxu0 0.0
        %2388 = vmatpush.msra.mxu0 0.0
        %2389 = vmatpush.msra.mxu0 0.0
        %2390 = vmatpush.msra.mxu0 0.0
        %2391 = vmatpush.msra.mxu0 %v1806
        %2392 = vmatpush.msra.mxu0 %v1805
        %2393 = vmatpush.msra.mxu0 %v1804
        %2394 = vmatpush.msra.mxu0 %v1803
        %2395 = vmatpush.msra.mxu0 %v1802
        %2396 = vmatpush.msra.mxu0 %v1801
        %2397 = vmatpush.msra.mxu0 %v1800
        %2398 = vmatpush.msra.mxu0 %v1799
        %2399 = vmatmul.f32.gmra.mxu0 %v1808
        %v2400 = vpop.f32.mrf.mxu0
        %v2401 = vadd.f32 0.0, %v2400
        %2402 = vmatmul.f32.gmra.mxu0 %v1811
        %v2403 = vpop.f32.mrf.mxu0
        %v2404 = vadd.f32 0.0, %v2403
        %2405 = vmatmul.f32.gmra.mxu0 %v1814
        %v2406 = vpop.f32.mrf.mxu0
        %v2407 = vadd.f32 0.0, %v2406
        %2408 = vmatmul.f32.gmra.mxu0 %v1817
        %v2409 = vpop.f32.mrf.mxu0
        %v2410 = vadd.f32 0.0, %v2409
        %2411 = vmatmul.f32.gmra.mxu0 %v1820
        %v2412 = vpop.f32.mrf.mxu0
        %v2413 = vadd.f32 0.0, %v2412
        %2414 = vmatmul.f32.gmra.mxu0 %v1823
        %v2415 = vpop.f32.mrf.mxu0
        %v2416 = vadd.f32 0.0, %v2415
        %2417 = vmatmul.f32.gmra.mxu0 %v1826
        %v2418 = vpop.f32.mrf.mxu0
        %v2419 = vadd.f32 0.0, %v2418
        %2420 = vmatmul.f32.gmra.mxu0 %v1829
        %v2421 = vpop.f32.mrf.mxu0
        %v2422 = vadd.f32 0.0, %v2421
        %2423 = vmatmul.f32.gmra.mxu0 %v1832
        %v2424 = vpop.f32.mrf.mxu0
        %v2425 = vadd.f32 0.0, %v2424
        %2426 = vmatmul.f32.gmra.mxu0 %v1835
        %v2427 = vpop.f32.mrf.mxu0
        %v2428 = vadd.f32 0.0, %v2427
        %2429 = vmatmul.f32.gmra.mxu0 %v1838
        %v2430 = vpop.f32.mrf.mxu0
        %v2431 = vadd.f32 0.0, %v2430
        %2432 = vmatmul.f32.gmra.mxu0 %v1841
        %v2433 = vpop.f32.mrf.mxu0
        %v2434 = vadd.f32 0.0, %v2433
        %2435 = vmatmul.f32.gmra.mxu0 %v1844
        %v2436 = vpop.f32.mrf.mxu0
        %v2437 = vadd.f32 0.0, %v2436
        %2438 = vmatmul.f32.gmra.mxu0 %v1847
        %v2439 = vpop.f32.mrf.mxu0
        %v2440 = vadd.f32 0.0, %v2439
        %2441 = vmatmul.f32.gmra.mxu0 %v1850
        %v2442 = vpop.f32.mrf.mxu0
        %v2443 = vadd.f32 0.0, %v2442
        %2444 = vmatmul.f32.gmra.mxu0 %v1853
        %v2445 = vpop.f32.mrf.mxu0
        %v2446 = vadd.f32 0.0, %v2445
        %2447 = vmatmul.f32.gmra.mxu0 %v1856
        %v2448 = vpop.f32.mrf.mxu0
        %v2449 = vadd.f32 0.0, %v2448
        %2450 = vmatmul.f32.gmra.mxu0 %v1859
        %v2451 = vpop.f32.mrf.mxu0
        %v2452 = vadd.f32 0.0, %v2451
        %2453 = vmatmul.f32.gmra.mxu0 %v1862
        %v2454 = vpop.f32.mrf.mxu0
        %v2455 = vadd.f32 0.0, %v2454
        %2456 = vmatmul.f32.gmra.mxu0 %v1865
        %v2457 = vpop.f32.mrf.mxu0
        %v2458 = vadd.f32 0.0, %v2457
        %2459 = vmatmul.f32.gmra.mxu0 %v1868
        %v2460 = vpop.f32.mrf.mxu0
        %v2461 = vadd.f32 0.0, %v2460
        %2462 = vmatmul.f32.gmra.mxu0 %v1871
        %v2463 = vpop.f32.mrf.mxu0
        %v2464 = vadd.f32 0.0, %v2463
        %2465 = vmatmul.f32.gmra.mxu0 %v1874
        %v2466 = vpop.f32.mrf.mxu0
        %v2467 = vadd.f32 0.0, %v2466
        %2468 = vmatmul.f32.gmra.mxu0 %v1877
        %v2469 = vpop.f32.mrf.mxu0
        %v2470 = vadd.f32 0.0, %v2469
        %2471 = vmatmul.f32.gmra.mxu0 %v1880
        %v2472 = vpop.f32.mrf.mxu0
        %v2473 = vadd.f32 0.0, %v2472
        %2474 = vmatmul.f32.gmra.mxu0 %v1883
        %v2475 = vpop.f32.mrf.mxu0
        %v2476 = vadd.f32 0.0, %v2475
        %2477 = vmatmul.f32.gmra.mxu0 %v1886
        %v2478 = vpop.f32.mrf.mxu0
        %v2479 = vadd.f32 0.0, %v2478
        %2480 = vmatmul.f32.gmra.mxu0 %v1889
        %v2481 = vpop.f32.mrf.mxu0
        %v2482 = vadd.f32 0.0, %v2481
        %2483 = vmatmul.f32.gmra.mxu0 %v1892
        %v2484 = vpop.f32.mrf.mxu0
        %v2485 = vadd.f32 0.0, %v2484
        %2486 = vmatmul.f32.gmra.mxu0 %v1895
        %v2487 = vpop.f32.mrf.mxu0
        %v2488 = vadd.f32 0.0, %v2487
        %2489 = vmatmul.f32.gmra.mxu0 %v1898
        %v2490 = vpop.f32.mrf.mxu0
        %v2491 = vadd.f32 0.0, %v2490
        %2492 = vmatmul.f32.gmra.mxu0 %v1901
        %v2493 = vpop.f32.mrf.mxu0
        %v2494 = vadd.f32 0.0, %v2493
        %2495 = vmatmul.f32.gmra.mxu0 %v1904
        %v2496 = vpop.f32.mrf.mxu0
        %v2497 = vadd.f32 0.0, %v2496
        %2498 = vmatmul.f32.gmra.mxu0 %v1907
        %v2499 = vpop.f32.mrf.mxu0
        %v2500 = vadd.f32 0.0, %v2499
        %2501 = vmatmul.f32.gmra.mxu0 %v1910
        %v2502 = vpop.f32.mrf.mxu0
        %v2503 = vadd.f32 0.0, %v2502
        %2504 = vmatmul.f32.gmra.mxu0 %v1913
        %v2505 = vpop.f32.mrf.mxu0
        %v2506 = vadd.f32 0.0, %v2505
        %2507 = vmatmul.f32.gmra.mxu0 %v1916
        %v2508 = vpop.f32.mrf.mxu0
        %v2509 = vadd.f32 0.0, %v2508
        %2510 = vmatmul.f32.gmra.mxu0 %v1919
        %v2511 = vpop.f32.mrf.mxu0
        %v2512 = vadd.f32 0.0, %v2511
        %2513 = vmatmul.f32.gmra.mxu0 %v1922
        %v2514 = vpop.f32.mrf.mxu0
        %v2515 = vadd.f32 0.0, %v2514
        %2516 = vmatmul.f32.gmra.mxu0 %v1925
        %v2517 = vpop.f32.mrf.mxu0
        %v2518 = vadd.f32 0.0, %v2517
        %2519 = vmatmul.f32.gmra.mxu0 %v1928
        %v2520 = vpop.f32.mrf.mxu0
        %v2521 = vadd.f32 0.0, %v2520
        %2522 = vmatmul.f32.gmra.mxu0 %v1931
        %v2523 = vpop.f32.mrf.mxu0
        %v2524 = vadd.f32 0.0, %v2523
        %2525 = vmatmul.f32.gmra.mxu0 %v1934
        %v2526 = vpop.f32.mrf.mxu0
        %v2527 = vadd.f32 0.0, %v2526
        %2528 = vmatmul.f32.gmra.mxu0 %v1937
        %v2529 = vpop.f32.mrf.mxu0
        %v2530 = vadd.f32 0.0, %v2529
        %2531 = vmatmul.f32.gmra.mxu0 %v1940
        %v2532 = vpop.f32.mrf.mxu0
        %v2533 = vadd.f32 0.0, %v2532
        %2534 = vmatmul.f32.gmra.mxu0 %v1943
        %v2535 = vpop.f32.mrf.mxu0
        %v2536 = vadd.f32 0.0, %v2535
        %2537 = vmatmul.f32.gmra.mxu0 %v1946
        %v2538 = vpop.f32.mrf.mxu0
        %v2539 = vadd.f32 0.0, %v2538
        %2540 = vmatmul.f32.gmra.mxu0 %v1949
        %v2541 = vpop.f32.mrf.mxu0
        %v2542 = vadd.f32 0.0, %v2541
        %2543 = vmatmul.f32.gmra.mxu0 %v1952
        %v2544 = vpop.f32.mrf.mxu0
        %v2545 = vadd.f32 0.0, %v2544
        %2546 = vmatmul.f32.gmra.mxu0 %v1955
        %v2547 = vpop.f32.mrf.mxu0
        %v2548 = vadd.f32 0.0, %v2547
        %2549 = vmatmul.f32.gmra.mxu0 %v1958
        %v2550 = vpop.f32.mrf.mxu0
        %v2551 = vadd.f32 0.0, %v2550
        %2552 = vmatmul.f32.gmra.mxu0 %v1961
        %v2553 = vpop.f32.mrf.mxu0
        %v2554 = vadd.f32 0.0, %v2553
        %2555 = vmatmul.f32.gmra.mxu0 %v1964
        %v2556 = vpop.f32.mrf.mxu0
        %v2557 = vadd.f32 0.0, %v2556
        %2558 = vmatmul.f32.gmra.mxu0 %v1967
        %v2559 = vpop.f32.mrf.mxu0
        %v2560 = vadd.f32 0.0, %v2559
        %2561 = vmatmul.f32.gmra.mxu0 %v1970
        %v2562 = vpop.f32.mrf.mxu0
        %v2563 = vadd.f32 0.0, %v2562
        %2564 = vmatmul.f32.gmra.mxu0 %v1973
        %v2565 = vpop.f32.mrf.mxu0
        %v2566 = vadd.f32 0.0, %v2565
        %2567 = vmatmul.f32.gmra.mxu0 %v1976
        %v2568 = vpop.f32.mrf.mxu0
        %v2569 = vadd.f32 0.0, %v2568
        %2570 = vmatmul.f32.gmra.mxu0 %v1979
        %v2571 = vpop.f32.mrf.mxu0
        %v2572 = vadd.f32 0.0, %v2571
        %2573 = vmatmul.f32.gmra.mxu0 %v1982
        %v2574 = vpop.f32.mrf.mxu0
        %v2575 = vadd.f32 0.0, %v2574
        %2576 = vmatmul.f32.gmra.mxu0 %v1985
        %v2577 = vpop.f32.mrf.mxu0
        %v2578 = vadd.f32 0.0, %v2577
        %2579 = vmatmul.f32.gmra.mxu0 %v1988
        %v2580 = vpop.f32.mrf.mxu0
        %v2581 = vadd.f32 0.0, %v2580
        %2582 = vmatmul.f32.gmra.mxu0 %v1991
        %v2583 = vpop.f32.mrf.mxu0
        %v2584 = vadd.f32 0.0, %v2583
        %2585 = vmatmul.f32.gmra.mxu0 %v1994
        %v2586 = vpop.f32.mrf.mxu0
        %v2587 = vadd.f32 0.0, %v2586
        %2588 = vmatmul.f32.gmra.mxu0 %v1997
        %v2589 = vpop.f32.mrf.mxu0
        %v2590 = vadd.f32 0.0, %v2589
        %2591 = vmatmul.f32.gmra.mxu0 %v2000
        %v2592 = vpop.f32.mrf.mxu0
        %v2593 = vadd.f32 0.0, %v2592
        %2594 = vmatmul.f32.gmra.mxu0 %v2003
        %v2595 = vpop.f32.mrf.mxu0
        %v2596 = vadd.f32 0.0, %v2595
        %2597 = vmatmul.f32.gmra.mxu0 %v2006
        %v2598 = vpop.f32.mrf.mxu0
        %v2599 = vadd.f32 0.0, %v2598
        %2600 = vmatmul.f32.gmra.mxu0 %v2009
        %v2601 = vpop.f32.mrf.mxu0
        %v2602 = vadd.f32 0.0, %v2601
        %2603 = vmatmul.f32.gmra.mxu0 %v2012
        %v2604 = vpop.f32.mrf.mxu0
        %v2605 = vadd.f32 0.0, %v2604
        %2606 = vmatmul.f32.gmra.mxu0 %v2015
        %v2607 = vpop.f32.mrf.mxu0
        %v2608 = vadd.f32 0.0, %v2607
        %2609 = vmatmul.f32.gmra.mxu0 %v2018
        %v2610 = vpop.f32.mrf.mxu0
        %v2611 = vadd.f32 0.0, %v2610
        %2612 = vmatmul.f32.gmra.mxu0 %v2021
        %v2613 = vpop.f32.mrf.mxu0
        %v2614 = vadd.f32 0.0, %v2613
        %2615 = vmatmul.f32.gmra.mxu0 %v2024
        %v2616 = vpop.f32.mrf.mxu0
        %v2617 = vadd.f32 0.0, %v2616
        %2618 = vmatmul.f32.gmra.mxu0 %v2027
        %v2619 = vpop.f32.mrf.mxu0
        %v2620 = vadd.f32 0.0, %v2619
        %2621 = vmatmul.f32.gmra.mxu0 %v2030
        %v2622 = vpop.f32.mrf.mxu0
        %v2623 = vadd.f32 0.0, %v2622
        %2624 = vmatmul.f32.gmra.mxu0 %v2033
        %v2625 = vpop.f32.mrf.mxu0
        %v2626 = vadd.f32 0.0, %v2625
        %2627 = vmatmul.f32.gmra.mxu0 %v2036
        %v2628 = vpop.f32.mrf.mxu0
        %v2629 = vadd.f32 0.0, %v2628
        %2630 = vmatmul.f32.gmra.mxu0 %v2039
        %v2631 = vpop.f32.mrf.mxu0
        %v2632 = vadd.f32 0.0, %v2631
        %2633 = vmatmul.f32.gmra.mxu0 %v2042
        %v2634 = vpop.f32.mrf.mxu0
        %v2635 = vadd.f32 0.0, %v2634
        %2636 = vmatmul.f32.gmra.mxu0 %v2045
        %v2637 = vpop.f32.mrf.mxu0
        %v2638 = vadd.f32 0.0, %v2637
        %2639 = vmatmul.f32.gmra.mxu0 %v2048
        %v2640 = vpop.f32.mrf.mxu0
        %v2641 = vadd.f32 0.0, %v2640
        %2642 = vmatmul.f32.gmra.mxu0 %v2051
        %v2643 = vpop.f32.mrf.mxu0
        %v2644 = vadd.f32 0.0, %v2643
        %2645 = vmatmul.f32.gmra.mxu0 %v2054
        %v2646 = vpop.f32.mrf.mxu0
        %v2647 = vadd.f32 0.0, %v2646
        %2648 = vmatmul.f32.gmra.mxu0 %v2057
        %v2649 = vpop.f32.mrf.mxu0
        %v2650 = vadd.f32 0.0, %v2649
        %2651 = vmatmul.f32.gmra.mxu0 %v2060
        %v2652 = vpop.f32.mrf.mxu0
        %v2653 = vadd.f32 0.0, %v2652
        %2654 = vmatmul.f32.gmra.mxu0 %v2063
        %v2655 = vpop.f32.mrf.mxu0
        %v2656 = vadd.f32 0.0, %v2655
        %2657 = vmatmul.f32.gmra.mxu0 %v2066
        %v2658 = vpop.f32.mrf.mxu0
        %v2659 = vadd.f32 0.0, %v2658
        %2660 = vmatmul.f32.gmra.mxu0 %v2069
        %v2661 = vpop.f32.mrf.mxu0
        %v2662 = vadd.f32 0.0, %v2661
        %2663 = vmatmul.f32.gmra.mxu0 %v2072
        %v2664 = vpop.f32.mrf.mxu0
        %v2665 = vadd.f32 0.0, %v2664
        %2666 = vmatmul.f32.gmra.mxu0 %v2075
        %v2667 = vpop.f32.mrf.mxu0
        %v2668 = vadd.f32 0.0, %v2667
        %2669 = vmatmul.f32.gmra.mxu0 %v2078
        %v2670 = vpop.f32.mrf.mxu0
        %v2671 = vadd.f32 0.0, %v2670
        %2672 = vmatmul.f32.gmra.mxu0 %v2081
        %v2673 = vpop.f32.mrf.mxu0
        %v2674 = vadd.f32 0.0, %v2673
        %2675 = vmatmul.f32.gmra.mxu0 %v2084
        %v2676 = vpop.f32.mrf.mxu0
        %v2677 = vadd.f32 0.0, %v2676
        %2678 = vmatmul.f32.gmra.mxu0 %v2087
        %v2679 = vpop.f32.mrf.mxu0
        %v2680 = vadd.f32 0.0, %v2679
        %2681 = vmatmul.f32.gmra.mxu0 %v2090
        %v2682 = vpop.f32.mrf.mxu0
        %v2683 = vadd.f32 0.0, %v2682
        %2684 = vmatmul.f32.gmra.mxu0 %v2093
        %v2685 = vpop.f32.mrf.mxu0
        %v2686 = vadd.f32 0.0, %v2685
        %2687 = vmatmul.f32.gmra.mxu0 %v2096
        %v2688 = vpop.f32.mrf.mxu0
        %v2689 = vadd.f32 0.0, %v2688
        %2690 = vmatmul.f32.gmra.mxu0 %v2099
        %v2691 = vpop.f32.mrf.mxu0
        %v2692 = vadd.f32 0.0, %v2691
        %2693 = vmatmul.f32.gmra.mxu0 %v2102
        %v2694 = vpop.f32.mrf.mxu0
        %v2695 = vadd.f32 0.0, %v2694
        %2696 = vmatmul.f32.gmra.mxu0 %v2105
        %v2697 = vpop.f32.mrf.mxu0
        %v2698 = vadd.f32 0.0, %v2697
        %2699 = vmatmul.f32.gmra.mxu0 %v2108
        %v2700 = vpop.f32.mrf.mxu0
        %v2701 = vadd.f32 0.0, %v2700
        %2702 = vmatmul.f32.gmra.mxu0 %v2111
        %v2703 = vpop.f32.mrf.mxu0
        %v2704 = vadd.f32 0.0, %v2703
        %2705 = vmatmul.f32.gmra.mxu0 %v2114
        %v2706 = vpop.f32.mrf.mxu0
        %v2707 = vadd.f32 0.0, %v2706
        %2708 = vmatmul.f32.gmra.mxu0 %v2117
        %v2709 = vpop.f32.mrf.mxu0
        %v2710 = vadd.f32 0.0, %v2709
        %2711 = vmatmul.f32.gmra.mxu0 %v2120
        %v2712 = vpop.f32.mrf.mxu0
        %v2713 = vadd.f32 0.0, %v2712
        %2714 = vmatmul.f32.gmra.mxu0 %v2123
        %v2715 = vpop.f32.mrf.mxu0
        %v2716 = vadd.f32 0.0, %v2715
        %2717 = vmatmul.f32.gmra.mxu0 %v2126
        %v2718 = vpop.f32.mrf.mxu0
        %v2719 = vadd.f32 0.0, %v2718
        %2720 = vmatmul.f32.gmra.mxu0 %v2129
        %v2721 = vpop.f32.mrf.mxu0
        %v2722 = vadd.f32 0.0, %v2721
        %2723 = vmatmul.f32.gmra.mxu0 %v2132
        %v2724 = vpop.f32.mrf.mxu0
        %v2725 = vadd.f32 0.0, %v2724
        %2726 = vmatmul.f32.gmra.mxu0 %v2135
        %v2727 = vpop.f32.mrf.mxu0
        %v2728 = vadd.f32 0.0, %v2727
        %2729 = vmatmul.f32.gmra.mxu0 %v2138
        %v2730 = vpop.f32.mrf.mxu0
        %v2731 = vadd.f32 0.0, %v2730
        %2732 = vmatmul.f32.gmra.mxu0 %v2141
        %v2733 = vpop.f32.mrf.mxu0
        %v2734 = vadd.f32 0.0, %v2733
        %2735 = vmatmul.f32.gmra.mxu0 %v2144
        %v2736 = vpop.f32.mrf.mxu0
        %v2737 = vadd.f32 0.0, %v2736
        %2738 = vmatmul.f32.gmra.mxu0 %v2147
        %v2739 = vpop.f32.mrf.mxu0
        %v2740 = vadd.f32 0.0, %v2739
        %2741 = vmatmul.f32.gmra.mxu0 %v2150
        %v2742 = vpop.f32.mrf.mxu0
        %v2743 = vadd.f32 0.0, %v2742
        %2744 = vmatmul.f32.gmra.mxu0 %v2153
        %v2745 = vpop.f32.mrf.mxu0
        %v2746 = vadd.f32 0.0, %v2745
        %2747 = vmatmul.f32.gmra.mxu0 %v2156
        %v2748 = vpop.f32.mrf.mxu0
        %v2749 = vadd.f32 0.0, %v2748
        %2750 = vmatmul.f32.gmra.mxu0 %v2159
        %v2751 = vpop.f32.mrf.mxu0
        %v2752 = vadd.f32 0.0, %v2751
        %2753 = vmatmul.f32.gmra.mxu0 %v2162
        %v2754 = vpop.f32.mrf.mxu0
        %v2755 = vadd.f32 0.0, %v2754
        %2756 = vmatmul.f32.gmra.mxu0 %v2165
        %v2757 = vpop.f32.mrf.mxu0
        %v2758 = vadd.f32 0.0, %v2757
        %2759 = vmatmul.f32.gmra.mxu0 %v2168
        %v2760 = vpop.f32.mrf.mxu0
        %v2761 = vadd.f32 0.0, %v2760
        %2762 = vmatmul.f32.gmra.mxu0 %v2171
        %v2763 = vpop.f32.mrf.mxu0
        %v2764 = vadd.f32 0.0, %v2763
        %2765 = vmatmul.f32.gmra.mxu0 %v2174
        %v2766 = vpop.f32.mrf.mxu0
        %v2767 = vadd.f32 0.0, %v2766
        %2768 = vmatmul.f32.gmra.mxu0 %v2177
        %v2769 = vpop.f32.mrf.mxu0
        %v2770 = vadd.f32 0.0, %v2769
        %2771 = vmatmul.f32.gmra.mxu0 %v2180
        %v2772 = vpop.f32.mrf.mxu0
        %v2773 = vadd.f32 0.0, %v2772
        %2774 = vmatmul.f32.gmra.mxu0 %v2183
        %v2775 = vpop.f32.mrf.mxu0
        %v2776 = vadd.f32 0.0, %v2775
        %2777 = vmatmul.f32.gmra.mxu0 %v2186
        %v2778 = vpop.f32.mrf.mxu0
        %v2779 = vadd.f32 0.0, %v2778
        %2780 = vmatmul.f32.gmra.mxu0 %v2189
        %v2781 = vpop.f32.mrf.mxu0
        %v2782 = vadd.f32 0.0, %v2781
        %2783 = vmatmul.f32.gmra.mxu0 %v2192
        %v2784 = vpop.f32.mrf.mxu0
        %v2785 = vadd.f32 0.0, %v2784
        %2786 = vmatmul.f32.gmra.mxu0 %v2195
        %v2787 = vpop.f32.mrf.mxu0
        %v2788 = vadd.f32 0.0, %v2787
        %2789 = vmatmul.f32.gmra.mxu0 %v2198
        %v2790 = vpop.f32.mrf.mxu0
        %v2791 = vadd.f32 0.0, %v2790
        %2792 = vmatmul.f32.gmra.mxu0 %v2201
        %v2793 = vpop.f32.mrf.mxu0
        %v2794 = vadd.f32 0.0, %v2793
        %2795 = vmatmul.f32.gmra.mxu0 %v2204
        %v2796 = vpop.f32.mrf.mxu0
        %v2797 = vadd.f32 0.0, %v2796
        %2798 = vmatmul.f32.gmra.mxu0 %v2207
        %v2799 = vpop.f32.mrf.mxu0
        %v2800 = vadd.f32 0.0, %v2799
        %2801 = vmatmul.f32.gmra.mxu0 %v2210
        %v2802 = vpop.f32.mrf.mxu0
        %v2803 = vadd.f32 0.0, %v2802
        %2804 = vmatmul.f32.gmra.mxu0 %v2213
        %v2805 = vpop.f32.mrf.mxu0
        %v2806 = vadd.f32 0.0, %v2805
        %2807 = vmatmul.f32.gmra.mxu0 %v2216
        %v2808 = vpop.f32.mrf.mxu0
        %v2809 = vadd.f32 0.0, %v2808
        %2810 = vmatmul.f32.gmra.mxu0 %v2219
        %v2811 = vpop.f32.mrf.mxu0
        %v2812 = vadd.f32 0.0, %v2811
        %2813 = vmatmul.f32.gmra.mxu0 %v2222
        %v2814 = vpop.f32.mrf.mxu0
        %v2815 = vadd.f32 0.0, %v2814
        %2816 = vmatmul.f32.gmra.mxu0 %v2225
        %v2817 = vpop.f32.mrf.mxu0
        %v2818 = vadd.f32 0.0, %v2817
        %2819 = vmatmul.f32.gmra.mxu0 %v2228
        %v2820 = vpop.f32.mrf.mxu0
        %v2821 = vadd.f32 0.0, %v2820
        %2822 = vmatmul.f32.gmra.mxu0 %v2231
        %v2823 = vpop.f32.mrf.mxu0
        %v2824 = vadd.f32 0.0, %v2823
        %2825 = vmatmul.f32.gmra.mxu0 %v2234
        %v2826 = vpop.f32.mrf.mxu0
        %v2827 = vadd.f32 0.0, %v2826
        %2828 = vmatmul.f32.gmra.mxu0 %v2237
        %v2829 = vpop.f32.mrf.mxu0
        %v2830 = vadd.f32 0.0, %v2829
        %2831 = vmatmul.f32.gmra.mxu0 %v2240
        %v2832 = vpop.f32.mrf.mxu0
        %v2833 = vadd.f32 0.0, %v2832
        %2834 = vmatmul.f32.gmra.mxu0 %v2243
        %v2835 = vpop.f32.mrf.mxu0
        %v2836 = vadd.f32 0.0, %v2835
        %2837 = vmatmul.f32.gmra.mxu0 %v2246
        %v2838 = vpop.f32.mrf.mxu0
        %v2839 = vadd.f32 0.0, %v2838
        %2840 = vmatmul.f32.gmra.mxu0 %v2249
        %v2841 = vpop.f32.mrf.mxu0
        %v2842 = vadd.f32 0.0, %v2841
        %2843 = vmatmul.f32.gmra.mxu0 %v2252
        %v2844 = vpop.f32.mrf.mxu0
        %v2845 = vadd.f32 0.0, %v2844
        %2846 = vmatmul.f32.gmra.mxu0 %v2255
        %v2847 = vpop.f32.mrf.mxu0
        %v2848 = vadd.f32 0.0, %v2847
        %2849 = vmatmul.f32.gmra.mxu0 %v2258
        %v2850 = vpop.f32.mrf.mxu0
        %v2851 = vadd.f32 0.0, %v2850
        %2852 = vmatmul.f32.gmra.mxu0 %v2261
        %v2853 = vpop.f32.mrf.mxu0
        %v2854 = vadd.f32 0.0, %v2853
        %2855 = vmatmul.f32.gmra.mxu0 %v2264
        %v2856 = vpop.f32.mrf.mxu0
        %v2857 = vadd.f32 0.0, %v2856
        %2858 = vmatmul.f32.gmra.mxu0 %v2267
        %v2859 = vpop.f32.mrf.mxu0
        %v2860 = vadd.f32 0.0, %v2859
        %2861 = vmatmul.f32.gmra.mxu0 %v2270
        %v2862 = vpop.f32.mrf.mxu0
        %v2863 = vadd.f32 0.0, %v2862
        %2864 = vmatmul.f32.gmra.mxu0 %v2273
        %v2865 = vpop.f32.mrf.mxu0
        %v2866 = vadd.f32 0.0, %v2865
        %2867 = vmatmul.f32.gmra.mxu0 %v2276
        %v2868 = vpop.f32.mrf.mxu0
        %v2869 = vadd.f32 0.0, %v2868
        %2870 = vmatmul.f32.gmra.mxu0 %v2279
        %v2871 = vpop.f32.mrf.mxu0
        %v2872 = vadd.f32 0.0, %v2871
        %2873 = vmatmul.f32.gmra.mxu0 %v2282
        %v2874 = vpop.f32.mrf.mxu0
        %v2875 = vadd.f32 0.0, %v2874
        %2876 = vmatmul.f32.gmra.mxu0 %v2285
        %v2877 = vpop.f32.mrf.mxu0
        %v2878 = vadd.f32 0.0, %v2877
        %2879 = vmatmul.f32.gmra.mxu0 %v2288
        %v2880 = vpop.f32.mrf.mxu0
        %v2881 = vadd.f32 0.0, %v2880
        %2882 = vmatmul.f32.gmra.mxu0 %v2291
        %v2883 = vpop.f32.mrf.mxu0
        %v2884 = vadd.f32 0.0, %v2883
        %2885 = vmatmul.f32.gmra.mxu0 %v2294
        %v2886 = vpop.f32.mrf.mxu0
        %v2887 = vadd.f32 0.0, %v2886
        %2888 = vmatmul.f32.gmra.mxu0 %v2297
        %v2889 = vpop.f32.mrf.mxu0
        %v2890 = vadd.f32 0.0, %v2889
        %2891 = vmatmul.f32.gmra.mxu0 %v2300
        %v2892 = vpop.f32.mrf.mxu0
        %v2893 = vadd.f32 0.0, %v2892
        %2894 = vmatmul.f32.gmra.mxu0 %v2303
        %v2895 = vpop.f32.mrf.mxu0
        %v2896 = vadd.f32 0.0, %v2895
        %2897 = vmatmul.f32.gmra.mxu0 %v2306
        %v2898 = vpop.f32.mrf.mxu0
        %v2899 = vadd.f32 0.0, %v2898
        %2900 = vmatmul.f32.gmra.mxu0 %v2309
        %v2901 = vpop.f32.mrf.mxu0
        %v2902 = vadd.f32 0.0, %v2901
        %2903 = vmatmul.f32.gmra.mxu0 %v2312
        %v2904 = vpop.f32.mrf.mxu0
        %v2905 = vadd.f32 0.0, %v2904
        %2906 = vmatmul.f32.gmra.mxu0 %v2315
        %v2907 = vpop.f32.mrf.mxu0
        %v2908 = vadd.f32 0.0, %v2907
        %2909 = vmatmul.f32.gmra.mxu0 %v2318
        %v2910 = vpop.f32.mrf.mxu0
        %v2911 = vadd.f32 0.0, %v2910
        %2912 = vmatmul.f32.gmra.mxu0 %v2321
        %v2913 = vpop.f32.mrf.mxu0
        %v2914 = vadd.f32 0.0, %v2913
        %2915 = vmatmul.f32.gmra.mxu0 %v2324
        %v2916 = vpop.f32.mrf.mxu0
        %v2917 = vadd.f32 0.0, %v2916
        %2918 = vmatmul.f32.gmra.mxu0 %v2327
        %v2919 = vpop.f32.mrf.mxu0
        %v2920 = vadd.f32 0.0, %v2919
        %2921 = vmatmul.f32.gmra.mxu0 %v2330
        %v2922 = vpop.f32.mrf.mxu0
        %v2923 = vadd.f32 0.0, %v2922
        %2924 = vmatmul.f32.gmra.mxu0 %v2333
        %v2925 = vpop.f32.mrf.mxu0
        %v2926 = vadd.f32 0.0, %v2925
        %2927 = vmatmul.f32.gmra.mxu0 %v2336
        %v2928 = vpop.f32.mrf.mxu0
        %v2929 = vadd.f32 0.0, %v2928
        %2930 = vmatmul.f32.gmra.mxu0 %v2339
        %v2931 = vpop.f32.mrf.mxu0
        %v2932 = vadd.f32 0.0, %v2931
        %2933 = vmatmul.f32.gmra.mxu0 %v2342
        %v2934 = vpop.f32.mrf.mxu0
        %v2935 = vadd.f32 0.0, %v2934
        %2936 = vmatmul.f32.gmra.mxu0 %v2345
        %v2937 = vpop.f32.mrf.mxu0
        %v2938 = vadd.f32 0.0, %v2937
        %2939 = vmatmul.f32.gmra.mxu0 %v2348
        %v2940 = vpop.f32.mrf.mxu0
        %v2941 = vadd.f32 0.0, %v2940
        %2942 = vmatmul.f32.gmra.mxu0 %v2351
        %v2943 = vpop.f32.mrf.mxu0
        %v2944 = vadd.f32 0.0, %v2943
        %2945 = vmatmul.f32.gmra.mxu0 %v2354
        %v2946 = vpop.f32.mrf.mxu0
        %v2947 = vadd.f32 0.0, %v2946
        %2948 = vmatmul.f32.gmra.mxu0 %v2357
        %v2949 = vpop.f32.mrf.mxu0
        %v2950 = vadd.f32 0.0, %v2949
        %2951 = vmatmul.f32.gmra.mxu0 %v2360
        %v2952 = vpop.f32.mrf.mxu0
        %v2953 = vadd.f32 0.0, %v2952
        %2954 = vmatmul.f32.gmra.mxu0 %v2363
        %v2955 = vpop.f32.mrf.mxu0
        %v2956 = vadd.f32 0.0, %v2955
        %2957 = vmatmul.f32.gmra.mxu0 %v2366
        %v2958 = vpop.f32.mrf.mxu0
        %v2959 = vadd.f32 0.0, %v2958
        %2960 = vmatmul.f32.gmra.mxu0 %v2369
        %v2961 = vpop.f32.mrf.mxu0
        %v2962 = vadd.f32 0.0, %v2961
        %2963 = vmatmul.f32.gmra.mxu0 %v2372
        %v2964 = vpop.f32.mrf.mxu0
        %v2965 = vadd.f32 0.0, %v2964
        %2966 = vmatmul.f32.gmra.mxu0 %v2375
        %v2967 = vpop.f32.mrf.mxu0
        %v2968 = vadd.f32 0.0, %v2967
        %2969 = vmatmul.f32.gmra.mxu0 %v2378
        %v2970 = vpop.f32.mrf.mxu0
        %v2971 = vadd.f32 0.0, %v2970
        %2972 = vmatmul.f32.gmra.mxu0 %v2381
        %v2973 = vpop.f32.mrf.mxu0
        %v2974 = vadd.f32 0.0, %v2973
        %2975 = vdwg.mxu0
        %v3168 = vrot.slane %v2401, 4
        %v3169 = vrot.slane %v2404, 4
        %v3170 = vrot.slane %v2407, 4
        %v3171 = vrot.slane %v2410, 4
        %v3172 = vrot.slane %v2413, 4
        %v3173 = vrot.slane %v2416, 4
        %v3174 = vrot.slane %v2419, 4
        %v3175 = vrot.slane %v2422, 4
        %v3176 = vrot.slane %v2425, 4
        %v3177 = vrot.slane %v2428, 4
        %v3178 = vrot.slane %v2431, 4
        %v3179 = vrot.slane %v2434, 4
        %v3180 = vrot.slane %v2437, 4
        %v3181 = vrot.slane %v2440, 4
        %v3182 = vrot.slane %v2443, 4
        %v3183 = vrot.slane %v2446, 4
        %v3184 = vrot.slane %v2449, 4
        %v3185 = vrot.slane %v2452, 4
        %v3186 = vrot.slane %v2455, 4
        %v3187 = vrot.slane %v2458, 4
        %v3188 = vrot.slane %v2461, 4
        %v3189 = vrot.slane %v2464, 4
        %v3190 = vrot.slane %v2467, 4
        %v3191 = vrot.slane %v2470, 4
        %v3192 = vrot.slane %v2473, 4
        %v3193 = vrot.slane %v2476, 4
        %v3194 = vrot.slane %v2479, 4
        %v3195 = vrot.slane %v2482, 4
        %v3196 = vrot.slane %v2485, 4
        %v3197 = vrot.slane %v2488, 4
        %v3198 = vrot.slane %v2491, 4
        %v3199 = vrot.slane %v2494, 4
        %v3200 = vrot.slane %v2497, 4
        %v3201 = vrot.slane %v2500, 4
        %v3202 = vrot.slane %v2503, 4
        %v3203 = vrot.slane %v2506, 4
        %v3204 = vrot.slane %v2509, 4
        %v3205 = vrot.slane %v2512, 4
        %v3206 = vrot.slane %v2515, 4
        %v3207 = vrot.slane %v2518, 4
        %v3208 = vrot.slane %v2521, 4
        %v3209 = vrot.slane %v2524, 4
        %v3210 = vrot.slane %v2527, 4
        %v3211 = vrot.slane %v2530, 4
        %v3212 = vrot.slane %v2533, 4
        %v3213 = vrot.slane %v2536, 4
        %v3214 = vrot.slane %v2539, 4
        %v3215 = vrot.slane %v2542, 4
        %v3216 = vrot.slane %v2545, 4
        %v3217 = vrot.slane %v2548, 4
        %v3218 = vrot.slane %v2551, 4
        %v3219 = vrot.slane %v2554, 4
        %v3220 = vrot.slane %v2557, 4
        %v3221 = vrot.slane %v2560, 4
        %v3222 = vrot.slane %v2563, 4
        %v3223 = vrot.slane %v2566, 4
        %v3224 = vrot.slane %v2569, 4
        %v3225 = vrot.slane %v2572, 4
        %v3226 = vrot.slane %v2575, 4
        %v3227 = vrot.slane %v2578, 4
        %v3228 = vrot.slane %v2581, 4
        %v3229 = vrot.slane %v2584, 4
        %v3230 = vrot.slane %v2587, 4
        %v3231 = vrot.slane %v2590, 4
        %v3232 = vrot.slane %v2593, 4
        %v3233 = vrot.slane %v2596, 4
        %v3234 = vrot.slane %v2599, 4
        %v3235 = vrot.slane %v2602, 4
        %v3236 = vrot.slane %v2605, 4
        %v3237 = vrot.slane %v2608, 4
        %v3238 = vrot.slane %v2611, 4
        %v3239 = vrot.slane %v2614, 4
        %v3240 = vrot.slane %v2617, 4
        %v3241 = vrot.slane %v2620, 4
        %v3242 = vrot.slane %v2623, 4
        %v3243 = vrot.slane %v2626, 4
        %v3244 = vrot.slane %v2629, 4
        %v3245 = vrot.slane %v2632, 4
        %v3246 = vrot.slane %v2635, 4
        %v3247 = vrot.slane %v2638, 4
        %v3248 = vrot.slane %v2641, 4
        %v3249 = vrot.slane %v2644, 4
        %v3250 = vrot.slane %v2647, 4
        %v3251 = vrot.slane %v2650, 4
        %v3252 = vrot.slane %v2653, 4
        %v3253 = vrot.slane %v2656, 4
        %v3254 = vrot.slane %v2659, 4
        %v3255 = vrot.slane %v2662, 4
        %v3256 = vrot.slane %v2665, 4
        %v3257 = vrot.slane %v2668, 4
        %v3258 = vrot.slane %v2671, 4
        %v3259 = vrot.slane %v2674, 4
        %v3260 = vrot.slane %v2677, 4
        %v3261 = vrot.slane %v2680, 4
        %v3262 = vrot.slane %v2683, 4
        %v3263 = vrot.slane %v2686, 4
        %v3264 = vrot.slane %v2689, 4
        %v3265 = vrot.slane %v2692, 4
        %v3266 = vrot.slane %v2695, 4
        %v3267 = vrot.slane %v2698, 4
        %v3268 = vrot.slane %v2701, 4
        %v3269 = vrot.slane %v2704, 4
        %v3270 = vrot.slane %v2707, 4
        %v3271 = vrot.slane %v2710, 4
        %v3272 = vrot.slane %v2713, 4
        %v3273 = vrot.slane %v2716, 4
        %v3274 = vrot.slane %v2719, 4
        %v3275 = vrot.slane %v2722, 4
        %v3276 = vrot.slane %v2725, 4
        %v3277 = vrot.slane %v2728, 4
        %v3278 = vrot.slane %v2731, 4
        %v3279 = vrot.slane %v2734, 4
        %v3280 = vrot.slane %v2737, 4
        %v3281 = vrot.slane %v2740, 4
        %v3282 = vrot.slane %v2743, 4
        %v3283 = vrot.slane %v2746, 4
        %v3284 = vrot.slane %v2749, 4
        %v3285 = vrot.slane %v2752, 4
        %v3286 = vrot.slane %v2755, 4
        %v3287 = vrot.slane %v2758, 4
        %v3288 = vrot.slane %v2761, 4
        %v3289 = vrot.slane %v2764, 4
        %v3290 = vrot.slane %v2767, 4
        %v3291 = vrot.slane %v2770, 4
        %v3292 = vrot.slane %v2773, 4
        %v3293 = vrot.slane %v2776, 4
        %v3294 = vrot.slane %v2779, 4
        %v3295 = vrot.slane %v2782, 4
        %v3296 = vrot.slane %v2785, 4
        %v3297 = vrot.slane %v2788, 4
        %v3298 = vrot.slane %v2791, 4
        %v3299 = vrot.slane %v2794, 4
        %v3300 = vrot.slane %v2797, 4
        %v3301 = vrot.slane %v2800, 4
        %v3302 = vrot.slane %v2803, 4
        %v3303 = vrot.slane %v2806, 4
        %v3304 = vrot.slane %v2809, 4
        %v3305 = vrot.slane %v2812, 4
        %v3306 = vrot.slane %v2815, 4
        %v3307 = vrot.slane %v2818, 4
        %v3308 = vrot.slane %v2821, 4
        %v3309 = vrot.slane %v2824, 4
        %v3310 = vrot.slane %v2827, 4
        %v3311 = vrot.slane %v2830, 4
        %v3312 = vrot.slane %v2833, 4
        %v3313 = vrot.slane %v2836, 4
        %v3314 = vrot.slane %v2839, 4
        %v3315 = vrot.slane %v2842, 4
        %v3316 = vrot.slane %v2845, 4
        %v3317 = vrot.slane %v2848, 4
        %v3318 = vrot.slane %v2851, 4
        %v3319 = vrot.slane %v2854, 4
        %v3320 = vrot.slane %v2857, 4
        %v3321 = vrot.slane %v2860, 4
        %v3322 = vrot.slane %v2863, 4
        %v3323 = vrot.slane %v2866, 4
        %v3324 = vrot.slane %v2869, 4
        %v3325 = vrot.slane %v2872, 4
        %v3326 = vrot.slane %v2875, 4
        %v3327 = vrot.slane %v2878, 4
        %v3328 = vrot.slane %v2881, 4
        %v3329 = vrot.slane %v2884, 4
        %v3330 = vrot.slane %v2887, 4
        %v3331 = vrot.slane %v2890, 4
        %v3332 = vrot.slane %v2893, 4
        %v3333 = vrot.slane %v2896, 4
        %v3334 = vrot.slane %v2899, 4
        %v3335 = vrot.slane %v2902, 4
        %v3336 = vrot.slane %v2905, 4
        %v3337 = vrot.slane %v2908, 4
        %v3338 = vrot.slane %v2911, 4
        %v3339 = vrot.slane %v2914, 4
        %v3340 = vrot.slane %v2917, 4
        %v3341 = vrot.slane %v2920, 4
        %v3342 = vrot.slane %v2923, 4
        %v3343 = vrot.slane %v2926, 4
        %v3344 = vrot.slane %v2929, 4
        %v3345 = vrot.slane %v2932, 4
        %v3346 = vrot.slane %v2935, 4
        %v3347 = vrot.slane %v2938, 4
        %v3348 = vrot.slane %v2941, 4
        %v3349 = vrot.slane %v2944, 4
        %v3350 = vrot.slane %v2947, 4
        %v3351 = vrot.slane %v2950, 4
        %v3352 = vrot.slane %v2953, 4
        %v3353 = vrot.slane %v2956, 4
        %v3354 = vrot.slane %v2959, 4
        %v3355 = vrot.slane %v2962, 4
        %v3356 = vrot.slane %v2965, 4
        %v3357 = vrot.slane %v2968, 4
        %v3358 = vrot.slane %v2971, 4
        %v3359 = vrot.slane %v2974, 4
        %v3568 = vrot.slane %v600, 1
        %v3569 = vrot.slane %v600, 2
        %v3570 = vrot.slane %v600, 3
        %v3571 = vrot.slane %v600, 4
        %v3572 = vrot.slane %v600, 5
        %v3573 = vrot.slane %v600, 6
        %v3574 = vrot.slane %v600, 7
        %v3575 = vrot.slane %v603, 1
        %v3576 = vrot.slane %v603, 2
        %v3577 = vrot.slane %v603, 3
        %v3578 = vrot.slane %v603, 4
        %v3579 = vrot.slane %v603, 5
        %v3580 = vrot.slane %v603, 6
        %v3581 = vrot.slane %v603, 7
        %v3582 = vrot.slane %v606, 1
        %v3583 = vrot.slane %v606, 2
        %v3584 = vrot.slane %v606, 3
        %v3585 = vrot.slane %v606, 4
        %v3586 = vrot.slane %v606, 5
        %v3587 = vrot.slane %v606, 6
        %v3588 = vrot.slane %v606, 7
        %v3589 = vrot.slane %v609, 1
        %v3590 = vrot.slane %v609, 2
        %v3591 = vrot.slane %v609, 3
        %v3592 = vrot.slane %v609, 4
        %v3593 = vrot.slane %v609, 5
        %v3594 = vrot.slane %v609, 6
        %v3595 = vrot.slane %v609, 7
        %v3596 = vrot.slane %v612, 1
        %v3597 = vrot.slane %v612, 2
        %v3598 = vrot.slane %v612, 3
        %v3599 = vrot.slane %v612, 4
        %v3600 = vrot.slane %v612, 5
        %v3601 = vrot.slane %v612, 6
        %v3602 = vrot.slane %v612, 7
        %v3603 = vrot.slane %v615, 1
        %v3604 = vrot.slane %v615, 2
        %v3605 = vrot.slane %v615, 3
        %v3606 = vrot.slane %v615, 4
        %v3607 = vrot.slane %v615, 5
        %v3608 = vrot.slane %v615, 6
        %v3609 = vrot.slane %v615, 7
        %v3610 = vrot.slane %v618, 1
        %v3611 = vrot.slane %v618, 2
        %v3612 = vrot.slane %v618, 3
        %v3613 = vrot.slane %v618, 4
        %v3614 = vrot.slane %v618, 5
        %v3615 = vrot.slane %v618, 6
        %v3616 = vrot.slane %v618, 7
        %v3617 = vrot.slane %v621, 1
        %v3618 = vrot.slane %v621, 2
        %v3619 = vrot.slane %v621, 3
        %v3620 = vrot.slane %v621, 4
        %v3621 = vrot.slane %v621, 5
        %v3622 = vrot.slane %v621, 6
        %v3623 = vrot.slane %v621, 7
        %v3624 = vrot.slane %v624, 1
        %v3625 = vrot.slane %v624, 2
        %v3626 = vrot.slane %v624, 3
        %v3627 = vrot.slane %v624, 4
        %v3628 = vrot.slane %v624, 5
        %v3629 = vrot.slane %v624, 6
        %v3630 = vrot.slane %v624, 7
        %v3631 = vrot.slane %v627, 1
        %v3632 = vrot.slane %v627, 2
        %v3633 = vrot.slane %v627, 3
        %v3634 = vrot.slane %v627, 4
        %v3635 = vrot.slane %v627, 5
        %v3636 = vrot.slane %v627, 6
        %v3637 = vrot.slane %v627, 7
        %v3638 = vrot.slane %v630, 1
        %v3639 = vrot.slane %v630, 2
        %v3640 = vrot.slane %v630, 3
        %v3641 = vrot.slane %v630, 4
        %v3642 = vrot.slane %v630, 5
        %v3643 = vrot.slane %v630, 6
        %v3644 = vrot.slane %v630, 7
        %v3645 = vrot.slane %v633, 1
        %v3646 = vrot.slane %v633, 2
        %v3647 = vrot.slane %v633, 3
        %v3648 = vrot.slane %v633, 4
        %v3649 = vrot.slane %v633, 5
        %v3650 = vrot.slane %v633, 6
        %v3651 = vrot.slane %v633, 7
        %v3652 = vrot.slane %v636, 1
        %v3653 = vrot.slane %v636, 2
        %v3654 = vrot.slane %v636, 3
        %v3655 = vrot.slane %v636, 4
        %v3656 = vrot.slane %v636, 5
        %v3657 = vrot.slane %v636, 6
        %v3658 = vrot.slane %v636, 7
        %v3659 = vrot.slane %v639, 1
        %v3660 = vrot.slane %v639, 2
        %v3661 = vrot.slane %v639, 3
        %v3662 = vrot.slane %v639, 4
        %v3663 = vrot.slane %v639, 5
        %v3664 = vrot.slane %v639, 6
        %v3665 = vrot.slane %v639, 7
        %v3666 = vrot.slane %v642, 1
        %v3667 = vrot.slane %v642, 2
        %v3668 = vrot.slane %v642, 3
        %v3669 = vrot.slane %v642, 4
        %v3670 = vrot.slane %v642, 5
        %v3671 = vrot.slane %v642, 6
        %v3672 = vrot.slane %v642, 7
        %v3673 = vrot.slane %v645, 1
        %v3674 = vrot.slane %v645, 2
        %v3675 = vrot.slane %v645, 3
        %v3676 = vrot.slane %v645, 4
        %v3677 = vrot.slane %v645, 5
        %v3678 = vrot.slane %v645, 6
        %v3679 = vrot.slane %v645, 7
        %v3680 = vperm.slane %v600, 0
        %v3681 = vperm.slane %v3568, 0
        %v3682 = vperm.slane %v3569, 0
        %v3683 = vperm.slane %v3570, 0
        %v3684 = vperm.slane %v3571, 0
        %v3685 = vperm.slane %v3572, 0
        %v3686 = vperm.slane %v3573, 0
        %v3687 = vperm.slane %v3574, 0
        %v3688 = vperm.slane %v603, 0
        %v3689 = vperm.slane %v3575, 0
        %v3690 = vperm.slane %v3576, 0
        %v3691 = vperm.slane %v3577, 0
        %v3692 = vperm.slane %v3578, 0
        %v3693 = vperm.slane %v3579, 0
        %v3694 = vperm.slane %v3580, 0
        %v3695 = vperm.slane %v3581, 0
        %v3696 = vperm.slane %v606, 0
        %v3697 = vperm.slane %v3582, 0
        %v3698 = vperm.slane %v3583, 0
        %v3699 = vperm.slane %v3584, 0
        %v3700 = vperm.slane %v3585, 0
        %v3701 = vperm.slane %v3586, 0
        %v3702 = vperm.slane %v3587, 0
        %v3703 = vperm.slane %v3588, 0
        %v3704 = vperm.slane %v609, 0
        %v3705 = vperm.slane %v3589, 0
        %v3706 = vperm.slane %v3590, 0
        %v3707 = vperm.slane %v3591, 0
        %v3708 = vperm.slane %v3592, 0
        %v3709 = vperm.slane %v3593, 0
        %v3710 = vperm.slane %v3594, 0
        %v3711 = vperm.slane %v3595, 0
        %v3712 = vperm.slane %v612, 0
        %v3713 = vperm.slane %v3596, 0
        %v3714 = vperm.slane %v3597, 0
        %v3715 = vperm.slane %v3598, 0
        %v3716 = vperm.slane %v3599, 0
        %v3717 = vperm.slane %v3600, 0
        %v3718 = vperm.slane %v3601, 0
        %v3719 = vperm.slane %v3602, 0
        %v3720 = vperm.slane %v615, 0
        %v3721 = vperm.slane %v3603, 0
        %v3722 = vperm.slane %v3604, 0
        %v3723 = vperm.slane %v3605, 0
        %v3724 = vperm.slane %v3606, 0
        %v3725 = vperm.slane %v3607, 0
        %v3726 = vperm.slane %v3608, 0
        %v3727 = vperm.slane %v3609, 0
        %v3728 = vperm.slane %v618, 0
        %v3729 = vperm.slane %v3610, 0
        %v3730 = vperm.slane %v3611, 0
        %v3731 = vperm.slane %v3612, 0
        %v3732 = vperm.slane %v3613, 0
        %v3733 = vperm.slane %v3614, 0
        %v3734 = vperm.slane %v3615, 0
        %v3735 = vperm.slane %v3616, 0
        %v3736 = vperm.slane %v621, 0
        %v3737 = vperm.slane %v3617, 0
        %v3738 = vperm.slane %v3618, 0
        %v3739 = vperm.slane %v3619, 0
        %v3740 = vperm.slane %v3620, 0
        %v3741 = vperm.slane %v3621, 0
        %v3742 = vperm.slane %v3622, 0
        %v3743 = vperm.slane %v3623, 0
        %v3744 = vperm.slane %v624, 0
        %v3745 = vperm.slane %v3624, 0
        %v3746 = vperm.slane %v3625, 0
        %v3747 = vperm.slane %v3626, 0
        %v3748 = vperm.slane %v3627, 0
        %v3749 = vperm.slane %v3628, 0
        %v3750 = vperm.slane %v3629, 0
        %v3751 = vperm.slane %v3630, 0
        %v3752 = vperm.slane %v627, 0
        %v3753 = vperm.slane %v3631, 0
        %v3754 = vperm.slane %v3632, 0
        %v3755 = vperm.slane %v3633, 0
        %v3756 = vperm.slane %v3634, 0
        %v3757 = vperm.slane %v3635, 0
        %v3758 = vperm.slane %v3636, 0
        %v3759 = vperm.slane %v3637, 0
        %v3760 = vperm.slane %v630, 0
        %v3761 = vperm.slane %v3638, 0
        %v3762 = vperm.slane %v3639, 0
        %v3763 = vperm.slane %v3640, 0
        %v3764 = vperm.slane %v3641, 0
        %v3765 = vperm.slane %v3642, 0
        %v3766 = vperm.slane %v3643, 0
        %v3767 = vperm.slane %v3644, 0
        %v3768 = vperm.slane %v633, 0
        %v3769 = vperm.slane %v3645, 0
        %v3770 = vperm.slane %v3646, 0
        %v3771 = vperm.slane %v3647, 0
        %v3772 = vperm.slane %v3648, 0
        %v3773 = vperm.slane %v3649, 0
        %v3774 = vperm.slane %v3650, 0
        %v3775 = vperm.slane %v3651, 0
        %v3776 = vperm.slane %v636, 0
        %v3777 = vperm.slane %v3652, 0
        %v3778 = vperm.slane %v3653, 0
        %v3779 = vperm.slane %v3654, 0
        %v3780 = vperm.slane %v3655, 0
        %v3781 = vperm.slane %v3656, 0
        %v3782 = vperm.slane %v3657, 0
        %v3783 = vperm.slane %v3658, 0
        %v3784 = vperm.slane %v639, 0
        %v3785 = vperm.slane %v3659, 0
        %v3786 = vperm.slane %v3660, 0
        %v3787 = vperm.slane %v3661, 0
        %v3788 = vperm.slane %v3662, 0
        %v3789 = vperm.slane %v3663, 0
        %v3790 = vperm.slane %v3664, 0
        %v3791 = vperm.slane %v3665, 0
        %v3792 = vperm.slane %v642, 0
        %v3793 = vperm.slane %v3666, 0
        %v3794 = vperm.slane %v3667, 0
        %v3795 = vperm.slane %v3668, 0
        %v3796 = vperm.slane %v3669, 0
        %v3797 = vperm.slane %v3670, 0
        %v3798 = vperm.slane %v3671, 0
        %v3799 = vperm.slane %v3672, 0
        %v3800 = vperm.slane %v645, 0
        %v3801 = vperm.slane %v3673, 0
        %v3802 = vperm.slane %v3674, 0
        %v3803 = vperm.slane %v3675, 0
        %v3804 = vperm.slane %v3676, 0
        %v3805 = vperm.slane %v3677, 0
        %v3806 = vperm.slane %v3678, 0
        %v3807 = vperm.slane %v3679, 0
        %v3936 = vrot.slane %v3680, 4
        %v3937 = vrot.slane %v3681, 4
        %v3938 = vrot.slane %v3682, 4
        %v3939 = vrot.slane %v3683, 4
        %v3940 = vrot.slane %v3684, 4
        %v3941 = vrot.slane %v3685, 4
        %v3942 = vrot.slane %v3686, 4
        %v3943 = vrot.slane %v3687, 4
        %v3944 = vrot.slane %v3688, 4
        %v3945 = vrot.slane %v3689, 4
        %v3946 = vrot.slane %v3690, 4
        %v3947 = vrot.slane %v3691, 4
        %v3948 = vrot.slane %v3692, 4
        %v3949 = vrot.slane %v3693, 4
        %v3950 = vrot.slane %v3694, 4
        %v3951 = vrot.slane %v3695, 4
        %v3952 = vrot.slane %v3696, 4
        %v3953 = vrot.slane %v3697, 4
        %v3954 = vrot.slane %v3698, 4
        %v3955 = vrot.slane %v3699, 4
        %v3956 = vrot.slane %v3700, 4
        %v3957 = vrot.slane %v3701, 4
        %v3958 = vrot.slane %v3702, 4
        %v3959 = vrot.slane %v3703, 4
        %v3960 = vrot.slane %v3704, 4
        %v3961 = vrot.slane %v3705, 4
        %v3962 = vrot.slane %v3706, 4
        %v3963 = vrot.slane %v3707, 4
        %v3964 = vrot.slane %v3708, 4
        %v3965 = vrot.slane %v3709, 4
        %v3966 = vrot.slane %v3710, 4
        %v3967 = vrot.slane %v3711, 4
        %v3968 = vrot.slane %v3712, 4
        %v3969 = vrot.slane %v3713, 4
        %v3970 = vrot.slane %v3714, 4
        %v3971 = vrot.slane %v3715, 4
        %v3972 = vrot.slane %v3716, 4
        %v3973 = vrot.slane %v3717, 4
        %v3974 = vrot.slane %v3718, 4
        %v3975 = vrot.slane %v3719, 4
        %v3976 = vrot.slane %v3720, 4
        %v3977 = vrot.slane %v3721, 4
        %v3978 = vrot.slane %v3722, 4
        %v3979 = vrot.slane %v3723, 4
        %v3980 = vrot.slane %v3724, 4
        %v3981 = vrot.slane %v3725, 4
        %v3982 = vrot.slane %v3726, 4
        %v3983 = vrot.slane %v3727, 4
        %v3984 = vrot.slane %v3728, 4
        %v3985 = vrot.slane %v3729, 4
        %v3986 = vrot.slane %v3730, 4
        %v3987 = vrot.slane %v3731, 4
        %v3988 = vrot.slane %v3732, 4
        %v3989 = vrot.slane %v3733, 4
        %v3990 = vrot.slane %v3734, 4
        %v3991 = vrot.slane %v3735, 4
        %v3992 = vrot.slane %v3736, 4
        %v3993 = vrot.slane %v3737, 4
        %v3994 = vrot.slane %v3738, 4
        %v3995 = vrot.slane %v3739, 4
        %v3996 = vrot.slane %v3740, 4
        %v3997 = vrot.slane %v3741, 4
        %v3998 = vrot.slane %v3742, 4
        %v3999 = vrot.slane %v3743, 4
        %v4000 = vrot.slane %v3744, 4
        %v4001 = vrot.slane %v3745, 4
        %v4002 = vrot.slane %v3746, 4
        %v4003 = vrot.slane %v3747, 4
        %v4004 = vrot.slane %v3748, 4
        %v4005 = vrot.slane %v3749, 4
        %v4006 = vrot.slane %v3750, 4
        %v4007 = vrot.slane %v3751, 4
        %v4008 = vrot.slane %v3752, 4
        %v4009 = vrot.slane %v3753, 4
        %v4010 = vrot.slane %v3754, 4
        %v4011 = vrot.slane %v3755, 4
        %v4012 = vrot.slane %v3756, 4
        %v4013 = vrot.slane %v3757, 4
        %v4014 = vrot.slane %v3758, 4
        %v4015 = vrot.slane %v3759, 4
        %v4016 = vrot.slane %v3760, 4
        %v4017 = vrot.slane %v3761, 4
        %v4018 = vrot.slane %v3762, 4
        %v4019 = vrot.slane %v3763, 4
        %v4020 = vrot.slane %v3764, 4
        %v4021 = vrot.slane %v3765, 4
        %v4022 = vrot.slane %v3766, 4
        %v4023 = vrot.slane %v3767, 4
        %v4024 = vrot.slane %v3768, 4
        %v4025 = vrot.slane %v3769, 4
        %v4026 = vrot.slane %v3770, 4
        %v4027 = vrot.slane %v3771, 4
        %v4028 = vrot.slane %v3772, 4
        %v4029 = vrot.slane %v3773, 4
        %v4030 = vrot.slane %v3774, 4
        %v4031 = vrot.slane %v3775, 4
        %v4032 = vrot.slane %v3776, 4
        %v4033 = vrot.slane %v3777, 4
        %v4034 = vrot.slane %v3778, 4
        %v4035 = vrot.slane %v3779, 4
        %v4036 = vrot.slane %v3780, 4
        %v4037 = vrot.slane %v3781, 4
        %v4038 = vrot.slane %v3782, 4
        %v4039 = vrot.slane %v3783, 4
        %v4040 = vrot.slane %v3784, 4
        %v4041 = vrot.slane %v3785, 4
        %v4042 = vrot.slane %v3786, 4
        %v4043 = vrot.slane %v3787, 4
        %v4044 = vrot.slane %v3788, 4
        %v4045 = vrot.slane %v3789, 4
        %v4046 = vrot.slane %v3790, 4
        %v4047 = vrot.slane %v3791, 4
        %v4048 = vrot.slane %v3792, 4
        %v4049 = vrot.slane %v3793, 4
        %v4050 = vrot.slane %v3794, 4
        %v4051 = vrot.slane %v3795, 4
        %v4052 = vrot.slane %v3796, 4
        %v4053 = vrot.slane %v3797, 4
        %v4054 = vrot.slane %v3798, 4
        %v4055 = vrot.slane %v3799, 4
        %v4056 = vrot.slane %v3800, 4
        %v4057 = vrot.slane %v3801, 4
        %v4058 = vrot.slane %v3802, 4
        %v4059 = vrot.slane %v3803, 4
        %v4060 = vrot.slane %v3804, 4
        %v4061 = vrot.slane %v3805, 4
        %v4062 = vrot.slane %v3806, 4
        %v4063 = vrot.slane %v3807, 4
        %v4192 = vmul.f32 %v2401, %v3680
        %v4193 = vmul.f32 %v3168, %v3936
        %v4194 = vmul.f32 %v2404, %v3680
        %v4195 = vmul.f32 %v3169, %v3681
        %v4196 = vmul.f32 %v2407, %v3937
        %v4197 = vmul.f32 %v3170, %v3681
        %v4198 = vmul.f32 %v2410, %v3682
        %v4199 = vmul.f32 %v3171, %v3938
        %v4200 = vmul.f32 %v2413, %v3682
        %v4201 = vmul.f32 %v3172, %v3683
        %v4202 = vmul.f32 %v2416, %v3939
        %v4203 = vmul.f32 %v3173, %v3683
        %v4204 = vmul.f32 %v2419, %v3684
        %v4205 = vmul.f32 %v3174, %v3940
        %v4206 = vmul.f32 %v2422, %v3684
        %v4207 = vmul.f32 %v3175, %v3685
        %v4208 = vmul.f32 %v2425, %v3941
        %v4209 = vmul.f32 %v3176, %v3685
        %v4210 = vmul.f32 %v2428, %v3686
        %v4211 = vmul.f32 %v3177, %v3942
        %v4212 = vmul.f32 %v2431, %v3686
        %v4213 = vmul.f32 %v3178, %v3687
        %v4214 = vmul.f32 %v2434, %v3943
        %v4215 = vmul.f32 %v3179, %v3687
        %v4216 = vmul.f32 %v2437, %v3688
        %v4217 = vmul.f32 %v3180, %v3944
        %v4218 = vmul.f32 %v2440, %v3688
        %v4219 = vmul.f32 %v3181, %v3689
        %v4220 = vmul.f32 %v2443, %v3945
        %v4221 = vmul.f32 %v3182, %v3689
        %v4222 = vmul.f32 %v2446, %v3690
        %v4223 = vmul.f32 %v3183, %v3946
        %v4224 = vmul.f32 %v2449, %v3690
        %v4225 = vmul.f32 %v3184, %v3691
        %v4226 = vmul.f32 %v2452, %v3947
        %v4227 = vmul.f32 %v3185, %v3691
        %v4228 = vmul.f32 %v2455, %v3692
        %v4229 = vmul.f32 %v3186, %v3948
        %v4230 = vmul.f32 %v2458, %v3692
        %v4231 = vmul.f32 %v3187, %v3693
        %v4232 = vmul.f32 %v2461, %v3949
        %v4233 = vmul.f32 %v3188, %v3693
        %v4234 = vmul.f32 %v2464, %v3694
        %v4235 = vmul.f32 %v3189, %v3950
        %v4236 = vmul.f32 %v2467, %v3694
        %v4237 = vmul.f32 %v3190, %v3695
        %v4238 = vmul.f32 %v2470, %v3951
        %v4239 = vmul.f32 %v3191, %v3695
        %v4240 = vmul.f32 %v2473, %v3696
        %v4241 = vmul.f32 %v3192, %v3952
        %v4242 = vmul.f32 %v2476, %v3696
        %v4243 = vmul.f32 %v3193, %v3697
        %v4244 = vmul.f32 %v2479, %v3953
        %v4245 = vmul.f32 %v3194, %v3697
        %v4246 = vmul.f32 %v2482, %v3698
        %v4247 = vmul.f32 %v3195, %v3954
        %v4248 = vmul.f32 %v2485, %v3698
        %v4249 = vmul.f32 %v3196, %v3699
        %v4250 = vmul.f32 %v2488, %v3955
        %v4251 = vmul.f32 %v3197, %v3699
        %v4252 = vmul.f32 %v2491, %v3700
        %v4253 = vmul.f32 %v3198, %v3956
        %v4254 = vmul.f32 %v2494, %v3700
        %v4255 = vmul.f32 %v3199, %v3701
        %v4256 = vmul.f32 %v2497, %v3957
        %v4257 = vmul.f32 %v3200, %v3701
        %v4258 = vmul.f32 %v2500, %v3702
        %v4259 = vmul.f32 %v3201, %v3958
        %v4260 = vmul.f32 %v2503, %v3702
        %v4261 = vmul.f32 %v3202, %v3703
        %v4262 = vmul.f32 %v2506, %v3959
        %v4263 = vmul.f32 %v3203, %v3703
        %v4264 = vmul.f32 %v2509, %v3704
        %v4265 = vmul.f32 %v3204, %v3960
        %v4266 = vmul.f32 %v2512, %v3704
        %v4267 = vmul.f32 %v3205, %v3705
        %v4268 = vmul.f32 %v2515, %v3961
        %v4269 = vmul.f32 %v3206, %v3705
        %v4270 = vmul.f32 %v2518, %v3706
        %v4271 = vmul.f32 %v3207, %v3962
        %v4272 = vmul.f32 %v2521, %v3706
        %v4273 = vmul.f32 %v3208, %v3707
        %v4274 = vmul.f32 %v2524, %v3963
        %v4275 = vmul.f32 %v3209, %v3707
        %v4276 = vmul.f32 %v2527, %v3708
        %v4277 = vmul.f32 %v3210, %v3964
        %v4278 = vmul.f32 %v2530, %v3708
        %v4279 = vmul.f32 %v3211, %v3709
        %v4280 = vmul.f32 %v2533, %v3965
        %v4281 = vmul.f32 %v3212, %v3709
        %v4282 = vmul.f32 %v2536, %v3710
        %v4283 = vmul.f32 %v3213, %v3966
        %v4284 = vmul.f32 %v2539, %v3710
        %v4285 = vmul.f32 %v3214, %v3711
        %v4286 = vmul.f32 %v2542, %v3967
        %v4287 = vmul.f32 %v3215, %v3711
        %v4288 = vmul.f32 %v2545, %v3712
        %v4289 = vmul.f32 %v3216, %v3968
        %v4290 = vmul.f32 %v2548, %v3712
        %v4291 = vmul.f32 %v3217, %v3713
        %v4292 = vmul.f32 %v2551, %v3969
        %v4293 = vmul.f32 %v3218, %v3713
        %v4294 = vmul.f32 %v2554, %v3714
        %v4295 = vmul.f32 %v3219, %v3970
        %v4296 = vmul.f32 %v2557, %v3714
        %v4297 = vmul.f32 %v3220, %v3715
        %v4298 = vmul.f32 %v2560, %v3971
        %v4299 = vmul.f32 %v3221, %v3715
        %v4300 = vmul.f32 %v2563, %v3716
        %v4301 = vmul.f32 %v3222, %v3972
        %v4302 = vmul.f32 %v2566, %v3716
        %v4303 = vmul.f32 %v3223, %v3717
        %v4304 = vmul.f32 %v2569, %v3973
        %v4305 = vmul.f32 %v3224, %v3717
        %v4306 = vmul.f32 %v2572, %v3718
        %v4307 = vmul.f32 %v3225, %v3974
        %v4308 = vmul.f32 %v2575, %v3718
        %v4309 = vmul.f32 %v3226, %v3719
        %v4310 = vmul.f32 %v2578, %v3975
        %v4311 = vmul.f32 %v3227, %v3719
        %v4312 = vmul.f32 %v2581, %v3720
        %v4313 = vmul.f32 %v3228, %v3976
        %v4314 = vmul.f32 %v2584, %v3720
        %v4315 = vmul.f32 %v3229, %v3721
        %v4316 = vmul.f32 %v2587, %v3977
        %v4317 = vmul.f32 %v3230, %v3721
        %v4318 = vmul.f32 %v2590, %v3722
        %v4319 = vmul.f32 %v3231, %v3978
        %v4320 = vmul.f32 %v2593, %v3722
        %v4321 = vmul.f32 %v3232, %v3723
        %v4322 = vmul.f32 %v2596, %v3979
        %v4323 = vmul.f32 %v3233, %v3723
        %v4324 = vmul.f32 %v2599, %v3724
        %v4325 = vmul.f32 %v3234, %v3980
        %v4326 = vmul.f32 %v2602, %v3724
        %v4327 = vmul.f32 %v3235, %v3725
        %v4328 = vmul.f32 %v2605, %v3981
        %v4329 = vmul.f32 %v3236, %v3725
        %v4330 = vmul.f32 %v2608, %v3726
        %v4331 = vmul.f32 %v3237, %v3982
        %v4332 = vmul.f32 %v2611, %v3726
        %v4333 = vmul.f32 %v3238, %v3727
        %v4334 = vmul.f32 %v2614, %v3983
        %v4335 = vmul.f32 %v3239, %v3727
        %v4336 = vmul.f32 %v2617, %v3728
        %v4337 = vmul.f32 %v3240, %v3984
        %v4338 = vmul.f32 %v2620, %v3728
        %v4339 = vmul.f32 %v3241, %v3729
        %v4340 = vmul.f32 %v2623, %v3985
        %v4341 = vmul.f32 %v3242, %v3729
        %v4342 = vmul.f32 %v2626, %v3730
        %v4343 = vmul.f32 %v3243, %v3986
        %v4344 = vmul.f32 %v2629, %v3730
        %v4345 = vmul.f32 %v3244, %v3731
        %v4346 = vmul.f32 %v2632, %v3987
        %v4347 = vmul.f32 %v3245, %v3731
        %v4348 = vmul.f32 %v2635, %v3732
        %v4349 = vmul.f32 %v3246, %v3988
        %v4350 = vmul.f32 %v2638, %v3732
        %v4351 = vmul.f32 %v3247, %v3733
        %v4352 = vmul.f32 %v2641, %v3989
        %v4353 = vmul.f32 %v3248, %v3733
        %v4354 = vmul.f32 %v2644, %v3734
        %v4355 = vmul.f32 %v3249, %v3990
        %v4356 = vmul.f32 %v2647, %v3734
        %v4357 = vmul.f32 %v3250, %v3735
        %v4358 = vmul.f32 %v2650, %v3991
        %v4359 = vmul.f32 %v3251, %v3735
        %v4360 = vmul.f32 %v2653, %v3736
        %v4361 = vmul.f32 %v3252, %v3992
        %v4362 = vmul.f32 %v2656, %v3736
        %v4363 = vmul.f32 %v3253, %v3737
        %v4364 = vmul.f32 %v2659, %v3993
        %v4365 = vmul.f32 %v3254, %v3737
        %v4366 = vmul.f32 %v2662, %v3738
        %v4367 = vmul.f32 %v3255, %v3994
        %v4368 = vmul.f32 %v2665, %v3738
        %v4369 = vmul.f32 %v3256, %v3739
        %v4370 = vmul.f32 %v2668, %v3995
        %v4371 = vmul.f32 %v3257, %v3739
        %v4372 = vmul.f32 %v2671, %v3740
        %v4373 = vmul.f32 %v3258, %v3996
        %v4374 = vmul.f32 %v2674, %v3740
        %v4375 = vmul.f32 %v3259, %v3741
        %v4376 = vmul.f32 %v2677, %v3997
        %v4377 = vmul.f32 %v3260, %v3741
        %v4378 = vmul.f32 %v2680, %v3742
        %v4379 = vmul.f32 %v3261, %v3998
        %v4380 = vmul.f32 %v2683, %v3742
        %v4381 = vmul.f32 %v3262, %v3743
        %v4382 = vmul.f32 %v2686, %v3999
        %v4383 = vmul.f32 %v3263, %v3743
        %v4384 = vmul.f32 %v2689, %v3744
        %v4385 = vmul.f32 %v3264, %v4000
        %v4386 = vmul.f32 %v2692, %v3744
        %v4387 = vmul.f32 %v3265, %v3745
        %v4388 = vmul.f32 %v2695, %v4001
        %v4389 = vmul.f32 %v3266, %v3745
        %v4390 = vmul.f32 %v2698, %v3746
        %v4391 = vmul.f32 %v3267, %v4002
        %v4392 = vmul.f32 %v2701, %v3746
        %v4393 = vmul.f32 %v3268, %v3747
        %v4394 = vmul.f32 %v2704, %v4003
        %v4395 = vmul.f32 %v3269, %v3747
        %v4396 = vmul.f32 %v2707, %v3748
        %v4397 = vmul.f32 %v3270, %v4004
        %v4398 = vmul.f32 %v2710, %v3748
        %v4399 = vmul.f32 %v3271, %v3749
        %v4400 = vmul.f32 %v2713, %v4005
        %v4401 = vmul.f32 %v3272, %v3749
        %v4402 = vmul.f32 %v2716, %v3750
        %v4403 = vmul.f32 %v3273, %v4006
        %v4404 = vmul.f32 %v2719, %v3750
        %v4405 = vmul.f32 %v3274, %v3751
        %v4406 = vmul.f32 %v2722, %v4007
        %v4407 = vmul.f32 %v3275, %v3751
        %v4408 = vmul.f32 %v2725, %v3752
        %v4409 = vmul.f32 %v3276, %v4008
        %v4410 = vmul.f32 %v2728, %v3752
        %v4411 = vmul.f32 %v3277, %v3753
        %v4412 = vmul.f32 %v2731, %v4009
        %v4413 = vmul.f32 %v3278, %v3753
        %v4414 = vmul.f32 %v2734, %v3754
        %v4415 = vmul.f32 %v3279, %v4010
        %v4416 = vmul.f32 %v2737, %v3754
        %v4417 = vmul.f32 %v3280, %v3755
        %v4418 = vmul.f32 %v2740, %v4011
        %v4419 = vmul.f32 %v3281, %v3755
        %v4420 = vmul.f32 %v2743, %v3756
        %v4421 = vmul.f32 %v3282, %v4012
        %v4422 = vmul.f32 %v2746, %v3756
        %v4423 = vmul.f32 %v3283, %v3757
        %v4424 = vmul.f32 %v2749, %v4013
        %v4425 = vmul.f32 %v3284, %v3757
        %v4426 = vmul.f32 %v2752, %v3758
        %v4427 = vmul.f32 %v3285, %v4014
        %v4428 = vmul.f32 %v2755, %v3758
        %v4429 = vmul.f32 %v3286, %v3759
        %v4430 = vmul.f32 %v2758, %v4015
        %v4431 = vmul.f32 %v3287, %v3759
        %v4432 = vmul.f32 %v2761, %v3760
        %v4433 = vmul.f32 %v3288, %v4016
        %v4434 = vmul.f32 %v2764, %v3760
        %v4435 = vmul.f32 %v3289, %v3761
        %v4436 = vmul.f32 %v2767, %v4017
        %v4437 = vmul.f32 %v3290, %v3761
        %v4438 = vmul.f32 %v2770, %v3762
        %v4439 = vmul.f32 %v3291, %v4018
        %v4440 = vmul.f32 %v2773, %v3762
        %v4441 = vmul.f32 %v3292, %v3763
        %v4442 = vmul.f32 %v2776, %v4019
        %v4443 = vmul.f32 %v3293, %v3763
        %v4444 = vmul.f32 %v2779, %v3764
        %v4445 = vmul.f32 %v3294, %v4020
        %v4446 = vmul.f32 %v2782, %v3764
        %v4447 = vmul.f32 %v3295, %v3765
        %v4448 = vmul.f32 %v2785, %v4021
        %v4449 = vmul.f32 %v3296, %v3765
        %v4450 = vmul.f32 %v2788, %v3766
        %v4451 = vmul.f32 %v3297, %v4022
        %v4452 = vmul.f32 %v2791, %v3766
        %v4453 = vmul.f32 %v3298, %v3767
        %v4454 = vmul.f32 %v2794, %v4023
        %v4455 = vmul.f32 %v3299, %v3767
        %v4456 = vmul.f32 %v2797, %v3768
        %v4457 = vmul.f32 %v3300, %v4024
        %v4458 = vmul.f32 %v2800, %v3768
        %v4459 = vmul.f32 %v3301, %v3769
        %v4460 = vmul.f32 %v2803, %v4025
        %v4461 = vmul.f32 %v3302, %v3769
        %v4462 = vmul.f32 %v2806, %v3770
        %v4463 = vmul.f32 %v3303, %v4026
        %v4464 = vmul.f32 %v2809, %v3770
        %v4465 = vmul.f32 %v3304, %v3771
        %v4466 = vmul.f32 %v2812, %v4027
        %v4467 = vmul.f32 %v3305, %v3771
        %v4468 = vmul.f32 %v2815, %v3772
        %v4469 = vmul.f32 %v3306, %v4028
        %v4470 = vmul.f32 %v2818, %v3772
        %v4471 = vmul.f32 %v3307, %v3773
        %v4472 = vmul.f32 %v2821, %v4029
        %v4473 = vmul.f32 %v3308, %v3773
        %v4474 = vmul.f32 %v2824, %v3774
        %v4475 = vmul.f32 %v3309, %v4030
        %v4476 = vmul.f32 %v2827, %v3774
        %v4477 = vmul.f32 %v3310, %v3775
        %v4478 = vmul.f32 %v2830, %v4031
        %v4479 = vmul.f32 %v3311, %v3775
        %v4480 = vmul.f32 %v2833, %v3776
        %v4481 = vmul.f32 %v3312, %v4032
        %v4482 = vmul.f32 %v2836, %v3776
        %v4483 = vmul.f32 %v3313, %v3777
        %v4484 = vmul.f32 %v2839, %v4033
        %v4485 = vmul.f32 %v3314, %v3777
        %v4486 = vmul.f32 %v2842, %v3778
        %v4487 = vmul.f32 %v3315, %v4034
        %v4488 = vmul.f32 %v2845, %v3778
        %v4489 = vmul.f32 %v3316, %v3779
        %v4490 = vmul.f32 %v2848, %v4035
        %v4491 = vmul.f32 %v3317, %v3779
        %v4492 = vmul.f32 %v2851, %v3780
        %v4493 = vmul.f32 %v3318, %v4036
        %v4494 = vmul.f32 %v2854, %v3780
        %v4495 = vmul.f32 %v3319, %v3781
        %v4496 = vmul.f32 %v2857, %v4037
        %v4497 = vmul.f32 %v3320, %v3781
        %v4498 = vmul.f32 %v2860, %v3782
        %v4499 = vmul.f32 %v3321, %v4038
        %v4500 = vmul.f32 %v2863, %v3782
        %v4501 = vmul.f32 %v3322, %v3783
        %v4502 = vmul.f32 %v2866, %v4039
        %v4503 = vmul.f32 %v3323, %v3783
        %v4504 = vmul.f32 %v2869, %v3784
        %v4505 = vmul.f32 %v3324, %v4040
        %v4506 = vmul.f32 %v2872, %v3784
        %v4507 = vmul.f32 %v3325, %v3785
        %v4508 = vmul.f32 %v2875, %v4041
        %v4509 = vmul.f32 %v3326, %v3785
        %v4510 = vmul.f32 %v2878, %v3786
        %v4511 = vmul.f32 %v3327, %v4042
        %v4512 = vmul.f32 %v2881, %v3786
        %v4513 = vmul.f32 %v3328, %v3787
        %v4514 = vmul.f32 %v2884, %v4043
        %v4515 = vmul.f32 %v3329, %v3787
        %v4516 = vmul.f32 %v2887, %v3788
        %v4517 = vmul.f32 %v3330, %v4044
        %v4518 = vmul.f32 %v2890, %v3788
        %v4519 = vmul.f32 %v3331, %v3789
        %v4520 = vmul.f32 %v2893, %v4045
        %v4521 = vmul.f32 %v3332, %v3789
        %v4522 = vmul.f32 %v2896, %v3790
        %v4523 = vmul.f32 %v3333, %v4046
        %v4524 = vmul.f32 %v2899, %v3790
        %v4525 = vmul.f32 %v3334, %v3791
        %v4526 = vmul.f32 %v2902, %v4047
        %v4527 = vmul.f32 %v3335, %v3791
        %v4528 = vmul.f32 %v2905, %v3792
        %v4529 = vmul.f32 %v3336, %v4048
        %v4530 = vmul.f32 %v2908, %v3792
        %v4531 = vmul.f32 %v3337, %v3793
        %v4532 = vmul.f32 %v2911, %v4049
        %v4533 = vmul.f32 %v3338, %v3793
        %v4534 = vmul.f32 %v2914, %v3794
        %v4535 = vmul.f32 %v3339, %v4050
        %v4536 = vmul.f32 %v2917, %v3794
        %v4537 = vmul.f32 %v3340, %v3795
        %v4538 = vmul.f32 %v2920, %v4051
        %v4539 = vmul.f32 %v3341, %v3795
        %v4540 = vmul.f32 %v2923, %v3796
        %v4541 = vmul.f32 %v3342, %v4052
        %v4542 = vmul.f32 %v2926, %v3796
        %v4543 = vmul.f32 %v3343, %v3797
        %v4544 = vmul.f32 %v2929, %v4053
        %v4545 = vmul.f32 %v3344, %v3797
        %v4546 = vmul.f32 %v2932, %v3798
        %v4547 = vmul.f32 %v3345, %v4054
        %v4548 = vmul.f32 %v2935, %v3798
        %v4549 = vmul.f32 %v3346, %v3799
        %v4550 = vmul.f32 %v2938, %v4055
        %v4551 = vmul.f32 %v3347, %v3799
        %v4552 = vmul.f32 %v2941, %v3800
        %v4553 = vmul.f32 %v3348, %v4056
        %v4554 = vmul.f32 %v2944, %v3800
        %v4555 = vmul.f32 %v3349, %v3801
        %v4556 = vmul.f32 %v2947, %v4057
        %v4557 = vmul.f32 %v3350, %v3801
        %v4558 = vmul.f32 %v2950, %v3802
        %v4559 = vmul.f32 %v3351, %v4058
        %v4560 = vmul.f32 %v2953, %v3802
        %v4561 = vmul.f32 %v3352, %v3803
        %v4562 = vmul.f32 %v2956, %v4059
        %v4563 = vmul.f32 %v3353, %v3803
        %v4564 = vmul.f32 %v2959, %v3804
        %v4565 = vmul.f32 %v3354, %v4060
        %v4566 = vmul.f32 %v2962, %v3804
        %v4567 = vmul.f32 %v3355, %v3805
        %v4568 = vmul.f32 %v2965, %v4061
        %v4569 = vmul.f32 %v3356, %v3805
        %v4570 = vmul.f32 %v2968, %v3806
        %v4571 = vmul.f32 %v3357, %v4062
        %v4572 = vmul.f32 %v2971, %v3806
        %v4573 = vmul.f32 %v3358, %v3807
        %v4574 = vmul.f32 %v2974, %v4063
        %v4575 = vmul.f32 %v3359, %v3807
        %4960 = vst [vmem:[#allocation1] ss:$2 sm:$0xff] %v4192
        %s4961 = scalar_lea.vmem [#allocation1], 1
        %4962 = vst [vmem:[%s4961] ss:$2 sm:$0xff] %v4193
        %s4963 = scalar_lea.vmem [#allocation1], 16
        %4964 = vst [vmem:[%s4963] ss:$2 sm:$0xff] %v4194
        %v4965 = vld.sshfl [vmem:[#allocation1] sm:$0xff pattern:$0x75316420]
        %v4966 = vld.sshfl [vmem:[#allocation1 + $0x10] sm:$0xff pattern:$0x75316420]
        %s4967 = scalar_lea.vmem [#allocation1], 32
        %4968 = vst [vmem:[%s4967] ss:$2 sm:$0xff] %v4195
        %s4969 = scalar_lea.vmem [#allocation1], 33
        %4970 = vst [vmem:[%s4969] ss:$2 sm:$0xff] %v4196
        %s4971 = scalar_lea.vmem [#allocation1], 48
        %4972 = vst [vmem:[%s4971] ss:$2 sm:$0xff] %v4197
        %v4973 = vld.sshfl [vmem:[#allocation1 + $0x20] sm:$0xff pattern:$0x75316420]
        %v4974 = vld.sshfl [vmem:[#allocation1 + $0x30] sm:$0xff pattern:$0x75316420]
        %4975 = vst [vmem:[#allocation1] ss:$2 sm:$0xff] %v4198
        %4976 = vst [vmem:[%s4961] ss:$2 sm:$0xff] %v4199
        %4977 = vst [vmem:[%s4963] ss:$2 sm:$0xff] %v4200
        %v4978 = vld.sshfl [vmem:[#allocation1] sm:$0xff pattern:$0x75316420]
        %v4979 = vld.sshfl [vmem:[#allocation1 + $0x10] sm:$0xff pattern:$0x75316420]
        %4980 = vst [vmem:[%s4967] ss:$2 sm:$0xff] %v4201
        %4981 = vst [vmem:[%s4969] ss:$2 sm:$0xff] %v4202
        %4982 = vst [vmem:[%s4971] ss:$2 sm:$0xff] %v4203
        %v4983 = vld.sshfl [vmem:[#allocation1 + $0x20] sm:$0xff pattern:$0x75316420]
        %v4984 = vld.sshfl [vmem:[#allocation1 + $0x30] sm:$0xff pattern:$0x75316420]
        %4985 = vst [vmem:[#allocation1] ss:$2 sm:$0xff] %v4204
        %4986 = vst [vmem:[%s4961] ss:$2 sm:$0xff] %v4205
        %4987 = vst [vmem:[%s4963] ss:$2 sm:$0xff] %v4206
        %v4988 = vld.sshfl [vmem:[#allocation1] sm:$0xff pattern:$0x75316420]
        %v4989 = vld.sshfl [vmem:[#allocation1 + $0x10] sm:$0xff pattern:$0x75316420]
        %4990 = vst [vmem:[%s4967] ss:$2 sm:$0xff] %v4207
        %4991 = vst [vmem:[%s4969] ss:$2 sm:$0xff] %v4208
        %4992 = vst [vmem:[%s4971] ss:$2 sm:$0xff] %v4209
        %v4993 = vld.sshfl [vmem:[#allocation1 + $0x20] sm:$0xff pattern:$0x75316420]
        %v4994 = vld.sshfl [vmem:[#allocation1 + $0x30] sm:$0xff pattern:$0x75316420]
        %4995 = vst [vmem:[#allocation1] ss:$2 sm:$0xff] %v4210
        %4996 = vst [vmem:[%s4961] ss:$2 sm:$0xff] %v4211
        %4997 = vst [vmem:[%s4963] ss:$2 sm:$0xff] %v4212
        %v4998 = vld.sshfl [vmem:[#allocation1] sm:$0xff pattern:$0x75316420]
        %v4999 = vld.sshfl [vmem:[#allocation1 + $0x10] sm:$0xff pattern:$0x75316420]
        %5000 = vst [vmem:[%s4967] ss:$2 sm:$0xff] %v4213
        %5001 = vst [vmem:[%s4969] ss:$2 sm:$0xff] %v4214
        %5002 = vst [vmem:[%s4971] ss:$2 sm:$0xff] %v4215
        %v5003 = vld.sshfl [vmem:[#allocation1 + $0x20] sm:$0xff pattern:$0x75316420]
        %v5004 = vld.sshfl [vmem:[#allocation1 + $0x30] sm:$0xff pattern:$0x75316420]
        %5005 = vst [vmem:[#allocation1] ss:$2 sm:$0xff] %v4216
        %5006 = vst [vmem:[%s4961] ss:$2 sm:$0xff] %v4217
        %5007 = vst [vmem:[%s4963] ss:$2 sm:$0xff] %v4218
        %v5008 = vld.sshfl [vmem:[#allocation1] sm:$0xff pattern:$0x75316420]
        %v5009 = vld.sshfl [vmem:[#allocation1 + $0x10] sm:$0xff pattern:$0x75316420]
        %5010 = vst [vmem:[%s4967] ss:$2 sm:$0xff] %v4219
        %5011 = vst [vmem:[%s4969] ss:$2 sm:$0xff] %v4220
        %5012 = vst [vmem:[%s4971] ss:$2 sm:$0xff] %v4221
        %v5013 = vld.sshfl [vmem:[#allocation1 + $0x20] sm:$0xff pattern:$0x75316420]
        %v5014 = vld.sshfl [vmem:[#allocation1 + $0x30] sm:$0xff pattern:$0x75316420]
        %5015 = vst [vmem:[#allocation1] ss:$2 sm:$0xff] %v4222
        %5016 = vst [vmem:[%s4961] ss:$2 sm:$0xff] %v4223
        %5017 = vst [vmem:[%s4963] ss:$2 sm:$0xff] %v4224
        %v5018 = vld.sshfl [vmem:[#allocation1] sm:$0xff pattern:$0x75316420]
        %v5019 = vld.sshfl [vmem:[#allocation1 + $0x10] sm:$0xff pattern:$0x75316420]
        %5020 = vst [vmem:[%s4967] ss:$2 sm:$0xff] %v4225
        %5021 = vst [vmem:[%s4969] ss:$2 sm:$0xff] %v4226
        %5022 = vst [vmem:[%s4971] ss:$2 sm:$0xff] %v4227
        %v5023 = vld.sshfl [vmem:[#allocation1 + $0x20] sm:$0xff pattern:$0x75316420]
        %v5024 = vld.sshfl [vmem:[#allocation1 + $0x30] sm:$0xff pattern:$0x75316420]
        %5025 = vst [vmem:[#allocation1] ss:$2 sm:$0xff] %v4228
        %5026 = vst [vmem:[%s4961] ss:$2 sm:$0xff] %v4229
        %5027 = vst [vmem:[%s4963] ss:$2 sm:$0xff] %v4230
        %v5028 = vld.sshfl [vmem:[#allocation1] sm:$0xff pattern:$0x75316420]
        %v5029 = vld.sshfl [vmem:[#allocation1 + $0x10] sm:$0xff pattern:$0x75316420]
        %5030 = vst [vmem:[%s4967] ss:$2 sm:$0xff] %v4231
        %5031 = vst [vmem:[%s4969] ss:$2 sm:$0xff] %v4232
        %5032 = vst [vmem:[%s4971] ss:$2 sm:$0xff] %v4233
        %v5033 = vld.sshfl [vmem:[#allocation1 + $0x20] sm:$0xff pattern:$0x75316420]
        %v5034 = vld.sshfl [vmem:[#allocation1 + $0x30] sm:$0xff pattern:$0x75316420]
        %5035 = vst [vmem:[#allocation1] ss:$2 sm:$0xff] %v4234
        %5036 = vst [vmem:[%s4961] ss:$2 sm:$0xff] %v4235
        %5037 = vst [vmem:[%s4963] ss:$2 sm:$0xff] %v4236
        %v5038 = vld.sshfl [vmem:[#allocation1] sm:$0xff pattern:$0x75316420]
        %v5039 = vld.sshfl [vmem:[#allocation1 + $0x10] sm:$0xff pattern:$0x75316420]
        %5040 = vst [vmem:[%s4967] ss:$2 sm:$0xff] %v4237
        %5041 = vst [vmem:[%s4969] ss:$2 sm:$0xff] %v4238
        %5042 = vst [vmem:[%s4971] ss:$2 sm:$0xff] %v4239
        %v5043 = vld.sshfl [vmem:[#allocation1 + $0x20] sm:$0xff pattern:$0x75316420]
        %v5044 = vld.sshfl [vmem:[#allocation1 + $0x30] sm:$0xff pattern:$0x75316420]
        %5045 = vst [vmem:[#allocation1] ss:$2 sm:$0xff] %v4240
        %5046 = vst [vmem:[%s4961] ss:$2 sm:$0xff] %v4241
        %5047 = vst [vmem:[%s4963] ss:$2 sm:$0xff] %v4242
        %v5048 = vld.sshfl [vmem:[#allocation1] sm:$0xff pattern:$0x75316420]
        %v5049 = vld.sshfl [vmem:[#allocation1 + $0x10] sm:$0xff pattern:$0x75316420]
        %5050 = vst [vmem:[%s4967] ss:$2 sm:$0xff] %v4243
        %5051 = vst [vmem:[%s4969] ss:$2 sm:$0xff] %v4244
        %5052 = vst [vmem:[%s4971] ss:$2 sm:$0xff] %v4245
        %v5053 = vld.sshfl [vmem:[#allocation1 + $0x20] sm:$0xff pattern:$0x75316420]
        %v5054 = vld.sshfl [vmem:[#allocation1 + $0x30] sm:$0xff pattern:$0x75316420]
        %5055 = vst [vmem:[#allocation1] ss:$2 sm:$0xff] %v4246
        %5056 = vst [vmem:[%s4961] ss:$2 sm:$0xff] %v4247
        %5057 = vst [vmem:[%s4963] ss:$2 sm:$0xff] %v4248
        %v5058 = vld.sshfl [vmem:[#allocation1] sm:$0xff pattern:$0x75316420]
        %v5059 = vld.sshfl [vmem:[#allocation1 + $0x10] sm:$0xff pattern:$0x75316420]
        %5060 = vst [vmem:[%s4967] ss:$2 sm:$0xff] %v4249
        %5061 = vst [vmem:[%s4969] ss:$2 sm:$0xff] %v4250
        %5062 = vst [vmem:[%s4971] ss:$2 sm:$0xff] %v4251
        %v5063 = vld.sshfl [vmem:[#allocation1 + $0x20] sm:$0xff pattern:$0x75316420]
        %v5064 = vld.sshfl [vmem:[#allocation1 + $0x30] sm:$0xff pattern:$0x75316420]
        %5065 = vst [vmem:[#allocation1] ss:$2 sm:$0xff] %v4252
        %5066 = vst [vmem:[%s4961] ss:$2 sm:$0xff] %v4253
        %5067 = vst [vmem:[%s4963] ss:$2 sm:$0xff] %v4254
        %v5068 = vld.sshfl [vmem:[#allocation1] sm:$0xff pattern:$0x75316420]
        %v5069 = vld.sshfl [vmem:[#allocation1 + $0x10] sm:$0xff pattern:$0x75316420]
        %5070 = vst [vmem:[%s4967] ss:$2 sm:$0xff] %v4255
        %5071 = vst [vmem:[%s4969] ss:$2 sm:$0xff] %v4256
        %5072 = vst [vmem:[%s4971] ss:$2 sm:$0xff] %v4257
        %v5073 = vld.sshfl [vmem:[#allocation1 + $0x20] sm:$0xff pattern:$0x75316420]
        %v5074 = vld.sshfl [vmem:[#allocation1 + $0x30] sm:$0xff pattern:$0x75316420]
        %5075 = vst [vmem:[#allocation1] ss:$2 sm:$0xff] %v4258
        %5076 = vst [vmem:[%s4961] ss:$2 sm:$0xff] %v4259
        %5077 = vst [vmem:[%s4963] ss:$2 sm:$0xff] %v4260
        %v5078 = vld.sshfl [vmem:[#allocation1] sm:$0xff pattern:$0x75316420]
        %v5079 = vld.sshfl [vmem:[#allocation1 + $0x10] sm:$0xff pattern:$0x75316420]
        %5080 = vst [vmem:[%s4967] ss:$2 sm:$0xff] %v4261
        %5081 = vst [vmem:[%s4969] ss:$2 sm:$0xff] %v4262
        %5082 = vst [vmem:[%s4971] ss:$2 sm:$0xff] %v4263
        %v5083 = vld.sshfl [vmem:[#allocation1 + $0x20] sm:$0xff pattern:$0x75316420]
        %v5084 = vld.sshfl [vmem:[#allocation1 + $0x30] sm:$0xff pattern:$0x75316420]
        %5085 = vst [vmem:[#allocation1] ss:$2 sm:$0xff] %v4264
        %5086 = vst [vmem:[%s4961] ss:$2 sm:$0xff] %v4265
        %5087 = vst [vmem:[%s4963] ss:$2 sm:$0xff] %v4266
        %v5088 = vld.sshfl [vmem:[#allocation1] sm:$0xff pattern:$0x75316420]
        %v5089 = vld.sshfl [vmem:[#allocation1 + $0x10] sm:$0xff pattern:$0x75316420]
        %5090 = vst [vmem:[%s4967] ss:$2 sm:$0xff] %v4267
        %5091 = vst [vmem:[%s4969] ss:$2 sm:$0xff] %v4268
        %5092 = vst [vmem:[%s4971] ss:$2 sm:$0xff] %v4269
        %v5093 = vld.sshfl [vmem:[#allocation1 + $0x20] sm:$0xff pattern:$0x75316420]
        %v5094 = vld.sshfl [vmem:[#allocation1 + $0x30] sm:$0xff pattern:$0x75316420]
        %5095 = vst [vmem:[#allocation1] ss:$2 sm:$0xff] %v4270
        %5096 = vst [vmem:[%s4961] ss:$2 sm:$0xff] %v4271
        %5097 = vst [vmem:[%s4963] ss:$2 sm:$0xff] %v4272
        %v5098 = vld.sshfl [vmem:[#allocation1] sm:$0xff pattern:$0x75316420]
        %v5099 = vld.sshfl [vmem:[#allocation1 + $0x10] sm:$0xff pattern:$0x75316420]
        %5100 = vst [vmem:[%s4967] ss:$2 sm:$0xff] %v4273
        %5101 = vst [vmem:[%s4969] ss:$2 sm:$0xff] %v4274
        %5102 = vst [vmem:[%s4971] ss:$2 sm:$0xff] %v4275
        %v5103 = vld.sshfl [vmem:[#allocation1 + $0x20] sm:$0xff pattern:$0x75316420]
        %v5104 = vld.sshfl [vmem:[#allocation1 + $0x30] sm:$0xff pattern:$0x75316420]
        %5105 = vst [vmem:[#allocation1] ss:$2 sm:$0xff] %v4276
        %5106 = vst [vmem:[%s4961] ss:$2 sm:$0xff] %v4277
        %5107 = vst [vmem:[%s4963] ss:$2 sm:$0xff] %v4278
        %v5108 = vld.sshfl [vmem:[#allocation1] sm:$0xff pattern:$0x75316420]
        %v5109 = vld.sshfl [vmem:[#allocation1 + $0x10] sm:$0xff pattern:$0x75316420]
        %5110 = vst [vmem:[%s4967] ss:$2 sm:$0xff] %v4279
        %5111 = vst [vmem:[%s4969] ss:$2 sm:$0xff] %v4280
        %5112 = vst [vmem:[%s4971] ss:$2 sm:$0xff] %v4281
        %v5113 = vld.sshfl [vmem:[#allocation1 + $0x20] sm:$0xff pattern:$0x75316420]
        %v5114 = vld.sshfl [vmem:[#allocation1 + $0x30] sm:$0xff pattern:$0x75316420]
        %5115 = vst [vmem:[#allocation1] ss:$2 sm:$0xff] %v4282
        %5116 = vst [vmem:[%s4961] ss:$2 sm:$0xff] %v4283
        %5117 = vst [vmem:[%s4963] ss:$2 sm:$0xff] %v4284
        %v5118 = vld.sshfl [vmem:[#allocation1] sm:$0xff pattern:$0x75316420]
        %v5119 = vld.sshfl [vmem:[#allocation1 + $0x10] sm:$0xff pattern:$0x75316420]
        %5120 = vst [vmem:[%s4967] ss:$2 sm:$0xff] %v4285
        %5121 = vst [vmem:[%s4969] ss:$2 sm:$0xff] %v4286
        %5122 = vst [vmem:[%s4971] ss:$2 sm:$0xff] %v4287
        %v5123 = vld.sshfl [vmem:[#allocation1 + $0x20] sm:$0xff pattern:$0x75316420]
        %v5124 = vld.sshfl [vmem:[#allocation1 + $0x30] sm:$0xff pattern:$0x75316420]
        %5125 = vst [vmem:[#allocation1] ss:$2 sm:$0xff] %v4288
        %5126 = vst [vmem:[%s4961] ss:$2 sm:$0xff] %v4289
        %5127 = vst [vmem:[%s4963] ss:$2 sm:$0xff] %v4290
        %v5128 = vld.sshfl [vmem:[#allocation1] sm:$0xff pattern:$0x75316420]
        %v5129 = vld.sshfl [vmem:[#allocation1 + $0x10] sm:$0xff pattern:$0x75316420]
        %5130 = vst [vmem:[%s4967] ss:$2 sm:$0xff] %v4291
        %5131 = vst [vmem:[%s4969] ss:$2 sm:$0xff] %v4292
        %5132 = vst [vmem:[%s4971] ss:$2 sm:$0xff] %v4293
        %v5133 = vld.sshfl [vmem:[#allocation1 + $0x20] sm:$0xff pattern:$0x75316420]
        %v5134 = vld.sshfl [vmem:[#allocation1 + $0x30] sm:$0xff pattern:$0x75316420]
        %5135 = vst [vmem:[#allocation1] ss:$2 sm:$0xff] %v4294
        %5136 = vst [vmem:[%s4961] ss:$2 sm:$0xff] %v4295
        %5137 = vst [vmem:[%s4963] ss:$2 sm:$0xff] %v4296
        %v5138 = vld.sshfl [vmem:[#allocation1] sm:$0xff pattern:$0x75316420]
        %v5139 = vld.sshfl [vmem:[#allocation1 + $0x10] sm:$0xff pattern:$0x75316420]
        %5140 = vst [vmem:[%s4967] ss:$2 sm:$0xff] %v4297
        %5141 = vst [vmem:[%s4969] ss:$2 sm:$0xff] %v4298
        %5142 = vst [vmem:[%s4971] ss:$2 sm:$0xff] %v4299
        %v5143 = vld.sshfl [vmem:[#allocation1 + $0x20] sm:$0xff pattern:$0x75316420]
        %v5144 = vld.sshfl [vmem:[#allocation1 + $0x30] sm:$0xff pattern:$0x75316420]
        %5145 = vst [vmem:[#allocation1] ss:$2 sm:$0xff] %v4300
        %5146 = vst [vmem:[%s4961] ss:$2 sm:$0xff] %v4301
        %5147 = vst [vmem:[%s4963] ss:$2 sm:$0xff] %v4302
        %v5148 = vld.sshfl [vmem:[#allocation1] sm:$0xff pattern:$0x75316420]
        %v5149 = vld.sshfl [vmem:[#allocation1 + $0x10] sm:$0xff pattern:$0x75316420]
        %5150 = vst [vmem:[%s4967] ss:$2 sm:$0xff] %v4303
        %5151 = vst [vmem:[%s4969] ss:$2 sm:$0xff] %v4304
        %5152 = vst [vmem:[%s4971] ss:$2 sm:$0xff] %v4305
        %v5153 = vld.sshfl [vmem:[#allocation1 + $0x20] sm:$0xff pattern:$0x75316420]
        %v5154 = vld.sshfl [vmem:[#allocation1 + $0x30] sm:$0xff pattern:$0x75316420]
        %5155 = vst [vmem:[#allocation1] ss:$2 sm:$0xff] %v4306
        %5156 = vst [vmem:[%s4961] ss:$2 sm:$0xff] %v4307
        %5157 = vst [vmem:[%s4963] ss:$2 sm:$0xff] %v4308
        %v5158 = vld.sshfl [vmem:[#allocation1] sm:$0xff pattern:$0x75316420]
        %v5159 = vld.sshfl [vmem:[#allocation1 + $0x10] sm:$0xff pattern:$0x75316420]
        %5160 = vst [vmem:[%s4967] ss:$2 sm:$0xff] %v4309
        %5161 = vst [vmem:[%s4969] ss:$2 sm:$0xff] %v4310
        %5162 = vst [vmem:[%s4971] ss:$2 sm:$0xff] %v4311
        %v5163 = vld.sshfl [vmem:[#allocation1 + $0x20] sm:$0xff pattern:$0x75316420]
        %v5164 = vld.sshfl [vmem:[#allocation1 + $0x30] sm:$0xff pattern:$0x75316420]
        %5165 = vst [vmem:[#allocation1] ss:$2 sm:$0xff] %v4312
        %5166 = vst [vmem:[%s4961] ss:$2 sm:$0xff] %v4313
        %5167 = vst [vmem:[%s4963] ss:$2 sm:$0xff] %v4314
        %v5168 = vld.sshfl [vmem:[#allocation1] sm:$0xff pattern:$0x75316420]
        %v5169 = vld.sshfl [vmem:[#allocation1 + $0x10] sm:$0xff pattern:$0x75316420]
        %5170 = vst [vmem:[%s4967] ss:$2 sm:$0xff] %v4315
        %5171 = vst [vmem:[%s4969] ss:$2 sm:$0xff] %v4316
        %5172 = vst [vmem:[%s4971] ss:$2 sm:$0xff] %v4317
        %v5173 = vld.sshfl [vmem:[#allocation1 + $0x20] sm:$0xff pattern:$0x75316420]
        %v5174 = vld.sshfl [vmem:[#allocation1 + $0x30] sm:$0xff pattern:$0x75316420]
        %5175 = vst [vmem:[#allocation1] ss:$2 sm:$0xff] %v4318
        %5176 = vst [vmem:[%s4961] ss:$2 sm:$0xff] %v4319
        %5177 = vst [vmem:[%s4963] ss:$2 sm:$0xff] %v4320
        %v5178 = vld.sshfl [vmem:[#allocation1] sm:$0xff pattern:$0x75316420]
        %v5179 = vld.sshfl [vmem:[#allocation1 + $0x10] sm:$0xff pattern:$0x75316420]
        %5180 = vst [vmem:[%s4967] ss:$2 sm:$0xff] %v4321
        %5181 = vst [vmem:[%s4969] ss:$2 sm:$0xff] %v4322
        %5182 = vst [vmem:[%s4971] ss:$2 sm:$0xff] %v4323
        %v5183 = vld.sshfl [vmem:[#allocation1 + $0x20] sm:$0xff pattern:$0x75316420]
        %v5184 = vld.sshfl [vmem:[#allocation1 + $0x30] sm:$0xff pattern:$0x75316420]
        %5185 = vst [vmem:[#allocation1] ss:$2 sm:$0xff] %v4324
        %5186 = vst [vmem:[%s4961] ss:$2 sm:$0xff] %v4325
        %5187 = vst [vmem:[%s4963] ss:$2 sm:$0xff] %v4326
        %v5188 = vld.sshfl [vmem:[#allocation1] sm:$0xff pattern:$0x75316420]
        %v5189 = vld.sshfl [vmem:[#allocation1 + $0x10] sm:$0xff pattern:$0x75316420]
        %5190 = vst [vmem:[%s4967] ss:$2 sm:$0xff] %v4327
        %5191 = vst [vmem:[%s4969] ss:$2 sm:$0xff] %v4328
        %5192 = vst [vmem:[%s4971] ss:$2 sm:$0xff] %v4329
        %v5193 = vld.sshfl [vmem:[#allocation1 + $0x20] sm:$0xff pattern:$0x75316420]
        %v5194 = vld.sshfl [vmem:[#allocation1 + $0x30] sm:$0xff pattern:$0x75316420]
        %5195 = vst [vmem:[#allocation1] ss:$2 sm:$0xff] %v4330
        %5196 = vst [vmem:[%s4961] ss:$2 sm:$0xff] %v4331
        %5197 = vst [vmem:[%s4963] ss:$2 sm:$0xff] %v4332
        %v5198 = vld.sshfl [vmem:[#allocation1] sm:$0xff pattern:$0x75316420]
        %v5199 = vld.sshfl [vmem:[#allocation1 + $0x10] sm:$0xff pattern:$0x75316420]
        %5200 = vst [vmem:[%s4967] ss:$2 sm:$0xff] %v4333
        %5201 = vst [vmem:[%s4969] ss:$2 sm:$0xff] %v4334
        %5202 = vst [vmem:[%s4971] ss:$2 sm:$0xff] %v4335
        %v5203 = vld.sshfl [vmem:[#allocation1 + $0x20] sm:$0xff pattern:$0x75316420]
        %v5204 = vld.sshfl [vmem:[#allocation1 + $0x30] sm:$0xff pattern:$0x75316420]
        %5205 = vst [vmem:[#allocation1] ss:$2 sm:$0xff] %v4336
        %5206 = vst [vmem:[%s4961] ss:$2 sm:$0xff] %v4337
        %5207 = vst [vmem:[%s4963] ss:$2 sm:$0xff] %v4338
        %v5208 = vld.sshfl [vmem:[#allocation1] sm:$0xff pattern:$0x75316420]
        %v5209 = vld.sshfl [vmem:[#allocation1 + $0x10] sm:$0xff pattern:$0x75316420]
        %5210 = vst [vmem:[%s4967] ss:$2 sm:$0xff] %v4339
        %5211 = vst [vmem:[%s4969] ss:$2 sm:$0xff] %v4340
        %5212 = vst [vmem:[%s4971] ss:$2 sm:$0xff] %v4341
        %v5213 = vld.sshfl [vmem:[#allocation1 + $0x20] sm:$0xff pattern:$0x75316420]
        %v5214 = vld.sshfl [vmem:[#allocation1 + $0x30] sm:$0xff pattern:$0x75316420]
        %5215 = vst [vmem:[#allocation1] ss:$2 sm:$0xff] %v4342
        %5216 = vst [vmem:[%s4961] ss:$2 sm:$0xff] %v4343
        %5217 = vst [vmem:[%s4963] ss:$2 sm:$0xff] %v4344
        %v5218 = vld.sshfl [vmem:[#allocation1] sm:$0xff pattern:$0x75316420]
        %v5219 = vld.sshfl [vmem:[#allocation1 + $0x10] sm:$0xff pattern:$0x75316420]
        %5220 = vst [vmem:[%s4967] ss:$2 sm:$0xff] %v4345
        %5221 = vst [vmem:[%s4969] ss:$2 sm:$0xff] %v4346
        %5222 = vst [vmem:[%s4971] ss:$2 sm:$0xff] %v4347
        %v5223 = vld.sshfl [vmem:[#allocation1 + $0x20] sm:$0xff pattern:$0x75316420]
        %v5224 = vld.sshfl [vmem:[#allocation1 + $0x30] sm:$0xff pattern:$0x75316420]
        %5225 = vst [vmem:[#allocation1] ss:$2 sm:$0xff] %v4348
        %5226 = vst [vmem:[%s4961] ss:$2 sm:$0xff] %v4349
        %5227 = vst [vmem:[%s4963] ss:$2 sm:$0xff] %v4350
        %v5228 = vld.sshfl [vmem:[#allocation1] sm:$0xff pattern:$0x75316420]
        %v5229 = vld.sshfl [vmem:[#allocation1 + $0x10] sm:$0xff pattern:$0x75316420]
        %5230 = vst [vmem:[%s4967] ss:$2 sm:$0xff] %v4351
        %5231 = vst [vmem:[%s4969] ss:$2 sm:$0xff] %v4352
        %5232 = vst [vmem:[%s4971] ss:$2 sm:$0xff] %v4353
        %v5233 = vld.sshfl [vmem:[#allocation1 + $0x20] sm:$0xff pattern:$0x75316420]
        %v5234 = vld.sshfl [vmem:[#allocation1 + $0x30] sm:$0xff pattern:$0x75316420]
        %5235 = vst [vmem:[#allocation1] ss:$2 sm:$0xff] %v4354
        %5236 = vst [vmem:[%s4961] ss:$2 sm:$0xff] %v4355
        %5237 = vst [vmem:[%s4963] ss:$2 sm:$0xff] %v4356
        %v5238 = vld.sshfl [vmem:[#allocation1] sm:$0xff pattern:$0x75316420]
        %v5239 = vld.sshfl [vmem:[#allocation1 + $0x10] sm:$0xff pattern:$0x75316420]
        %5240 = vst [vmem:[%s4967] ss:$2 sm:$0xff] %v4357
        %5241 = vst [vmem:[%s4969] ss:$2 sm:$0xff] %v4358
        %5242 = vst [vmem:[%s4971] ss:$2 sm:$0xff] %v4359
        %v5243 = vld.sshfl [vmem:[#allocation1 + $0x20] sm:$0xff pattern:$0x75316420]
        %v5244 = vld.sshfl [vmem:[#allocation1 + $0x30] sm:$0xff pattern:$0x75316420]
        %5245 = vst [vmem:[#allocation1] ss:$2 sm:$0xff] %v4360
        %5246 = vst [vmem:[%s4961] ss:$2 sm:$0xff] %v4361
        %5247 = vst [vmem:[%s4963] ss:$2 sm:$0xff] %v4362
        %v5248 = vld.sshfl [vmem:[#allocation1] sm:$0xff pattern:$0x75316420]
        %v5249 = vld.sshfl [vmem:[#allocation1 + $0x10] sm:$0xff pattern:$0x75316420]
        %5250 = vst [vmem:[%s4967] ss:$2 sm:$0xff] %v4363
        %5251 = vst [vmem:[%s4969] ss:$2 sm:$0xff] %v4364
        %5252 = vst [vmem:[%s4971] ss:$2 sm:$0xff] %v4365
        %v5253 = vld.sshfl [vmem:[#allocation1 + $0x20] sm:$0xff pattern:$0x75316420]
        %v5254 = vld.sshfl [vmem:[#allocation1 + $0x30] sm:$0xff pattern:$0x75316420]
        %5255 = vst [vmem:[#allocation1] ss:$2 sm:$0xff] %v4366
        %5256 = vst [vmem:[%s4961] ss:$2 sm:$0xff] %v4367
        %5257 = vst [vmem:[%s4963] ss:$2 sm:$0xff] %v4368
        %v5258 = vld.sshfl [vmem:[#allocation1] sm:$0xff pattern:$0x75316420]
        %v5259 = vld.sshfl [vmem:[#allocation1 + $0x10] sm:$0xff pattern:$0x75316420]
        %5260 = vst [vmem:[%s4967] ss:$2 sm:$0xff] %v4369
        %5261 = vst [vmem:[%s4969] ss:$2 sm:$0xff] %v4370
        %5262 = vst [vmem:[%s4971] ss:$2 sm:$0xff] %v4371
        %v5263 = vld.sshfl [vmem:[#allocation1 + $0x20] sm:$0xff pattern:$0x75316420]
        %v5264 = vld.sshfl [vmem:[#allocation1 + $0x30] sm:$0xff pattern:$0x75316420]
        %5265 = vst [vmem:[#allocation1] ss:$2 sm:$0xff] %v4372
        %5266 = vst [vmem:[%s4961] ss:$2 sm:$0xff] %v4373
        %5267 = vst [vmem:[%s4963] ss:$2 sm:$0xff] %v4374
        %v5268 = vld.sshfl [vmem:[#allocation1] sm:$0xff pattern:$0x75316420]
        %v5269 = vld.sshfl [vmem:[#allocation1 + $0x10] sm:$0xff pattern:$0x75316420]
        %5270 = vst [vmem:[%s4967] ss:$2 sm:$0xff] %v4375
        %5271 = vst [vmem:[%s4969] ss:$2 sm:$0xff] %v4376
        %5272 = vst [vmem:[%s4971] ss:$2 sm:$0xff] %v4377
        %v5273 = vld.sshfl [vmem:[#allocation1 + $0x20] sm:$0xff pattern:$0x75316420]
        %v5274 = vld.sshfl [vmem:[#allocation1 + $0x30] sm:$0xff pattern:$0x75316420]
        %5275 = vst [vmem:[#allocation1] ss:$2 sm:$0xff] %v4378
        %5276 = vst [vmem:[%s4961] ss:$2 sm:$0xff] %v4379
        %5277 = vst [vmem:[%s4963] ss:$2 sm:$0xff] %v4380
        %v5278 = vld.sshfl [vmem:[#allocation1] sm:$0xff pattern:$0x75316420]
        %v5279 = vld.sshfl [vmem:[#allocation1 + $0x10] sm:$0xff pattern:$0x75316420]
        %5280 = vst [vmem:[%s4967] ss:$2 sm:$0xff] %v4381
        %5281 = vst [vmem:[%s4969] ss:$2 sm:$0xff] %v4382
        %5282 = vst [vmem:[%s4971] ss:$2 sm:$0xff] %v4383
        %v5283 = vld.sshfl [vmem:[#allocation1 + $0x20] sm:$0xff pattern:$0x75316420]
        %v5284 = vld.sshfl [vmem:[#allocation1 + $0x30] sm:$0xff pattern:$0x75316420]
        %5285 = vst [vmem:[#allocation1] ss:$2 sm:$0xff] %v4384
        %5286 = vst [vmem:[%s4961] ss:$2 sm:$0xff] %v4385
        %5287 = vst [vmem:[%s4963] ss:$2 sm:$0xff] %v4386
        %v5288 = vld.sshfl [vmem:[#allocation1] sm:$0xff pattern:$0x75316420]
        %v5289 = vld.sshfl [vmem:[#allocation1 + $0x10] sm:$0xff pattern:$0x75316420]
        %5290 = vst [vmem:[%s4967] ss:$2 sm:$0xff] %v4387
        %5291 = vst [vmem:[%s4969] ss:$2 sm:$0xff] %v4388
        %5292 = vst [vmem:[%s4971] ss:$2 sm:$0xff] %v4389
        %v5293 = vld.sshfl [vmem:[#allocation1 + $0x20] sm:$0xff pattern:$0x75316420]
        %v5294 = vld.sshfl [vmem:[#allocation1 + $0x30] sm:$0xff pattern:$0x75316420]
        %5295 = vst [vmem:[#allocation1] ss:$2 sm:$0xff] %v4390
        %5296 = vst [vmem:[%s4961] ss:$2 sm:$0xff] %v4391
        %5297 = vst [vmem:[%s4963] ss:$2 sm:$0xff] %v4392
        %v5298 = vld.sshfl [vmem:[#allocation1] sm:$0xff pattern:$0x75316420]
        %v5299 = vld.sshfl [vmem:[#allocation1 + $0x10] sm:$0xff pattern:$0x75316420]
        %5300 = vst [vmem:[%s4967] ss:$2 sm:$0xff] %v4393
        %5301 = vst [vmem:[%s4969] ss:$2 sm:$0xff] %v4394
        %5302 = vst [vmem:[%s4971] ss:$2 sm:$0xff] %v4395
        %v5303 = vld.sshfl [vmem:[#allocation1 + $0x20] sm:$0xff pattern:$0x75316420]
        %v5304 = vld.sshfl [vmem:[#allocation1 + $0x30] sm:$0xff pattern:$0x75316420]
        %5305 = vst [vmem:[#allocation1] ss:$2 sm:$0xff] %v4396
        %5306 = vst [vmem:[%s4961] ss:$2 sm:$0xff] %v4397
        %5307 = vst [vmem:[%s4963] ss:$2 sm:$0xff] %v4398
        %v5308 = vld.sshfl [vmem:[#allocation1] sm:$0xff pattern:$0x75316420]
        %v5309 = vld.sshfl [vmem:[#allocation1 + $0x10] sm:$0xff pattern:$0x75316420]
        %5310 = vst [vmem:[%s4967] ss:$2 sm:$0xff] %v4399
        %5311 = vst [vmem:[%s4969] ss:$2 sm:$0xff] %v4400
        %5312 = vst [vmem:[%s4971] ss:$2 sm:$0xff] %v4401
        %v5313 = vld.sshfl [vmem:[#allocation1 + $0x20] sm:$0xff pattern:$0x75316420]
        %v5314 = vld.sshfl [vmem:[#allocation1 + $0x30] sm:$0xff pattern:$0x75316420]
        %5315 = vst [vmem:[#allocation1] ss:$2 sm:$0xff] %v4402
        %5316 = vst [vmem:[%s4961] ss:$2 sm:$0xff] %v4403
        %5317 = vst [vmem:[%s4963] ss:$2 sm:$0xff] %v4404
        %v5318 = vld.sshfl [vmem:[#allocation1] sm:$0xff pattern:$0x75316420]
        %v5319 = vld.sshfl [vmem:[#allocation1 + $0x10] sm:$0xff pattern:$0x75316420]
        %5320 = vst [vmem:[%s4967] ss:$2 sm:$0xff] %v4405
        %5321 = vst [vmem:[%s4969] ss:$2 sm:$0xff] %v4406
        %5322 = vst [vmem:[%s4971] ss:$2 sm:$0xff] %v4407
        %v5323 = vld.sshfl [vmem:[#allocation1 + $0x20] sm:$0xff pattern:$0x75316420]
        %v5324 = vld.sshfl [vmem:[#allocation1 + $0x30] sm:$0xff pattern:$0x75316420]
        %5325 = vst [vmem:[#allocation1] ss:$2 sm:$0xff] %v4408
        %5326 = vst [vmem:[%s4961] ss:$2 sm:$0xff] %v4409
        %5327 = vst [vmem:[%s4963] ss:$2 sm:$0xff] %v4410
        %v5328 = vld.sshfl [vmem:[#allocation1] sm:$0xff pattern:$0x75316420]
        %v5329 = vld.sshfl [vmem:[#allocation1 + $0x10] sm:$0xff pattern:$0x75316420]
        %5330 = vst [vmem:[%s4967] ss:$2 sm:$0xff] %v4411
        %5331 = vst [vmem:[%s4969] ss:$2 sm:$0xff] %v4412
        %5332 = vst [vmem:[%s4971] ss:$2 sm:$0xff] %v4413
        %v5333 = vld.sshfl [vmem:[#allocation1 + $0x20] sm:$0xff pattern:$0x75316420]
        %v5334 = vld.sshfl [vmem:[#allocation1 + $0x30] sm:$0xff pattern:$0x75316420]
        %5335 = vst [vmem:[#allocation1] ss:$2 sm:$0xff] %v4414
        %5336 = vst [vmem:[%s4961] ss:$2 sm:$0xff] %v4415
        %5337 = vst [vmem:[%s4963] ss:$2 sm:$0xff] %v4416
        %v5338 = vld.sshfl [vmem:[#allocation1] sm:$0xff pattern:$0x75316420]
        %v5339 = vld.sshfl [vmem:[#allocation1 + $0x10] sm:$0xff pattern:$0x75316420]
        %5340 = vst [vmem:[%s4967] ss:$2 sm:$0xff] %v4417
        %5341 = vst [vmem:[%s4969] ss:$2 sm:$0xff] %v4418
        %5342 = vst [vmem:[%s4971] ss:$2 sm:$0xff] %v4419
        %v5343 = vld.sshfl [vmem:[#allocation1 + $0x20] sm:$0xff pattern:$0x75316420]
        %v5344 = vld.sshfl [vmem:[#allocation1 + $0x30] sm:$0xff pattern:$0x75316420]
        %5345 = vst [vmem:[#allocation1] ss:$2 sm:$0xff] %v4420
        %5346 = vst [vmem:[%s4961] ss:$2 sm:$0xff] %v4421
        %5347 = vst [vmem:[%s4963] ss:$2 sm:$0xff] %v4422
        %v5348 = vld.sshfl [vmem:[#allocation1] sm:$0xff pattern:$0x75316420]
        %v5349 = vld.sshfl [vmem:[#allocation1 + $0x10] sm:$0xff pattern:$0x75316420]
        %5350 = vst [vmem:[%s4967] ss:$2 sm:$0xff] %v4423
        %5351 = vst [vmem:[%s4969] ss:$2 sm:$0xff] %v4424
        %5352 = vst [vmem:[%s4971] ss:$2 sm:$0xff] %v4425
        %v5353 = vld.sshfl [vmem:[#allocation1 + $0x20] sm:$0xff pattern:$0x75316420]
        %v5354 = vld.sshfl [vmem:[#allocation1 + $0x30] sm:$0xff pattern:$0x75316420]
        %5355 = vst [vmem:[#allocation1] ss:$2 sm:$0xff] %v4426
        %5356 = vst [vmem:[%s4961] ss:$2 sm:$0xff] %v4427
        %5357 = vst [vmem:[%s4963] ss:$2 sm:$0xff] %v4428
        %v5358 = vld.sshfl [vmem:[#allocation1] sm:$0xff pattern:$0x75316420]
        %v5359 = vld.sshfl [vmem:[#allocation1 + $0x10] sm:$0xff pattern:$0x75316420]
        %5360 = vst [vmem:[%s4967] ss:$2 sm:$0xff] %v4429
        %5361 = vst [vmem:[%s4969] ss:$2 sm:$0xff] %v4430
        %5362 = vst [vmem:[%s4971] ss:$2 sm:$0xff] %v4431
        %v5363 = vld.sshfl [vmem:[#allocation1 + $0x20] sm:$0xff pattern:$0x75316420]
        %v5364 = vld.sshfl [vmem:[#allocation1 + $0x30] sm:$0xff pattern:$0x75316420]
        %5365 = vst [vmem:[#allocation1] ss:$2 sm:$0xff] %v4432
        %5366 = vst [vmem:[%s4961] ss:$2 sm:$0xff] %v4433
        %5367 = vst [vmem:[%s4963] ss:$2 sm:$0xff] %v4434
        %v5368 = vld.sshfl [vmem:[#allocation1] sm:$0xff pattern:$0x75316420]
        %v5369 = vld.sshfl [vmem:[#allocation1 + $0x10] sm:$0xff pattern:$0x75316420]
        %5370 = vst [vmem:[%s4967] ss:$2 sm:$0xff] %v4435
        %5371 = vst [vmem:[%s4969] ss:$2 sm:$0xff] %v4436
        %5372 = vst [vmem:[%s4971] ss:$2 sm:$0xff] %v4437
        %v5373 = vld.sshfl [vmem:[#allocation1 + $0x20] sm:$0xff pattern:$0x75316420]
        %v5374 = vld.sshfl [vmem:[#allocation1 + $0x30] sm:$0xff pattern:$0x75316420]
        %5375 = vst [vmem:[#allocation1] ss:$2 sm:$0xff] %v4438
        %5376 = vst [vmem:[%s4961] ss:$2 sm:$0xff] %v4439
        %5377 = vst [vmem:[%s4963] ss:$2 sm:$0xff] %v4440
        %v5378 = vld.sshfl [vmem:[#allocation1] sm:$0xff pattern:$0x75316420]
        %v5379 = vld.sshfl [vmem:[#allocation1 + $0x10] sm:$0xff pattern:$0x75316420]
        %5380 = vst [vmem:[%s4967] ss:$2 sm:$0xff] %v4441
        %5381 = vst [vmem:[%s4969] ss:$2 sm:$0xff] %v4442
        %5382 = vst [vmem:[%s4971] ss:$2 sm:$0xff] %v4443
        %v5383 = vld.sshfl [vmem:[#allocation1 + $0x20] sm:$0xff pattern:$0x75316420]
        %v5384 = vld.sshfl [vmem:[#allocation1 + $0x30] sm:$0xff pattern:$0x75316420]
        %5385 = vst [vmem:[#allocation1] ss:$2 sm:$0xff] %v4444
        %5386 = vst [vmem:[%s4961] ss:$2 sm:$0xff] %v4445
        %5387 = vst [vmem:[%s4963] ss:$2 sm:$0xff] %v4446
        %v5388 = vld.sshfl [vmem:[#allocation1] sm:$0xff pattern:$0x75316420]
        %v5389 = vld.sshfl [vmem:[#allocation1 + $0x10] sm:$0xff pattern:$0x75316420]
        %5390 = vst [vmem:[%s4967] ss:$2 sm:$0xff] %v4447
        %5391 = vst [vmem:[%s4969] ss:$2 sm:$0xff] %v4448
        %5392 = vst [vmem:[%s4971] ss:$2 sm:$0xff] %v4449
        %v5393 = vld.sshfl [vmem:[#allocation1 + $0x20] sm:$0xff pattern:$0x75316420]
        %v5394 = vld.sshfl [vmem:[#allocation1 + $0x30] sm:$0xff pattern:$0x75316420]
        %5395 = vst [vmem:[#allocation1] ss:$2 sm:$0xff] %v4450
        %5396 = vst [vmem:[%s4961] ss:$2 sm:$0xff] %v4451
        %5397 = vst [vmem:[%s4963] ss:$2 sm:$0xff] %v4452
        %v5398 = vld.sshfl [vmem:[#allocation1] sm:$0xff pattern:$0x75316420]
        %v5399 = vld.sshfl [vmem:[#allocation1 + $0x10] sm:$0xff pattern:$0x75316420]
        %5400 = vst [vmem:[%s4967] ss:$2 sm:$0xff] %v4453
        %5401 = vst [vmem:[%s4969] ss:$2 sm:$0xff] %v4454
        %5402 = vst [vmem:[%s4971] ss:$2 sm:$0xff] %v4455
        %v5403 = vld.sshfl [vmem:[#allocation1 + $0x20] sm:$0xff pattern:$0x75316420]
        %v5404 = vld.sshfl [vmem:[#allocation1 + $0x30] sm:$0xff pattern:$0x75316420]
        %5405 = vst [vmem:[#allocation1] ss:$2 sm:$0xff] %v4456
        %5406 = vst [vmem:[%s4961] ss:$2 sm:$0xff] %v4457
        %5407 = vst [vmem:[%s4963] ss:$2 sm:$0xff] %v4458
        %v5408 = vld.sshfl [vmem:[#allocation1] sm:$0xff pattern:$0x75316420]
        %v5409 = vld.sshfl [vmem:[#allocation1 + $0x10] sm:$0xff pattern:$0x75316420]
        %5410 = vst [vmem:[%s4967] ss:$2 sm:$0xff] %v4459
        %5411 = vst [vmem:[%s4969] ss:$2 sm:$0xff] %v4460
        %5412 = vst [vmem:[%s4971] ss:$2 sm:$0xff] %v4461
        %v5413 = vld.sshfl [vmem:[#allocation1 + $0x20] sm:$0xff pattern:$0x75316420]
        %v5414 = vld.sshfl [vmem:[#allocation1 + $0x30] sm:$0xff pattern:$0x75316420]
        %5415 = vst [vmem:[#allocation1] ss:$2 sm:$0xff] %v4462
        %5416 = vst [vmem:[%s4961] ss:$2 sm:$0xff] %v4463
        %5417 = vst [vmem:[%s4963] ss:$2 sm:$0xff] %v4464
        %v5418 = vld.sshfl [vmem:[#allocation1] sm:$0xff pattern:$0x75316420]
        %v5419 = vld.sshfl [vmem:[#allocation1 + $0x10] sm:$0xff pattern:$0x75316420]
        %5420 = vst [vmem:[%s4967] ss:$2 sm:$0xff] %v4465
        %5421 = vst [vmem:[%s4969] ss:$2 sm:$0xff] %v4466
        %5422 = vst [vmem:[%s4971] ss:$2 sm:$0xff] %v4467
        %v5423 = vld.sshfl [vmem:[#allocation1 + $0x20] sm:$0xff pattern:$0x75316420]
        %v5424 = vld.sshfl [vmem:[#allocation1 + $0x30] sm:$0xff pattern:$0x75316420]
        %5425 = vst [vmem:[#allocation1] ss:$2 sm:$0xff] %v4468
        %5426 = vst [vmem:[%s4961] ss:$2 sm:$0xff] %v4469
        %5427 = vst [vmem:[%s4963] ss:$2 sm:$0xff] %v4470
        %v5428 = vld.sshfl [vmem:[#allocation1] sm:$0xff pattern:$0x75316420]
        %v5429 = vld.sshfl [vmem:[#allocation1 + $0x10] sm:$0xff pattern:$0x75316420]
        %5430 = vst [vmem:[%s4967] ss:$2 sm:$0xff] %v4471
        %5431 = vst [vmem:[%s4969] ss:$2 sm:$0xff] %v4472
        %5432 = vst [vmem:[%s4971] ss:$2 sm:$0xff] %v4473
        %v5433 = vld.sshfl [vmem:[#allocation1 + $0x20] sm:$0xff pattern:$0x75316420]
        %v5434 = vld.sshfl [vmem:[#allocation1 + $0x30] sm:$0xff pattern:$0x75316420]
        %5435 = vst [vmem:[#allocation1] ss:$2 sm:$0xff] %v4474
        %5436 = vst [vmem:[%s4961] ss:$2 sm:$0xff] %v4475
        %5437 = vst [vmem:[%s4963] ss:$2 sm:$0xff] %v4476
        %v5438 = vld.sshfl [vmem:[#allocation1] sm:$0xff pattern:$0x75316420]
        %v5439 = vld.sshfl [vmem:[#allocation1 + $0x10] sm:$0xff pattern:$0x75316420]
        %5440 = vst [vmem:[%s4967] ss:$2 sm:$0xff] %v4477
        %5441 = vst [vmem:[%s4969] ss:$2 sm:$0xff] %v4478
        %5442 = vst [vmem:[%s4971] ss:$2 sm:$0xff] %v4479
        %v5443 = vld.sshfl [vmem:[#allocation1 + $0x20] sm:$0xff pattern:$0x75316420]
        %v5444 = vld.sshfl [vmem:[#allocation1 + $0x30] sm:$0xff pattern:$0x75316420]
        %5445 = vst [vmem:[#allocation1] ss:$2 sm:$0xff] %v4480
        %5446 = vst [vmem:[%s4961] ss:$2 sm:$0xff] %v4481
        %5447 = vst [vmem:[%s4963] ss:$2 sm:$0xff] %v4482
        %v5448 = vld.sshfl [vmem:[#allocation1] sm:$0xff pattern:$0x75316420]
        %v5449 = vld.sshfl [vmem:[#allocation1 + $0x10] sm:$0xff pattern:$0x75316420]
        %5450 = vst [vmem:[%s4967] ss:$2 sm:$0xff] %v4483
        %5451 = vst [vmem:[%s4969] ss:$2 sm:$0xff] %v4484
        %5452 = vst [vmem:[%s4971] ss:$2 sm:$0xff] %v4485
        %v5453 = vld.sshfl [vmem:[#allocation1 + $0x20] sm:$0xff pattern:$0x75316420]
        %v5454 = vld.sshfl [vmem:[#allocation1 + $0x30] sm:$0xff pattern:$0x75316420]
        %5455 = vst [vmem:[#allocation1] ss:$2 sm:$0xff] %v4486
        %5456 = vst [vmem:[%s4961] ss:$2 sm:$0xff] %v4487
        %5457 = vst [vmem:[%s4963] ss:$2 sm:$0xff] %v4488
        %v5458 = vld.sshfl [vmem:[#allocation1] sm:$0xff pattern:$0x75316420]
        %v5459 = vld.sshfl [vmem:[#allocation1 + $0x10] sm:$0xff pattern:$0x75316420]
        %5460 = vst [vmem:[%s4967] ss:$2 sm:$0xff] %v4489
        %5461 = vst [vmem:[%s4969] ss:$2 sm:$0xff] %v4490
        %5462 = vst [vmem:[%s4971] ss:$2 sm:$0xff] %v4491
        %v5463 = vld.sshfl [vmem:[#allocation1 + $0x20] sm:$0xff pattern:$0x75316420]
        %v5464 = vld.sshfl [vmem:[#allocation1 + $0x30] sm:$0xff pattern:$0x75316420]
        %5465 = vst [vmem:[#allocation1] ss:$2 sm:$0xff] %v4492
        %5466 = vst [vmem:[%s4961] ss:$2 sm:$0xff] %v4493
        %5467 = vst [vmem:[%s4963] ss:$2 sm:$0xff] %v4494
        %v5468 = vld.sshfl [vmem:[#allocation1] sm:$0xff pattern:$0x75316420]
        %v5469 = vld.sshfl [vmem:[#allocation1 + $0x10] sm:$0xff pattern:$0x75316420]
        %5470 = vst [vmem:[%s4967] ss:$2 sm:$0xff] %v4495
        %5471 = vst [vmem:[%s4969] ss:$2 sm:$0xff] %v4496
        %5472 = vst [vmem:[%s4971] ss:$2 sm:$0xff] %v4497
        %v5473 = vld.sshfl [vmem:[#allocation1 + $0x20] sm:$0xff pattern:$0x75316420]
        %v5474 = vld.sshfl [vmem:[#allocation1 + $0x30] sm:$0xff pattern:$0x75316420]
        %5475 = vst [vmem:[#allocation1] ss:$2 sm:$0xff] %v4498
        %5476 = vst [vmem:[%s4961] ss:$2 sm:$0xff] %v4499
        %5477 = vst [vmem:[%s4963] ss:$2 sm:$0xff] %v4500
        %v5478 = vld.sshfl [vmem:[#allocation1] sm:$0xff pattern:$0x75316420]
        %v5479 = vld.sshfl [vmem:[#allocation1 + $0x10] sm:$0xff pattern:$0x75316420]
        %5480 = vst [vmem:[%s4967] ss:$2 sm:$0xff] %v4501
        %5481 = vst [vmem:[%s4969] ss:$2 sm:$0xff] %v4502
        %5482 = vst [vmem:[%s4971] ss:$2 sm:$0xff] %v4503
        %v5483 = vld.sshfl [vmem:[#allocation1 + $0x20] sm:$0xff pattern:$0x75316420]
        %v5484 = vld.sshfl [vmem:[#allocation1 + $0x30] sm:$0xff pattern:$0x75316420]
        %5485 = vst [vmem:[#allocation1] ss:$2 sm:$0xff] %v4504
        %5486 = vst [vmem:[%s4961] ss:$2 sm:$0xff] %v4505
        %5487 = vst [vmem:[%s4963] ss:$2 sm:$0xff] %v4506
        %v5488 = vld.sshfl [vmem:[#allocation1] sm:$0xff pattern:$0x75316420]
        %v5489 = vld.sshfl [vmem:[#allocation1 + $0x10] sm:$0xff pattern:$0x75316420]
        %5490 = vst [vmem:[%s4967] ss:$2 sm:$0xff] %v4507
        %5491 = vst [vmem:[%s4969] ss:$2 sm:$0xff] %v4508
        %5492 = vst [vmem:[%s4971] ss:$2 sm:$0xff] %v4509
        %v5493 = vld.sshfl [vmem:[#allocation1 + $0x20] sm:$0xff pattern:$0x75316420]
        %v5494 = vld.sshfl [vmem:[#allocation1 + $0x30] sm:$0xff pattern:$0x75316420]
        %5495 = vst [vmem:[#allocation1] ss:$2 sm:$0xff] %v4510
        %5496 = vst [vmem:[%s4961] ss:$2 sm:$0xff] %v4511
        %5497 = vst [vmem:[%s4963] ss:$2 sm:$0xff] %v4512
        %v5498 = vld.sshfl [vmem:[#allocation1] sm:$0xff pattern:$0x75316420]
        %v5499 = vld.sshfl [vmem:[#allocation1 + $0x10] sm:$0xff pattern:$0x75316420]
        %5500 = vst [vmem:[%s4967] ss:$2 sm:$0xff] %v4513
        %5501 = vst [vmem:[%s4969] ss:$2 sm:$0xff] %v4514
        %5502 = vst [vmem:[%s4971] ss:$2 sm:$0xff] %v4515
        %v5503 = vld.sshfl [vmem:[#allocation1 + $0x20] sm:$0xff pattern:$0x75316420]
        %v5504 = vld.sshfl [vmem:[#allocation1 + $0x30] sm:$0xff pattern:$0x75316420]
        %5505 = vst [vmem:[#allocation1] ss:$2 sm:$0xff] %v4516
        %5506 = vst [vmem:[%s4961] ss:$2 sm:$0xff] %v4517
        %5507 = vst [vmem:[%s4963] ss:$2 sm:$0xff] %v4518
        %v5508 = vld.sshfl [vmem:[#allocation1] sm:$0xff pattern:$0x75316420]
        %v5509 = vld.sshfl [vmem:[#allocation1 + $0x10] sm:$0xff pattern:$0x75316420]
        %5510 = vst [vmem:[%s4967] ss:$2 sm:$0xff] %v4519
        %5511 = vst [vmem:[%s4969] ss:$2 sm:$0xff] %v4520
        %5512 = vst [vmem:[%s4971] ss:$2 sm:$0xff] %v4521
        %v5513 = vld.sshfl [vmem:[#allocation1 + $0x20] sm:$0xff pattern:$0x75316420]
        %v5514 = vld.sshfl [vmem:[#allocation1 + $0x30] sm:$0xff pattern:$0x75316420]
        %5515 = vst [vmem:[#allocation1] ss:$2 sm:$0xff] %v4522
        %5516 = vst [vmem:[%s4961] ss:$2 sm:$0xff] %v4523
        %5517 = vst [vmem:[%s4963] ss:$2 sm:$0xff] %v4524
        %v5518 = vld.sshfl [vmem:[#allocation1] sm:$0xff pattern:$0x75316420]
        %v5519 = vld.sshfl [vmem:[#allocation1 + $0x10] sm:$0xff pattern:$0x75316420]
        %5520 = vst [vmem:[%s4967] ss:$2 sm:$0xff] %v4525
        %5521 = vst [vmem:[%s4969] ss:$2 sm:$0xff] %v4526
        %5522 = vst [vmem:[%s4971] ss:$2 sm:$0xff] %v4527
        %v5523 = vld.sshfl [vmem:[#allocation1 + $0x20] sm:$0xff pattern:$0x75316420]
        %v5524 = vld.sshfl [vmem:[#allocation1 + $0x30] sm:$0xff pattern:$0x75316420]
        %5525 = vst [vmem:[#allocation1] ss:$2 sm:$0xff] %v4528
        %5526 = vst [vmem:[%s4961] ss:$2 sm:$0xff] %v4529
        %5527 = vst [vmem:[%s4963] ss:$2 sm:$0xff] %v4530
        %v5528 = vld.sshfl [vmem:[#allocation1] sm:$0xff pattern:$0x75316420]
        %v5529 = vld.sshfl [vmem:[#allocation1 + $0x10] sm:$0xff pattern:$0x75316420]
        %5530 = vst [vmem:[%s4967] ss:$2 sm:$0xff] %v4531
        %5531 = vst [vmem:[%s4969] ss:$2 sm:$0xff] %v4532
        %5532 = vst [vmem:[%s4971] ss:$2 sm:$0xff] %v4533
        %v5533 = vld.sshfl [vmem:[#allocation1 + $0x20] sm:$0xff pattern:$0x75316420]
        %v5534 = vld.sshfl [vmem:[#allocation1 + $0x30] sm:$0xff pattern:$0x75316420]
        %5535 = vst [vmem:[#allocation1] ss:$2 sm:$0xff] %v4534
        %5536 = vst [vmem:[%s4961] ss:$2 sm:$0xff] %v4535
        %5537 = vst [vmem:[%s4963] ss:$2 sm:$0xff] %v4536
        %v5538 = vld.sshfl [vmem:[#allocation1] sm:$0xff pattern:$0x75316420]
        %v5539 = vld.sshfl [vmem:[#allocation1 + $0x10] sm:$0xff pattern:$0x75316420]
        %5540 = vst [vmem:[%s4967] ss:$2 sm:$0xff] %v4537
        %5541 = vst [vmem:[%s4969] ss:$2 sm:$0xff] %v4538
        %5542 = vst [vmem:[%s4971] ss:$2 sm:$0xff] %v4539
        %v5543 = vld.sshfl [vmem:[#allocation1 + $0x20] sm:$0xff pattern:$0x75316420]
        %v5544 = vld.sshfl [vmem:[#allocation1 + $0x30] sm:$0xff pattern:$0x75316420]
        %5545 = vst [vmem:[#allocation1] ss:$2 sm:$0xff] %v4540
        %5546 = vst [vmem:[%s4961] ss:$2 sm:$0xff] %v4541
        %5547 = vst [vmem:[%s4963] ss:$2 sm:$0xff] %v4542
        %v5548 = vld.sshfl [vmem:[#allocation1] sm:$0xff pattern:$0x75316420]
        %v5549 = vld.sshfl [vmem:[#allocation1 + $0x10] sm:$0xff pattern:$0x75316420]
        %5550 = vst [vmem:[%s4967] ss:$2 sm:$0xff] %v4543
        %5551 = vst [vmem:[%s4969] ss:$2 sm:$0xff] %v4544
        %5552 = vst [vmem:[%s4971] ss:$2 sm:$0xff] %v4545
        %v5553 = vld.sshfl [vmem:[#allocation1 + $0x20] sm:$0xff pattern:$0x75316420]
        %v5554 = vld.sshfl [vmem:[#allocation1 + $0x30] sm:$0xff pattern:$0x75316420]
        %5555 = vst [vmem:[#allocation1] ss:$2 sm:$0xff] %v4546
        %5556 = vst [vmem:[%s4961] ss:$2 sm:$0xff] %v4547
        %5557 = vst [vmem:[%s4963] ss:$2 sm:$0xff] %v4548
        %v5558 = vld.sshfl [vmem:[#allocation1] sm:$0xff pattern:$0x75316420]
        %v5559 = vld.sshfl [vmem:[#allocation1 + $0x10] sm:$0xff pattern:$0x75316420]
        %5560 = vst [vmem:[%s4967] ss:$2 sm:$0xff] %v4549
        %5561 = vst [vmem:[%s4969] ss:$2 sm:$0xff] %v4550
        %5562 = vst [vmem:[%s4971] ss:$2 sm:$0xff] %v4551
        %v5563 = vld.sshfl [vmem:[#allocation1 + $0x20] sm:$0xff pattern:$0x75316420]
        %v5564 = vld.sshfl [vmem:[#allocation1 + $0x30] sm:$0xff pattern:$0x75316420]
        %5565 = vst [vmem:[#allocation1] ss:$2 sm:$0xff] %v4552
        %5566 = vst [vmem:[%s4961] ss:$2 sm:$0xff] %v4553
        %5567 = vst [vmem:[%s4963] ss:$2 sm:$0xff] %v4554
        %v5568 = vld.sshfl [vmem:[#allocation1] sm:$0xff pattern:$0x75316420]
        %v5569 = vld.sshfl [vmem:[#allocation1 + $0x10] sm:$0xff pattern:$0x75316420]
        %5570 = vst [vmem:[%s4967] ss:$2 sm:$0xff] %v4555
        %5571 = vst [vmem:[%s4969] ss:$2 sm:$0xff] %v4556
        %5572 = vst [vmem:[%s4971] ss:$2 sm:$0xff] %v4557
        %v5573 = vld.sshfl [vmem:[#allocation1 + $0x20] sm:$0xff pattern:$0x75316420]
        %v5574 = vld.sshfl [vmem:[#allocation1 + $0x30] sm:$0xff pattern:$0x75316420]
        %5575 = vst [vmem:[#allocation1] ss:$2 sm:$0xff] %v4558
        %5576 = vst [vmem:[%s4961] ss:$2 sm:$0xff] %v4559
        %5577 = vst [vmem:[%s4963] ss:$2 sm:$0xff] %v4560
        %v5578 = vld.sshfl [vmem:[#allocation1] sm:$0xff pattern:$0x75316420]
        %v5579 = vld.sshfl [vmem:[#allocation1 + $0x10] sm:$0xff pattern:$0x75316420]
        %5580 = vst [vmem:[%s4967] ss:$2 sm:$0xff] %v4561
        %5581 = vst [vmem:[%s4969] ss:$2 sm:$0xff] %v4562
        %5582 = vst [vmem:[%s4971] ss:$2 sm:$0xff] %v4563
        %v5583 = vld.sshfl [vmem:[#allocation1 + $0x20] sm:$0xff pattern:$0x75316420]
        %v5584 = vld.sshfl [vmem:[#allocation1 + $0x30] sm:$0xff pattern:$0x75316420]
        %5585 = vst [vmem:[#allocation1] ss:$2 sm:$0xff] %v4564
        %5586 = vst [vmem:[%s4961] ss:$2 sm:$0xff] %v4565
        %5587 = vst [vmem:[%s4963] ss:$2 sm:$0xff] %v4566
        %v5588 = vld.sshfl [vmem:[#allocation1] sm:$0xff pattern:$0x75316420]
        %v5589 = vld.sshfl [vmem:[#allocation1 + $0x10] sm:$0xff pattern:$0x75316420]
        %5590 = vst [vmem:[%s4967] ss:$2 sm:$0xff] %v4567
        %5591 = vst [vmem:[%s4969] ss:$2 sm:$0xff] %v4568
        %5592 = vst [vmem:[%s4971] ss:$2 sm:$0xff] %v4569
        %v5593 = vld.sshfl [vmem:[#allocation1 + $0x20] sm:$0xff pattern:$0x75316420]
        %v5594 = vld.sshfl [vmem:[#allocation1 + $0x30] sm:$0xff pattern:$0x75316420]
        %5595 = vst [vmem:[#allocation1] ss:$2 sm:$0xff] %v4570
        %5596 = vst [vmem:[%s4961] ss:$2 sm:$0xff] %v4571
        %5597 = vst [vmem:[%s4963] ss:$2 sm:$0xff] %v4572
        %v5598 = vld.sshfl [vmem:[#allocation1] sm:$0xff pattern:$0x75316420]
        %v5599 = vld.sshfl [vmem:[#allocation1 + $0x10] sm:$0xff pattern:$0x75316420]
        %5600 = vst [vmem:[%s4967] ss:$2 sm:$0xff] %v4573
        %5601 = vst [vmem:[%s4969] ss:$2 sm:$0xff] %v4574
        %5602 = vst [vmem:[%s4971] ss:$2 sm:$0xff] %v4575
        %v5603 = vld.sshfl [vmem:[#allocation1 + $0x20] sm:$0xff pattern:$0x75316420]
        %v5604 = vld.sshfl [vmem:[#allocation1 + $0x30] sm:$0xff pattern:$0x75316420]
        %vm5861 = vcmask 261120
        %v5862 = vsel %vm5861, %v4965, 0.0
        %5863 = vadd.xlane.f32.xlu0 %v5862
        %v5864 = vpop.xlane.xlu0 %5863
        %vm5865 = vcmask 257024
        %v5866 = vsel %vm5865, %v4966, 0.0
        %5867 = vadd.xlane.f32.xlu0 %v5866
        %v5868 = vpop.xlane.xlu0 %5867
        %v5869 = vsel %vm5861, %v4973, 0.0
        %5870 = vadd.xlane.f32.xlu0 %v5869
        %v5871 = vpop.xlane.xlu0 %5870
        %v5872 = vsel %vm5865, %v4974, 0.0
        %5873 = vadd.xlane.f32.xlu0 %v5872
        %v5874 = vpop.xlane.xlu0 %5873
        %v5875 = vsel %vm5861, %v4978, 0.0
        %5876 = vadd.xlane.f32.xlu0 %v5875
        %v5877 = vpop.xlane.xlu0 %5876
        %v5878 = vsel %vm5865, %v4979, 0.0
        %5879 = vadd.xlane.f32.xlu0 %v5878
        %v5880 = vpop.xlane.xlu0 %5879
        %v5881 = vsel %vm5861, %v4983, 0.0
        %5882 = vadd.xlane.f32.xlu0 %v5881
        %v5883 = vpop.xlane.xlu0 %5882
        %v5884 = vsel %vm5865, %v4984, 0.0
        %5885 = vadd.xlane.f32.xlu0 %v5884
        %v5886 = vpop.xlane.xlu0 %5885
        %v5887 = vsel %vm5861, %v4988, 0.0
        %5888 = vadd.xlane.f32.xlu0 %v5887
        %v5889 = vpop.xlane.xlu0 %5888
        %v5890 = vsel %vm5865, %v4989, 0.0
        %5891 = vadd.xlane.f32.xlu0 %v5890
        %v5892 = vpop.xlane.xlu0 %5891
        %v5893 = vsel %vm5861, %v4993, 0.0
        %5894 = vadd.xlane.f32.xlu0 %v5893
        %v5895 = vpop.xlane.xlu0 %5894
        %v5896 = vsel %vm5865, %v4994, 0.0
        %5897 = vadd.xlane.f32.xlu0 %v5896
        %v5898 = vpop.xlane.xlu0 %5897
        %v5899 = vsel %vm5861, %v4998, 0.0
        %5900 = vadd.xlane.f32.xlu0 %v5899
        %v5901 = vpop.xlane.xlu0 %5900
        %v5902 = vsel %vm5865, %v4999, 0.0
        %5903 = vadd.xlane.f32.xlu0 %v5902
        %v5904 = vpop.xlane.xlu0 %5903
        %v5905 = vsel %vm5861, %v5003, 0.0
        %5906 = vadd.xlane.f32.xlu0 %v5905
        %v5907 = vpop.xlane.xlu0 %5906
        %v5908 = vsel %vm5865, %v5004, 0.0
        %5909 = vadd.xlane.f32.xlu0 %v5908
        %v5910 = vpop.xlane.xlu0 %5909
        %v5911 = vsel %vm5861, %v5008, 0.0
        %5912 = vadd.xlane.f32.xlu0 %v5911
        %v5913 = vpop.xlane.xlu0 %5912
        %v5914 = vsel %vm5865, %v5009, 0.0
        %5915 = vadd.xlane.f32.xlu0 %v5914
        %v5916 = vpop.xlane.xlu0 %5915
        %v5917 = vsel %vm5861, %v5013, 0.0
        %5918 = vadd.xlane.f32.xlu0 %v5917
        %v5919 = vpop.xlane.xlu0 %5918
        %v5920 = vsel %vm5865, %v5014, 0.0
        %5921 = vadd.xlane.f32.xlu0 %v5920
        %v5922 = vpop.xlane.xlu0 %5921
        %v5923 = vsel %vm5861, %v5018, 0.0
        %5924 = vadd.xlane.f32.xlu0 %v5923
        %v5925 = vpop.xlane.xlu0 %5924
        %v5926 = vsel %vm5865, %v5019, 0.0
        %5927 = vadd.xlane.f32.xlu0 %v5926
        %v5928 = vpop.xlane.xlu0 %5927
        %v5929 = vsel %vm5861, %v5023, 0.0
        %5930 = vadd.xlane.f32.xlu0 %v5929
        %v5931 = vpop.xlane.xlu0 %5930
        %v5932 = vsel %vm5865, %v5024, 0.0
        %5933 = vadd.xlane.f32.xlu0 %v5932
        %v5934 = vpop.xlane.xlu0 %5933
        %v5935 = vsel %vm5861, %v5028, 0.0
        %5936 = vadd.xlane.f32.xlu0 %v5935
        %v5937 = vpop.xlane.xlu0 %5936
        %v5938 = vsel %vm5865, %v5029, 0.0
        %5939 = vadd.xlane.f32.xlu0 %v5938
        %v5940 = vpop.xlane.xlu0 %5939
        %v5941 = vsel %vm5861, %v5033, 0.0
        %5942 = vadd.xlane.f32.xlu0 %v5941
        %v5943 = vpop.xlane.xlu0 %5942
        %v5944 = vsel %vm5865, %v5034, 0.0
        %5945 = vadd.xlane.f32.xlu0 %v5944
        %v5946 = vpop.xlane.xlu0 %5945
        %v5947 = vsel %vm5861, %v5038, 0.0
        %5948 = vadd.xlane.f32.xlu0 %v5947
        %v5949 = vpop.xlane.xlu0 %5948
        %v5950 = vsel %vm5865, %v5039, 0.0
        %5951 = vadd.xlane.f32.xlu0 %v5950
        %v5952 = vpop.xlane.xlu0 %5951
        %v5953 = vsel %vm5861, %v5043, 0.0
        %5954 = vadd.xlane.f32.xlu0 %v5953
        %v5955 = vpop.xlane.xlu0 %5954
        %v5956 = vsel %vm5865, %v5044, 0.0
        %5957 = vadd.xlane.f32.xlu0 %v5956
        %v5958 = vpop.xlane.xlu0 %5957
        %v5959 = vsel %vm5861, %v5048, 0.0
        %5960 = vadd.xlane.f32.xlu0 %v5959
        %v5961 = vpop.xlane.xlu0 %5960
        %v5962 = vsel %vm5865, %v5049, 0.0
        %5963 = vadd.xlane.f32.xlu0 %v5962
        %v5964 = vpop.xlane.xlu0 %5963
        %v5965 = vsel %vm5861, %v5053, 0.0
        %5966 = vadd.xlane.f32.xlu0 %v5965
        %v5967 = vpop.xlane.xlu0 %5966
        %v5968 = vsel %vm5865, %v5054, 0.0
        %5969 = vadd.xlane.f32.xlu0 %v5968
        %v5970 = vpop.xlane.xlu0 %5969
        %v5971 = vsel %vm5861, %v5058, 0.0
        %5972 = vadd.xlane.f32.xlu0 %v5971
        %v5973 = vpop.xlane.xlu0 %5972
        %v5974 = vsel %vm5865, %v5059, 0.0
        %5975 = vadd.xlane.f32.xlu0 %v5974
        %v5976 = vpop.xlane.xlu0 %5975
        %v5977 = vsel %vm5861, %v5063, 0.0
        %5978 = vadd.xlane.f32.xlu0 %v5977
        %v5979 = vpop.xlane.xlu0 %5978
        %v5980 = vsel %vm5865, %v5064, 0.0
        %5981 = vadd.xlane.f32.xlu0 %v5980
        %v5982 = vpop.xlane.xlu0 %5981
        %v5983 = vsel %vm5861, %v5068, 0.0
        %5984 = vadd.xlane.f32.xlu0 %v5983
        %v5985 = vpop.xlane.xlu0 %5984
        %v5986 = vsel %vm5865, %v5069, 0.0
        %5987 = vadd.xlane.f32.xlu0 %v5986
        %v5988 = vpop.xlane.xlu0 %5987
        %v5989 = vsel %vm5861, %v5073, 0.0
        %5990 = vadd.xlane.f32.xlu0 %v5989
        %v5991 = vpop.xlane.xlu0 %5990
        %v5992 = vsel %vm5865, %v5074, 0.0
        %5993 = vadd.xlane.f32.xlu0 %v5992
        %v5994 = vpop.xlane.xlu0 %5993
        %v5995 = vsel %vm5861, %v5078, 0.0
        %5996 = vadd.xlane.f32.xlu0 %v5995
        %v5997 = vpop.xlane.xlu0 %5996
        %v5998 = vsel %vm5865, %v5079, 0.0
        %5999 = vadd.xlane.f32.xlu0 %v5998
        %v6000 = vpop.xlane.xlu0 %5999
        %v6001 = vsel %vm5861, %v5083, 0.0
        %6002 = vadd.xlane.f32.xlu0 %v6001
        %v6003 = vpop.xlane.xlu0 %6002
        %v6004 = vsel %vm5865, %v5084, 0.0
        %6005 = vadd.xlane.f32.xlu0 %v6004
        %v6006 = vpop.xlane.xlu0 %6005
        %v6007 = vsel %vm5861, %v5088, 0.0
        %6008 = vadd.xlane.f32.xlu0 %v6007
        %v6009 = vpop.xlane.xlu0 %6008
        %v6010 = vsel %vm5865, %v5089, 0.0
        %6011 = vadd.xlane.f32.xlu0 %v6010
        %v6012 = vpop.xlane.xlu0 %6011
        %v6013 = vsel %vm5861, %v5093, 0.0
        %6014 = vadd.xlane.f32.xlu0 %v6013
        %v6015 = vpop.xlane.xlu0 %6014
        %v6016 = vsel %vm5865, %v5094, 0.0
        %6017 = vadd.xlane.f32.xlu0 %v6016
        %v6018 = vpop.xlane.xlu0 %6017
        %v6019 = vsel %vm5861, %v5098, 0.0
        %6020 = vadd.xlane.f32.xlu0 %v6019
        %v6021 = vpop.xlane.xlu0 %6020
        %v6022 = vsel %vm5865, %v5099, 0.0
        %6023 = vadd.xlane.f32.xlu0 %v6022
        %v6024 = vpop.xlane.xlu0 %6023
        %v6025 = vsel %vm5861, %v5103, 0.0
        %6026 = vadd.xlane.f32.xlu0 %v6025
        %v6027 = vpop.xlane.xlu0 %6026
        %v6028 = vsel %vm5865, %v5104, 0.0
        %6029 = vadd.xlane.f32.xlu0 %v6028
        %v6030 = vpop.xlane.xlu0 %6029
        %v6031 = vsel %vm5861, %v5108, 0.0
        %6032 = vadd.xlane.f32.xlu0 %v6031
        %v6033 = vpop.xlane.xlu0 %6032
        %v6034 = vsel %vm5865, %v5109, 0.0
        %6035 = vadd.xlane.f32.xlu0 %v6034
        %v6036 = vpop.xlane.xlu0 %6035
        %v6037 = vsel %vm5861, %v5113, 0.0
        %6038 = vadd.xlane.f32.xlu0 %v6037
        %v6039 = vpop.xlane.xlu0 %6038
        %v6040 = vsel %vm5865, %v5114, 0.0
        %6041 = vadd.xlane.f32.xlu0 %v6040
        %v6042 = vpop.xlane.xlu0 %6041
        %v6043 = vsel %vm5861, %v5118, 0.0
        %6044 = vadd.xlane.f32.xlu0 %v6043
        %v6045 = vpop.xlane.xlu0 %6044
        %v6046 = vsel %vm5865, %v5119, 0.0
        %6047 = vadd.xlane.f32.xlu0 %v6046
        %v6048 = vpop.xlane.xlu0 %6047
        %v6049 = vsel %vm5861, %v5123, 0.0
        %6050 = vadd.xlane.f32.xlu0 %v6049
        %v6051 = vpop.xlane.xlu0 %6050
        %v6052 = vsel %vm5865, %v5124, 0.0
        %6053 = vadd.xlane.f32.xlu0 %v6052
        %v6054 = vpop.xlane.xlu0 %6053
        %v6055 = vsel %vm5861, %v5128, 0.0
        %6056 = vadd.xlane.f32.xlu0 %v6055
        %v6057 = vpop.xlane.xlu0 %6056
        %v6058 = vsel %vm5865, %v5129, 0.0
        %6059 = vadd.xlane.f32.xlu0 %v6058
        %v6060 = vpop.xlane.xlu0 %6059
        %v6061 = vsel %vm5861, %v5133, 0.0
        %6062 = vadd.xlane.f32.xlu0 %v6061
        %v6063 = vpop.xlane.xlu0 %6062
        %v6064 = vsel %vm5865, %v5134, 0.0
        %6065 = vadd.xlane.f32.xlu0 %v6064
        %v6066 = vpop.xlane.xlu0 %6065
        %v6067 = vsel %vm5861, %v5138, 0.0
        %6068 = vadd.xlane.f32.xlu0 %v6067
        %v6069 = vpop.xlane.xlu0 %6068
        %v6070 = vsel %vm5865, %v5139, 0.0
        %6071 = vadd.xlane.f32.xlu0 %v6070
        %v6072 = vpop.xlane.xlu0 %6071
        %v6073 = vsel %vm5861, %v5143, 0.0
        %6074 = vadd.xlane.f32.xlu0 %v6073
        %v6075 = vpop.xlane.xlu0 %6074
        %v6076 = vsel %vm5865, %v5144, 0.0
        %6077 = vadd.xlane.f32.xlu0 %v6076
        %v6078 = vpop.xlane.xlu0 %6077
        %v6079 = vsel %vm5861, %v5148, 0.0
        %6080 = vadd.xlane.f32.xlu0 %v6079
        %v6081 = vpop.xlane.xlu0 %6080
        %v6082 = vsel %vm5865, %v5149, 0.0
        %6083 = vadd.xlane.f32.xlu0 %v6082
        %v6084 = vpop.xlane.xlu0 %6083
        %v6085 = vsel %vm5861, %v5153, 0.0
        %6086 = vadd.xlane.f32.xlu0 %v6085
        %v6087 = vpop.xlane.xlu0 %6086
        %v6088 = vsel %vm5865, %v5154, 0.0
        %6089 = vadd.xlane.f32.xlu0 %v6088
        %v6090 = vpop.xlane.xlu0 %6089
        %v6091 = vsel %vm5861, %v5158, 0.0
        %6092 = vadd.xlane.f32.xlu0 %v6091
        %v6093 = vpop.xlane.xlu0 %6092
        %v6094 = vsel %vm5865, %v5159, 0.0
        %6095 = vadd.xlane.f32.xlu0 %v6094
        %v6096 = vpop.xlane.xlu0 %6095
        %v6097 = vsel %vm5861, %v5163, 0.0
        %6098 = vadd.xlane.f32.xlu0 %v6097
        %v6099 = vpop.xlane.xlu0 %6098
        %v6100 = vsel %vm5865, %v5164, 0.0
        %6101 = vadd.xlane.f32.xlu0 %v6100
        %v6102 = vpop.xlane.xlu0 %6101
        %v6103 = vsel %vm5861, %v5168, 0.0
        %6104 = vadd.xlane.f32.xlu0 %v6103
        %v6105 = vpop.xlane.xlu0 %6104
        %v6106 = vsel %vm5865, %v5169, 0.0
        %6107 = vadd.xlane.f32.xlu0 %v6106
        %v6108 = vpop.xlane.xlu0 %6107
        %v6109 = vsel %vm5861, %v5173, 0.0
        %6110 = vadd.xlane.f32.xlu0 %v6109
        %v6111 = vpop.xlane.xlu0 %6110
        %v6112 = vsel %vm5865, %v5174, 0.0
        %6113 = vadd.xlane.f32.xlu0 %v6112
        %v6114 = vpop.xlane.xlu0 %6113
        %v6115 = vsel %vm5861, %v5178, 0.0
        %6116 = vadd.xlane.f32.xlu0 %v6115
        %v6117 = vpop.xlane.xlu0 %6116
        %v6118 = vsel %vm5865, %v5179, 0.0
        %6119 = vadd.xlane.f32.xlu0 %v6118
        %v6120 = vpop.xlane.xlu0 %6119
        %v6121 = vsel %vm5861, %v5183, 0.0
        %6122 = vadd.xlane.f32.xlu0 %v6121
        %v6123 = vpop.xlane.xlu0 %6122
        %v6124 = vsel %vm5865, %v5184, 0.0
        %6125 = vadd.xlane.f32.xlu0 %v6124
        %v6126 = vpop.xlane.xlu0 %6125
        %v6127 = vsel %vm5861, %v5188, 0.0
        %6128 = vadd.xlane.f32.xlu0 %v6127
        %v6129 = vpop.xlane.xlu0 %6128
        %v6130 = vsel %vm5865, %v5189, 0.0
        %6131 = vadd.xlane.f32.xlu0 %v6130
        %v6132 = vpop.xlane.xlu0 %6131
        %v6133 = vsel %vm5861, %v5193, 0.0
        %6134 = vadd.xlane.f32.xlu0 %v6133
        %v6135 = vpop.xlane.xlu0 %6134
        %v6136 = vsel %vm5865, %v5194, 0.0
        %6137 = vadd.xlane.f32.xlu0 %v6136
        %v6138 = vpop.xlane.xlu0 %6137
        %v6139 = vsel %vm5861, %v5198, 0.0
        %6140 = vadd.xlane.f32.xlu0 %v6139
        %v6141 = vpop.xlane.xlu0 %6140
        %v6142 = vsel %vm5865, %v5199, 0.0
        %6143 = vadd.xlane.f32.xlu0 %v6142
        %v6144 = vpop.xlane.xlu0 %6143
        %v6145 = vsel %vm5861, %v5203, 0.0
        %6146 = vadd.xlane.f32.xlu0 %v6145
        %v6147 = vpop.xlane.xlu0 %6146
        %v6148 = vsel %vm5865, %v5204, 0.0
        %6149 = vadd.xlane.f32.xlu0 %v6148
        %v6150 = vpop.xlane.xlu0 %6149
        %v6151 = vsel %vm5861, %v5208, 0.0
        %6152 = vadd.xlane.f32.xlu0 %v6151
        %v6153 = vpop.xlane.xlu0 %6152
        %v6154 = vsel %vm5865, %v5209, 0.0
        %6155 = vadd.xlane.f32.xlu0 %v6154
        %v6156 = vpop.xlane.xlu0 %6155
        %v6157 = vsel %vm5861, %v5213, 0.0
        %6158 = vadd.xlane.f32.xlu0 %v6157
        %v6159 = vpop.xlane.xlu0 %6158
        %v6160 = vsel %vm5865, %v5214, 0.0
        %6161 = vadd.xlane.f32.xlu0 %v6160
        %v6162 = vpop.xlane.xlu0 %6161
        %v6163 = vsel %vm5861, %v5218, 0.0
        %6164 = vadd.xlane.f32.xlu0 %v6163
        %v6165 = vpop.xlane.xlu0 %6164
        %v6166 = vsel %vm5865, %v5219, 0.0
        %6167 = vadd.xlane.f32.xlu0 %v6166
        %v6168 = vpop.xlane.xlu0 %6167
        %v6169 = vsel %vm5861, %v5223, 0.0
        %6170 = vadd.xlane.f32.xlu0 %v6169
        %v6171 = vpop.xlane.xlu0 %6170
        %v6172 = vsel %vm5865, %v5224, 0.0
        %6173 = vadd.xlane.f32.xlu0 %v6172
        %v6174 = vpop.xlane.xlu0 %6173
        %v6175 = vsel %vm5861, %v5228, 0.0
        %6176 = vadd.xlane.f32.xlu0 %v6175
        %v6177 = vpop.xlane.xlu0 %6176
        %v6178 = vsel %vm5865, %v5229, 0.0
        %6179 = vadd.xlane.f32.xlu0 %v6178
        %v6180 = vpop.xlane.xlu0 %6179
        %v6181 = vsel %vm5861, %v5233, 0.0
        %6182 = vadd.xlane.f32.xlu0 %v6181
        %v6183 = vpop.xlane.xlu0 %6182
        %v6184 = vsel %vm5865, %v5234, 0.0
        %6185 = vadd.xlane.f32.xlu0 %v6184
        %v6186 = vpop.xlane.xlu0 %6185
        %v6187 = vsel %vm5861, %v5238, 0.0
        %6188 = vadd.xlane.f32.xlu0 %v6187
        %v6189 = vpop.xlane.xlu0 %6188
        %v6190 = vsel %vm5865, %v5239, 0.0
        %6191 = vadd.xlane.f32.xlu0 %v6190
        %v6192 = vpop.xlane.xlu0 %6191
        %v6193 = vsel %vm5861, %v5243, 0.0
        %6194 = vadd.xlane.f32.xlu0 %v6193
        %v6195 = vpop.xlane.xlu0 %6194
        %v6196 = vsel %vm5865, %v5244, 0.0
        %6197 = vadd.xlane.f32.xlu0 %v6196
        %v6198 = vpop.xlane.xlu0 %6197
        %v6199 = vsel %vm5861, %v5248, 0.0
        %6200 = vadd.xlane.f32.xlu0 %v6199
        %v6201 = vpop.xlane.xlu0 %6200
        %v6202 = vsel %vm5865, %v5249, 0.0
        %6203 = vadd.xlane.f32.xlu0 %v6202
        %v6204 = vpop.xlane.xlu0 %6203
        %v6205 = vsel %vm5861, %v5253, 0.0
        %6206 = vadd.xlane.f32.xlu0 %v6205
        %v6207 = vpop.xlane.xlu0 %6206
        %v6208 = vsel %vm5865, %v5254, 0.0
        %6209 = vadd.xlane.f32.xlu0 %v6208
        %v6210 = vpop.xlane.xlu0 %6209
        %v6211 = vsel %vm5861, %v5258, 0.0
        %6212 = vadd.xlane.f32.xlu0 %v6211
        %v6213 = vpop.xlane.xlu0 %6212
        %v6214 = vsel %vm5865, %v5259, 0.0
        %6215 = vadd.xlane.f32.xlu0 %v6214
        %v6216 = vpop.xlane.xlu0 %6215
        %v6217 = vsel %vm5861, %v5263, 0.0
        %6218 = vadd.xlane.f32.xlu0 %v6217
        %v6219 = vpop.xlane.xlu0 %6218
        %v6220 = vsel %vm5865, %v5264, 0.0
        %6221 = vadd.xlane.f32.xlu0 %v6220
        %v6222 = vpop.xlane.xlu0 %6221
        %v6223 = vsel %vm5861, %v5268, 0.0
        %6224 = vadd.xlane.f32.xlu0 %v6223
        %v6225 = vpop.xlane.xlu0 %6224
        %v6226 = vsel %vm5865, %v5269, 0.0
        %6227 = vadd.xlane.f32.xlu0 %v6226
        %v6228 = vpop.xlane.xlu0 %6227
        %v6229 = vsel %vm5861, %v5273, 0.0
        %6230 = vadd.xlane.f32.xlu0 %v6229
        %v6231 = vpop.xlane.xlu0 %6230
        %v6232 = vsel %vm5865, %v5274, 0.0
        %6233 = vadd.xlane.f32.xlu0 %v6232
        %v6234 = vpop.xlane.xlu0 %6233
        %v6235 = vsel %vm5861, %v5278, 0.0
        %6236 = vadd.xlane.f32.xlu0 %v6235
        %v6237 = vpop.xlane.xlu0 %6236
        %v6238 = vsel %vm5865, %v5279, 0.0
        %6239 = vadd.xlane.f32.xlu0 %v6238
        %v6240 = vpop.xlane.xlu0 %6239
        %v6241 = vsel %vm5861, %v5283, 0.0
        %6242 = vadd.xlane.f32.xlu0 %v6241
        %v6243 = vpop.xlane.xlu0 %6242
        %v6244 = vsel %vm5865, %v5284, 0.0
        %6245 = vadd.xlane.f32.xlu0 %v6244
        %v6246 = vpop.xlane.xlu0 %6245
        %v6247 = vsel %vm5861, %v5288, 0.0
        %6248 = vadd.xlane.f32.xlu0 %v6247
        %v6249 = vpop.xlane.xlu0 %6248
        %v6250 = vsel %vm5865, %v5289, 0.0
        %6251 = vadd.xlane.f32.xlu0 %v6250
        %v6252 = vpop.xlane.xlu0 %6251
        %v6253 = vsel %vm5861, %v5293, 0.0
        %6254 = vadd.xlane.f32.xlu0 %v6253
        %v6255 = vpop.xlane.xlu0 %6254
        %v6256 = vsel %vm5865, %v5294, 0.0
        %6257 = vadd.xlane.f32.xlu0 %v6256
        %v6258 = vpop.xlane.xlu0 %6257
        %v6259 = vsel %vm5861, %v5298, 0.0
        %6260 = vadd.xlane.f32.xlu0 %v6259
        %v6261 = vpop.xlane.xlu0 %6260
        %v6262 = vsel %vm5865, %v5299, 0.0
        %6263 = vadd.xlane.f32.xlu0 %v6262
        %v6264 = vpop.xlane.xlu0 %6263
        %v6265 = vsel %vm5861, %v5303, 0.0
        %6266 = vadd.xlane.f32.xlu0 %v6265
        %v6267 = vpop.xlane.xlu0 %6266
        %v6268 = vsel %vm5865, %v5304, 0.0
        %6269 = vadd.xlane.f32.xlu0 %v6268
        %v6270 = vpop.xlane.xlu0 %6269
        %v6271 = vsel %vm5861, %v5308, 0.0
        %6272 = vadd.xlane.f32.xlu0 %v6271
        %v6273 = vpop.xlane.xlu0 %6272
        %v6274 = vsel %vm5865, %v5309, 0.0
        %6275 = vadd.xlane.f32.xlu0 %v6274
        %v6276 = vpop.xlane.xlu0 %6275
        %v6277 = vsel %vm5861, %v5313, 0.0
        %6278 = vadd.xlane.f32.xlu0 %v6277
        %v6279 = vpop.xlane.xlu0 %6278
        %v6280 = vsel %vm5865, %v5314, 0.0
        %6281 = vadd.xlane.f32.xlu0 %v6280
        %v6282 = vpop.xlane.xlu0 %6281
        %v6283 = vsel %vm5861, %v5318, 0.0
        %6284 = vadd.xlane.f32.xlu0 %v6283
        %v6285 = vpop.xlane.xlu0 %6284
        %v6286 = vsel %vm5865, %v5319, 0.0
        %6287 = vadd.xlane.f32.xlu0 %v6286
        %v6288 = vpop.xlane.xlu0 %6287
        %v6289 = vsel %vm5861, %v5323, 0.0
        %6290 = vadd.xlane.f32.xlu0 %v6289
        %v6291 = vpop.xlane.xlu0 %6290
        %v6292 = vsel %vm5865, %v5324, 0.0
        %6293 = vadd.xlane.f32.xlu0 %v6292
        %v6294 = vpop.xlane.xlu0 %6293
        %v6295 = vsel %vm5861, %v5328, 0.0
        %6296 = vadd.xlane.f32.xlu0 %v6295
        %v6297 = vpop.xlane.xlu0 %6296
        %v6298 = vsel %vm5865, %v5329, 0.0
        %6299 = vadd.xlane.f32.xlu0 %v6298
        %v6300 = vpop.xlane.xlu0 %6299
        %v6301 = vsel %vm5861, %v5333, 0.0
        %6302 = vadd.xlane.f32.xlu0 %v6301
        %v6303 = vpop.xlane.xlu0 %6302
        %v6304 = vsel %vm5865, %v5334, 0.0
        %6305 = vadd.xlane.f32.xlu0 %v6304
        %v6306 = vpop.xlane.xlu0 %6305
        %v6307 = vsel %vm5861, %v5338, 0.0
        %6308 = vadd.xlane.f32.xlu0 %v6307
        %v6309 = vpop.xlane.xlu0 %6308
        %v6310 = vsel %vm5865, %v5339, 0.0
        %6311 = vadd.xlane.f32.xlu0 %v6310
        %v6312 = vpop.xlane.xlu0 %6311
        %v6313 = vsel %vm5861, %v5343, 0.0
        %6314 = vadd.xlane.f32.xlu0 %v6313
        %v6315 = vpop.xlane.xlu0 %6314
        %v6316 = vsel %vm5865, %v5344, 0.0
        %6317 = vadd.xlane.f32.xlu0 %v6316
        %v6318 = vpop.xlane.xlu0 %6317
        %v6319 = vsel %vm5861, %v5348, 0.0
        %6320 = vadd.xlane.f32.xlu0 %v6319
        %v6321 = vpop.xlane.xlu0 %6320
        %v6322 = vsel %vm5865, %v5349, 0.0
        %6323 = vadd.xlane.f32.xlu0 %v6322
        %v6324 = vpop.xlane.xlu0 %6323
        %v6325 = vsel %vm5861, %v5353, 0.0
        %6326 = vadd.xlane.f32.xlu0 %v6325
        %v6327 = vpop.xlane.xlu0 %6326
        %v6328 = vsel %vm5865, %v5354, 0.0
        %6329 = vadd.xlane.f32.xlu0 %v6328
        %v6330 = vpop.xlane.xlu0 %6329
        %v6331 = vsel %vm5861, %v5358, 0.0
        %6332 = vadd.xlane.f32.xlu0 %v6331
        %v6333 = vpop.xlane.xlu0 %6332
        %v6334 = vsel %vm5865, %v5359, 0.0
        %6335 = vadd.xlane.f32.xlu0 %v6334
        %v6336 = vpop.xlane.xlu0 %6335
        %v6337 = vsel %vm5861, %v5363, 0.0
        %6338 = vadd.xlane.f32.xlu0 %v6337
        %v6339 = vpop.xlane.xlu0 %6338
        %v6340 = vsel %vm5865, %v5364, 0.0
        %6341 = vadd.xlane.f32.xlu0 %v6340
        %v6342 = vpop.xlane.xlu0 %6341
        %v6343 = vsel %vm5861, %v5368, 0.0
        %6344 = vadd.xlane.f32.xlu0 %v6343
        %v6345 = vpop.xlane.xlu0 %6344
        %v6346 = vsel %vm5865, %v5369, 0.0
        %6347 = vadd.xlane.f32.xlu0 %v6346
        %v6348 = vpop.xlane.xlu0 %6347
        %v6349 = vsel %vm5861, %v5373, 0.0
        %6350 = vadd.xlane.f32.xlu0 %v6349
        %v6351 = vpop.xlane.xlu0 %6350
        %v6352 = vsel %vm5865, %v5374, 0.0
        %6353 = vadd.xlane.f32.xlu0 %v6352
        %v6354 = vpop.xlane.xlu0 %6353
        %v6355 = vsel %vm5861, %v5378, 0.0
        %6356 = vadd.xlane.f32.xlu0 %v6355
        %v6357 = vpop.xlane.xlu0 %6356
        %v6358 = vsel %vm5865, %v5379, 0.0
        %6359 = vadd.xlane.f32.xlu0 %v6358
        %v6360 = vpop.xlane.xlu0 %6359
        %v6361 = vsel %vm5861, %v5383, 0.0
        %6362 = vadd.xlane.f32.xlu0 %v6361
        %v6363 = vpop.xlane.xlu0 %6362
        %v6364 = vsel %vm5865, %v5384, 0.0
        %6365 = vadd.xlane.f32.xlu0 %v6364
        %v6366 = vpop.xlane.xlu0 %6365
        %v6367 = vsel %vm5861, %v5388, 0.0
        %6368 = vadd.xlane.f32.xlu0 %v6367
        %v6369 = vpop.xlane.xlu0 %6368
        %v6370 = vsel %vm5865, %v5389, 0.0
        %6371 = vadd.xlane.f32.xlu0 %v6370
        %v6372 = vpop.xlane.xlu0 %6371
        %v6373 = vsel %vm5861, %v5393, 0.0
        %6374 = vadd.xlane.f32.xlu0 %v6373
        %v6375 = vpop.xlane.xlu0 %6374
        %v6376 = vsel %vm5865, %v5394, 0.0
        %6377 = vadd.xlane.f32.xlu0 %v6376
        %v6378 = vpop.xlane.xlu0 %6377
        %v6379 = vsel %vm5861, %v5398, 0.0
        %6380 = vadd.xlane.f32.xlu0 %v6379
        %v6381 = vpop.xlane.xlu0 %6380
        %v6382 = vsel %vm5865, %v5399, 0.0
        %6383 = vadd.xlane.f32.xlu0 %v6382
        %v6384 = vpop.xlane.xlu0 %6383
        %v6385 = vsel %vm5861, %v5403, 0.0
        %6386 = vadd.xlane.f32.xlu0 %v6385
        %v6387 = vpop.xlane.xlu0 %6386
        %v6388 = vsel %vm5865, %v5404, 0.0
        %6389 = vadd.xlane.f32.xlu0 %v6388
        %v6390 = vpop.xlane.xlu0 %6389
        %v6391 = vsel %vm5861, %v5408, 0.0
        %6392 = vadd.xlane.f32.xlu0 %v6391
        %v6393 = vpop.xlane.xlu0 %6392
        %v6394 = vsel %vm5865, %v5409, 0.0
        %6395 = vadd.xlane.f32.xlu0 %v6394
        %v6396 = vpop.xlane.xlu0 %6395
        %v6397 = vsel %vm5861, %v5413, 0.0
        %6398 = vadd.xlane.f32.xlu0 %v6397
        %v6399 = vpop.xlane.xlu0 %6398
        %v6400 = vsel %vm5865, %v5414, 0.0
        %6401 = vadd.xlane.f32.xlu0 %v6400
        %v6402 = vpop.xlane.xlu0 %6401
        %v6403 = vsel %vm5861, %v5418, 0.0
        %6404 = vadd.xlane.f32.xlu0 %v6403
        %v6405 = vpop.xlane.xlu0 %6404
        %v6406 = vsel %vm5865, %v5419, 0.0
        %6407 = vadd.xlane.f32.xlu0 %v6406
        %v6408 = vpop.xlane.xlu0 %6407
        %v6409 = vsel %vm5861, %v5423, 0.0
        %6410 = vadd.xlane.f32.xlu0 %v6409
        %v6411 = vpop.xlane.xlu0 %6410
        %v6412 = vsel %vm5865, %v5424, 0.0
        %6413 = vadd.xlane.f32.xlu0 %v6412
        %v6414 = vpop.xlane.xlu0 %6413
        %v6415 = vsel %vm5861, %v5428, 0.0
        %6416 = vadd.xlane.f32.xlu0 %v6415
        %v6417 = vpop.xlane.xlu0 %6416
        %v6418 = vsel %vm5865, %v5429, 0.0
        %6419 = vadd.xlane.f32.xlu0 %v6418
        %v6420 = vpop.xlane.xlu0 %6419
        %v6421 = vsel %vm5861, %v5433, 0.0
        %6422 = vadd.xlane.f32.xlu0 %v6421
        %v6423 = vpop.xlane.xlu0 %6422
        %v6424 = vsel %vm5865, %v5434, 0.0
        %6425 = vadd.xlane.f32.xlu0 %v6424
        %v6426 = vpop.xlane.xlu0 %6425
        %v6427 = vsel %vm5861, %v5438, 0.0
        %6428 = vadd.xlane.f32.xlu0 %v6427
        %v6429 = vpop.xlane.xlu0 %6428
        %v6430 = vsel %vm5865, %v5439, 0.0
        %6431 = vadd.xlane.f32.xlu0 %v6430
        %v6432 = vpop.xlane.xlu0 %6431
        %v6433 = vsel %vm5861, %v5443, 0.0
        %6434 = vadd.xlane.f32.xlu0 %v6433
        %v6435 = vpop.xlane.xlu0 %6434
        %v6436 = vsel %vm5865, %v5444, 0.0
        %6437 = vadd.xlane.f32.xlu0 %v6436
        %v6438 = vpop.xlane.xlu0 %6437
        %v6439 = vsel %vm5861, %v5448, 0.0
        %6440 = vadd.xlane.f32.xlu0 %v6439
        %v6441 = vpop.xlane.xlu0 %6440
        %v6442 = vsel %vm5865, %v5449, 0.0
        %6443 = vadd.xlane.f32.xlu0 %v6442
        %v6444 = vpop.xlane.xlu0 %6443
        %v6445 = vsel %vm5861, %v5453, 0.0
        %6446 = vadd.xlane.f32.xlu0 %v6445
        %v6447 = vpop.xlane.xlu0 %6446
        %v6448 = vsel %vm5865, %v5454, 0.0
        %6449 = vadd.xlane.f32.xlu0 %v6448
        %v6450 = vpop.xlane.xlu0 %6449
        %v6451 = vsel %vm5861, %v5458, 0.0
        %6452 = vadd.xlane.f32.xlu0 %v6451
        %v6453 = vpop.xlane.xlu0 %6452
        %v6454 = vsel %vm5865, %v5459, 0.0
        %6455 = vadd.xlane.f32.xlu0 %v6454
        %v6456 = vpop.xlane.xlu0 %6455
        %v6457 = vsel %vm5861, %v5463, 0.0
        %6458 = vadd.xlane.f32.xlu0 %v6457
        %v6459 = vpop.xlane.xlu0 %6458
        %v6460 = vsel %vm5865, %v5464, 0.0
        %6461 = vadd.xlane.f32.xlu0 %v6460
        %v6462 = vpop.xlane.xlu0 %6461
        %v6463 = vsel %vm5861, %v5468, 0.0
        %6464 = vadd.xlane.f32.xlu0 %v6463
        %v6465 = vpop.xlane.xlu0 %6464
        %v6466 = vsel %vm5865, %v5469, 0.0
        %6467 = vadd.xlane.f32.xlu0 %v6466
        %v6468 = vpop.xlane.xlu0 %6467
        %v6469 = vsel %vm5861, %v5473, 0.0
        %6470 = vadd.xlane.f32.xlu0 %v6469
        %v6471 = vpop.xlane.xlu0 %6470
        %v6472 = vsel %vm5865, %v5474, 0.0
        %6473 = vadd.xlane.f32.xlu0 %v6472
        %v6474 = vpop.xlane.xlu0 %6473
        %v6475 = vsel %vm5861, %v5478, 0.0
        %6476 = vadd.xlane.f32.xlu0 %v6475
        %v6477 = vpop.xlane.xlu0 %6476
        %v6478 = vsel %vm5865, %v5479, 0.0
        %6479 = vadd.xlane.f32.xlu0 %v6478
        %v6480 = vpop.xlane.xlu0 %6479
        %v6481 = vsel %vm5861, %v5483, 0.0
        %6482 = vadd.xlane.f32.xlu0 %v6481
        %v6483 = vpop.xlane.xlu0 %6482
        %v6484 = vsel %vm5865, %v5484, 0.0
        %6485 = vadd.xlane.f32.xlu0 %v6484
        %v6486 = vpop.xlane.xlu0 %6485
        %v6487 = vsel %vm5861, %v5488, 0.0
        %6488 = vadd.xlane.f32.xlu0 %v6487
        %v6489 = vpop.xlane.xlu0 %6488
        %v6490 = vsel %vm5865, %v5489, 0.0
        %6491 = vadd.xlane.f32.xlu0 %v6490
        %v6492 = vpop.xlane.xlu0 %6491
        %v6493 = vsel %vm5861, %v5493, 0.0
        %6494 = vadd.xlane.f32.xlu0 %v6493
        %v6495 = vpop.xlane.xlu0 %6494
        %v6496 = vsel %vm5865, %v5494, 0.0
        %6497 = vadd.xlane.f32.xlu0 %v6496
        %v6498 = vpop.xlane.xlu0 %6497
        %v6499 = vsel %vm5861, %v5498, 0.0
        %6500 = vadd.xlane.f32.xlu0 %v6499
        %v6501 = vpop.xlane.xlu0 %6500
        %v6502 = vsel %vm5865, %v5499, 0.0
        %6503 = vadd.xlane.f32.xlu0 %v6502
        %v6504 = vpop.xlane.xlu0 %6503
        %v6505 = vsel %vm5861, %v5503, 0.0
        %6506 = vadd.xlane.f32.xlu0 %v6505
        %v6507 = vpop.xlane.xlu0 %6506
        %v6508 = vsel %vm5865, %v5504, 0.0
        %6509 = vadd.xlane.f32.xlu0 %v6508
        %v6510 = vpop.xlane.xlu0 %6509
        %v6511 = vsel %vm5861, %v5508, 0.0
        %6512 = vadd.xlane.f32.xlu0 %v6511
        %v6513 = vpop.xlane.xlu0 %6512
        %v6514 = vsel %vm5865, %v5509, 0.0
        %6515 = vadd.xlane.f32.xlu0 %v6514
        %v6516 = vpop.xlane.xlu0 %6515
        %v6517 = vsel %vm5861, %v5513, 0.0
        %6518 = vadd.xlane.f32.xlu0 %v6517
        %v6519 = vpop.xlane.xlu0 %6518
        %v6520 = vsel %vm5865, %v5514, 0.0
        %6521 = vadd.xlane.f32.xlu0 %v6520
        %v6522 = vpop.xlane.xlu0 %6521
        %v6523 = vsel %vm5861, %v5518, 0.0
        %6524 = vadd.xlane.f32.xlu0 %v6523
        %v6525 = vpop.xlane.xlu0 %6524
        %v6526 = vsel %vm5865, %v5519, 0.0
        %6527 = vadd.xlane.f32.xlu0 %v6526
        %v6528 = vpop.xlane.xlu0 %6527
        %v6529 = vsel %vm5861, %v5523, 0.0
        %6530 = vadd.xlane.f32.xlu0 %v6529
        %v6531 = vpop.xlane.xlu0 %6530
        %v6532 = vsel %vm5865, %v5524, 0.0
        %6533 = vadd.xlane.f32.xlu0 %v6532
        %v6534 = vpop.xlane.xlu0 %6533
        %v6535 = vsel %vm5861, %v5528, 0.0
        %6536 = vadd.xlane.f32.xlu0 %v6535
        %v6537 = vpop.xlane.xlu0 %6536
        %v6538 = vsel %vm5865, %v5529, 0.0
        %6539 = vadd.xlane.f32.xlu0 %v6538
        %v6540 = vpop.xlane.xlu0 %6539
        %v6541 = vsel %vm5861, %v5533, 0.0
        %6542 = vadd.xlane.f32.xlu0 %v6541
        %v6543 = vpop.xlane.xlu0 %6542
        %v6544 = vsel %vm5865, %v5534, 0.0
        %6545 = vadd.xlane.f32.xlu0 %v6544
        %v6546 = vpop.xlane.xlu0 %6545
        %v6547 = vsel %vm5861, %v5538, 0.0
        %6548 = vadd.xlane.f32.xlu0 %v6547
        %v6549 = vpop.xlane.xlu0 %6548
        %v6550 = vsel %vm5865, %v5539, 0.0
        %6551 = vadd.xlane.f32.xlu0 %v6550
        %v6552 = vpop.xlane.xlu0 %6551
        %v6553 = vsel %vm5861, %v5543, 0.0
        %6554 = vadd.xlane.f32.xlu0 %v6553
        %v6555 = vpop.xlane.xlu0 %6554
        %v6556 = vsel %vm5865, %v5544, 0.0
        %6557 = vadd.xlane.f32.xlu0 %v6556
        %v6558 = vpop.xlane.xlu0 %6557
        %v6559 = vsel %vm5861, %v5548, 0.0
        %6560 = vadd.xlane.f32.xlu0 %v6559
        %v6561 = vpop.xlane.xlu0 %6560
        %v6562 = vsel %vm5865, %v5549, 0.0
        %6563 = vadd.xlane.f32.xlu0 %v6562
        %v6564 = vpop.xlane.xlu0 %6563
        %v6565 = vsel %vm5861, %v5553, 0.0
        %6566 = vadd.xlane.f32.xlu0 %v6565
        %v6567 = vpop.xlane.xlu0 %6566
        %v6568 = vsel %vm5865, %v5554, 0.0
        %6569 = vadd.xlane.f32.xlu0 %v6568
        %v6570 = vpop.xlane.xlu0 %6569
        %v6571 = vsel %vm5861, %v5558, 0.0
        %6572 = vadd.xlane.f32.xlu0 %v6571
        %v6573 = vpop.xlane.xlu0 %6572
        %v6574 = vsel %vm5865, %v5559, 0.0
        %6575 = vadd.xlane.f32.xlu0 %v6574
        %v6576 = vpop.xlane.xlu0 %6575
        %v6577 = vsel %vm5861, %v5563, 0.0
        %6578 = vadd.xlane.f32.xlu0 %v6577
        %v6579 = vpop.xlane.xlu0 %6578
        %v6580 = vsel %vm5865, %v5564, 0.0
        %6581 = vadd.xlane.f32.xlu0 %v6580
        %v6582 = vpop.xlane.xlu0 %6581
        %v6583 = vsel %vm5861, %v5568, 0.0
        %6584 = vadd.xlane.f32.xlu0 %v6583
        %v6585 = vpop.xlane.xlu0 %6584
        %v6586 = vsel %vm5865, %v5569, 0.0
        %6587 = vadd.xlane.f32.xlu0 %v6586
        %v6588 = vpop.xlane.xlu0 %6587
        %v6589 = vsel %vm5861, %v5573, 0.0
        %6590 = vadd.xlane.f32.xlu0 %v6589
        %v6591 = vpop.xlane.xlu0 %6590
        %v6592 = vsel %vm5865, %v5574, 0.0
        %6593 = vadd.xlane.f32.xlu0 %v6592
        %v6594 = vpop.xlane.xlu0 %6593
        %v6595 = vsel %vm5861, %v5578, 0.0
        %6596 = vadd.xlane.f32.xlu0 %v6595
        %v6597 = vpop.xlane.xlu0 %6596
        %v6598 = vsel %vm5865, %v5579, 0.0
        %6599 = vadd.xlane.f32.xlu0 %v6598
        %v6600 = vpop.xlane.xlu0 %6599
        %v6601 = vsel %vm5861, %v5583, 0.0
        %6602 = vadd.xlane.f32.xlu0 %v6601
        %v6603 = vpop.xlane.xlu0 %6602
        %v6604 = vsel %vm5865, %v5584, 0.0
        %6605 = vadd.xlane.f32.xlu0 %v6604
        %v6606 = vpop.xlane.xlu0 %6605
        %v6607 = vsel %vm5861, %v5588, 0.0
        %6608 = vadd.xlane.f32.xlu0 %v6607
        %v6609 = vpop.xlane.xlu0 %6608
        %v6610 = vsel %vm5865, %v5589, 0.0
        %6611 = vadd.xlane.f32.xlu0 %v6610
        %v6612 = vpop.xlane.xlu0 %6611
        %v6613 = vsel %vm5861, %v5593, 0.0
        %6614 = vadd.xlane.f32.xlu0 %v6613
        %v6615 = vpop.xlane.xlu0 %6614
        %v6616 = vsel %vm5865, %v5594, 0.0
        %6617 = vadd.xlane.f32.xlu0 %v6616
        %v6618 = vpop.xlane.xlu0 %6617
        %v6619 = vsel %vm5861, %v5598, 0.0
        %6620 = vadd.xlane.f32.xlu0 %v6619
        %v6621 = vpop.xlane.xlu0 %6620
        %v6622 = vsel %vm5865, %v5599, 0.0
        %6623 = vadd.xlane.f32.xlu0 %v6622
        %v6624 = vpop.xlane.xlu0 %6623
        %v6625 = vsel %vm5861, %v5603, 0.0
        %6626 = vadd.xlane.f32.xlu0 %v6625
        %v6627 = vpop.xlane.xlu0 %6626
        %v6628 = vsel %vm5865, %v5604, 0.0
        %6629 = vadd.xlane.f32.xlu0 %v6628
        %v6630 = vpop.xlane.xlu0 %6629
        %vm6631 = vcmp.lt.s32.totalorder %v428, 4
        %v6632 = vsub.f32 0.0, %v5864
        %v6633 = vsub.f32 0.0, %v5868
        %v6634 = vsub.f32 0.0, %v5871
        %v6635 = vsub.f32 0.0, %v5874
        %v6636 = vsub.f32 0.0, %v5877
        %v6637 = vsub.f32 0.0, %v5880
        %v6638 = vsub.f32 0.0, %v5883
        %v6639 = vsub.f32 0.0, %v5886
        %v6640 = vsub.f32 0.0, %v5889
        %v6641 = vsub.f32 0.0, %v5892
        %v6642 = vsub.f32 0.0, %v5895
        %v6643 = vsub.f32 0.0, %v5898
        %v6644 = vsub.f32 0.0, %v5901
        %v6645 = vsub.f32 0.0, %v5904
        %v6646 = vsub.f32 0.0, %v5907
        %v6647 = vsub.f32 0.0, %v5910
        %v6648 = vsub.f32 0.0, %v5913
        %v6649 = vsub.f32 0.0, %v5916
        %v6650 = vsub.f32 0.0, %v5919
        %v6651 = vsub.f32 0.0, %v5922
        %v6652 = vsub.f32 0.0, %v5925
        %v6653 = vsub.f32 0.0, %v5928
        %v6654 = vsub.f32 0.0, %v5931
        %v6655 = vsub.f32 0.0, %v5934
        %v6656 = vsub.f32 0.0, %v5937
        %v6657 = vsub.f32 0.0, %v5940
        %v6658 = vsub.f32 0.0, %v5943
        %v6659 = vsub.f32 0.0, %v5946
        %v6660 = vsub.f32 0.0, %v5949
        %v6661 = vsub.f32 0.0, %v5952
        %v6662 = vsub.f32 0.0, %v5955
        %v6663 = vsub.f32 0.0, %v5958
        %v6664 = vsub.f32 0.0, %v5961
        %v6665 = vsub.f32 0.0, %v5964
        %v6666 = vsub.f32 0.0, %v5967
        %v6667 = vsub.f32 0.0, %v5970
        %v6668 = vsub.f32 0.0, %v5973
        %v6669 = vsub.f32 0.0, %v5976
        %v6670 = vsub.f32 0.0, %v5979
        %v6671 = vsub.f32 0.0, %v5982
        %v6672 = vsub.f32 0.0, %v5985
        %v6673 = vsub.f32 0.0, %v5988
        %v6674 = vsub.f32 0.0, %v5991
        %v6675 = vsub.f32 0.0, %v5994
        %v6676 = vsub.f32 0.0, %v5997
        %v6677 = vsub.f32 0.0, %v6000
        %v6678 = vsub.f32 0.0, %v6003
        %v6679 = vsub.f32 0.0, %v6006
        %v6680 = vsub.f32 0.0, %v6009
        %v6681 = vsub.f32 0.0, %v6012
        %v6682 = vsub.f32 0.0, %v6015
        %v6683 = vsub.f32 0.0, %v6018
        %v6684 = vsub.f32 0.0, %v6021
        %v6685 = vsub.f32 0.0, %v6024
        %v6686 = vsub.f32 0.0, %v6027
        %v6687 = vsub.f32 0.0, %v6030
        %v6688 = vsub.f32 0.0, %v6033
        %v6689 = vsub.f32 0.0, %v6036
        %v6690 = vsub.f32 0.0, %v6039
        %v6691 = vsub.f32 0.0, %v6042
        %v6692 = vsub.f32 0.0, %v6045
        %v6693 = vsub.f32 0.0, %v6048
        %v6694 = vsub.f32 0.0, %v6051
        %v6695 = vsub.f32 0.0, %v6054
        %v6696 = vsub.f32 0.0, %v6057
        %v6697 = vsub.f32 0.0, %v6060
        %v6698 = vsub.f32 0.0, %v6063
        %v6699 = vsub.f32 0.0, %v6066
        %v6700 = vsub.f32 0.0, %v6069
        %v6701 = vsub.f32 0.0, %v6072
        %v6702 = vsub.f32 0.0, %v6075
        %v6703 = vsub.f32 0.0, %v6078
        %v6704 = vsub.f32 0.0, %v6081
        %v6705 = vsub.f32 0.0, %v6084
        %v6706 = vsub.f32 0.0, %v6087
        %v6707 = vsub.f32 0.0, %v6090
        %v6708 = vsub.f32 0.0, %v6093
        %v6709 = vsub.f32 0.0, %v6096
        %v6710 = vsub.f32 0.0, %v6099
        %v6711 = vsub.f32 0.0, %v6102
        %v6712 = vsub.f32 0.0, %v6105
        %v6713 = vsub.f32 0.0, %v6108
        %v6714 = vsub.f32 0.0, %v6111
        %v6715 = vsub.f32 0.0, %v6114
        %v6716 = vsub.f32 0.0, %v6117
        %v6717 = vsub.f32 0.0, %v6120
        %v6718 = vsub.f32 0.0, %v6123
        %v6719 = vsub.f32 0.0, %v6126
        %v6720 = vsub.f32 0.0, %v6129
        %v6721 = vsub.f32 0.0, %v6132
        %v6722 = vsub.f32 0.0, %v6135
        %v6723 = vsub.f32 0.0, %v6138
        %v6724 = vsub.f32 0.0, %v6141
        %v6725 = vsub.f32 0.0, %v6144
        %v6726 = vsub.f32 0.0, %v6147
        %v6727 = vsub.f32 0.0, %v6150
        %v6728 = vsub.f32 0.0, %v6153
        %v6729 = vsub.f32 0.0, %v6156
        %v6730 = vsub.f32 0.0, %v6159
        %v6731 = vsub.f32 0.0, %v6162
        %v6732 = vsub.f32 0.0, %v6165
        %v6733 = vsub.f32 0.0, %v6168
        %v6734 = vsub.f32 0.0, %v6171
        %v6735 = vsub.f32 0.0, %v6174
        %v6736 = vsub.f32 0.0, %v6177
        %v6737 = vsub.f32 0.0, %v6180
        %v6738 = vsub.f32 0.0, %v6183
        %v6739 = vsub.f32 0.0, %v6186
        %v6740 = vsub.f32 0.0, %v6189
        %v6741 = vsub.f32 0.0, %v6192
        %v6742 = vsub.f32 0.0, %v6195
        %v6743 = vsub.f32 0.0, %v6198
        %v6744 = vsub.f32 0.0, %v6201
        %v6745 = vsub.f32 0.0, %v6204
        %v6746 = vsub.f32 0.0, %v6207
        %v6747 = vsub.f32 0.0, %v6210
        %v6748 = vsub.f32 0.0, %v6213
        %v6749 = vsub.f32 0.0, %v6216
        %v6750 = vsub.f32 0.0, %v6219
        %v6751 = vsub.f32 0.0, %v6222
        %v6752 = vsub.f32 0.0, %v6225
        %v6753 = vsub.f32 0.0, %v6228
        %v6754 = vsub.f32 0.0, %v6231
        %v6755 = vsub.f32 0.0, %v6234
        %v6756 = vsub.f32 0.0, %v6237
        %v6757 = vsub.f32 0.0, %v6240
        %v6758 = vsub.f32 0.0, %v6243
        %v6759 = vsub.f32 0.0, %v6246
        %v6760 = vsub.f32 0.0, %v6249
        %v6761 = vsub.f32 0.0, %v6252
        %v6762 = vsub.f32 0.0, %v6255
        %v6763 = vsub.f32 0.0, %v6258
        %v6764 = vsub.f32 0.0, %v6261
        %v6765 = vsub.f32 0.0, %v6264
        %v6766 = vsub.f32 0.0, %v6267
        %v6767 = vsub.f32 0.0, %v6270
        %v6768 = vsub.f32 0.0, %v6273
        %v6769 = vsub.f32 0.0, %v6276
        %v6770 = vsub.f32 0.0, %v6279
        %v6771 = vsub.f32 0.0, %v6282
        %v6772 = vsub.f32 0.0, %v6285
        %v6773 = vsub.f32 0.0, %v6288
        %v6774 = vsub.f32 0.0, %v6291
        %v6775 = vsub.f32 0.0, %v6294
        %v6776 = vsub.f32 0.0, %v6297
        %v6777 = vsub.f32 0.0, %v6300
        %v6778 = vsub.f32 0.0, %v6303
        %v6779 = vsub.f32 0.0, %v6306
        %v6780 = vsub.f32 0.0, %v6309
        %v6781 = vsub.f32 0.0, %v6312
        %v6782 = vsub.f32 0.0, %v6315
        %v6783 = vsub.f32 0.0, %v6318
        %v6784 = vsub.f32 0.0, %v6321
        %v6785 = vsub.f32 0.0, %v6324
        %v6786 = vsub.f32 0.0, %v6327
        %v6787 = vsub.f32 0.0, %v6330
        %v6788 = vsub.f32 0.0, %v6333
        %v6789 = vsub.f32 0.0, %v6336
        %v6790 = vsub.f32 0.0, %v6339
        %v6791 = vsub.f32 0.0, %v6342
        %v6792 = vsub.f32 0.0, %v6345
        %v6793 = vsub.f32 0.0, %v6348
        %v6794 = vsub.f32 0.0, %v6351
        %v6795 = vsub.f32 0.0, %v6354
        %v6796 = vsub.f32 0.0, %v6357
        %v6797 = vsub.f32 0.0, %v6360
        %v6798 = vsub.f32 0.0, %v6363
        %v6799 = vsub.f32 0.0, %v6366
        %v6800 = vsub.f32 0.0, %v6369
        %v6801 = vsub.f32 0.0, %v6372
        %v6802 = vsub.f32 0.0, %v6375
        %v6803 = vsub.f32 0.0, %v6378
        %v6804 = vsub.f32 0.0, %v6381
        %v6805 = vsub.f32 0.0, %v6384
        %v6806 = vsub.f32 0.0, %v6387
        %v6807 = vsub.f32 0.0, %v6390
        %v6808 = vsub.f32 0.0, %v6393
        %v6809 = vsub.f32 0.0, %v6396
        %v6810 = vsub.f32 0.0, %v6399
        %v6811 = vsub.f32 0.0, %v6402
        %v6812 = vsub.f32 0.0, %v6405
        %v6813 = vsub.f32 0.0, %v6408
        %v6814 = vsub.f32 0.0, %v6411
        %v6815 = vsub.f32 0.0, %v6414
        %v6816 = vsub.f32 0.0, %v6417
        %v6817 = vsub.f32 0.0, %v6420
        %v6818 = vsub.f32 0.0, %v6423
        %v6819 = vsub.f32 0.0, %v6426
        %v6820 = vsub.f32 0.0, %v6429
        %v6821 = vsub.f32 0.0, %v6432
        %v6822 = vsub.f32 0.0, %v6435
        %v6823 = vsub.f32 0.0, %v6438
        %v6824 = vsub.f32 0.0, %v6441
        %v6825 = vsub.f32 0.0, %v6444
        %v6826 = vsub.f32 0.0, %v6447
        %v6827 = vsub.f32 0.0, %v6450
        %v6828 = vsub.f32 0.0, %v6453
        %v6829 = vsub.f32 0.0, %v6456
        %v6830 = vsub.f32 0.0, %v6459
        %v6831 = vsub.f32 0.0, %v6462
        %v6832 = vsub.f32 0.0, %v6465
        %v6833 = vsub.f32 0.0, %v6468
        %v6834 = vsub.f32 0.0, %v6471
        %v6835 = vsub.f32 0.0, %v6474
        %v6836 = vsub.f32 0.0, %v6477
        %v6837 = vsub.f32 0.0, %v6480
        %v6838 = vsub.f32 0.0, %v6483
        %v6839 = vsub.f32 0.0, %v6486
        %v6840 = vsub.f32 0.0, %v6489
        %v6841 = vsub.f32 0.0, %v6492
        %v6842 = vsub.f32 0.0, %v6495
        %v6843 = vsub.f32 0.0, %v6498
        %v6844 = vsub.f32 0.0, %v6501
        %v6845 = vsub.f32 0.0, %v6504
        %v6846 = vsub.f32 0.0, %v6507
        %v6847 = vsub.f32 0.0, %v6510
        %v6848 = vsub.f32 0.0, %v6513
        %v6849 = vsub.f32 0.0, %v6516
        %v6850 = vsub.f32 0.0, %v6519
        %v6851 = vsub.f32 0.0, %v6522
        %v6852 = vsub.f32 0.0, %v6525
        %v6853 = vsub.f32 0.0, %v6528
        %v6854 = vsub.f32 0.0, %v6531
        %v6855 = vsub.f32 0.0, %v6534
        %v6856 = vsub.f32 0.0, %v6537
        %v6857 = vsub.f32 0.0, %v6540
        %v6858 = vsub.f32 0.0, %v6543
        %v6859 = vsub.f32 0.0, %v6546
        %v6860 = vsub.f32 0.0, %v6549
        %v6861 = vsub.f32 0.0, %v6552
        %v6862 = vsub.f32 0.0, %v6555
        %v6863 = vsub.f32 0.0, %v6558
        %v6864 = vsub.f32 0.0, %v6561
        %v6865 = vsub.f32 0.0, %v6564
        %v6866 = vsub.f32 0.0, %v6567
        %v6867 = vsub.f32 0.0, %v6570
        %v6868 = vsub.f32 0.0, %v6573
        %v6869 = vsub.f32 0.0, %v6576
        %v6870 = vsub.f32 0.0, %v6579
        %v6871 = vsub.f32 0.0, %v6582
        %v6872 = vsub.f32 0.0, %v6585
        %v6873 = vsub.f32 0.0, %v6588
        %v6874 = vsub.f32 0.0, %v6591
        %v6875 = vsub.f32 0.0, %v6594
        %v6876 = vsub.f32 0.0, %v6597
        %v6877 = vsub.f32 0.0, %v6600
        %v6878 = vsub.f32 0.0, %v6603
        %v6879 = vsub.f32 0.0, %v6606
        %v6880 = vsub.f32 0.0, %v6609
        %v6881 = vsub.f32 0.0, %v6612
        %v6882 = vsub.f32 0.0, %v6615
        %v6883 = vsub.f32 0.0, %v6618
        %v6884 = vsub.f32 0.0, %v6621
        %v6885 = vsub.f32 0.0, %v6624
        %v6886 = vsub.f32 0.0, %v6627
        %v6887 = vsub.f32 0.0, %v6630
        %v7144 = vperm.slane %v5864, %v428
        %v7145 = vadd.s32 %v428, 4294967288
        %v7146 = vperm.slane %v5868, %v7145
        %vm7147 = vcmask 130112
        %v7148 = vsel %vm7147, %v7146, %v7144
        %v7149 = vperm.slane %v5871, %v428
        %v7150 = vperm.slane %v5874, %v7145
        %v7151 = vsel %vm7147, %v7150, %v7149
        %v7152 = vperm.slane %v5877, %v428
        %v7153 = vperm.slane %v5880, %v7145
        %v7154 = vsel %vm7147, %v7153, %v7152
        %v7155 = vperm.slane %v5883, %v428
        %v7156 = vperm.slane %v5886, %v7145
        %v7157 = vsel %vm7147, %v7156, %v7155
        %v7158 = vperm.slane %v5889, %v428
        %v7159 = vperm.slane %v5892, %v7145
        %v7160 = vsel %vm7147, %v7159, %v7158
        %v7161 = vperm.slane %v5895, %v428
        %v7162 = vperm.slane %v5898, %v7145
        %v7163 = vsel %vm7147, %v7162, %v7161
        %v7164 = vperm.slane %v5901, %v428
        %v7165 = vperm.slane %v5904, %v7145
        %v7166 = vsel %vm7147, %v7165, %v7164
        %v7167 = vperm.slane %v5907, %v428
        %v7168 = vperm.slane %v5910, %v7145
        %v7169 = vsel %vm7147, %v7168, %v7167
        %v7170 = vperm.slane %v5913, %v428
        %v7171 = vperm.slane %v5916, %v7145
        %v7172 = vsel %vm7147, %v7171, %v7170
        %v7173 = vperm.slane %v5919, %v428
        %v7174 = vperm.slane %v5922, %v7145
        %v7175 = vsel %vm7147, %v7174, %v7173
        %v7176 = vperm.slane %v5925, %v428
        %v7177 = vperm.slane %v5928, %v7145
        %v7178 = vsel %vm7147, %v7177, %v7176
        %v7179 = vperm.slane %v5931, %v428
        %v7180 = vperm.slane %v5934, %v7145
        %v7181 = vsel %vm7147, %v7180, %v7179
        %v7182 = vperm.slane %v5937, %v428
        %v7183 = vperm.slane %v5940, %v7145
        %v7184 = vsel %vm7147, %v7183, %v7182
        %v7185 = vperm.slane %v5943, %v428
        %v7186 = vperm.slane %v5946, %v7145
        %v7187 = vsel %vm7147, %v7186, %v7185
        %v7188 = vperm.slane %v5949, %v428
        %v7189 = vperm.slane %v5952, %v7145
        %v7190 = vsel %vm7147, %v7189, %v7188
        %v7191 = vperm.slane %v5955, %v428
        %v7192 = vperm.slane %v5958, %v7145
        %v7193 = vsel %vm7147, %v7192, %v7191
        %v7194 = vperm.slane %v5961, %v428
        %v7195 = vperm.slane %v5964, %v7145
        %v7196 = vsel %vm7147, %v7195, %v7194
        %v7197 = vperm.slane %v5967, %v428
        %v7198 = vperm.slane %v5970, %v7145
        %v7199 = vsel %vm7147, %v7198, %v7197
        %v7200 = vperm.slane %v5973, %v428
        %v7201 = vperm.slane %v5976, %v7145
        %v7202 = vsel %vm7147, %v7201, %v7200
        %v7203 = vperm.slane %v5979, %v428
        %v7204 = vperm.slane %v5982, %v7145
        %v7205 = vsel %vm7147, %v7204, %v7203
        %v7206 = vperm.slane %v5985, %v428
        %v7207 = vperm.slane %v5988, %v7145
        %v7208 = vsel %vm7147, %v7207, %v7206
        %v7209 = vperm.slane %v5991, %v428
        %v7210 = vperm.slane %v5994, %v7145
        %v7211 = vsel %vm7147, %v7210, %v7209
        %v7212 = vperm.slane %v5997, %v428
        %v7213 = vperm.slane %v6000, %v7145
        %v7214 = vsel %vm7147, %v7213, %v7212
        %v7215 = vperm.slane %v6003, %v428
        %v7216 = vperm.slane %v6006, %v7145
        %v7217 = vsel %vm7147, %v7216, %v7215
        %v7218 = vperm.slane %v6009, %v428
        %v7219 = vperm.slane %v6012, %v7145
        %v7220 = vsel %vm7147, %v7219, %v7218
        %v7221 = vperm.slane %v6015, %v428
        %v7222 = vperm.slane %v6018, %v7145
        %v7223 = vsel %vm7147, %v7222, %v7221
        %v7224 = vperm.slane %v6021, %v428
        %v7225 = vperm.slane %v6024, %v7145
        %v7226 = vsel %vm7147, %v7225, %v7224
        %v7227 = vperm.slane %v6027, %v428
        %v7228 = vperm.slane %v6030, %v7145
        %v7229 = vsel %vm7147, %v7228, %v7227
        %v7230 = vperm.slane %v6033, %v428
        %v7231 = vperm.slane %v6036, %v7145
        %v7232 = vsel %vm7147, %v7231, %v7230
        %v7233 = vperm.slane %v6039, %v428
        %v7234 = vperm.slane %v6042, %v7145
        %v7235 = vsel %vm7147, %v7234, %v7233
        %v7236 = vperm.slane %v6045, %v428
        %v7237 = vperm.slane %v6048, %v7145
        %v7238 = vsel %vm7147, %v7237, %v7236
        %v7239 = vperm.slane %v6051, %v428
        %v7240 = vperm.slane %v6054, %v7145
        %v7241 = vsel %vm7147, %v7240, %v7239
        %v7242 = vperm.slane %v6057, %v428
        %v7243 = vperm.slane %v6060, %v7145
        %v7244 = vsel %vm7147, %v7243, %v7242
        %v7245 = vperm.slane %v6063, %v428
        %v7246 = vperm.slane %v6066, %v7145
        %v7247 = vsel %vm7147, %v7246, %v7245
        %v7248 = vperm.slane %v6069, %v428
        %v7249 = vperm.slane %v6072, %v7145
        %v7250 = vsel %vm7147, %v7249, %v7248
        %v7251 = vperm.slane %v6075, %v428
        %v7252 = vperm.slane %v6078, %v7145
        %v7253 = vsel %vm7147, %v7252, %v7251
        %v7254 = vperm.slane %v6081, %v428
        %v7255 = vperm.slane %v6084, %v7145
        %v7256 = vsel %vm7147, %v7255, %v7254
        %v7257 = vperm.slane %v6087, %v428
        %v7258 = vperm.slane %v6090, %v7145
        %v7259 = vsel %vm7147, %v7258, %v7257
        %v7260 = vperm.slane %v6093, %v428
        %v7261 = vperm.slane %v6096, %v7145
        %v7262 = vsel %vm7147, %v7261, %v7260
        %v7263 = vperm.slane %v6099, %v428
        %v7264 = vperm.slane %v6102, %v7145
        %v7265 = vsel %vm7147, %v7264, %v7263
        %v7266 = vperm.slane %v6105, %v428
        %v7267 = vperm.slane %v6108, %v7145
        %v7268 = vsel %vm7147, %v7267, %v7266
        %v7269 = vperm.slane %v6111, %v428
        %v7270 = vperm.slane %v6114, %v7145
        %v7271 = vsel %vm7147, %v7270, %v7269
        %v7272 = vperm.slane %v6117, %v428
        %v7273 = vperm.slane %v6120, %v7145
        %v7274 = vsel %vm7147, %v7273, %v7272
        %v7275 = vperm.slane %v6123, %v428
        %v7276 = vperm.slane %v6126, %v7145
        %v7277 = vsel %vm7147, %v7276, %v7275
        %v7278 = vperm.slane %v6129, %v428
        %v7279 = vperm.slane %v6132, %v7145
        %v7280 = vsel %vm7147, %v7279, %v7278
        %v7281 = vperm.slane %v6135, %v428
        %v7282 = vperm.slane %v6138, %v7145
        %v7283 = vsel %vm7147, %v7282, %v7281
        %v7284 = vperm.slane %v6141, %v428
        %v7285 = vperm.slane %v6144, %v7145
        %v7286 = vsel %vm7147, %v7285, %v7284
        %v7287 = vperm.slane %v6147, %v428
        %v7288 = vperm.slane %v6150, %v7145
        %v7289 = vsel %vm7147, %v7288, %v7287
        %v7290 = vperm.slane %v6153, %v428
        %v7291 = vperm.slane %v6156, %v7145
        %v7292 = vsel %vm7147, %v7291, %v7290
        %v7293 = vperm.slane %v6159, %v428
        %v7294 = vperm.slane %v6162, %v7145
        %v7295 = vsel %vm7147, %v7294, %v7293
        %v7296 = vperm.slane %v6165, %v428
        %v7297 = vperm.slane %v6168, %v7145
        %v7298 = vsel %vm7147, %v7297, %v7296
        %v7299 = vperm.slane %v6171, %v428
        %v7300 = vperm.slane %v6174, %v7145
        %v7301 = vsel %vm7147, %v7300, %v7299
        %v7302 = vperm.slane %v6177, %v428
        %v7303 = vperm.slane %v6180, %v7145
        %v7304 = vsel %vm7147, %v7303, %v7302
        %v7305 = vperm.slane %v6183, %v428
        %v7306 = vperm.slane %v6186, %v7145
        %v7307 = vsel %vm7147, %v7306, %v7305
        %v7308 = vperm.slane %v6189, %v428
        %v7309 = vperm.slane %v6192, %v7145
        %v7310 = vsel %vm7147, %v7309, %v7308
        %v7311 = vperm.slane %v6195, %v428
        %v7312 = vperm.slane %v6198, %v7145
        %v7313 = vsel %vm7147, %v7312, %v7311
        %v7314 = vperm.slane %v6201, %v428
        %v7315 = vperm.slane %v6204, %v7145
        %v7316 = vsel %vm7147, %v7315, %v7314
        %v7317 = vperm.slane %v6207, %v428
        %v7318 = vperm.slane %v6210, %v7145
        %v7319 = vsel %vm7147, %v7318, %v7317
        %v7320 = vperm.slane %v6213, %v428
        %v7321 = vperm.slane %v6216, %v7145
        %v7322 = vsel %vm7147, %v7321, %v7320
        %v7323 = vperm.slane %v6219, %v428
        %v7324 = vperm.slane %v6222, %v7145
        %v7325 = vsel %vm7147, %v7324, %v7323
        %v7326 = vperm.slane %v6225, %v428
        %v7327 = vperm.slane %v6228, %v7145
        %v7328 = vsel %vm7147, %v7327, %v7326
        %v7329 = vperm.slane %v6231, %v428
        %v7330 = vperm.slane %v6234, %v7145
        %v7331 = vsel %vm7147, %v7330, %v7329
        %v7332 = vperm.slane %v6237, %v428
        %v7333 = vperm.slane %v6240, %v7145
        %v7334 = vsel %vm7147, %v7333, %v7332
        %v7335 = vperm.slane %v6243, %v428
        %v7336 = vperm.slane %v6246, %v7145
        %v7337 = vsel %vm7147, %v7336, %v7335
        %v7338 = vperm.slane %v6249, %v428
        %v7339 = vperm.slane %v6252, %v7145
        %v7340 = vsel %vm7147, %v7339, %v7338
        %v7341 = vperm.slane %v6255, %v428
        %v7342 = vperm.slane %v6258, %v7145
        %v7343 = vsel %vm7147, %v7342, %v7341
        %v7344 = vperm.slane %v6261, %v428
        %v7345 = vperm.slane %v6264, %v7145
        %v7346 = vsel %vm7147, %v7345, %v7344
        %v7347 = vperm.slane %v6267, %v428
        %v7348 = vperm.slane %v6270, %v7145
        %v7349 = vsel %vm7147, %v7348, %v7347
        %v7350 = vperm.slane %v6273, %v428
        %v7351 = vperm.slane %v6276, %v7145
        %v7352 = vsel %vm7147, %v7351, %v7350
        %v7353 = vperm.slane %v6279, %v428
        %v7354 = vperm.slane %v6282, %v7145
        %v7355 = vsel %vm7147, %v7354, %v7353
        %v7356 = vperm.slane %v6285, %v428
        %v7357 = vperm.slane %v6288, %v7145
        %v7358 = vsel %vm7147, %v7357, %v7356
        %v7359 = vperm.slane %v6291, %v428
        %v7360 = vperm.slane %v6294, %v7145
        %v7361 = vsel %vm7147, %v7360, %v7359
        %v7362 = vperm.slane %v6297, %v428
        %v7363 = vperm.slane %v6300, %v7145
        %v7364 = vsel %vm7147, %v7363, %v7362
        %v7365 = vperm.slane %v6303, %v428
        %v7366 = vperm.slane %v6306, %v7145
        %v7367 = vsel %vm7147, %v7366, %v7365
        %v7368 = vperm.slane %v6309, %v428
        %v7369 = vperm.slane %v6312, %v7145
        %v7370 = vsel %vm7147, %v7369, %v7368
        %v7371 = vperm.slane %v6315, %v428
        %v7372 = vperm.slane %v6318, %v7145
        %v7373 = vsel %vm7147, %v7372, %v7371
        %v7374 = vperm.slane %v6321, %v428
        %v7375 = vperm.slane %v6324, %v7145
        %v7376 = vsel %vm7147, %v7375, %v7374
        %v7377 = vperm.slane %v6327, %v428
        %v7378 = vperm.slane %v6330, %v7145
        %v7379 = vsel %vm7147, %v7378, %v7377
        %v7380 = vperm.slane %v6333, %v428
        %v7381 = vperm.slane %v6336, %v7145
        %v7382 = vsel %vm7147, %v7381, %v7380
        %v7383 = vperm.slane %v6339, %v428
        %v7384 = vperm.slane %v6342, %v7145
        %v7385 = vsel %vm7147, %v7384, %v7383
        %v7386 = vperm.slane %v6345, %v428
        %v7387 = vperm.slane %v6348, %v7145
        %v7388 = vsel %vm7147, %v7387, %v7386
        %v7389 = vperm.slane %v6351, %v428
        %v7390 = vperm.slane %v6354, %v7145
        %v7391 = vsel %vm7147, %v7390, %v7389
        %v7392 = vperm.slane %v6357, %v428
        %v7393 = vperm.slane %v6360, %v7145
        %v7394 = vsel %vm7147, %v7393, %v7392
        %v7395 = vperm.slane %v6363, %v428
        %v7396 = vperm.slane %v6366, %v7145
        %v7397 = vsel %vm7147, %v7396, %v7395
        %v7398 = vperm.slane %v6369, %v428
        %v7399 = vperm.slane %v6372, %v7145
        %v7400 = vsel %vm7147, %v7399, %v7398
        %v7401 = vperm.slane %v6375, %v428
        %v7402 = vperm.slane %v6378, %v7145
        %v7403 = vsel %vm7147, %v7402, %v7401
        %v7404 = vperm.slane %v6381, %v428
        %v7405 = vperm.slane %v6384, %v7145
        %v7406 = vsel %vm7147, %v7405, %v7404
        %v7407 = vperm.slane %v6387, %v428
        %v7408 = vperm.slane %v6390, %v7145
        %v7409 = vsel %vm7147, %v7408, %v7407
        %v7410 = vperm.slane %v6393, %v428
        %v7411 = vperm.slane %v6396, %v7145
        %v7412 = vsel %vm7147, %v7411, %v7410
        %v7413 = vperm.slane %v6399, %v428
        %v7414 = vperm.slane %v6402, %v7145
        %v7415 = vsel %vm7147, %v7414, %v7413
        %v7416 = vperm.slane %v6405, %v428
        %v7417 = vperm.slane %v6408, %v7145
        %v7418 = vsel %vm7147, %v7417, %v7416
        %v7419 = vperm.slane %v6411, %v428
        %v7420 = vperm.slane %v6414, %v7145
        %v7421 = vsel %vm7147, %v7420, %v7419
        %v7422 = vperm.slane %v6417, %v428
        %v7423 = vperm.slane %v6420, %v7145
        %v7424 = vsel %vm7147, %v7423, %v7422
        %v7425 = vperm.slane %v6423, %v428
        %v7426 = vperm.slane %v6426, %v7145
        %v7427 = vsel %vm7147, %v7426, %v7425
        %v7428 = vperm.slane %v6429, %v428
        %v7429 = vperm.slane %v6432, %v7145
        %v7430 = vsel %vm7147, %v7429, %v7428
        %v7431 = vperm.slane %v6435, %v428
        %v7432 = vperm.slane %v6438, %v7145
        %v7433 = vsel %vm7147, %v7432, %v7431
        %v7434 = vperm.slane %v6441, %v428
        %v7435 = vperm.slane %v6444, %v7145
        %v7436 = vsel %vm7147, %v7435, %v7434
        %v7437 = vperm.slane %v6447, %v428
        %v7438 = vperm.slane %v6450, %v7145
        %v7439 = vsel %vm7147, %v7438, %v7437
        %v7440 = vperm.slane %v6453, %v428
        %v7441 = vperm.slane %v6456, %v7145
        %v7442 = vsel %vm7147, %v7441, %v7440
        %v7443 = vperm.slane %v6459, %v428
        %v7444 = vperm.slane %v6462, %v7145
        %v7445 = vsel %vm7147, %v7444, %v7443
        %v7446 = vperm.slane %v6465, %v428
        %v7447 = vperm.slane %v6468, %v7145
        %v7448 = vsel %vm7147, %v7447, %v7446
        %v7449 = vperm.slane %v6471, %v428
        %v7450 = vperm.slane %v6474, %v7145
        %v7451 = vsel %vm7147, %v7450, %v7449
        %v7452 = vperm.slane %v6477, %v428
        %v7453 = vperm.slane %v6480, %v7145
        %v7454 = vsel %vm7147, %v7453, %v7452
        %v7455 = vperm.slane %v6483, %v428
        %v7456 = vperm.slane %v6486, %v7145
        %v7457 = vsel %vm7147, %v7456, %v7455
        %v7458 = vperm.slane %v6489, %v428
        %v7459 = vperm.slane %v6492, %v7145
        %v7460 = vsel %vm7147, %v7459, %v7458
        %v7461 = vperm.slane %v6495, %v428
        %v7462 = vperm.slane %v6498, %v7145
        %v7463 = vsel %vm7147, %v7462, %v7461
        %v7464 = vperm.slane %v6501, %v428
        %v7465 = vperm.slane %v6504, %v7145
        %v7466 = vsel %vm7147, %v7465, %v7464
        %v7467 = vperm.slane %v6507, %v428
        %v7468 = vperm.slane %v6510, %v7145
        %v7469 = vsel %vm7147, %v7468, %v7467
        %v7470 = vperm.slane %v6513, %v428
        %v7471 = vperm.slane %v6516, %v7145
        %v7472 = vsel %vm7147, %v7471, %v7470
        %v7473 = vperm.slane %v6519, %v428
        %v7474 = vperm.slane %v6522, %v7145
        %v7475 = vsel %vm7147, %v7474, %v7473
        %v7476 = vperm.slane %v6525, %v428
        %v7477 = vperm.slane %v6528, %v7145
        %v7478 = vsel %vm7147, %v7477, %v7476
        %v7479 = vperm.slane %v6531, %v428
        %v7480 = vperm.slane %v6534, %v7145
        %v7481 = vsel %vm7147, %v7480, %v7479
        %v7482 = vperm.slane %v6537, %v428
        %v7483 = vperm.slane %v6540, %v7145
        %v7484 = vsel %vm7147, %v7483, %v7482
        %v7485 = vperm.slane %v6543, %v428
        %v7486 = vperm.slane %v6546, %v7145
        %v7487 = vsel %vm7147, %v7486, %v7485
        %v7488 = vperm.slane %v6549, %v428
        %v7489 = vperm.slane %v6552, %v7145
        %v7490 = vsel %vm7147, %v7489, %v7488
        %v7491 = vperm.slane %v6555, %v428
        %v7492 = vperm.slane %v6558, %v7145
        %v7493 = vsel %vm7147, %v7492, %v7491
        %v7494 = vperm.slane %v6561, %v428
        %v7495 = vperm.slane %v6564, %v7145
        %v7496 = vsel %vm7147, %v7495, %v7494
        %v7497 = vperm.slane %v6567, %v428
        %v7498 = vperm.slane %v6570, %v7145
        %v7499 = vsel %vm7147, %v7498, %v7497
        %v7500 = vperm.slane %v6573, %v428
        %v7501 = vperm.slane %v6576, %v7145
        %v7502 = vsel %vm7147, %v7501, %v7500
        %v7503 = vperm.slane %v6579, %v428
        %v7504 = vperm.slane %v6582, %v7145
        %v7505 = vsel %vm7147, %v7504, %v7503
        %v7506 = vperm.slane %v6585, %v428
        %v7507 = vperm.slane %v6588, %v7145
        %v7508 = vsel %vm7147, %v7507, %v7506
        %v7509 = vperm.slane %v6591, %v428
        %v7510 = vperm.slane %v6594, %v7145
        %v7511 = vsel %vm7147, %v7510, %v7509
        %v7512 = vperm.slane %v6597, %v428
        %v7513 = vperm.slane %v6600, %v7145
        %v7514 = vsel %vm7147, %v7513, %v7512
        %v7515 = vperm.slane %v6603, %v428
        %v7516 = vperm.slane %v6606, %v7145
        %v7517 = vsel %vm7147, %v7516, %v7515
        %v7518 = vperm.slane %v6609, %v428
        %v7519 = vperm.slane %v6612, %v7145
        %v7520 = vsel %vm7147, %v7519, %v7518
        %v7521 = vperm.slane %v6615, %v428
        %v7522 = vperm.slane %v6618, %v7145
        %v7523 = vsel %vm7147, %v7522, %v7521
        %v7524 = vperm.slane %v6621, %v428
        %v7525 = vperm.slane %v6624, %v7145
        %v7526 = vsel %vm7147, %v7525, %v7524
        %v7527 = vperm.slane %v6627, %v428
        %v7528 = vperm.slane %v6630, %v7145
        %v7529 = vsel %vm7147, %v7528, %v7527
        %vm7530 = vcmask 1041409
        %v7531 = vsel %vm7530, %v7151, %v7148
        %vm7532 = vcmask 1042434
        %v7533 = vsel %vm7532, %v7154, %v7531
        %vm7534 = vcmask 1043459
        %v7535 = vsel %vm7534, %v7157, %v7533
        %vm7536 = vcmask 1044484
        %v7537 = vsel %vm7536, %v7160, %v7535
        %vm7538 = vcmask 1045509
        %v7539 = vsel %vm7538, %v7163, %v7537
        %vm7540 = vcmask 1046534
        %v7541 = vsel %vm7540, %v7166, %v7539
        %vm7542 = vcmask 1047559
        %v7543 = vsel %vm7542, %v7169, %v7541
        %v7544 = vsel %vm7530, %v7175, %v7172
        %v7545 = vsel %vm7532, %v7178, %v7544
        %v7546 = vsel %vm7534, %v7181, %v7545
        %v7547 = vsel %vm7536, %v7184, %v7546
        %v7548 = vsel %vm7538, %v7187, %v7547
        %v7549 = vsel %vm7540, %v7190, %v7548
        %v7550 = vsel %vm7542, %v7193, %v7549
        %v7551 = vsel %vm7530, %v7199, %v7196
        %v7552 = vsel %vm7532, %v7202, %v7551
        %v7553 = vsel %vm7534, %v7205, %v7552
        %v7554 = vsel %vm7536, %v7208, %v7553
        %v7555 = vsel %vm7538, %v7211, %v7554
        %v7556 = vsel %vm7540, %v7214, %v7555
        %v7557 = vsel %vm7542, %v7217, %v7556
        %v7558 = vsel %vm7530, %v7223, %v7220
        %v7559 = vsel %vm7532, %v7226, %v7558
        %v7560 = vsel %vm7534, %v7229, %v7559
        %v7561 = vsel %vm7536, %v7232, %v7560
        %v7562 = vsel %vm7538, %v7235, %v7561
        %v7563 = vsel %vm7540, %v7238, %v7562
        %v7564 = vsel %vm7542, %v7241, %v7563
        %v7565 = vsel %vm7530, %v7247, %v7244
        %v7566 = vsel %vm7532, %v7250, %v7565
        %v7567 = vsel %vm7534, %v7253, %v7566
        %v7568 = vsel %vm7536, %v7256, %v7567
        %v7569 = vsel %vm7538, %v7259, %v7568
        %v7570 = vsel %vm7540, %v7262, %v7569
        %v7571 = vsel %vm7542, %v7265, %v7570
        %v7572 = vsel %vm7530, %v7271, %v7268
        %v7573 = vsel %vm7532, %v7274, %v7572
        %v7574 = vsel %vm7534, %v7277, %v7573
        %v7575 = vsel %vm7536, %v7280, %v7574
        %v7576 = vsel %vm7538, %v7283, %v7575
        %v7577 = vsel %vm7540, %v7286, %v7576
        %v7578 = vsel %vm7542, %v7289, %v7577
        %v7579 = vsel %vm7530, %v7295, %v7292
        %v7580 = vsel %vm7532, %v7298, %v7579
        %v7581 = vsel %vm7534, %v7301, %v7580
        %v7582 = vsel %vm7536, %v7304, %v7581
        %v7583 = vsel %vm7538, %v7307, %v7582
        %v7584 = vsel %vm7540, %v7310, %v7583
        %v7585 = vsel %vm7542, %v7313, %v7584
        %v7586 = vsel %vm7530, %v7319, %v7316
        %v7587 = vsel %vm7532, %v7322, %v7586
        %v7588 = vsel %vm7534, %v7325, %v7587
        %v7589 = vsel %vm7536, %v7328, %v7588
        %v7590 = vsel %vm7538, %v7331, %v7589
        %v7591 = vsel %vm7540, %v7334, %v7590
        %v7592 = vsel %vm7542, %v7337, %v7591
        %v7593 = vsel %vm7530, %v7343, %v7340
        %v7594 = vsel %vm7532, %v7346, %v7593
        %v7595 = vsel %vm7534, %v7349, %v7594
        %v7596 = vsel %vm7536, %v7352, %v7595
        %v7597 = vsel %vm7538, %v7355, %v7596
        %v7598 = vsel %vm7540, %v7358, %v7597
        %v7599 = vsel %vm7542, %v7361, %v7598
        %v7600 = vsel %vm7530, %v7367, %v7364
        %v7601 = vsel %vm7532, %v7370, %v7600
        %v7602 = vsel %vm7534, %v7373, %v7601
        %v7603 = vsel %vm7536, %v7376, %v7602
        %v7604 = vsel %vm7538, %v7379, %v7603
        %v7605 = vsel %vm7540, %v7382, %v7604
        %v7606 = vsel %vm7542, %v7385, %v7605
        %v7607 = vsel %vm7530, %v7391, %v7388
        %v7608 = vsel %vm7532, %v7394, %v7607
        %v7609 = vsel %vm7534, %v7397, %v7608
        %v7610 = vsel %vm7536, %v7400, %v7609
        %v7611 = vsel %vm7538, %v7403, %v7610
        %v7612 = vsel %vm7540, %v7406, %v7611
        %v7613 = vsel %vm7542, %v7409, %v7612
        %v7614 = vsel %vm7530, %v7415, %v7412
        %v7615 = vsel %vm7532, %v7418, %v7614
        %v7616 = vsel %vm7534, %v7421, %v7615
        %v7617 = vsel %vm7536, %v7424, %v7616
        %v7618 = vsel %vm7538, %v7427, %v7617
        %v7619 = vsel %vm7540, %v7430, %v7618
        %v7620 = vsel %vm7542, %v7433, %v7619
        %v7621 = vsel %vm7530, %v7439, %v7436
        %v7622 = vsel %vm7532, %v7442, %v7621
        %v7623 = vsel %vm7534, %v7445, %v7622
        %v7624 = vsel %vm7536, %v7448, %v7623
        %v7625 = vsel %vm7538, %v7451, %v7624
        %v7626 = vsel %vm7540, %v7454, %v7625
        %v7627 = vsel %vm7542, %v7457, %v7626
        %v7628 = vsel %vm7530, %v7463, %v7460
        %v7629 = vsel %vm7532, %v7466, %v7628
        %v7630 = vsel %vm7534, %v7469, %v7629
        %v7631 = vsel %vm7536, %v7472, %v7630
        %v7632 = vsel %vm7538, %v7475, %v7631
        %v7633 = vsel %vm7540, %v7478, %v7632
        %v7634 = vsel %vm7542, %v7481, %v7633
        %v7635 = vsel %vm7530, %v7487, %v7484
        %v7636 = vsel %vm7532, %v7490, %v7635
        %v7637 = vsel %vm7534, %v7493, %v7636
        %v7638 = vsel %vm7536, %v7496, %v7637
        %v7639 = vsel %vm7538, %v7499, %v7638
        %v7640 = vsel %vm7540, %v7502, %v7639
        %v7641 = vsel %vm7542, %v7505, %v7640
        %v7642 = vsel %vm7530, %v7511, %v7508
        %v7643 = vsel %vm7532, %v7514, %v7642
        %v7644 = vsel %vm7534, %v7517, %v7643
        %v7645 = vsel %vm7536, %v7520, %v7644
        %v7646 = vsel %vm7538, %v7523, %v7645
        %v7647 = vsel %vm7540, %v7526, %v7646
        %v7648 = vsel %vm7542, %v7529, %v7647
        %v7921 = vperm.slane %v6632, %v428
        %v7922 = vperm.slane %v6633, %v7145
        %v7923 = vsel %vm7147, %v7922, %v7921
        %v7924 = vperm.slane %v6634, %v428
        %v7925 = vperm.slane %v6635, %v7145
        %v7926 = vsel %vm7147, %v7925, %v7924
        %v7927 = vperm.slane %v6636, %v428
        %v7928 = vperm.slane %v6637, %v7145
        %v7929 = vsel %vm7147, %v7928, %v7927
        %v7930 = vperm.slane %v6638, %v428
        %v7931 = vperm.slane %v6639, %v7145
        %v7932 = vsel %vm7147, %v7931, %v7930
        %v7933 = vperm.slane %v6640, %v428
        %v7934 = vperm.slane %v6641, %v7145
        %v7935 = vsel %vm7147, %v7934, %v7933
        %v7936 = vperm.slane %v6642, %v428
        %v7937 = vperm.slane %v6643, %v7145
        %v7938 = vsel %vm7147, %v7937, %v7936
        %v7939 = vperm.slane %v6644, %v428
        %v7940 = vperm.slane %v6645, %v7145
        %v7941 = vsel %vm7147, %v7940, %v7939
        %v7942 = vperm.slane %v6646, %v428
        %v7943 = vperm.slane %v6647, %v7145
        %v7944 = vsel %vm7147, %v7943, %v7942
        %v7945 = vperm.slane %v6648, %v428
        %v7946 = vperm.slane %v6649, %v7145
        %v7947 = vsel %vm7147, %v7946, %v7945
        %v7948 = vperm.slane %v6650, %v428
        %v7949 = vperm.slane %v6651, %v7145
        %v7950 = vsel %vm7147, %v7949, %v7948
        %v7951 = vperm.slane %v6652, %v428
        %v7952 = vperm.slane %v6653, %v7145
        %v7953 = vsel %vm7147, %v7952, %v7951
        %v7954 = vperm.slane %v6654, %v428
        %v7955 = vperm.slane %v6655, %v7145
        %v7956 = vsel %vm7147, %v7955, %v7954
        %v7957 = vperm.slane %v6656, %v428
        %v7958 = vperm.slane %v6657, %v7145
        %v7959 = vsel %vm7147, %v7958, %v7957
        %v7960 = vperm.slane %v6658, %v428
        %v7961 = vperm.slane %v6659, %v7145
        %v7962 = vsel %vm7147, %v7961, %v7960
        %v7963 = vperm.slane %v6660, %v428
        %v7964 = vperm.slane %v6661, %v7145
        %v7965 = vsel %vm7147, %v7964, %v7963
        %v7966 = vperm.slane %v6662, %v428
        %v7967 = vperm.slane %v6663, %v7145
        %v7968 = vsel %vm7147, %v7967, %v7966
        %v7969 = vperm.slane %v6664, %v428
        %v7970 = vperm.slane %v6665, %v7145
        %v7971 = vsel %vm7147, %v7970, %v7969
        %v7972 = vperm.slane %v6666, %v428
        %v7973 = vperm.slane %v6667, %v7145
        %v7974 = vsel %vm7147, %v7973, %v7972
        %v7975 = vperm.slane %v6668, %v428
        %v7976 = vperm.slane %v6669, %v7145
        %v7977 = vsel %vm7147, %v7976, %v7975
        %v7978 = vperm.slane %v6670, %v428
        %v7979 = vperm.slane %v6671, %v7145
        %v7980 = vsel %vm7147, %v7979, %v7978
        %v7981 = vperm.slane %v6672, %v428
        %v7982 = vperm.slane %v6673, %v7145
        %v7983 = vsel %vm7147, %v7982, %v7981
        %v7984 = vperm.slane %v6674, %v428
        %v7985 = vperm.slane %v6675, %v7145
        %v7986 = vsel %vm7147, %v7985, %v7984
        %v7987 = vperm.slane %v6676, %v428
        %v7988 = vperm.slane %v6677, %v7145
        %v7989 = vsel %vm7147, %v7988, %v7987
        %v7990 = vperm.slane %v6678, %v428
        %v7991 = vperm.slane %v6679, %v7145
        %v7992 = vsel %vm7147, %v7991, %v7990
        %v7993 = vperm.slane %v6680, %v428
        %v7994 = vperm.slane %v6681, %v7145
        %v7995 = vsel %vm7147, %v7994, %v7993
        %v7996 = vperm.slane %v6682, %v428
        %v7997 = vperm.slane %v6683, %v7145
        %v7998 = vsel %vm7147, %v7997, %v7996
        %v7999 = vperm.slane %v6684, %v428
        %v8000 = vperm.slane %v6685, %v7145
        %v8001 = vsel %vm7147, %v8000, %v7999
        %v8002 = vperm.slane %v6686, %v428
        %v8003 = vperm.slane %v6687, %v7145
        %v8004 = vsel %vm7147, %v8003, %v8002
        %v8005 = vperm.slane %v6688, %v428
        %v8006 = vperm.slane %v6689, %v7145
        %v8007 = vsel %vm7147, %v8006, %v8005
        %v8008 = vperm.slane %v6690, %v428
        %v8009 = vperm.slane %v6691, %v7145
        %v8010 = vsel %vm7147, %v8009, %v8008
        %v8011 = vperm.slane %v6692, %v428
        %v8012 = vperm.slane %v6693, %v7145
        %v8013 = vsel %vm7147, %v8012, %v8011
        %v8014 = vperm.slane %v6694, %v428
        %v8015 = vperm.slane %v6695, %v7145
        %v8016 = vsel %vm7147, %v8015, %v8014
        %v8017 = vperm.slane %v6696, %v428
        %v8018 = vperm.slane %v6697, %v7145
        %v8019 = vsel %vm7147, %v8018, %v8017
        %v8020 = vperm.slane %v6698, %v428
        %v8021 = vperm.slane %v6699, %v7145
        %v8022 = vsel %vm7147, %v8021, %v8020
        %v8023 = vperm.slane %v6700, %v428
        %v8024 = vperm.slane %v6701, %v7145
        %v8025 = vsel %vm7147, %v8024, %v8023
        %v8026 = vperm.slane %v6702, %v428
        %v8027 = vperm.slane %v6703, %v7145
        %v8028 = vsel %vm7147, %v8027, %v8026
        %v8029 = vperm.slane %v6704, %v428
        %v8030 = vperm.slane %v6705, %v7145
        %v8031 = vsel %vm7147, %v8030, %v8029
        %v8032 = vperm.slane %v6706, %v428
        %v8033 = vperm.slane %v6707, %v7145
        %v8034 = vsel %vm7147, %v8033, %v8032
        %v8035 = vperm.slane %v6708, %v428
        %v8036 = vperm.slane %v6709, %v7145
        %v8037 = vsel %vm7147, %v8036, %v8035
        %v8038 = vperm.slane %v6710, %v428
        %v8039 = vperm.slane %v6711, %v7145
        %v8040 = vsel %vm7147, %v8039, %v8038
        %v8041 = vperm.slane %v6712, %v428
        %v8042 = vperm.slane %v6713, %v7145
        %v8043 = vsel %vm7147, %v8042, %v8041
        %v8044 = vperm.slane %v6714, %v428
        %v8045 = vperm.slane %v6715, %v7145
        %v8046 = vsel %vm7147, %v8045, %v8044
        %v8047 = vperm.slane %v6716, %v428
        %v8048 = vperm.slane %v6717, %v7145
        %v8049 = vsel %vm7147, %v8048, %v8047
        %v8050 = vperm.slane %v6718, %v428
        %v8051 = vperm.slane %v6719, %v7145
        %v8052 = vsel %vm7147, %v8051, %v8050
        %v8053 = vperm.slane %v6720, %v428
        %v8054 = vperm.slane %v6721, %v7145
        %v8055 = vsel %vm7147, %v8054, %v8053
        %v8056 = vperm.slane %v6722, %v428
        %v8057 = vperm.slane %v6723, %v7145
        %v8058 = vsel %vm7147, %v8057, %v8056
        %v8059 = vperm.slane %v6724, %v428
        %v8060 = vperm.slane %v6725, %v7145
        %v8061 = vsel %vm7147, %v8060, %v8059
        %v8062 = vperm.slane %v6726, %v428
        %v8063 = vperm.slane %v6727, %v7145
        %v8064 = vsel %vm7147, %v8063, %v8062
        %v8065 = vperm.slane %v6728, %v428
        %v8066 = vperm.slane %v6729, %v7145
        %v8067 = vsel %vm7147, %v8066, %v8065
        %v8068 = vperm.slane %v6730, %v428
        %v8069 = vperm.slane %v6731, %v7145
        %v8070 = vsel %vm7147, %v8069, %v8068
        %v8071 = vperm.slane %v6732, %v428
        %v8072 = vperm.slane %v6733, %v7145
        %v8073 = vsel %vm7147, %v8072, %v8071
        %v8074 = vperm.slane %v6734, %v428
        %v8075 = vperm.slane %v6735, %v7145
        %v8076 = vsel %vm7147, %v8075, %v8074
        %v8077 = vperm.slane %v6736, %v428
        %v8078 = vperm.slane %v6737, %v7145
        %v8079 = vsel %vm7147, %v8078, %v8077
        %v8080 = vperm.slane %v6738, %v428
        %v8081 = vperm.slane %v6739, %v7145
        %v8082 = vsel %vm7147, %v8081, %v8080
        %v8083 = vperm.slane %v6740, %v428
        %v8084 = vperm.slane %v6741, %v7145
        %v8085 = vsel %vm7147, %v8084, %v8083
        %v8086 = vperm.slane %v6742, %v428
        %v8087 = vperm.slane %v6743, %v7145
        %v8088 = vsel %vm7147, %v8087, %v8086
        %v8089 = vperm.slane %v6744, %v428
        %v8090 = vperm.slane %v6745, %v7145
        %v8091 = vsel %vm7147, %v8090, %v8089
        %v8092 = vperm.slane %v6746, %v428
        %v8093 = vperm.slane %v6747, %v7145
        %v8094 = vsel %vm7147, %v8093, %v8092
        %v8095 = vperm.slane %v6748, %v428
        %v8096 = vperm.slane %v6749, %v7145
        %v8097 = vsel %vm7147, %v8096, %v8095
        %v8098 = vperm.slane %v6750, %v428
        %v8099 = vperm.slane %v6751, %v7145
        %v8100 = vsel %vm7147, %v8099, %v8098
        %v8101 = vperm.slane %v6752, %v428
        %v8102 = vperm.slane %v6753, %v7145
        %v8103 = vsel %vm7147, %v8102, %v8101
        %v8104 = vperm.slane %v6754, %v428
        %v8105 = vperm.slane %v6755, %v7145
        %v8106 = vsel %vm7147, %v8105, %v8104
        %v8107 = vperm.slane %v6756, %v428
        %v8108 = vperm.slane %v6757, %v7145
        %v8109 = vsel %vm7147, %v8108, %v8107
        %v8110 = vperm.slane %v6758, %v428
        %v8111 = vperm.slane %v6759, %v7145
        %v8112 = vsel %vm7147, %v8111, %v8110
        %v8113 = vperm.slane %v6760, %v428
        %v8114 = vperm.slane %v6761, %v7145
        %v8115 = vsel %vm7147, %v8114, %v8113
        %v8116 = vperm.slane %v6762, %v428
        %v8117 = vperm.slane %v6763, %v7145
        %v8118 = vsel %vm7147, %v8117, %v8116
        %v8119 = vperm.slane %v6764, %v428
        %v8120 = vperm.slane %v6765, %v7145
        %v8121 = vsel %vm7147, %v8120, %v8119
        %v8122 = vperm.slane %v6766, %v428
        %v8123 = vperm.slane %v6767, %v7145
        %v8124 = vsel %vm7147, %v8123, %v8122
        %v8125 = vperm.slane %v6768, %v428
        %v8126 = vperm.slane %v6769, %v7145
        %v8127 = vsel %vm7147, %v8126, %v8125
        %v8128 = vperm.slane %v6770, %v428
        %v8129 = vperm.slane %v6771, %v7145
        %v8130 = vsel %vm7147, %v8129, %v8128
        %v8131 = vperm.slane %v6772, %v428
        %v8132 = vperm.slane %v6773, %v7145
        %v8133 = vsel %vm7147, %v8132, %v8131
        %v8134 = vperm.slane %v6774, %v428
        %v8135 = vperm.slane %v6775, %v7145
        %v8136 = vsel %vm7147, %v8135, %v8134
        %v8137 = vperm.slane %v6776, %v428
        %v8138 = vperm.slane %v6777, %v7145
        %v8139 = vsel %vm7147, %v8138, %v8137
        %v8140 = vperm.slane %v6778, %v428
        %v8141 = vperm.slane %v6779, %v7145
        %v8142 = vsel %vm7147, %v8141, %v8140
        %v8143 = vperm.slane %v6780, %v428
        %v8144 = vperm.slane %v6781, %v7145
        %v8145 = vsel %vm7147, %v8144, %v8143
        %v8146 = vperm.slane %v6782, %v428
        %v8147 = vperm.slane %v6783, %v7145
        %v8148 = vsel %vm7147, %v8147, %v8146
        %v8149 = vperm.slane %v6784, %v428
        %v8150 = vperm.slane %v6785, %v7145
        %v8151 = vsel %vm7147, %v8150, %v8149
        %v8152 = vperm.slane %v6786, %v428
        %v8153 = vperm.slane %v6787, %v7145
        %v8154 = vsel %vm7147, %v8153, %v8152
        %v8155 = vperm.slane %v6788, %v428
        %v8156 = vperm.slane %v6789, %v7145
        %v8157 = vsel %vm7147, %v8156, %v8155
        %v8158 = vperm.slane %v6790, %v428
        %v8159 = vperm.slane %v6791, %v7145
        %v8160 = vsel %vm7147, %v8159, %v8158
        %v8161 = vperm.slane %v6792, %v428
        %v8162 = vperm.slane %v6793, %v7145
        %v8163 = vsel %vm7147, %v8162, %v8161
        %v8164 = vperm.slane %v6794, %v428
        %v8165 = vperm.slane %v6795, %v7145
        %v8166 = vsel %vm7147, %v8165, %v8164
        %v8167 = vperm.slane %v6796, %v428
        %v8168 = vperm.slane %v6797, %v7145
        %v8169 = vsel %vm7147, %v8168, %v8167
        %v8170 = vperm.slane %v6798, %v428
        %v8171 = vperm.slane %v6799, %v7145
        %v8172 = vsel %vm7147, %v8171, %v8170
        %v8173 = vperm.slane %v6800, %v428
        %v8174 = vperm.slane %v6801, %v7145
        %v8175 = vsel %vm7147, %v8174, %v8173
        %v8176 = vperm.slane %v6802, %v428
        %v8177 = vperm.slane %v6803, %v7145
        %v8178 = vsel %vm7147, %v8177, %v8176
        %v8179 = vperm.slane %v6804, %v428
        %v8180 = vperm.slane %v6805, %v7145
        %v8181 = vsel %vm7147, %v8180, %v8179
        %v8182 = vperm.slane %v6806, %v428
        %v8183 = vperm.slane %v6807, %v7145
        %v8184 = vsel %vm7147, %v8183, %v8182
        %v8185 = vperm.slane %v6808, %v428
        %v8186 = vperm.slane %v6809, %v7145
        %v8187 = vsel %vm7147, %v8186, %v8185
        %v8188 = vperm.slane %v6810, %v428
        %v8189 = vperm.slane %v6811, %v7145
        %v8190 = vsel %vm7147, %v8189, %v8188
        %v8191 = vperm.slane %v6812, %v428
        %v8192 = vperm.slane %v6813, %v7145
        %v8193 = vsel %vm7147, %v8192, %v8191
        %v8194 = vperm.slane %v6814, %v428
        %v8195 = vperm.slane %v6815, %v7145
        %v8196 = vsel %vm7147, %v8195, %v8194
        %v8197 = vperm.slane %v6816, %v428
        %v8198 = vperm.slane %v6817, %v7145
        %v8199 = vsel %vm7147, %v8198, %v8197
        %v8200 = vperm.slane %v6818, %v428
        %v8201 = vperm.slane %v6819, %v7145
        %v8202 = vsel %vm7147, %v8201, %v8200
        %v8203 = vperm.slane %v6820, %v428
        %v8204 = vperm.slane %v6821, %v7145
        %v8205 = vsel %vm7147, %v8204, %v8203
        %v8206 = vperm.slane %v6822, %v428
        %v8207 = vperm.slane %v6823, %v7145
        %v8208 = vsel %vm7147, %v8207, %v8206
        %v8209 = vperm.slane %v6824, %v428
        %v8210 = vperm.slane %v6825, %v7145
        %v8211 = vsel %vm7147, %v8210, %v8209
        %v8212 = vperm.slane %v6826, %v428
        %v8213 = vperm.slane %v6827, %v7145
        %v8214 = vsel %vm7147, %v8213, %v8212
        %v8215 = vperm.slane %v6828, %v428
        %v8216 = vperm.slane %v6829, %v7145
        %v8217 = vsel %vm7147, %v8216, %v8215
        %v8218 = vperm.slane %v6830, %v428
        %v8219 = vperm.slane %v6831, %v7145
        %v8220 = vsel %vm7147, %v8219, %v8218
        %v8221 = vperm.slane %v6832, %v428
        %v8222 = vperm.slane %v6833, %v7145
        %v8223 = vsel %vm7147, %v8222, %v8221
        %v8224 = vperm.slane %v6834, %v428
        %v8225 = vperm.slane %v6835, %v7145
        %v8226 = vsel %vm7147, %v8225, %v8224
        %v8227 = vperm.slane %v6836, %v428
        %v8228 = vperm.slane %v6837, %v7145
        %v8229 = vsel %vm7147, %v8228, %v8227
        %v8230 = vperm.slane %v6838, %v428
        %v8231 = vperm.slane %v6839, %v7145
        %v8232 = vsel %vm7147, %v8231, %v8230
        %v8233 = vperm.slane %v6840, %v428
        %v8234 = vperm.slane %v6841, %v7145
        %v8235 = vsel %vm7147, %v8234, %v8233
        %v8236 = vperm.slane %v6842, %v428
        %v8237 = vperm.slane %v6843, %v7145
        %v8238 = vsel %vm7147, %v8237, %v8236
        %v8239 = vperm.slane %v6844, %v428
        %v8240 = vperm.slane %v6845, %v7145
        %v8241 = vsel %vm7147, %v8240, %v8239
        %v8242 = vperm.slane %v6846, %v428
        %v8243 = vperm.slane %v6847, %v7145
        %v8244 = vsel %vm7147, %v8243, %v8242
        %v8245 = vperm.slane %v6848, %v428
        %v8246 = vperm.slane %v6849, %v7145
        %v8247 = vsel %vm7147, %v8246, %v8245
        %v8248 = vperm.slane %v6850, %v428
        %v8249 = vperm.slane %v6851, %v7145
        %v8250 = vsel %vm7147, %v8249, %v8248
        %v8251 = vperm.slane %v6852, %v428
        %v8252 = vperm.slane %v6853, %v7145
        %v8253 = vsel %vm7147, %v8252, %v8251
        %v8254 = vperm.slane %v6854, %v428
        %v8255 = vperm.slane %v6855, %v7145
        %v8256 = vsel %vm7147, %v8255, %v8254
        %v8257 = vperm.slane %v6856, %v428
        %v8258 = vperm.slane %v6857, %v7145
        %v8259 = vsel %vm7147, %v8258, %v8257
        %v8260 = vperm.slane %v6858, %v428
        %v8261 = vperm.slane %v6859, %v7145
        %v8262 = vsel %vm7147, %v8261, %v8260
        %v8263 = vperm.slane %v6860, %v428
        %v8264 = vperm.slane %v6861, %v7145
        %v8265 = vsel %vm7147, %v8264, %v8263
        %v8266 = vperm.slane %v6862, %v428
        %v8267 = vperm.slane %v6863, %v7145
        %v8268 = vsel %vm7147, %v8267, %v8266
        %v8269 = vperm.slane %v6864, %v428
        %v8270 = vperm.slane %v6865, %v7145
        %v8271 = vsel %vm7147, %v8270, %v8269
        %v8272 = vperm.slane %v6866, %v428
        %v8273 = vperm.slane %v6867, %v7145
        %v8274 = vsel %vm7147, %v8273, %v8272
        %v8275 = vperm.slane %v6868, %v428
        %v8276 = vperm.slane %v6869, %v7145
        %v8277 = vsel %vm7147, %v8276, %v8275
        %v8278 = vperm.slane %v6870, %v428
        %v8279 = vperm.slane %v6871, %v7145
        %v8280 = vsel %vm7147, %v8279, %v8278
        %v8281 = vperm.slane %v6872, %v428
        %v8282 = vperm.slane %v6873, %v7145
        %v8283 = vsel %vm7147, %v8282, %v8281
        %v8284 = vperm.slane %v6874, %v428
        %v8285 = vperm.slane %v6875, %v7145
        %v8286 = vsel %vm7147, %v8285, %v8284
        %v8287 = vperm.slane %v6876, %v428
        %v8288 = vperm.slane %v6877, %v7145
        %v8289 = vsel %vm7147, %v8288, %v8287
        %v8290 = vperm.slane %v6878, %v428
        %v8291 = vperm.slane %v6879, %v7145
        %v8292 = vsel %vm7147, %v8291, %v8290
        %v8293 = vperm.slane %v6880, %v428
        %v8294 = vperm.slane %v6881, %v7145
        %v8295 = vsel %vm7147, %v8294, %v8293
        %v8296 = vperm.slane %v6882, %v428
        %v8297 = vperm.slane %v6883, %v7145
        %v8298 = vsel %vm7147, %v8297, %v8296
        %v8299 = vperm.slane %v6884, %v428
        %v8300 = vperm.slane %v6885, %v7145
        %v8301 = vsel %vm7147, %v8300, %v8299
        %v8302 = vperm.slane %v6886, %v428
        %v8303 = vperm.slane %v6887, %v7145
        %v8304 = vsel %vm7147, %v8303, %v8302
        %v8305 = vsel %vm7530, %v7926, %v7923
        %v8306 = vsel %vm7532, %v7929, %v8305
        %v8307 = vsel %vm7534, %v7932, %v8306
        %v8308 = vsel %vm7536, %v7935, %v8307
        %v8309 = vsel %vm7538, %v7938, %v8308
        %v8310 = vsel %vm7540, %v7941, %v8309
        %v8311 = vsel %vm7542, %v7944, %v8310
        %v8312 = vsel %vm7530, %v7950, %v7947
        %v8313 = vsel %vm7532, %v7953, %v8312
        %v8314 = vsel %vm7534, %v7956, %v8313
        %v8315 = vsel %vm7536, %v7959, %v8314
        %v8316 = vsel %vm7538, %v7962, %v8315
        %v8317 = vsel %vm7540, %v7965, %v8316
        %v8318 = vsel %vm7542, %v7968, %v8317
        %v8319 = vsel %vm7530, %v7974, %v7971
        %v8320 = vsel %vm7532, %v7977, %v8319
        %v8321 = vsel %vm7534, %v7980, %v8320
        %v8322 = vsel %vm7536, %v7983, %v8321
        %v8323 = vsel %vm7538, %v7986, %v8322
        %v8324 = vsel %vm7540, %v7989, %v8323
        %v8325 = vsel %vm7542, %v7992, %v8324
        %v8326 = vsel %vm7530, %v7998, %v7995
        %v8327 = vsel %vm7532, %v8001, %v8326
        %v8328 = vsel %vm7534, %v8004, %v8327
        %v8329 = vsel %vm7536, %v8007, %v8328
        %v8330 = vsel %vm7538, %v8010, %v8329
        %v8331 = vsel %vm7540, %v8013, %v8330
        %v8332 = vsel %vm7542, %v8016, %v8331
        %v8333 = vsel %vm7530, %v8022, %v8019
        %v8334 = vsel %vm7532, %v8025, %v8333
        %v8335 = vsel %vm7534, %v8028, %v8334
        %v8336 = vsel %vm7536, %v8031, %v8335
        %v8337 = vsel %vm7538, %v8034, %v8336
        %v8338 = vsel %vm7540, %v8037, %v8337
        %v8339 = vsel %vm7542, %v8040, %v8338
        %v8340 = vsel %vm7530, %v8046, %v8043
        %v8341 = vsel %vm7532, %v8049, %v8340
        %v8342 = vsel %vm7534, %v8052, %v8341
        %v8343 = vsel %vm7536, %v8055, %v8342
        %v8344 = vsel %vm7538, %v8058, %v8343
        %v8345 = vsel %vm7540, %v8061, %v8344
        %v8346 = vsel %vm7542, %v8064, %v8345
        %v8347 = vsel %vm7530, %v8070, %v8067
        %v8348 = vsel %vm7532, %v8073, %v8347
        %v8349 = vsel %vm7534, %v8076, %v8348
        %v8350 = vsel %vm7536, %v8079, %v8349
        %v8351 = vsel %vm7538, %v8082, %v8350
        %v8352 = vsel %vm7540, %v8085, %v8351
        %v8353 = vsel %vm7542, %v8088, %v8352
        %v8354 = vsel %vm7530, %v8094, %v8091
        %v8355 = vsel %vm7532, %v8097, %v8354
        %v8356 = vsel %vm7534, %v8100, %v8355
        %v8357 = vsel %vm7536, %v8103, %v8356
        %v8358 = vsel %vm7538, %v8106, %v8357
        %v8359 = vsel %vm7540, %v8109, %v8358
        %v8360 = vsel %vm7542, %v8112, %v8359
        %v8361 = vsel %vm7530, %v8118, %v8115
        %v8362 = vsel %vm7532, %v8121, %v8361
        %v8363 = vsel %vm7534, %v8124, %v8362
        %v8364 = vsel %vm7536, %v8127, %v8363
        %v8365 = vsel %vm7538, %v8130, %v8364
        %v8366 = vsel %vm7540, %v8133, %v8365
        %v8367 = vsel %vm7542, %v8136, %v8366
        %v8368 = vsel %vm7530, %v8142, %v8139
        %v8369 = vsel %vm7532, %v8145, %v8368
        %v8370 = vsel %vm7534, %v8148, %v8369
        %v8371 = vsel %vm7536, %v8151, %v8370
        %v8372 = vsel %vm7538, %v8154, %v8371
        %v8373 = vsel %vm7540, %v8157, %v8372
        %v8374 = vsel %vm7542, %v8160, %v8373
        %v8375 = vsel %vm7530, %v8166, %v8163
        %v8376 = vsel %vm7532, %v8169, %v8375
        %v8377 = vsel %vm7534, %v8172, %v8376
        %v8378 = vsel %vm7536, %v8175, %v8377
        %v8379 = vsel %vm7538, %v8178, %v8378
        %v8380 = vsel %vm7540, %v8181, %v8379
        %v8381 = vsel %vm7542, %v8184, %v8380
        %v8382 = vsel %vm7530, %v8190, %v8187
        %v8383 = vsel %vm7532, %v8193, %v8382
        %v8384 = vsel %vm7534, %v8196, %v8383
        %v8385 = vsel %vm7536, %v8199, %v8384
        %v8386 = vsel %vm7538, %v8202, %v8385
        %v8387 = vsel %vm7540, %v8205, %v8386
        %v8388 = vsel %vm7542, %v8208, %v8387
        %v8389 = vsel %vm7530, %v8214, %v8211
        %v8390 = vsel %vm7532, %v8217, %v8389
        %v8391 = vsel %vm7534, %v8220, %v8390
        %v8392 = vsel %vm7536, %v8223, %v8391
        %v8393 = vsel %vm7538, %v8226, %v8392
        %v8394 = vsel %vm7540, %v8229, %v8393
        %v8395 = vsel %vm7542, %v8232, %v8394
        %v8396 = vsel %vm7530, %v8238, %v8235
        %v8397 = vsel %vm7532, %v8241, %v8396
        %v8398 = vsel %vm7534, %v8244, %v8397
        %v8399 = vsel %vm7536, %v8247, %v8398
        %v8400 = vsel %vm7538, %v8250, %v8399
        %v8401 = vsel %vm7540, %v8253, %v8400
        %v8402 = vsel %vm7542, %v8256, %v8401
        %v8403 = vsel %vm7530, %v8262, %v8259
        %v8404 = vsel %vm7532, %v8265, %v8403
        %v8405 = vsel %vm7534, %v8268, %v8404
        %v8406 = vsel %vm7536, %v8271, %v8405
        %v8407 = vsel %vm7538, %v8274, %v8406
        %v8408 = vsel %vm7540, %v8277, %v8407
        %v8409 = vsel %vm7542, %v8280, %v8408
        %v8410 = vsel %vm7530, %v8286, %v8283
        %v8411 = vsel %vm7532, %v8289, %v8410
        %v8412 = vsel %vm7534, %v8292, %v8411
        %v8413 = vsel %vm7536, %v8295, %v8412
        %v8414 = vsel %vm7538, %v8298, %v8413
        %v8415 = vsel %vm7540, %v8301, %v8414
        %v8416 = vsel %vm7542, %v8304, %v8415
        %v8433 = vsel %vm6631, %v7543, %v8311
        %v8434 = vsel %vm6631, %v7550, %v8318
        %v8435 = vsel %vm6631, %v7557, %v8325
        %v8436 = vsel %vm6631, %v7564, %v8332
        %v8437 = vsel %vm6631, %v7571, %v8339
        %v8438 = vsel %vm6631, %v7578, %v8346
        %v8439 = vsel %vm6631, %v7585, %v8353
        %v8440 = vsel %vm6631, %v7592, %v8360
        %v8441 = vsel %vm6631, %v7599, %v8367
        %v8442 = vsel %vm6631, %v7606, %v8374
        %v8443 = vsel %vm6631, %v7613, %v8381
        %v8444 = vsel %vm6631, %v7620, %v8388
        %v8445 = vsel %vm6631, %v7627, %v8395
        %v8446 = vsel %vm6631, %v7634, %v8402
        %v8447 = vsel %vm6631, %v7641, %v8409
        %v8448 = vsel %vm6631, %v7648, %v8416
        %v8449 = vmin.f32 %v8433, 0.0
        %v8450 = vmin.f32 %v8434, 0.0
        %v8451 = vmin.f32 %v8435, 0.0
        %v8452 = vmin.f32 %v8436, 0.0
        %v8453 = vmin.f32 %v8437, 0.0
        %v8454 = vmin.f32 %v8438, 0.0
        %v8455 = vmin.f32 %v8439, 0.0
        %v8456 = vmin.f32 %v8440, 0.0
        %v8457 = vmin.f32 %v8441, 0.0
        %v8458 = vmin.f32 %v8442, 0.0
        %v8459 = vmin.f32 %v8443, 0.0
        %v8460 = vmin.f32 %v8444, 0.0
        %v8461 = vmin.f32 %v8445, 0.0
        %v8462 = vmin.f32 %v8446, 0.0
        %v8463 = vmin.f32 %v8447, 0.0
        %v8464 = vmin.f32 %v8448, 0.0
        %v8465 = vand.u32 2147483647, %v8433
        %v8466 = vand.u32 2147483647, %v8434
        %v8467 = vand.u32 2147483647, %v8435
        %v8468 = vand.u32 2147483647, %v8436
        %v8469 = vand.u32 2147483647, %v8437
        %v8470 = vand.u32 2147483647, %v8438
        %v8471 = vand.u32 2147483647, %v8439
        %v8472 = vand.u32 2147483647, %v8440
        %v8473 = vand.u32 2147483647, %v8441
        %v8474 = vand.u32 2147483647, %v8442
        %v8475 = vand.u32 2147483647, %v8443
        %v8476 = vand.u32 2147483647, %v8444
        %v8477 = vand.u32 2147483647, %v8445
        %v8478 = vand.u32 2147483647, %v8446
        %v8479 = vand.u32 2147483647, %v8447
        %v8480 = vand.u32 2147483647, %v8448
        %v8481 = vsub.f32 0.0, %v8465
        %v8482 = vsub.f32 0.0, %v8466
        %v8483 = vsub.f32 0.0, %v8467
        %v8484 = vsub.f32 0.0, %v8468
        %v8485 = vsub.f32 0.0, %v8469
        %v8486 = vsub.f32 0.0, %v8470
        %v8487 = vsub.f32 0.0, %v8471
        %v8488 = vsub.f32 0.0, %v8472
        %v8489 = vsub.f32 0.0, %v8473
        %v8490 = vsub.f32 0.0, %v8474
        %v8491 = vsub.f32 0.0, %v8475
        %v8492 = vsub.f32 0.0, %v8476
        %v8493 = vsub.f32 0.0, %v8477
        %v8494 = vsub.f32 0.0, %v8478
        %v8495 = vsub.f32 0.0, %v8479
        %v8496 = vsub.f32 0.0, %v8480
        %v8497 = vmul.f32 %v8481, 1.442695
        %v8498 = vpow.pop %v8497
        %v8499 = vmul.f32 %v8482, 1.442695
        %v8500 = vpow.pop %v8499
        %v8501 = vmul.f32 %v8483, 1.442695
        %v8502 = vpow.pop %v8501
        %v8503 = vmul.f32 %v8484, 1.442695
        %v8504 = vpow.pop %v8503
        %v8505 = vmul.f32 %v8485, 1.442695
        %v8506 = vpow.pop %v8505
        %v8507 = vmul.f32 %v8486, 1.442695
        %v8508 = vpow.pop %v8507
        %v8509 = vmul.f32 %v8487, 1.442695
        %v8510 = vpow.pop %v8509
        %v8511 = vmul.f32 %v8488, 1.442695
        %v8512 = vpow.pop %v8511
        %v8513 = vmul.f32 %v8489, 1.442695
        %v8514 = vpow.pop %v8513
        %v8515 = vmul.f32 %v8490, 1.442695
        %v8516 = vpow.pop %v8515
        %v8517 = vmul.f32 %v8491, 1.442695
        %v8518 = vpow.pop %v8517
        %v8519 = vmul.f32 %v8492, 1.442695
        %v8520 = vpow.pop %v8519
        %v8521 = vmul.f32 %v8493, 1.442695
        %v8522 = vpow.pop %v8521
        %v8523 = vmul.f32 %v8494, 1.442695
        %v8524 = vpow.pop %v8523
        %v8525 = vmul.f32 %v8495, 1.442695
        %v8526 = vpow.pop %v8525
        %v8527 = vmul.f32 %v8496, 1.442695
        %v8528 = vpow.pop %v8527
        %v8529 = vadd.f32 %v8498, 1.0
        %v8530 = vlog2.pop %v8529
        %v8531 = vmul.f32 %v8530, 0.6931472
        %v8532 = vmul.f32 -0.5, %v8498
        %v8533 = vadd.f32 %v8532, 1.0
        %v8534 = vmul.f32 %v8533, %v8498
        %v8535 = vand.u32 2147483647, %v8498
        %vm8536 = vcmp.lt.f32.partialorder %v8535, 0.0004427343
        %v8537 = vsel %vm8536, %v8534, %v8531
        %v8538 = vadd.f32 %v8500, 1.0
        %v8539 = vlog2.pop %v8538
        %v8540 = vmul.f32 %v8539, 0.6931472
        %v8541 = vmul.f32 -0.5, %v8500
        %v8542 = vadd.f32 %v8541, 1.0
        %v8543 = vmul.f32 %v8542, %v8500
        %v8544 = vand.u32 2147483647, %v8500
        %vm8545 = vcmp.lt.f32.partialorder %v8544, 0.0004427343
        %v8546 = vsel %vm8545, %v8543, %v8540
        %v8547 = vadd.f32 %v8502, 1.0
        %v8548 = vlog2.pop %v8547
        %v8549 = vmul.f32 %v8548, 0.6931472
        %v8550 = vmul.f32 -0.5, %v8502
        %v8551 = vadd.f32 %v8550, 1.0
        %v8552 = vmul.f32 %v8551, %v8502
        %v8553 = vand.u32 2147483647, %v8502
        %vm8554 = vcmp.lt.f32.partialorder %v8553, 0.0004427343
        %v8555 = vsel %vm8554, %v8552, %v8549
        %v8556 = vadd.f32 %v8504, 1.0
        %v8557 = vlog2.pop %v8556
        %v8558 = vmul.f32 %v8557, 0.6931472
        %v8559 = vmul.f32 -0.5, %v8504
        %v8560 = vadd.f32 %v8559, 1.0
        %v8561 = vmul.f32 %v8560, %v8504
        %v8562 = vand.u32 2147483647, %v8504
        %vm8563 = vcmp.lt.f32.partialorder %v8562, 0.0004427343
        %v8564 = vsel %vm8563, %v8561, %v8558
        %v8565 = vadd.f32 %v8506, 1.0
        %v8566 = vlog2.pop %v8565
        %v8567 = vmul.f32 %v8566, 0.6931472
        %v8568 = vmul.f32 -0.5, %v8506
        %v8569 = vadd.f32 %v8568, 1.0
        %v8570 = vmul.f32 %v8569, %v8506
        %v8571 = vand.u32 2147483647, %v8506
        %vm8572 = vcmp.lt.f32.partialorder %v8571, 0.0004427343
        %v8573 = vsel %vm8572, %v8570, %v8567
        %v8574 = vadd.f32 %v8508, 1.0
        %v8575 = vlog2.pop %v8574
        %v8576 = vmul.f32 %v8575, 0.6931472
        %v8577 = vmul.f32 -0.5, %v8508
        %v8578 = vadd.f32 %v8577, 1.0
        %v8579 = vmul.f32 %v8578, %v8508
        %v8580 = vand.u32 2147483647, %v8508
        %vm8581 = vcmp.lt.f32.partialorder %v8580, 0.0004427343
        %v8582 = vsel %vm8581, %v8579, %v8576
        %v8583 = vadd.f32 %v8510, 1.0
        %v8584 = vlog2.pop %v8583
        %v8585 = vmul.f32 %v8584, 0.6931472
        %v8586 = vmul.f32 -0.5, %v8510
        %v8587 = vadd.f32 %v8586, 1.0
        %v8588 = vmul.f32 %v8587, %v8510
        %v8589 = vand.u32 2147483647, %v8510
        %vm8590 = vcmp.lt.f32.partialorder %v8589, 0.0004427343
        %v8591 = vsel %vm8590, %v8588, %v8585
        %v8592 = vadd.f32 %v8512, 1.0
        %v8593 = vlog2.pop %v8592
        %v8594 = vmul.f32 %v8593, 0.6931472
        %v8595 = vmul.f32 -0.5, %v8512
        %v8596 = vadd.f32 %v8595, 1.0
        %v8597 = vmul.f32 %v8596, %v8512
        %v8598 = vand.u32 2147483647, %v8512
        %vm8599 = vcmp.lt.f32.partialorder %v8598, 0.0004427343
        %v8600 = vsel %vm8599, %v8597, %v8594
        %v8601 = vadd.f32 %v8514, 1.0
        %v8602 = vlog2.pop %v8601
        %v8603 = vmul.f32 %v8602, 0.6931472
        %v8604 = vmul.f32 -0.5, %v8514
        %v8605 = vadd.f32 %v8604, 1.0
        %v8606 = vmul.f32 %v8605, %v8514
        %v8607 = vand.u32 2147483647, %v8514
        %vm8608 = vcmp.lt.f32.partialorder %v8607, 0.0004427343
        %v8609 = vsel %vm8608, %v8606, %v8603
        %v8610 = vadd.f32 %v8516, 1.0
        %v8611 = vlog2.pop %v8610
        %v8612 = vmul.f32 %v8611, 0.6931472
        %v8613 = vmul.f32 -0.5, %v8516
        %v8614 = vadd.f32 %v8613, 1.0
        %v8615 = vmul.f32 %v8614, %v8516
        %v8616 = vand.u32 2147483647, %v8516
        %vm8617 = vcmp.lt.f32.partialorder %v8616, 0.0004427343
        %v8618 = vsel %vm8617, %v8615, %v8612
        %v8619 = vadd.f32 %v8518, 1.0
        %v8620 = vlog2.pop %v8619
        %v8621 = vmul.f32 %v8620, 0.6931472
        %v8622 = vmul.f32 -0.5, %v8518
        %v8623 = vadd.f32 %v8622, 1.0
        %v8624 = vmul.f32 %v8623, %v8518
        %v8625 = vand.u32 2147483647, %v8518
        %vm8626 = vcmp.lt.f32.partialorder %v8625, 0.0004427343
        %v8627 = vsel %vm8626, %v8624, %v8621
        %v8628 = vadd.f32 %v8520, 1.0
        %v8629 = vlog2.pop %v8628
        %v8630 = vmul.f32 %v8629, 0.6931472
        %v8631 = vmul.f32 -0.5, %v8520
        %v8632 = vadd.f32 %v8631, 1.0
        %v8633 = vmul.f32 %v8632, %v8520
        %v8634 = vand.u32 2147483647, %v8520
        %vm8635 = vcmp.lt.f32.partialorder %v8634, 0.0004427343
        %v8636 = vsel %vm8635, %v8633, %v8630
        %v8637 = vadd.f32 %v8522, 1.0
        %v8638 = vlog2.pop %v8637
        %v8639 = vmul.f32 %v8638, 0.6931472
        %v8640 = vmul.f32 -0.5, %v8522
        %v8641 = vadd.f32 %v8640, 1.0
        %v8642 = vmul.f32 %v8641, %v8522
        %v8643 = vand.u32 2147483647, %v8522
        %vm8644 = vcmp.lt.f32.partialorder %v8643, 0.0004427343
        %v8645 = vsel %vm8644, %v8642, %v8639
        %v8646 = vadd.f32 %v8524, 1.0
        %v8647 = vlog2.pop %v8646
        %v8648 = vmul.f32 %v8647, 0.6931472
        %v8649 = vmul.f32 -0.5, %v8524
        %v8650 = vadd.f32 %v8649, 1.0
        %v8651 = vmul.f32 %v8650, %v8524
        %v8652 = vand.u32 2147483647, %v8524
        %vm8653 = vcmp.lt.f32.partialorder %v8652, 0.0004427343
        %v8654 = vsel %vm8653, %v8651, %v8648
        %v8655 = vadd.f32 %v8526, 1.0
        %v8656 = vlog2.pop %v8655
        %v8657 = vmul.f32 %v8656, 0.6931472
        %v8658 = vmul.f32 -0.5, %v8526
        %v8659 = vadd.f32 %v8658, 1.0
        %v8660 = vmul.f32 %v8659, %v8526
        %v8661 = vand.u32 2147483647, %v8526
        %vm8662 = vcmp.lt.f32.partialorder %v8661, 0.0004427343
        %v8663 = vsel %vm8662, %v8660, %v8657
        %v8664 = vadd.f32 %v8528, 1.0
        %v8665 = vlog2.pop %v8664
        %v8666 = vmul.f32 %v8665, 0.6931472
        %v8667 = vmul.f32 -0.5, %v8528
        %v8668 = vadd.f32 %v8667, 1.0
        %v8669 = vmul.f32 %v8668, %v8528
        %v8670 = vand.u32 2147483647, %v8528
        %vm8671 = vcmp.lt.f32.partialorder %v8670, 0.0004427343
        %v8672 = vsel %vm8671, %v8669, %v8666
        %v8673 = vsub.f32 %v8449, %v8537
        %v8674 = vsub.f32 %v8450, %v8546
        %v8675 = vsub.f32 %v8451, %v8555
        %v8676 = vsub.f32 %v8452, %v8564
        %v8677 = vsub.f32 %v8453, %v8573
        %v8678 = vsub.f32 %v8454, %v8582
        %v8679 = vsub.f32 %v8455, %v8591
        %v8680 = vsub.f32 %v8456, %v8600
        %v8681 = vsub.f32 %v8457, %v8609
        %v8682 = vsub.f32 %v8458, %v8618
        %v8683 = vsub.f32 %v8459, %v8627
        %v8684 = vsub.f32 %v8460, %v8636
        %v8685 = vsub.f32 %v8461, %v8645
        %v8686 = vsub.f32 %v8462, %v8654
        %v8687 = vsub.f32 %v8463, %v8663
        %v8688 = vsub.f32 %v8464, %v8672
        %vm8689 = vcmask 97280
        %v8690 = vsel %vm8689, %v8673, 0.0
        %8691 = vadd.xlane.f32.xlu0 %v8690
        %v8692 = vpop.xlane.xlu0 %8691
        %v8693 = vsel %vm8689, %v8674, 0.0
        %8694 = vadd.xlane.f32.xlu0 %v8693
        %v8695 = vpop.xlane.xlu0 %8694
        %v8696 = vsel %vm8689, %v8675, 0.0
        %8697 = vadd.xlane.f32.xlu0 %v8696
        %v8698 = vpop.xlane.xlu0 %8697
        %v8699 = vsel %vm8689, %v8676, 0.0
        %8700 = vadd.xlane.f32.xlu0 %v8699
        %v8701 = vpop.xlane.xlu0 %8700
        %v8702 = vsel %vm8689, %v8677, 0.0
        %8703 = vadd.xlane.f32.xlu0 %v8702
        %v8704 = vpop.xlane.xlu0 %8703
        %v8705 = vsel %vm8689, %v8678, 0.0
        %8706 = vadd.xlane.f32.xlu0 %v8705
        %v8707 = vpop.xlane.xlu0 %8706
        %v8708 = vsel %vm8689, %v8679, 0.0
        %8709 = vadd.xlane.f32.xlu0 %v8708
        %v8710 = vpop.xlane.xlu0 %8709
        %v8711 = vsel %vm8689, %v8680, 0.0
        %8712 = vadd.xlane.f32.xlu0 %v8711
        %v8713 = vpop.xlane.xlu0 %8712
        %v8714 = vsel %vm8689, %v8681, 0.0
        %8715 = vadd.xlane.f32.xlu0 %v8714
        %v8716 = vpop.xlane.xlu0 %8715
        %v8717 = vsel %vm8689, %v8682, 0.0
        %8718 = vadd.xlane.f32.xlu0 %v8717
        %v8719 = vpop.xlane.xlu0 %8718
        %v8720 = vsel %vm8689, %v8683, 0.0
        %8721 = vadd.xlane.f32.xlu0 %v8720
        %v8722 = vpop.xlane.xlu0 %8721
        %v8723 = vsel %vm8689, %v8684, 0.0
        %8724 = vadd.xlane.f32.xlu0 %v8723
        %v8725 = vpop.xlane.xlu0 %8724
        %v8726 = vsel %vm8689, %v8685, 0.0
        %8727 = vadd.xlane.f32.xlu0 %v8726
        %v8728 = vpop.xlane.xlu0 %8727
        %v8729 = vsel %vm8689, %v8686, 0.0
        %8730 = vadd.xlane.f32.xlu0 %v8729
        %v8731 = vpop.xlane.xlu0 %8730
        %v8732 = vsel %vm8689, %v8687, 0.0
        %8733 = vadd.xlane.f32.xlu0 %v8732
        %v8734 = vpop.xlane.xlu0 %8733
        %v8735 = vsel %vm8689, %v8688, 0.0
        %8736 = vadd.xlane.f32.xlu0 %v8735
        %v8737 = vpop.xlane.xlu0 %8736
        %v8738 = vsub.f32 0.0, %v8692
        %v8739 = vsub.f32 0.0, %v8695
        %v8740 = vsub.f32 0.0, %v8698
        %v8741 = vsub.f32 0.0, %v8701
        %v8742 = vsub.f32 0.0, %v8704
        %v8743 = vsub.f32 0.0, %v8707
        %v8744 = vsub.f32 0.0, %v8710
        %v8745 = vsub.f32 0.0, %v8713
        %v8746 = vsub.f32 0.0, %v8716
        %v8747 = vsub.f32 0.0, %v8719
        %v8748 = vsub.f32 0.0, %v8722
        %v8749 = vsub.f32 0.0, %v8725
        %v8750 = vsub.f32 0.0, %v8728
        %v8751 = vsub.f32 0.0, %v8731
        %v8752 = vsub.f32 0.0, %v8734
        %v8753 = vsub.f32 0.0, %v8737
        %v8770 = vperm.slane %v8738, %v428
        %v8771 = vperm.slane %v8739, %v7145
        %v8772 = vsel %vm7147, %v8771, %v8770
        %v8773 = vadd.s32 %v428, 4294967280
        %v8774 = vperm.slane %v8740, %v8773
        %vm8775 = vcmask 195712
        %v8776 = vsel %vm8775, %v8774, %v8772
        %v8777 = vadd.s32 %v428, 4294967272
        %v8778 = vperm.slane %v8741, %v8777
        %vm8779 = vcmask 261312
        %v8780 = vsel %vm8779, %v8778, %v8776
        %v8781 = vadd.s32 %v428, 4294967264
        %v8782 = vperm.slane %v8742, %v8781
        %vm8783 = vcmask 326912
        %v8784 = vsel %vm8783, %v8782, %v8780
        %v8785 = vadd.s32 %v428, 4294967256
        %v8786 = vperm.slane %v8743, %v8785
        %vm8787 = vcmask 392512
        %v8788 = vsel %vm8787, %v8786, %v8784
        %v8789 = vadd.s32 %v428, 4294967248
        %v8790 = vperm.slane %v8744, %v8789
        %vm8791 = vcmask 458112
        %v8792 = vsel %vm8791, %v8790, %v8788
        %v8793 = vadd.s32 %v428, 4294967240
        %v8794 = vperm.slane %v8745, %v8793
        %vm8795 = vcmask 523712
        %v8796 = vsel %vm8795, %v8794, %v8792
        %v8797 = vadd.s32 %v428, 4294967232
        %v8798 = vperm.slane %v8746, %v8797
        %vm8799 = vcmask 589312
        %v8800 = vsel %vm8799, %v8798, %v8796
        %v8801 = vadd.s32 %v428, 4294967224
        %v8802 = vperm.slane %v8747, %v8801
        %vm8803 = vcmask 654912
        %v8804 = vsel %vm8803, %v8802, %v8800
        %v8805 = vadd.s32 %v428, 4294967216
        %v8806 = vperm.slane %v8748, %v8805
        %vm8807 = vcmask 720512
        %v8808 = vsel %vm8807, %v8806, %v8804
        %v8809 = vadd.s32 %v428, 4294967208
        %v8810 = vperm.slane %v8749, %v8809
        %vm8811 = vcmask 786112
        %v8812 = vsel %vm8811, %v8810, %v8808
        %v8813 = vadd.s32 %v428, 4294967200
        %v8814 = vperm.slane %v8750, %v8813
        %vm8815 = vcmask 851712
        %v8816 = vsel %vm8815, %v8814, %v8812
        %v8817 = vadd.s32 %v428, 4294967192
        %v8818 = vperm.slane %v8751, %v8817
        %vm8819 = vcmask 917312
        %v8820 = vsel %vm8819, %v8818, %v8816
        %v8821 = vadd.s32 %v428, 4294967184
        %v8822 = vperm.slane %v8752, %v8821
        %vm8823 = vcmask 982912
        %v8824 = vsel %vm8823, %v8822, %v8820
        %v8825 = vadd.s32 %v428, 4294967176
        %v8826 = vperm.slane %v8753, %v8825
        %vm8827 = vcmask 1048512
        %v8828 = vsel %vm8827, %v8826, %v8824
        %8830 = vst [vmem:[%s206] sm:$0x1] %v8828
        %s8831 = sand.u32 %s120, 1
        %s8832 = scalar_lea.sflag [#allocation3], %s8831
        %s8833 = sand.u32 %s120, 1
        %s8834 = scalar_lea.vmem [#allocation2], %s8833
        // Predicated region
        $region37: #{tpu_custom_call.1} parent=35 // pred_check
          %p8835 = pneg %p130
        $region38: #{tpu_custom_call.1} parent=35 // pred_check_branch
          %8837 = sbr.rel (%p8835) target = $region40
        $region39: #{tpu_custom_call.1} parent=35 // pred_region
          %8839 = vsyncadd %s8832, 0
          %s8840 = scalar_lea.hbm %s4, %s18
          %s8842 = sshll.u32 %s8834, 4
          %s8843 = int_to_ptr.vmem [resolvable:$true] %s8842
          %s8844 = sshll.u32 %s8840, 4
          %s8845 = int_to_ptr.hbm [resolvable:$true] %s8844
          %8847 = dma.vmem_to_hbm [thread:$0]  %s8843, 16, %s8845, %s8832
        $region40: #{tpu_custom_call.1} parent=35 // pred_fallthru
          _
      $region36: #{tpu_custom_call.1} parent=5 // pred_fallthru
        _
      %p8848 = scmp.le.s32.totalorder 2, %s13
      // Predicated region
      $region41: #{tpu_custom_call.1} parent=5 // pred_check
        %p8849 = pneg %p8848
      $region42: #{tpu_custom_call.1} parent=5 // pred_check_branch
        %8851 = sbr.rel (%p8849) target = $region44
      $region43: #{tpu_custom_call.1} parent=5 // pred_region
        %s8852 = ssub.s32 %s13, 2
        // Predicated region
        $region45: #{tpu_custom_call.1} parent=43 // pred_check
          %p8853 = pneg %p136
        $region46: #{tpu_custom_call.1} parent=43 // pred_check_branch
          %8855 = sbr.rel (%p8853) target = $region48
        $region47: #{tpu_custom_call.1} parent=43 // pred_region
          %s8856 = sand.u32 %s121, 1
          %s8857 = scalar_lea.sflag [#allocation3], %s8856
          %s8858 = sand.u32 %s121, 1
          %s8859 = scalar_lea.vmem [#allocation2], %s8858
          %8861 = dma.done %s8857, 16
        $region48: #{tpu_custom_call.1} parent=43 // pred_fallthru
          _
      $region44: #{tpu_custom_call.1} parent=5 // pred_fallthru
        _
    $region6: #{tpu_custom_call.1} parent=1 // loop_footer
      %s17 = sadd.s32 1, %s13
    $region7: #{tpu_custom_call.1} parent=1 // loop_footer_branch
      %12 = sbr.rel target = $region3
    $region8: #{tpu_custom_call.1} parent=1 // loop_exit
      _
    %8862 = vsyncpa [#allocation3], 1
    %s8863 = scalar_lea.sflag [#allocation3], 1
    %8864 = vsyncpa %s8863, 1

</llo_original>
